<compile_context>
chip_gen: v6e
topology: v6e:2x2x1
jax: 0.10.0
libtpu: 0.0.40
codegen_flags: <defaults>
</compile_context>

<pallas_src>
import jax
import jax.numpy as jnp
from jax.experimental import pallas as pl
from jax.experimental.pallas import tpu as pltpu

# ----- model hyper-parameters (the `params` dict of the PyTorch module) -----
D      = 2      # params['d']      : input coordinate dimension
WIDTH  = 32     # params['width']  : hidden width
DEPTH  = 3      # params['depth']  : number of residual hidden layers
DD     = 1      # params['dd']     : output dimension (kernel assumes DD == 1)


# --------------------------------------------------------------------------- #
# Device-dependent defaults
# --------------------------------------------------------------------------- #
def _device_kind():
    try:
        return jax.devices()[0].device_kind.lower()
    except Exception:
        return ""


def _default_hidden_dtype():
    """bf16 hidden loop on v6e/v7x (bf16 VPU/EUP, MXU-native); f32 elsewhere.

    v5e has no bf16 VPU/EUP so bf16 would only add cast ops there.
    """
    kind = _device_kind()
    if ("v6" in kind) or ("v7" in kind):
        return jnp.bfloat16
    return jnp.float32


def _default_tm(n):
    """Row-tile (lane) size.

    Single-TC chips (v5e/v6e): fewest, fattest grid steps -- the body is a few
    hundred cycles so the ~0.35us per-step overhead dominates at small N.
    v7x (2 TCs/chip): target ~4 blocks so both cores get work AND each core
    still has >=2 steps for the BlockSpec pipeliner to overlap.
    Capped at 1024 lanes to keep h/z/t (each (32, tm) f32 = tm/32 vregs) from
    overflowing the 64-entry vreg file.
    """
    kind = _device_kind()
    target_blocks = 4 if "v7" in kind else 1
    tm = -(-n // target_blocks)             # cdiv
    tm = min(max(tm, 256), 1024)
    return -(-tm // 128) * 128              # multiple of 128 lanes


# --------------------------------------------------------------------------- #
# Kernel
# --------------------------------------------------------------------------- #
def _make_kernel(hidden_dtype):
    hidden_dtype = jnp.dtype(hidden_dtype)
    f32_hidden = hidden_dtype == jnp.dtype(jnp.float32)
    # For the pure-f32 path, force true f32 matmuls (default precision may use
    # reduced-precision MXU passes); bf16 path uses native bf16 MXU operands.
    mm_precision = jax.lax.Precision.HIGHEST if f32_hidden else None

    def ritznet_kernel(x_ref, win_ref, bin_ref, wh_ref, bh_ref,
                       wout_ref, bout_ref, o_ref):
        """One tile of TM batch points, batch-on-lanes.

        x_ref    : (D, TM)    f32    coordinates, transposed
        win_ref  : (WIDTH, D) f32    W_in^T
        bin_ref  : (WIDTH, 1) f32    b_in as a column
        wh_ref   : (DEPTH, WIDTH, WIDTH) hidden_dtype   each slice is W_l^T
        bh_ref   : (DEPTH, WIDTH, 1) f32 b_l as columns
        wout_ref : (WIDTH, DD=1) f32 W_out (column)
        bout_ref : (1, 1) f32        b_out
        o_ref    : (DD=1, TM) f32    output, transposed (lane-dense store)
        """
        xxx = x_ref[0:1, :]                      # (1, TM)  x-coordinate
        yyy = x_ref[1:2, :]                      # (1, TM)  y-coordinate

        # input layer: D = 2 -> two lane-dense VPU FMAs instead of a tiny matmul
        h = win_ref[:, 0:1] * xxx + win_ref[:, 1:2] * yyy + bin_ref[...]  # (W,TM) f32

        # residual cubed-tanh blocks (DEPTH is static -> unrolled)
        for l in range(DEPTH):
            z = jnp.dot(wh_ref[l], h.astype(hidden_dtype),
                        preferred_element_type=jnp.float32,
                        precision=mm_precision) + bh_ref[l]               # (W,TM) f32
            t = jnp.tanh(z.astype(hidden_dtype))      # 1 EUP op (bf16 on v6e/v7x)
            h = (t * t * t).astype(jnp.float32) + h   # residual add stays f32

        # output layer: DD = 1 -> VPU multiply + sublane (XLU) reduction
        out = jnp.sum(wout_ref[...] * h, axis=0, keepdims=True) + bout_ref[...]

        # boundary-condition enforcement: (1 - x)*x*u + x  (lane-dense VPU, f32)
        o_ref[...] = (1.0 - xxx) * xxx * out + xxx

    return ritznet_kernel


# --------------------------------------------------------------------------- #
# Wrappers
# --------------------------------------------------------------------------- #
def prepare_params(win, bin_, wh, bh, wout, bout, *, hidden_dtype=jnp.float32):
    """One-time weight re-layout (do this OUTSIDE the hot path)."""
    return (win.T,                                            # (WIDTH, D)
            bin_.T,                                           # (WIDTH, 1)
            jnp.swapaxes(wh, 1, 2).astype(hidden_dtype),      # (DEPTH, WIDTH, WIDTH)
            jnp.swapaxes(bh, 1, 2),                           # (DEPTH, WIDTH, 1)
            wout,                                             # (WIDTH, DD)
            bout)                                             # (1, DD)


def ritznet_forward_t(x_t, win_t, bin_t, wh_t, bh_t, wout, bout, *, tm=None):
    """Hot-path forward.  x_t: (D, N) f32 (batch-on-lanes).  Returns (N, DD)."""
    d, N = x_t.shape
    assert d == D and DD == 1  # DD==1: output reduce + reshape below assume it
    hidden_dtype = wh_t.dtype
    if tm is None:
        tm = _default_tm(N)
    n_blocks = pl.cdiv(N, tm)
    n_pad = n_blocks * tm
    if n_pad != N:
        x_t = jnp.pad(x_t, ((0, 0), (0, n_pad - N)))

    cost = pl.CostEstimate(
        flops=int(n_pad * (2 * D * WIDTH
                           + DEPTH * (2 * WIDTH * WIDTH + 5 * WIDTH)
                           + 2 * WIDTH + 4)),
        transcendentals=int(n_pad * DEPTH * WIDTH),
        bytes_accessed=int(4 * n_pad * (D + DD)
                           + 4 * (D * WIDTH + WIDTH + DEPTH * WIDTH + WIDTH * DD + DD)
                           + jnp.dtype(hidden_dtype).itemsize * DEPTH * WIDTH * WIDTH))

    out_t = pl.pallas_call(
        _make_kernel(hidden_dtype),
        out_shape=jax.ShapeDtypeStruct((DD, n_pad), jnp.float32),
        grid_spec=pltpu.PrefetchScalarGridSpec(
            num_scalar_prefetch=0,
            grid=(n_blocks,),
            in_specs=[
                pl.BlockSpec((D, tm),               lambda i: (0, i)),     # x^T tile
                pl.BlockSpec((WIDTH, D),            lambda i: (0, 0)),     # W_in^T
                pl.BlockSpec((WIDTH, 1),            lambda i: (0, 0)),     # b_in
                pl.BlockSpec((DEPTH, WIDTH, WIDTH), lambda i: (0, 0, 0)),  # W_h^T
                pl.BlockSpec((DEPTH, WIDTH, 1),     lambda i: (0, 0, 0)),  # b_h
                pl.BlockSpec((WIDTH, DD),           lambda i: (0, 0)),     # W_out
                pl.BlockSpec((1, DD),               lambda i: (0, 0)),     # b_out
            ],
            out_specs=pl.BlockSpec((DD, tm), lambda i: (0, i)),            # lane-dense
        ),
        compiler_params=pltpu.CompilerParams(
            dimension_semantics=("parallel",)),
        cost_estimate=cost,
    )(x_t, win_t, bin_t, wh_t, bh_t, wout, bout)

    # (1, n_pad) -> (n_pad, 1) -> drop padded rows
    return out_t.reshape(n_pad, DD)[:N]


def ritznet_forward(x, win, bin_, wh, bh, wout, bout, *, tm=None, hidden_dtype=None):
    """Convenience wrapper taking PyTorch-layout x of shape (N, D).

    NOTE: the x.T here is a separate XLA op with its own HBM round-trip; for
    repeated calls (training / Ritz-loss evaluation) generate or cache the
    quadrature points in (D, N) layout and call ritznet_forward_t directly.
    """
    if hidden_dtype is None:
        hidden_dtype = _default_hidden_dtype()
    prep = prepare_params(win, bin_, wh, bh, wout, bout, hidden_dtype=hidden_dtype)
    return ritznet_forward_t(x.T, *prep, tm=tm)


# --------------------------------------------------------------------------- #
# Init + reference
# --------------------------------------------------------------------------- #
def init_params(key):
    """Deterministic init mimicking nn.Linear's uniform(-1/sqrt(fan_in), ...)."""
    def linear(key, fan_in, fan_out):
        kw, kb = jax.random.split(key)
        bound = 1.0 / jnp.sqrt(fan_in)
        w = jax.random.uniform(kw, (fan_in, fan_out), jnp.float32, -bound, bound)
        b = jax.random.uniform(kb, (1, fan_out), jnp.float32, -bound, bound)
        return w, b

    keys = jax.random.split(key, DEPTH + 2)
    win, bin_ = linear(keys[0], D, WIDTH)
    whs, bhs = [], []
    for l in range(DEPTH):
        w, b = linear(keys[1 + l], WIDTH, WIDTH)
        whs.append(w)
        bhs.append(b)
    wh = jnp.stack(whs, axis=0)                    # (DEPTH, WIDTH, WIDTH)
    bh = jnp.stack(bhs, axis=0)                    # (DEPTH, 1, WIDTH)
    wout, bout = linear(keys[-1], WIDTH, DD)
    return win, bin_, wh, bh, wout, bout


def ritznet_ref(x, win, bin_, wh, bh, wout, bout):
    """Pure-JAX f32 reference (row-major, matches the PyTorch forward)."""
    xxx = x[:, 0:1]
    h = x @ win + bin_
    for l in range(DEPTH):
        h = jnp.tanh(h @ wh[l] + bh[l]) ** 3 + h
    out = h @ wout + bout
    return (1.0 - xxx) * xxx * out + xxx


# --------------------------------------------------------------------------- #
if __name__ == "__main__":
    key = jax.random.PRNGKey(0)
    kx, kp = jax.random.split(key)

    N = 1024
    # Quadrature points generated directly in the kernel's (D, N) layout:
    # no per-call transpose in the hot path (review item).
    x_t = jax.random.uniform(kx, (D, N), jnp.float32)   # coordinates in [0, 1)^2

    params = init_params(kp)
    ref = ritznet_ref(x_t.T, *params)

    # ---- f32 path (valid on every TPU generation), checked tightly ---------
    prep_f32 = prepare_params(*params, hidden_dtype=jnp.float32)
    out_f32 = jax.block_until_ready(ritznet_forward_t(x_t, *prep_f32))
    assert out_f32.shape == (N, DD)
    assert jnp.allclose(out_f32, ref, atol=1e-4, rtol=1e-4), "f32 kernel mismatch"

    # ---- auto path: bf16 hidden loop on v6e/v7x, f32 elsewhere --------------
    # Loose tolerance: bf16 tanh/matmul operands, residual & output kept f32.
    hd = _default_hidden_dtype()
    prep_auto = prepare_params(*params, hidden_dtype=hd)
    out_auto = jax.block_until_ready(ritznet_forward_t(x_t, *prep_auto))
    assert out_auto.shape == (N, DD)
    assert jnp.allclose(out_auto, ref, atol=1e-1, rtol=0.0), "auto-dtype kernel mismatch"

    print("KERNEL_OK")
</pallas_src>

<mosaic_0001>
module attributes {stable_mosaic.version = 11 : i64} {
  func.func @ritznet_kernel(%arg0: i32, %arg1: memref<2x1024xf32, #tpu.memory_space<vmem>>, %arg2: memref<32x2xf32, #tpu.memory_space<vmem>>, %arg3: memref<32x1xf32, #tpu.memory_space<vmem>>, %arg4: memref<3x32x32xf32, #tpu.memory_space<vmem>>, %arg5: memref<3x32x1xf32, #tpu.memory_space<vmem>>, %arg6: memref<32x1xf32, #tpu.memory_space<vmem>>, %arg7: memref<1x1xf32, #tpu.memory_space<vmem>>, %arg8: memref<1x1024xf32, #tpu.memory_space<vmem>>) attributes {dimension_semantics = [#tpu.dimension_semantics<parallel>], iteration_bounds = array<i64: 1>, scalar_prefetch = 0 : i64, scratch_operands = 0 : i64, tpu.core_type = #tpu.core_type<tc>, window_params = [{transform_indices = @transform_0, window_bounds = array<i64: 2, 1024>}, {pipeline_mode = #tpu.pipeline_mode<synchronous>, transform_indices = @transform_1, window_bounds = array<i64: 32, 2>}, {pipeline_mode = #tpu.pipeline_mode<synchronous>, transform_indices = @transform_2, window_bounds = array<i64: 32, 1>}, {pipeline_mode = #tpu.pipeline_mode<synchronous>, transform_indices = @transform_3, window_bounds = array<i64: 3, 32, 32>}, {pipeline_mode = #tpu.pipeline_mode<synchronous>, transform_indices = @transform_4, window_bounds = array<i64: 3, 32, 1>}, {pipeline_mode = #tpu.pipeline_mode<synchronous>, transform_indices = @transform_5, window_bounds = array<i64: 32, 1>}, {pipeline_mode = #tpu.pipeline_mode<synchronous>, transform_indices = @transform_6, window_bounds = array<i64: 1, 1>}, {transform_indices = @transform_7, window_bounds = array<i64: 1, 1024>}]} {
    %c0 = arith.constant 0 : index
    %c0_0 = arith.constant 0 : index
    %0 = vector.load %arg1[%c0, %c0_0] : memref<2x1024xf32, #tpu.memory_space<vmem>>, vector<1x1024xf32>
    %c1 = arith.constant 1 : index
    %c0_1 = arith.constant 0 : index
    %1 = vector.load %arg1[%c1, %c0_1] : memref<2x1024xf32, #tpu.memory_space<vmem>>, vector<1x1024xf32>
    %c0_2 = arith.constant 0 : index
    %c0_3 = arith.constant 0 : index
    %2 = vector.load %arg2[%c0_2, %c0_3] : memref<32x2xf32, #tpu.memory_space<vmem>>, vector<32x1xf32>
    %3 = vector.broadcast %2 : vector<32x1xf32> to vector<32x1024xf32>
    %4 = vector.broadcast %0 : vector<1x1024xf32> to vector<32x1024xf32>
    %5 = arith.mulf %3, %4 : vector<32x1024xf32>
    %c0_4 = arith.constant 0 : index
    %c1_5 = arith.constant 1 : index
    %6 = vector.load %arg2[%c0_4, %c1_5] : memref<32x2xf32, #tpu.memory_space<vmem>>, vector<32x1xf32>
    %7 = vector.broadcast %6 : vector<32x1xf32> to vector<32x1024xf32>
    %8 = vector.broadcast %1 : vector<1x1024xf32> to vector<32x1024xf32>
    %9 = arith.mulf %7, %8 : vector<32x1024xf32>
    %10 = arith.addf %5, %9 : vector<32x1024xf32>
    %c0_6 = arith.constant 0 : index
    %c0_7 = arith.constant 0 : index
    %11 = vector.load %arg3[%c0_6, %c0_7] : memref<32x1xf32, #tpu.memory_space<vmem>>, vector<32x1xf32>
    %12 = vector.broadcast %11 : vector<32x1xf32> to vector<32x1024xf32>
    %13 = arith.addf %10, %12 : vector<32x1024xf32>
    %c0_8 = arith.constant 0 : index
    %c0_9 = arith.constant 0 : index
    %c0_10 = arith.constant 0 : index
    %14 = vector.load %arg4[%c0_8, %c0_9, %c0_10] : memref<3x32x32xf32, #tpu.memory_space<vmem>>, vector<1x32x32xf32>
    %15 = vector.shape_cast %14 : vector<1x32x32xf32> to vector<32x32xf32>
    %cst = arith.constant dense<0.000000e+00> : vector<32x1024xf32>
    %16 = tpu.matmul %15, %13, %cst {dimension_numbers = #tpu.dot_dimension_numbers<[1], [0], [0], [1], [0, 0, 1, 1], [], []>, precision = #tpu.contract_precision<fp32>} : vector<32x32xf32>, vector<32x1024xf32>, vector<32x1024xf32> -> vector<32x1024xf32>
    %c0_11 = arith.constant 0 : index
    %c0_12 = arith.constant 0 : index
    %c0_13 = arith.constant 0 : index
    %17 = vector.load %arg5[%c0_11, %c0_12, %c0_13] : memref<3x32x1xf32, #tpu.memory_space<vmem>>, vector<1x32x1xf32>
    %18 = vector.shape_cast %17 : vector<1x32x1xf32> to vector<32x1xf32>
    %19 = vector.broadcast %18 : vector<32x1xf32> to vector<32x1024xf32>
    %20 = arith.addf %16, %19 : vector<32x1024xf32>
    %21 = math.tanh %20 : vector<32x1024xf32>
    %22 = arith.mulf %21, %21 : vector<32x1024xf32>
    %23 = arith.mulf %22, %21 : vector<32x1024xf32>
    %24 = arith.addf %23, %13 : vector<32x1024xf32>
    %c1_14 = arith.constant 1 : index
    %c0_15 = arith.constant 0 : index
    %c0_16 = arith.constant 0 : index
    %25 = vector.load %arg4[%c1_14, %c0_15, %c0_16] : memref<3x32x32xf32, #tpu.memory_space<vmem>>, vector<1x32x32xf32>
    %26 = vector.shape_cast %25 : vector<1x32x32xf32> to vector<32x32xf32>
    %cst_17 = arith.constant dense<0.000000e+00> : vector<32x1024xf32>
    %27 = tpu.matmul %26, %24, %cst_17 {dimension_numbers = #tpu.dot_dimension_numbers<[1], [0], [0], [1], [0, 0, 1, 1], [], []>, precision = #tpu.contract_precision<fp32>} : vector<32x32xf32>, vector<32x1024xf32>, vector<32x1024xf32> -> vector<32x1024xf32>
    %c1_18 = arith.constant 1 : index
    %c0_19 = arith.constant 0 : index
    %c0_20 = arith.constant 0 : index
    %28 = vector.load %arg5[%c1_18, %c0_19, %c0_20] : memref<3x32x1xf32, #tpu.memory_space<vmem>>, vector<1x32x1xf32>
    %29 = vector.shape_cast %28 : vector<1x32x1xf32> to vector<32x1xf32>
    %30 = vector.broadcast %29 : vector<32x1xf32> to vector<32x1024xf32>
    %31 = arith.addf %27, %30 : vector<32x1024xf32>
    %32 = math.tanh %31 : vector<32x1024xf32>
    %33 = arith.mulf %32, %32 : vector<32x1024xf32>
    %34 = arith.mulf %33, %32 : vector<32x1024xf32>
    %35 = arith.addf %34, %24 : vector<32x1024xf32>
    %c2 = arith.constant 2 : index
    %c0_21 = arith.constant 0 : index
    %c0_22 = arith.constant 0 : index
    %36 = vector.load %arg4[%c2, %c0_21, %c0_22] : memref<3x32x32xf32, #tpu.memory_space<vmem>>, vector<1x32x32xf32>
    %37 = vector.shape_cast %36 : vector<1x32x32xf32> to vector<32x32xf32>
    %cst_23 = arith.constant dense<0.000000e+00> : vector<32x1024xf32>
    %38 = tpu.matmul %37, %35, %cst_23 {dimension_numbers = #tpu.dot_dimension_numbers<[1], [0], [0], [1], [0, 0, 1, 1], [], []>, precision = #tpu.contract_precision<fp32>} : vector<32x32xf32>, vector<32x1024xf32>, vector<32x1024xf32> -> vector<32x1024xf32>
    %c2_24 = arith.constant 2 : index
    %c0_25 = arith.constant 0 : index
    %c0_26 = arith.constant 0 : index
    %39 = vector.load %arg5[%c2_24, %c0_25, %c0_26] : memref<3x32x1xf32, #tpu.memory_space<vmem>>, vector<1x32x1xf32>
    %40 = vector.shape_cast %39 : vector<1x32x1xf32> to vector<32x1xf32>
    %41 = vector.broadcast %40 : vector<32x1xf32> to vector<32x1024xf32>
    %42 = arith.addf %38, %41 : vector<32x1024xf32>
    %43 = math.tanh %42 : vector<32x1024xf32>
    %44 = arith.mulf %43, %43 : vector<32x1024xf32>
    %45 = arith.mulf %44, %43 : vector<32x1024xf32>
    %46 = arith.addf %45, %35 : vector<32x1024xf32>
    %c0_27 = arith.constant 0 : index
    %c0_28 = arith.constant 0 : index
    %47 = vector.load %arg6[%c0_27, %c0_28] : memref<32x1xf32, #tpu.memory_space<vmem>>, vector<32x1xf32>
    %48 = vector.broadcast %47 : vector<32x1xf32> to vector<32x1024xf32>
    %49 = arith.mulf %48, %46 : vector<32x1024xf32>
    %cst_29 = arith.constant dense<0.000000e+00> : vector<1024xf32>
    %50 = vector.multi_reduction <add>, %49, %cst_29 [0] : vector<32x1024xf32> to vector<1024xf32>
    %51 = vector.shape_cast %50 : vector<1024xf32> to vector<1x1024xf32>
    %c0_30 = arith.constant 0 : index
    %c0_31 = arith.constant 0 : index
    %52 = vector.load %arg7[%c0_30, %c0_31] : memref<1x1xf32, #tpu.memory_space<vmem>>, vector<1x1xf32>
    %53 = vector.broadcast %52 : vector<1x1xf32> to vector<1x1024xf32>
    %54 = arith.addf %51, %53 : vector<1x1024xf32>
    %cst_32 = arith.constant 1.000000e+00 : f32
    %55 = vector.broadcast %cst_32 : f32 to vector<1x1024xf32>
    %56 = arith.subf %55, %0 : vector<1x1024xf32>
    %57 = arith.mulf %56, %0 : vector<1x1024xf32>
    %58 = arith.mulf %57, %54 : vector<1x1024xf32>
    %59 = arith.addf %58, %0 : vector<1x1024xf32>
    %c0_33 = arith.constant 0 : index
    %c0_34 = arith.constant 0 : index
    %60 = vector.load %arg8[%c0_33, %c0_34] : memref<1x1024xf32, #tpu.memory_space<vmem>>, vector<1x1024xf32>
    tpu.vector_store %arg8[%c0_33, %c0_34], %59 {strides = array<i32>} : memref<1x1024xf32, #tpu.memory_space<vmem>>, vector<1x1024xf32>,
    return
  }
  func.func @transform_0(%arg0: i32) -> (i32, i32) {
    %c0_i32 = arith.constant 0 : i32
    %c0_i32_0 = arith.constant 0 : i32
    return %c0_i32, %arg0 : i32, i32
  }
  func.func @transform_1(%arg0: i32) -> (i32, i32) {
    %c0_i32 = arith.constant 0 : i32
    %c0_i32_0 = arith.constant 0 : i32
    %c0_i32_1 = arith.constant 0 : i32
    return %c0_i32, %c0_i32_0 : i32, i32
  }
  func.func @transform_2(%arg0: i32) -> (i32, i32) {
    %c0_i32 = arith.constant 0 : i32
    %c0_i32_0 = arith.constant 0 : i32
    %c0_i32_1 = arith.constant 0 : i32
    return %c0_i32, %c0_i32_0 : i32, i32
  }
  func.func @transform_3(%arg0: i32) -> (i32, i32, i32) {
    %c0_i32 = arith.constant 0 : i32
    %c0_i32_0 = arith.constant 0 : i32
    %c0_i32_1 = arith.constant 0 : i32
    %c0_i32_2 = arith.constant 0 : i32
    return %c0_i32, %c0_i32_0, %c0_i32_1 : i32, i32, i32
  }
  func.func @transform_4(%arg0: i32) -> (i32, i32, i32) {
    %c0_i32 = arith.constant 0 : i32
    %c0_i32_0 = arith.constant 0 : i32
    %c0_i32_1 = arith.constant 0 : i32
    %c0_i32_2 = arith.constant 0 : i32
    return %c0_i32, %c0_i32_0, %c0_i32_1 : i32, i32, i32
  }
  func.func @transform_5(%arg0: i32) -> (i32, i32) {
    %c0_i32 = arith.constant 0 : i32
    %c0_i32_0 = arith.constant 0 : i32
    %c0_i32_1 = arith.constant 0 : i32
    return %c0_i32, %c0_i32_0 : i32, i32
  }
  func.func @transform_6(%arg0: i32) -> (i32, i32) {
    %c0_i32 = arith.constant 0 : i32
    %c0_i32_0 = arith.constant 0 : i32
    %c0_i32_1 = arith.constant 0 : i32
    return %c0_i32, %c0_i32_0 : i32, i32
  }
  func.func @transform_7(%arg0: i32) -> (i32, i32) {
    %c0_i32 = arith.constant 0 : i32
    %c0_i32_0 = arith.constant 0 : i32
    return %c0_i32, %arg0 : i32, i32
  }
}

</mosaic_0001>

<llo_original>
// kernel: tpu_custom_call.1
$region0: #{tpu_custom_call.1}
  #allocation0 [shape = 'u32[]', space=smem, size = 0x4, offset = 0x4, fixed_abs, tag = 'smem constant byte address 0x4 - core index']
  #allocation1 [shape = 'u32[144,128]{1,0:T(1,128)}', space=vmem, size = 0x12000, scoped, tag = 'internal scratch']
  #allocation2 [shape = 'f32[1,1]{1,0:T(1,128)S(1)}', space=vmem, size = 0x200, scoped, tag = 'scoped memory for tpu_custom_call.1']
  %s0 = inlined_call_operand.vmem [shape: f32[2,1024], index: 0, kind: input, shape index: {}]
  %s1 = inlined_call_operand.vmem [shape: f32[32,2], index: 1, kind: input, shape index: {}]
  %s2 = inlined_call_operand.vmem [shape: f32[32,1], index: 2, kind: input, shape index: {}]
  %s3 = inlined_call_operand.vmem [shape: f32[3,32,32], index: 3, kind: input, shape index: {}]
  %s4 = inlined_call_operand.vmem [shape: f32[3,32,1], index: 4, kind: input, shape index: {}]
  %s5 = inlined_call_operand.vmem [shape: f32[32,1], index: 5, kind: input, shape index: {}]
  %s6 = inlined_call_operand.<no memory space> [shape: f32[1,1], index: 6, kind: input, shape index: {}]
  %s7 = inlined_call_operand.hbm [shape: f32[1,1024], index: 7, kind: output, shape index: {}]
  %s8 = sld [smem:[#allocation0]]
  $region38: #{tpu_custom_call.1} parent=0
    _
  %s10 = ssub.s32 1, %s8
  %s11 = scalar_select 0, %s10, %s8
  %v12 = vstv %s6
  %13 = vst [vmem:[#allocation2] sm:$0x1] %v12
  $region1: #{tpu_custom_call.1} parent=0
    #allocation3 [shape = 'u8[4096]{0}', space=vmem, size = 0x1000, scoped, tag = 'output window, operand 0, single buffered']
    #allocation4 [shape = 's32[1]{0}', space=sflag, size = 0x4, scoped, tag = 'scoped memory for tpu_custom_call.1']
    %14 = vsyncpa [#allocation4], 0
    // Predicated region
    $region2: #{tpu_custom_call.1} parent=1 // pred_check
      _
    $region3: #{tpu_custom_call.1} parent=1 // pred_check_branch
      %16 = sbr.rel (0) target = $region5
    $region4: #{tpu_custom_call.1} parent=1 // pred_region
      _
    $region5: #{tpu_custom_call.1} parent=1 // pred_fallthru
      _
    // Predicated region
    $region6: #{tpu_custom_call.1} parent=1 // pred_check
      _
    $region7: #{tpu_custom_call.1} parent=1 // pred_check_branch
      %18 = sbr.rel (0) target = $region9
    $region8: #{tpu_custom_call.1} parent=1 // pred_region
      _
    $region9: #{tpu_custom_call.1} parent=1 // pred_fallthru
      _
    // Predicated region
    $region10: #{tpu_custom_call.1} parent=1 // pred_check
      _
    $region11: #{tpu_custom_call.1} parent=1 // pred_check_branch
      %20 = sbr.rel (0) target = $region13
    $region12: #{tpu_custom_call.1} parent=1 // pred_region
      _
    $region13: #{tpu_custom_call.1} parent=1 // pred_fallthru
      _
    // Predicated region
    $region14: #{tpu_custom_call.1} parent=1 // pred_check
      _
    $region15: #{tpu_custom_call.1} parent=1 // pred_check_branch
      %22 = sbr.rel (0) target = $region17
    $region16: #{tpu_custom_call.1} parent=1 // pred_region
      _
    $region17: #{tpu_custom_call.1} parent=1 // pred_fallthru
      _
    // Predicated region
    $region18: #{tpu_custom_call.1} parent=1 // pred_check
      _
    $region19: #{tpu_custom_call.1} parent=1 // pred_check_branch
      %24 = sbr.rel (0) target = $region21
    $region20: #{tpu_custom_call.1} parent=1 // pred_region
      _
    $region21: #{tpu_custom_call.1} parent=1 // pred_fallthru
      _
    // Predicated region
    $region22: #{tpu_custom_call.1} parent=1 // pred_check
      _
    $region23: #{tpu_custom_call.1} parent=1 // pred_check_branch
      %26 = sbr.rel (0) target = $region25
    $region24: #{tpu_custom_call.1} parent=1 // pred_region
      _
    $region25: #{tpu_custom_call.1} parent=1 // pred_fallthru
      _
    // Predicated region
    $region26: #{tpu_custom_call.1} parent=1 // pred_check
      _
    $region27: #{tpu_custom_call.1} parent=1 // pred_check_branch
      %28 = sbr.rel (0) target = $region29
    $region28: #{tpu_custom_call.1} parent=1 // pred_region
      _
    $region29: #{tpu_custom_call.1} parent=1 // pred_fallthru
      _
    %v29 = vld [vmem:[%s0] ss:$2 sm:$0xff]
    %s30 = scalar_lea.vmem %s0, 1
    %v31 = vld [vmem:[%s30] ss:$2 sm:$0xff]
    %v32 = vld [vmem:[%s1] sm:$0xff]
    %v33 = vld [vmem:[%s1 + $0x8] sm:$0xff]
    %v34 = vld [vmem:[%s1 + $0x10] sm:$0xff]
    %v35 = vld [vmem:[%s1 + $0x18] sm:$0xff]
    %37 = vset.pattern.permute.xlu0 0
    %38 = vperm.xlu0 %37, %v32
    %v39 = vpop.permute.xlu0 %38
    %42 = vset.pattern.permute.xlu0 0
    %43 = vperm.xlu0 %42, %v33
    %v44 = vpop.permute.xlu0 %43
    %47 = vset.pattern.permute.xlu0 0
    %48 = vperm.xlu0 %47, %v34
    %v49 = vpop.permute.xlu0 %48
    %52 = vset.pattern.permute.xlu0 0
    %53 = vperm.xlu0 %52, %v35
    %v54 = vpop.permute.xlu0 %53
    %v57 = vlaneseq
    %v58 = vshrl.u32 %v57, 7
    %v59 = vsub.s32 0, %v58
    %v60 = vrot.slane %v29, %v59
    %v61 = vlaneseq
    %v62 = vshrl.u32 %v61, 7
    %v63 = vsub.s32 1, %v62
    %v64 = vrot.slane %v29, %v63
    %v65 = vlaneseq
    %v66 = vshrl.u32 %v65, 7
    %v67 = vsub.s32 2, %v66
    %v68 = vrot.slane %v29, %v67
    %v69 = vlaneseq
    %v70 = vshrl.u32 %v69, 7
    %v71 = vsub.s32 3, %v70
    %v72 = vrot.slane %v29, %v71
    %v73 = vlaneseq
    %v74 = vshrl.u32 %v73, 7
    %v75 = vsub.s32 4, %v74
    %v76 = vrot.slane %v29, %v75
    %v77 = vlaneseq
    %v78 = vshrl.u32 %v77, 7
    %v79 = vsub.s32 5, %v78
    %v80 = vrot.slane %v29, %v79
    %v81 = vlaneseq
    %v82 = vshrl.u32 %v81, 7
    %v83 = vsub.s32 6, %v82
    %v84 = vrot.slane %v29, %v83
    %v85 = vlaneseq
    %v86 = vshrl.u32 %v85, 7
    %v87 = vsub.s32 7, %v86
    %v88 = vrot.slane %v29, %v87
    %v97 = vmul.f32 %v39, %v60
    %v98 = vmul.f32 %v39, %v64
    %v99 = vmul.f32 %v39, %v68
    %v100 = vmul.f32 %v39, %v72
    %v101 = vmul.f32 %v39, %v76
    %v102 = vmul.f32 %v39, %v80
    %v103 = vmul.f32 %v39, %v84
    %v104 = vmul.f32 %v39, %v88
    %v105 = vmul.f32 %v44, %v60
    %v106 = vmul.f32 %v44, %v64
    %v107 = vmul.f32 %v44, %v68
    %v108 = vmul.f32 %v44, %v72
    %v109 = vmul.f32 %v44, %v76
    %v110 = vmul.f32 %v44, %v80
    %v111 = vmul.f32 %v44, %v84
    %v112 = vmul.f32 %v44, %v88
    %v113 = vmul.f32 %v49, %v60
    %v114 = vmul.f32 %v49, %v64
    %v115 = vmul.f32 %v49, %v68
    %v116 = vmul.f32 %v49, %v72
    %v117 = vmul.f32 %v49, %v76
    %v118 = vmul.f32 %v49, %v80
    %v119 = vmul.f32 %v49, %v84
    %v120 = vmul.f32 %v49, %v88
    %v121 = vmul.f32 %v54, %v60
    %v122 = vmul.f32 %v54, %v64
    %v123 = vmul.f32 %v54, %v68
    %v124 = vmul.f32 %v54, %v72
    %v125 = vmul.f32 %v54, %v76
    %v126 = vmul.f32 %v54, %v80
    %v127 = vmul.f32 %v54, %v84
    %v128 = vmul.f32 %v54, %v88
    %129 = vset.pattern.permute.xlu0 1
    %130 = vperm.xlu0 %129, %v32
    %v131 = vpop.permute.xlu0 %130
    %133 = vset.pattern.permute.xlu0 1
    %134 = vperm.xlu0 %133, %v33
    %v135 = vpop.permute.xlu0 %134
    %137 = vset.pattern.permute.xlu0 1
    %138 = vperm.xlu0 %137, %v34
    %v139 = vpop.permute.xlu0 %138
    %141 = vset.pattern.permute.xlu0 1
    %142 = vperm.xlu0 %141, %v35
    %v143 = vpop.permute.xlu0 %142
    %v146 = vlaneseq
    %v147 = vshrl.u32 %v146, 7
    %v148 = vsub.s32 0, %v147
    %v149 = vrot.slane %v31, %v148
    %v150 = vlaneseq
    %v151 = vshrl.u32 %v150, 7
    %v152 = vsub.s32 1, %v151
    %v153 = vrot.slane %v31, %v152
    %v154 = vlaneseq
    %v155 = vshrl.u32 %v154, 7
    %v156 = vsub.s32 2, %v155
    %v157 = vrot.slane %v31, %v156
    %v158 = vlaneseq
    %v159 = vshrl.u32 %v158, 7
    %v160 = vsub.s32 3, %v159
    %v161 = vrot.slane %v31, %v160
    %v162 = vlaneseq
    %v163 = vshrl.u32 %v162, 7
    %v164 = vsub.s32 4, %v163
    %v165 = vrot.slane %v31, %v164
    %v166 = vlaneseq
    %v167 = vshrl.u32 %v166, 7
    %v168 = vsub.s32 5, %v167
    %v169 = vrot.slane %v31, %v168
    %v170 = vlaneseq
    %v171 = vshrl.u32 %v170, 7
    %v172 = vsub.s32 6, %v171
    %v173 = vrot.slane %v31, %v172
    %v174 = vlaneseq
    %v175 = vshrl.u32 %v174, 7
    %v176 = vsub.s32 7, %v175
    %v177 = vrot.slane %v31, %v176
    %v186 = vmul.f32 %v131, %v149
    %v187 = vmul.f32 %v131, %v153
    %v188 = vmul.f32 %v131, %v157
    %v189 = vmul.f32 %v131, %v161
    %v190 = vmul.f32 %v131, %v165
    %v191 = vmul.f32 %v131, %v169
    %v192 = vmul.f32 %v131, %v173
    %v193 = vmul.f32 %v131, %v177
    %v194 = vmul.f32 %v135, %v149
    %v195 = vmul.f32 %v135, %v153
    %v196 = vmul.f32 %v135, %v157
    %v197 = vmul.f32 %v135, %v161
    %v198 = vmul.f32 %v135, %v165
    %v199 = vmul.f32 %v135, %v169
    %v200 = vmul.f32 %v135, %v173
    %v201 = vmul.f32 %v135, %v177
    %v202 = vmul.f32 %v139, %v149
    %v203 = vmul.f32 %v139, %v153
    %v204 = vmul.f32 %v139, %v157
    %v205 = vmul.f32 %v139, %v161
    %v206 = vmul.f32 %v139, %v165
    %v207 = vmul.f32 %v139, %v169
    %v208 = vmul.f32 %v139, %v173
    %v209 = vmul.f32 %v139, %v177
    %v210 = vmul.f32 %v143, %v149
    %v211 = vmul.f32 %v143, %v153
    %v212 = vmul.f32 %v143, %v157
    %v213 = vmul.f32 %v143, %v161
    %v214 = vmul.f32 %v143, %v165
    %v215 = vmul.f32 %v143, %v169
    %v216 = vmul.f32 %v143, %v173
    %v217 = vmul.f32 %v143, %v177
    %v218 = vadd.f32 %v97, %v186
    %v219 = vadd.f32 %v98, %v187
    %v220 = vadd.f32 %v99, %v188
    %v221 = vadd.f32 %v100, %v189
    %v222 = vadd.f32 %v101, %v190
    %v223 = vadd.f32 %v102, %v191
    %v224 = vadd.f32 %v103, %v192
    %v225 = vadd.f32 %v104, %v193
    %v226 = vadd.f32 %v105, %v194
    %v227 = vadd.f32 %v106, %v195
    %v228 = vadd.f32 %v107, %v196
    %v229 = vadd.f32 %v108, %v197
    %v230 = vadd.f32 %v109, %v198
    %v231 = vadd.f32 %v110, %v199
    %v232 = vadd.f32 %v111, %v200
    %v233 = vadd.f32 %v112, %v201
    %v234 = vadd.f32 %v113, %v202
    %v235 = vadd.f32 %v114, %v203
    %v236 = vadd.f32 %v115, %v204
    %v237 = vadd.f32 %v116, %v205
    %v238 = vadd.f32 %v117, %v206
    %v239 = vadd.f32 %v118, %v207
    %v240 = vadd.f32 %v119, %v208
    %v241 = vadd.f32 %v120, %v209
    %v242 = vadd.f32 %v121, %v210
    %v243 = vadd.f32 %v122, %v211
    %v244 = vadd.f32 %v123, %v212
    %v245 = vadd.f32 %v124, %v213
    %v246 = vadd.f32 %v125, %v214
    %v247 = vadd.f32 %v126, %v215
    %v248 = vadd.f32 %v127, %v216
    %v249 = vadd.f32 %v128, %v217
    %v250 = vld [vmem:[%s2] sm:$0xff]
    %v251 = vld [vmem:[%s2 + $0x8] sm:$0xff]
    %v252 = vld [vmem:[%s2 + $0x10] sm:$0xff]
    %v253 = vld [vmem:[%s2 + $0x18] sm:$0xff]
    %255 = vset.pattern.permute.xlu0 0
    %256 = vperm.xlu0 %255, %v250
    %v257 = vpop.permute.xlu0 %256
    %260 = vset.pattern.permute.xlu0 0
    %261 = vperm.xlu0 %260, %v251
    %v262 = vpop.permute.xlu0 %261
    %265 = vset.pattern.permute.xlu0 0
    %266 = vperm.xlu0 %265, %v252
    %v267 = vpop.permute.xlu0 %266
    %270 = vset.pattern.permute.xlu0 0
    %271 = vperm.xlu0 %270, %v253
    %v272 = vpop.permute.xlu0 %271
    %v274 = vadd.f32 %v218, %v257
    %v275 = vadd.f32 %v219, %v257
    %v276 = vadd.f32 %v220, %v257
    %v277 = vadd.f32 %v221, %v257
    %v278 = vadd.f32 %v222, %v257
    %v279 = vadd.f32 %v223, %v257
    %v280 = vadd.f32 %v224, %v257
    %v281 = vadd.f32 %v225, %v257
    %v282 = vadd.f32 %v226, %v262
    %v283 = vadd.f32 %v227, %v262
    %v284 = vadd.f32 %v228, %v262
    %v285 = vadd.f32 %v229, %v262
    %v286 = vadd.f32 %v230, %v262
    %v287 = vadd.f32 %v231, %v262
    %v288 = vadd.f32 %v232, %v262
    %v289 = vadd.f32 %v233, %v262
    %v290 = vadd.f32 %v234, %v267
    %v291 = vadd.f32 %v235, %v267
    %v292 = vadd.f32 %v236, %v267
    %v293 = vadd.f32 %v237, %v267
    %v294 = vadd.f32 %v238, %v267
    %v295 = vadd.f32 %v239, %v267
    %v296 = vadd.f32 %v240, %v267
    %v297 = vadd.f32 %v241, %v267
    %v298 = vadd.f32 %v242, %v272
    %v299 = vadd.f32 %v243, %v272
    %v300 = vadd.f32 %v244, %v272
    %v301 = vadd.f32 %v245, %v272
    %v302 = vadd.f32 %v246, %v272
    %v303 = vadd.f32 %v247, %v272
    %v304 = vadd.f32 %v248, %v272
    %v305 = vadd.f32 %v249, %v272
    %v306 = vld [vmem:[%s3] sm:$0xff]
    %v307 = vld [vmem:[%s3 + $0x8] sm:$0xff]
    %v308 = vld [vmem:[%s3 + $0x10] sm:$0xff]
    %v309 = vld [vmem:[%s3 + $0x18] sm:$0xff]
    %v310 = vld [vmem:[%s4] sm:$0xff]
    %v311 = vld [vmem:[%s4 + $0x8] sm:$0xff]
    %v312 = vld [vmem:[%s4 + $0x10] sm:$0xff]
    %v313 = vld [vmem:[%s4 + $0x18] sm:$0xff]
    %315 = vset.pattern.permute.xlu0 0
    %316 = vperm.xlu0 %315, %v310
    %v317 = vpop.permute.xlu0 %316
    %320 = vset.pattern.permute.xlu0 0
    %321 = vperm.xlu0 %320, %v311
    %v322 = vpop.permute.xlu0 %321
    %325 = vset.pattern.permute.xlu0 0
    %326 = vperm.xlu0 %325, %v312
    %v327 = vpop.permute.xlu0 %326
    %330 = vset.pattern.permute.xlu0 0
    %331 = vperm.xlu0 %330, %v313
    %v332 = vpop.permute.xlu0 %331
    %vm334 = vcmask 261120
    %v336 = vsel %vm334, %v306, 0
    %v339 = vsel %vm334, %v307, 0
    %v342 = vsel %vm334, %v308, 0
    %v345 = vsel %vm334, %v309, 0
    %347 = vmatprep.subr.mxu0 0.0
    %348 = vmatpush1.msra.mxu0 0.0
    %349 = vmatprep.subr.mxu0 0.0
    %350 = vmatpush1.msra.mxu0 0.0
    %351 = vmatprep.subr.mxu0 0.0
    %352 = vmatpush1.msra.mxu0 0.0
    %353 = vmatprep.subr.mxu0 0.0
    %354 = vmatpush1.msra.mxu0 0.0
    %355 = vmatprep.subr.mxu0 0.0
    %356 = vmatpush1.msra.mxu0 0.0
    %357 = vmatprep.subr.mxu0 0.0
    %358 = vmatpush1.msra.mxu0 0.0
    %359 = vmatprep.subr.mxu0 0.0
    %360 = vmatpush1.msra.mxu0 0.0
    %361 = vmatprep.subr.mxu0 0.0
    %362 = vmatpush1.msra.mxu0 0.0
    %363 = vmatprep.subr.mxu0 0.0
    %364 = vmatpush1.msra.mxu0 0.0
    %365 = vmatprep.subr.mxu0 0.0
    %366 = vmatpush1.msra.mxu0 0.0
    %367 = vmatprep.subr.mxu0 0.0
    %368 = vmatpush1.msra.mxu0 0.0
    %369 = vmatprep.subr.mxu0 0.0
    %370 = vmatpush1.msra.mxu0 0.0
    %v371 = vand.u32 %v299, 4294901760
    %372 = vmatprep.subr.mxu0 %v371
    %v373 = vand.u32 %v298, 4294901760
    %374 = vmatpush1.msra.mxu0 %v373
    %v375 = vand.u32 %v291, 4294901760
    %376 = vmatprep.subr.mxu0 %v375
    %v377 = vand.u32 %v290, 4294901760
    %378 = vmatpush1.msra.mxu0 %v377
    %v379 = vand.u32 %v283, 4294901760
    %380 = vmatprep.subr.mxu0 %v379
    %v381 = vand.u32 %v282, 4294901760
    %382 = vmatpush1.msra.mxu0 %v381
    %v383 = vand.u32 %v275, 4294901760
    %384 = vmatprep.subr.mxu0 %v383
    %v385 = vand.u32 %v274, 4294901760
    %386 = vmatpush1.msra.mxu0 %v385
    %387 = vmatprep.subr.mxu0 0.0
    %388 = vmatpush2.msra.mxu0 0.0
    %389 = vmatprep.subr.mxu0 0.0
    %390 = vmatpush2.msra.mxu0 0.0
    %391 = vmatprep.subr.mxu0 0.0
    %392 = vmatpush2.msra.mxu0 0.0
    %393 = vmatprep.subr.mxu0 0.0
    %394 = vmatpush2.msra.mxu0 0.0
    %395 = vmatprep.subr.mxu0 0.0
    %396 = vmatpush2.msra.mxu0 0.0
    %397 = vmatprep.subr.mxu0 0.0
    %398 = vmatpush2.msra.mxu0 0.0
    %399 = vmatprep.subr.mxu0 0.0
    %400 = vmatpush2.msra.mxu0 0.0
    %401 = vmatprep.subr.mxu0 0.0
    %402 = vmatpush2.msra.mxu0 0.0
    %403 = vmatprep.subr.mxu0 0.0
    %404 = vmatpush2.msra.mxu0 0.0
    %405 = vmatprep.subr.mxu0 0.0
    %406 = vmatpush2.msra.mxu0 0.0
    %407 = vmatprep.subr.mxu0 0.0
    %408 = vmatpush2.msra.mxu0 0.0
    %409 = vmatprep.subr.mxu0 0.0
    %410 = vmatpush2.msra.mxu0 0.0
    %411 = vmatprep.subr.mxu0 0.0
    %412 = vmatpush2.msra.mxu0 0.0
    %413 = vmatprep.subr.mxu0 0.0
    %414 = vmatpush2.msra.mxu0 0.0
    %415 = vmatprep.subr.mxu0 0.0
    %416 = vmatpush2.msra.mxu0 0.0
    %417 = vmatprep.subr.mxu0 0.0
    %418 = vmatpush2.msra.mxu0 0.0
    %419 = vmatprep.mubr.f32.mxu0 0.0
    %v420 = vand.u32 %v336, 4294901760
    %v421 = vsub.f32 %v336, %v420
    %v422 = vand.u32 %v421, 4294901760
    %v423 = vsub.f32 %v421, %v422
    %v424 = vand.u32 %v423, 4294901760
    %425 = vmatmul.mubr.f32.gmra.mxu0 %v424
    %v426 = vpop.f32.mrf.mxu0
    %v427 = vadd.f32 %v317, %v426
    %v428 = vpop.f32.mrf.mxu0
    %v429 = vadd.f32 %v317, %v428
    %430 = vmatprep.mubr.f32.mxu0 0.0
    %v431 = vand.u32 %v339, 4294901760
    %v432 = vsub.f32 %v339, %v431
    %v433 = vand.u32 %v432, 4294901760
    %v434 = vsub.f32 %v432, %v433
    %v435 = vand.u32 %v434, 4294901760
    %436 = vmatmul.mubr.f32.gmra.mxu0 %v435
    %v437 = vpop.f32.mrf.mxu0
    %v438 = vadd.f32 %v322, %v437
    %v439 = vpop.f32.mrf.mxu0
    %v440 = vadd.f32 %v322, %v439
    %441 = vmatprep.mubr.f32.mxu0 0.0
    %v442 = vand.u32 %v342, 4294901760
    %v443 = vsub.f32 %v342, %v442
    %v444 = vand.u32 %v443, 4294901760
    %v445 = vsub.f32 %v443, %v444
    %v446 = vand.u32 %v445, 4294901760
    %447 = vmatmul.mubr.f32.gmra.mxu0 %v446
    %v448 = vpop.f32.mrf.mxu0
    %v449 = vadd.f32 %v327, %v448
    %v450 = vpop.f32.mrf.mxu0
    %v451 = vadd.f32 %v327, %v450
    %452 = vmatprep.mubr.f32.mxu0 0.0
    %v453 = vand.u32 %v345, 4294901760
    %v454 = vsub.f32 %v345, %v453
    %v455 = vand.u32 %v454, 4294901760
    %v456 = vsub.f32 %v454, %v455
    %v457 = vand.u32 %v456, 4294901760
    %458 = vmatmul.mubr.f32.gmra.mxu0 %v457
    %v459 = vpop.f32.mrf.mxu0
    %v460 = vadd.f32 %v332, %v459
    %v461 = vpop.f32.mrf.mxu0
    %v462 = vadd.f32 %v332, %v461
    %463 = vdwg.mxu0
    %464 = vmatprep.subr.mxu0 0.0
    %465 = vmatpush1.msra.mxu0 0.0
    %466 = vmatprep.subr.mxu0 0.0
    %467 = vmatpush1.msra.mxu0 0.0
    %468 = vmatprep.subr.mxu0 0.0
    %469 = vmatpush1.msra.mxu0 0.0
    %470 = vmatprep.subr.mxu0 0.0
    %471 = vmatpush1.msra.mxu0 0.0
    %472 = vmatprep.subr.mxu0 0.0
    %473 = vmatpush1.msra.mxu0 0.0
    %474 = vmatprep.subr.mxu0 0.0
    %475 = vmatpush1.msra.mxu0 0.0
    %476 = vmatprep.subr.mxu0 0.0
    %477 = vmatpush1.msra.mxu0 0.0
    %478 = vmatprep.subr.mxu0 0.0
    %479 = vmatpush1.msra.mxu0 0.0
    %480 = vmatprep.subr.mxu0 0.0
    %481 = vmatpush1.msra.mxu0 0.0
    %482 = vmatprep.subr.mxu0 0.0
    %483 = vmatpush1.msra.mxu0 0.0
    %484 = vmatprep.subr.mxu0 0.0
    %485 = vmatpush1.msra.mxu0 0.0
    %486 = vmatprep.subr.mxu0 0.0
    %487 = vmatpush1.msra.mxu0 0.0
    %v488 = vand.u32 %v299, 4294901760
    %v489 = vsub.f32 %v299, %v488
    %v490 = vand.u32 %v489, 4294901760
    %v491 = vsub.f32 %v489, %v490
    %v492 = vand.u32 %v491, 4294901760
    %493 = vmatprep.subr.mxu0 %v492
    %v494 = vand.u32 %v298, 4294901760
    %v495 = vsub.f32 %v298, %v494
    %v496 = vand.u32 %v495, 4294901760
    %v497 = vsub.f32 %v495, %v496
    %v498 = vand.u32 %v497, 4294901760
    %499 = vmatpush1.msra.mxu0 %v498
    %v500 = vand.u32 %v291, 4294901760
    %v501 = vsub.f32 %v291, %v500
    %v502 = vand.u32 %v501, 4294901760
    %v503 = vsub.f32 %v501, %v502
    %v504 = vand.u32 %v503, 4294901760
    %505 = vmatprep.subr.mxu0 %v504
    %v506 = vand.u32 %v290, 4294901760
    %v507 = vsub.f32 %v290, %v506
    %v508 = vand.u32 %v507, 4294901760
    %v509 = vsub.f32 %v507, %v508
    %v510 = vand.u32 %v509, 4294901760
    %511 = vmatpush1.msra.mxu0 %v510
    %v512 = vand.u32 %v283, 4294901760
    %v513 = vsub.f32 %v283, %v512
    %v514 = vand.u32 %v513, 4294901760
    %v515 = vsub.f32 %v513, %v514
    %v516 = vand.u32 %v515, 4294901760
    %517 = vmatprep.subr.mxu0 %v516
    %v518 = vand.u32 %v282, 4294901760
    %v519 = vsub.f32 %v282, %v518
    %v520 = vand.u32 %v519, 4294901760
    %v521 = vsub.f32 %v519, %v520
    %v522 = vand.u32 %v521, 4294901760
    %523 = vmatpush1.msra.mxu0 %v522
    %v524 = vand.u32 %v275, 4294901760
    %v525 = vsub.f32 %v275, %v524
    %v526 = vand.u32 %v525, 4294901760
    %v527 = vsub.f32 %v525, %v526
    %v528 = vand.u32 %v527, 4294901760
    %529 = vmatprep.subr.mxu0 %v528
    %v530 = vand.u32 %v274, 4294901760
    %v531 = vsub.f32 %v274, %v530
    %v532 = vand.u32 %v531, 4294901760
    %v533 = vsub.f32 %v531, %v532
    %v534 = vand.u32 %v533, 4294901760
    %535 = vmatpush1.msra.mxu0 %v534
    %536 = vmatprep.subr.mxu0 0.0
    %537 = vmatpush2.msra.mxu0 0.0
    %538 = vmatprep.subr.mxu0 0.0
    %539 = vmatpush2.msra.mxu0 0.0
    %540 = vmatprep.subr.mxu0 0.0
    %541 = vmatpush2.msra.mxu0 0.0
    %542 = vmatprep.subr.mxu0 0.0
    %543 = vmatpush2.msra.mxu0 0.0
    %544 = vmatprep.subr.mxu0 0.0
    %545 = vmatpush2.msra.mxu0 0.0
    %546 = vmatprep.subr.mxu0 0.0
    %547 = vmatpush2.msra.mxu0 0.0
    %548 = vmatprep.subr.mxu0 0.0
    %549 = vmatpush2.msra.mxu0 0.0
    %550 = vmatprep.subr.mxu0 0.0
    %551 = vmatpush2.msra.mxu0 0.0
    %552 = vmatprep.subr.mxu0 0.0
    %553 = vmatpush2.msra.mxu0 0.0
    %554 = vmatprep.subr.mxu0 0.0
    %555 = vmatpush2.msra.mxu0 0.0
    %556 = vmatprep.subr.mxu0 0.0
    %557 = vmatpush2.msra.mxu0 0.0
    %558 = vmatprep.subr.mxu0 0.0
    %559 = vmatpush2.msra.mxu0 0.0
    %560 = vmatprep.subr.mxu0 0.0
    %561 = vmatpush2.msra.mxu0 0.0
    %562 = vmatprep.subr.mxu0 0.0
    %563 = vmatpush2.msra.mxu0 0.0
    %564 = vmatprep.subr.mxu0 0.0
    %565 = vmatpush2.msra.mxu0 0.0
    %566 = vmatprep.subr.mxu0 0.0
    %567 = vmatpush2.msra.mxu0 0.0
    %568 = vmatprep.mubr.f32.mxu0 0.0
    %v569 = vand.u32 %v336, 4294901760
    %570 = vmatmul.mubr.f32.gmra.mxu0 %v569
    %v571 = vpop.f32.mrf.mxu0
    %v572 = vadd.f32 %v427, %v571
    %v573 = vpop.f32.mrf.mxu0
    %v574 = vadd.f32 %v429, %v573
    %575 = vmatprep.mubr.f32.mxu0 0.0
    %v576 = vand.u32 %v339, 4294901760
    %577 = vmatmul.mubr.f32.gmra.mxu0 %v576
    %v578 = vpop.f32.mrf.mxu0
    %v579 = vadd.f32 %v438, %v578
    %v580 = vpop.f32.mrf.mxu0
    %v581 = vadd.f32 %v440, %v580
    %582 = vmatprep.mubr.f32.mxu0 0.0
    %v583 = vand.u32 %v342, 4294901760
    %584 = vmatmul.mubr.f32.gmra.mxu0 %v583
    %v585 = vpop.f32.mrf.mxu0
    %v586 = vadd.f32 %v449, %v585
    %v587 = vpop.f32.mrf.mxu0
    %v588 = vadd.f32 %v451, %v587
    %589 = vmatprep.mubr.f32.mxu0 0.0
    %v590 = vand.u32 %v345, 4294901760
    %591 = vmatmul.mubr.f32.gmra.mxu0 %v590
    %v592 = vpop.f32.mrf.mxu0
    %v593 = vadd.f32 %v460, %v592
    %v594 = vpop.f32.mrf.mxu0
    %v595 = vadd.f32 %v462, %v594
    %596 = vdwg.mxu0
    %597 = vmatprep.subr.mxu0 0.0
    %598 = vmatpush1.msra.mxu0 0.0
    %599 = vmatprep.subr.mxu0 0.0
    %600 = vmatpush1.msra.mxu0 0.0
    %601 = vmatprep.subr.mxu0 0.0
    %602 = vmatpush1.msra.mxu0 0.0
    %603 = vmatprep.subr.mxu0 0.0
    %604 = vmatpush1.msra.mxu0 0.0
    %605 = vmatprep.subr.mxu0 0.0
    %606 = vmatpush1.msra.mxu0 0.0
    %607 = vmatprep.subr.mxu0 0.0
    %608 = vmatpush1.msra.mxu0 0.0
    %609 = vmatprep.subr.mxu0 0.0
    %610 = vmatpush1.msra.mxu0 0.0
    %611 = vmatprep.subr.mxu0 0.0
    %612 = vmatpush1.msra.mxu0 0.0
    %613 = vmatprep.subr.mxu0 0.0
    %614 = vmatpush1.msra.mxu0 0.0
    %615 = vmatprep.subr.mxu0 0.0
    %616 = vmatpush1.msra.mxu0 0.0
    %617 = vmatprep.subr.mxu0 0.0
    %618 = vmatpush1.msra.mxu0 0.0
    %619 = vmatprep.subr.mxu0 0.0
    %620 = vmatpush1.msra.mxu0 0.0
    %v621 = vand.u32 %v299, 4294901760
    %v622 = vsub.f32 %v299, %v621
    %623 = vmatprep.subr.mxu0 %v622
    %v624 = vand.u32 %v298, 4294901760
    %v625 = vsub.f32 %v298, %v624
    %626 = vmatpush1.msra.mxu0 %v625
    %v627 = vand.u32 %v291, 4294901760
    %v628 = vsub.f32 %v291, %v627
    %629 = vmatprep.subr.mxu0 %v628
    %v630 = vand.u32 %v290, 4294901760
    %v631 = vsub.f32 %v290, %v630
    %632 = vmatpush1.msra.mxu0 %v631
    %v633 = vand.u32 %v283, 4294901760
    %v634 = vsub.f32 %v283, %v633
    %635 = vmatprep.subr.mxu0 %v634
    %v636 = vand.u32 %v282, 4294901760
    %v637 = vsub.f32 %v282, %v636
    %638 = vmatpush1.msra.mxu0 %v637
    %v639 = vand.u32 %v275, 4294901760
    %v640 = vsub.f32 %v275, %v639
    %641 = vmatprep.subr.mxu0 %v640
    %v642 = vand.u32 %v274, 4294901760
    %v643 = vsub.f32 %v274, %v642
    %644 = vmatpush1.msra.mxu0 %v643
    %645 = vmatprep.subr.mxu0 0.0
    %646 = vmatpush2.msra.mxu0 0.0
    %647 = vmatprep.subr.mxu0 0.0
    %648 = vmatpush2.msra.mxu0 0.0
    %649 = vmatprep.subr.mxu0 0.0
    %650 = vmatpush2.msra.mxu0 0.0
    %651 = vmatprep.subr.mxu0 0.0
    %652 = vmatpush2.msra.mxu0 0.0
    %653 = vmatprep.subr.mxu0 0.0
    %654 = vmatpush2.msra.mxu0 0.0
    %655 = vmatprep.subr.mxu0 0.0
    %656 = vmatpush2.msra.mxu0 0.0
    %657 = vmatprep.subr.mxu0 0.0
    %658 = vmatpush2.msra.mxu0 0.0
    %659 = vmatprep.subr.mxu0 0.0
    %660 = vmatpush2.msra.mxu0 0.0
    %661 = vmatprep.subr.mxu0 0.0
    %662 = vmatpush2.msra.mxu0 0.0
    %663 = vmatprep.subr.mxu0 0.0
    %664 = vmatpush2.msra.mxu0 0.0
    %665 = vmatprep.subr.mxu0 0.0
    %666 = vmatpush2.msra.mxu0 0.0
    %667 = vmatprep.subr.mxu0 0.0
    %668 = vmatpush2.msra.mxu0 0.0
    %669 = vmatprep.subr.mxu0 0.0
    %670 = vmatpush2.msra.mxu0 0.0
    %671 = vmatprep.subr.mxu0 0.0
    %672 = vmatpush2.msra.mxu0 0.0
    %673 = vmatprep.subr.mxu0 0.0
    %674 = vmatpush2.msra.mxu0 0.0
    %675 = vmatprep.subr.mxu0 0.0
    %676 = vmatpush2.msra.mxu0 0.0
    %677 = vmatprep.mubr.f32.mxu0 0.0
    %v678 = vand.u32 %v336, 4294901760
    %v679 = vsub.f32 %v336, %v678
    %680 = vmatmul.mubr.f32.gmra.mxu0 %v679
    %v681 = vpop.f32.mrf.mxu0
    %v682 = vadd.f32 %v572, %v681
    %v683 = vpop.f32.mrf.mxu0
    %v684 = vadd.f32 %v574, %v683
    %685 = vmatprep.mubr.f32.mxu0 0.0
    %v686 = vand.u32 %v339, 4294901760
    %v687 = vsub.f32 %v339, %v686
    %688 = vmatmul.mubr.f32.gmra.mxu0 %v687
    %v689 = vpop.f32.mrf.mxu0
    %v690 = vadd.f32 %v579, %v689
    %v691 = vpop.f32.mrf.mxu0
    %v692 = vadd.f32 %v581, %v691
    %693 = vmatprep.mubr.f32.mxu0 0.0
    %v694 = vand.u32 %v342, 4294901760
    %v695 = vsub.f32 %v342, %v694
    %696 = vmatmul.mubr.f32.gmra.mxu0 %v695
    %v697 = vpop.f32.mrf.mxu0
    %v698 = vadd.f32 %v586, %v697
    %v699 = vpop.f32.mrf.mxu0
    %v700 = vadd.f32 %v588, %v699
    %701 = vmatprep.mubr.f32.mxu0 0.0
    %v702 = vand.u32 %v345, 4294901760
    %v703 = vsub.f32 %v345, %v702
    %704 = vmatmul.mubr.f32.gmra.mxu0 %v703
    %v705 = vpop.f32.mrf.mxu0
    %v706 = vadd.f32 %v593, %v705
    %v707 = vpop.f32.mrf.mxu0
    %v708 = vadd.f32 %v595, %v707
    %709 = vdwg.mxu0
    %710 = vmatprep.subr.mxu0 0.0
    %711 = vmatpush1.msra.mxu0 0.0
    %712 = vmatprep.subr.mxu0 0.0
    %713 = vmatpush1.msra.mxu0 0.0
    %714 = vmatprep.subr.mxu0 0.0
    %715 = vmatpush1.msra.mxu0 0.0
    %716 = vmatprep.subr.mxu0 0.0
    %717 = vmatpush1.msra.mxu0 0.0
    %718 = vmatprep.subr.mxu0 0.0
    %719 = vmatpush1.msra.mxu0 0.0
    %720 = vmatprep.subr.mxu0 0.0
    %721 = vmatpush1.msra.mxu0 0.0
    %722 = vmatprep.subr.mxu0 0.0
    %723 = vmatpush1.msra.mxu0 0.0
    %724 = vmatprep.subr.mxu0 0.0
    %725 = vmatpush1.msra.mxu0 0.0
    %726 = vmatprep.subr.mxu0 0.0
    %727 = vmatpush1.msra.mxu0 0.0
    %728 = vmatprep.subr.mxu0 0.0
    %729 = vmatpush1.msra.mxu0 0.0
    %730 = vmatprep.subr.mxu0 0.0
    %731 = vmatpush1.msra.mxu0 0.0
    %732 = vmatprep.subr.mxu0 0.0
    %733 = vmatpush1.msra.mxu0 0.0
    %v734 = vand.u32 %v299, 4294901760
    %735 = vmatprep.subr.mxu0 %v734
    %v736 = vand.u32 %v298, 4294901760
    %737 = vmatpush1.msra.mxu0 %v736
    %v738 = vand.u32 %v291, 4294901760
    %739 = vmatprep.subr.mxu0 %v738
    %v740 = vand.u32 %v290, 4294901760
    %741 = vmatpush1.msra.mxu0 %v740
    %v742 = vand.u32 %v283, 4294901760
    %743 = vmatprep.subr.mxu0 %v742
    %v744 = vand.u32 %v282, 4294901760
    %745 = vmatpush1.msra.mxu0 %v744
    %v746 = vand.u32 %v275, 4294901760
    %747 = vmatprep.subr.mxu0 %v746
    %v748 = vand.u32 %v274, 4294901760
    %749 = vmatpush1.msra.mxu0 %v748
    %750 = vmatprep.subr.mxu0 0.0
    %751 = vmatpush2.msra.mxu0 0.0
    %752 = vmatprep.subr.mxu0 0.0
    %753 = vmatpush2.msra.mxu0 0.0
    %754 = vmatprep.subr.mxu0 0.0
    %755 = vmatpush2.msra.mxu0 0.0
    %756 = vmatprep.subr.mxu0 0.0
    %757 = vmatpush2.msra.mxu0 0.0
    %758 = vmatprep.subr.mxu0 0.0
    %759 = vmatpush2.msra.mxu0 0.0
    %760 = vmatprep.subr.mxu0 0.0
    %761 = vmatpush2.msra.mxu0 0.0
    %762 = vmatprep.subr.mxu0 0.0
    %763 = vmatpush2.msra.mxu0 0.0
    %764 = vmatprep.subr.mxu0 0.0
    %765 = vmatpush2.msra.mxu0 0.0
    %766 = vmatprep.subr.mxu0 0.0
    %767 = vmatpush2.msra.mxu0 0.0
    %768 = vmatprep.subr.mxu0 0.0
    %769 = vmatpush2.msra.mxu0 0.0
    %770 = vmatprep.subr.mxu0 0.0
    %771 = vmatpush2.msra.mxu0 0.0
    %772 = vmatprep.subr.mxu0 0.0
    %773 = vmatpush2.msra.mxu0 0.0
    %774 = vmatprep.subr.mxu0 0.0
    %775 = vmatpush2.msra.mxu0 0.0
    %776 = vmatprep.subr.mxu0 0.0
    %777 = vmatpush2.msra.mxu0 0.0
    %778 = vmatprep.subr.mxu0 0.0
    %779 = vmatpush2.msra.mxu0 0.0
    %780 = vmatprep.subr.mxu0 0.0
    %781 = vmatpush2.msra.mxu0 0.0
    %782 = vmatprep.mubr.f32.mxu0 0.0
    %v783 = vand.u32 %v336, 4294901760
    %v784 = vsub.f32 %v336, %v783
    %v785 = vand.u32 %v784, 4294901760
    %786 = vmatmul.mubr.f32.gmra.mxu0 %v785
    %v787 = vpop.f32.mrf.mxu0
    %v788 = vadd.f32 %v682, %v787
    %v789 = vpop.f32.mrf.mxu0
    %v790 = vadd.f32 %v684, %v789
    %791 = vmatprep.mubr.f32.mxu0 0.0
    %v792 = vand.u32 %v339, 4294901760
    %v793 = vsub.f32 %v339, %v792
    %v794 = vand.u32 %v793, 4294901760
    %795 = vmatmul.mubr.f32.gmra.mxu0 %v794
    %v796 = vpop.f32.mrf.mxu0
    %v797 = vadd.f32 %v690, %v796
    %v798 = vpop.f32.mrf.mxu0
    %v799 = vadd.f32 %v692, %v798
    %800 = vmatprep.mubr.f32.mxu0 0.0
    %v801 = vand.u32 %v342, 4294901760
    %v802 = vsub.f32 %v342, %v801
    %v803 = vand.u32 %v802, 4294901760
    %804 = vmatmul.mubr.f32.gmra.mxu0 %v803
    %v805 = vpop.f32.mrf.mxu0
    %v806 = vadd.f32 %v698, %v805
    %v807 = vpop.f32.mrf.mxu0
    %v808 = vadd.f32 %v700, %v807
    %809 = vmatprep.mubr.f32.mxu0 0.0
    %v810 = vand.u32 %v345, 4294901760
    %v811 = vsub.f32 %v345, %v810
    %v812 = vand.u32 %v811, 4294901760
    %813 = vmatmul.mubr.f32.gmra.mxu0 %v812
    %v814 = vpop.f32.mrf.mxu0
    %v815 = vadd.f32 %v706, %v814
    %v816 = vpop.f32.mrf.mxu0
    %v817 = vadd.f32 %v708, %v816
    %818 = vdwg.mxu0
    %819 = vmatprep.subr.mxu0 0.0
    %820 = vmatpush1.msra.mxu0 0.0
    %821 = vmatprep.subr.mxu0 0.0
    %822 = vmatpush1.msra.mxu0 0.0
    %823 = vmatprep.subr.mxu0 0.0
    %824 = vmatpush1.msra.mxu0 0.0
    %825 = vmatprep.subr.mxu0 0.0
    %826 = vmatpush1.msra.mxu0 0.0
    %827 = vmatprep.subr.mxu0 0.0
    %828 = vmatpush1.msra.mxu0 0.0
    %829 = vmatprep.subr.mxu0 0.0
    %830 = vmatpush1.msra.mxu0 0.0
    %831 = vmatprep.subr.mxu0 0.0
    %832 = vmatpush1.msra.mxu0 0.0
    %833 = vmatprep.subr.mxu0 0.0
    %834 = vmatpush1.msra.mxu0 0.0
    %835 = vmatprep.subr.mxu0 0.0
    %836 = vmatpush1.msra.mxu0 0.0
    %837 = vmatprep.subr.mxu0 0.0
    %838 = vmatpush1.msra.mxu0 0.0
    %839 = vmatprep.subr.mxu0 0.0
    %840 = vmatpush1.msra.mxu0 0.0
    %841 = vmatprep.subr.mxu0 0.0
    %842 = vmatpush1.msra.mxu0 0.0
    %v843 = vand.u32 %v299, 4294901760
    %v844 = vsub.f32 %v299, %v843
    %v845 = vand.u32 %v844, 4294901760
    %846 = vmatprep.subr.mxu0 %v845
    %v847 = vand.u32 %v298, 4294901760
    %v848 = vsub.f32 %v298, %v847
    %v849 = vand.u32 %v848, 4294901760
    %850 = vmatpush1.msra.mxu0 %v849
    %v851 = vand.u32 %v291, 4294901760
    %v852 = vsub.f32 %v291, %v851
    %v853 = vand.u32 %v852, 4294901760
    %854 = vmatprep.subr.mxu0 %v853
    %v855 = vand.u32 %v290, 4294901760
    %v856 = vsub.f32 %v290, %v855
    %v857 = vand.u32 %v856, 4294901760
    %858 = vmatpush1.msra.mxu0 %v857
    %v859 = vand.u32 %v283, 4294901760
    %v860 = vsub.f32 %v283, %v859
    %v861 = vand.u32 %v860, 4294901760
    %862 = vmatprep.subr.mxu0 %v861
    %v863 = vand.u32 %v282, 4294901760
    %v864 = vsub.f32 %v282, %v863
    %v865 = vand.u32 %v864, 4294901760
    %866 = vmatpush1.msra.mxu0 %v865
    %v867 = vand.u32 %v275, 4294901760
    %v868 = vsub.f32 %v275, %v867
    %v869 = vand.u32 %v868, 4294901760
    %870 = vmatprep.subr.mxu0 %v869
    %v871 = vand.u32 %v274, 4294901760
    %v872 = vsub.f32 %v274, %v871
    %v873 = vand.u32 %v872, 4294901760
    %874 = vmatpush1.msra.mxu0 %v873
    %875 = vmatprep.subr.mxu0 0.0
    %876 = vmatpush2.msra.mxu0 0.0
    %877 = vmatprep.subr.mxu0 0.0
    %878 = vmatpush2.msra.mxu0 0.0
    %879 = vmatprep.subr.mxu0 0.0
    %880 = vmatpush2.msra.mxu0 0.0
    %881 = vmatprep.subr.mxu0 0.0
    %882 = vmatpush2.msra.mxu0 0.0
    %883 = vmatprep.subr.mxu0 0.0
    %884 = vmatpush2.msra.mxu0 0.0
    %885 = vmatprep.subr.mxu0 0.0
    %886 = vmatpush2.msra.mxu0 0.0
    %887 = vmatprep.subr.mxu0 0.0
    %888 = vmatpush2.msra.mxu0 0.0
    %889 = vmatprep.subr.mxu0 0.0
    %890 = vmatpush2.msra.mxu0 0.0
    %891 = vmatprep.subr.mxu0 0.0
    %892 = vmatpush2.msra.mxu0 0.0
    %893 = vmatprep.subr.mxu0 0.0
    %894 = vmatpush2.msra.mxu0 0.0
    %895 = vmatprep.subr.mxu0 0.0
    %896 = vmatpush2.msra.mxu0 0.0
    %897 = vmatprep.subr.mxu0 0.0
    %898 = vmatpush2.msra.mxu0 0.0
    %899 = vmatprep.subr.mxu0 0.0
    %900 = vmatpush2.msra.mxu0 0.0
    %901 = vmatprep.subr.mxu0 0.0
    %902 = vmatpush2.msra.mxu0 0.0
    %903 = vmatprep.subr.mxu0 0.0
    %904 = vmatpush2.msra.mxu0 0.0
    %905 = vmatprep.subr.mxu0 0.0
    %906 = vmatpush2.msra.mxu0 0.0
    %907 = vmatprep.mubr.f32.mxu0 0.0
    %v908 = vand.u32 %v336, 4294901760
    %909 = vmatmul.mubr.f32.gmra.mxu0 %v908
    %v910 = vpop.f32.mrf.mxu0
    %v911 = vadd.f32 %v788, %v910
    %v912 = vpop.f32.mrf.mxu0
    %v913 = vadd.f32 %v790, %v912
    %914 = vmatprep.mubr.f32.mxu0 0.0
    %v915 = vand.u32 %v339, 4294901760
    %916 = vmatmul.mubr.f32.gmra.mxu0 %v915
    %v917 = vpop.f32.mrf.mxu0
    %v918 = vadd.f32 %v797, %v917
    %v919 = vpop.f32.mrf.mxu0
    %v920 = vadd.f32 %v799, %v919
    %921 = vmatprep.mubr.f32.mxu0 0.0
    %v922 = vand.u32 %v342, 4294901760
    %923 = vmatmul.mubr.f32.gmra.mxu0 %v922
    %v924 = vpop.f32.mrf.mxu0
    %v925 = vadd.f32 %v806, %v924
    %v926 = vpop.f32.mrf.mxu0
    %v927 = vadd.f32 %v808, %v926
    %928 = vmatprep.mubr.f32.mxu0 0.0
    %v929 = vand.u32 %v345, 4294901760
    %930 = vmatmul.mubr.f32.gmra.mxu0 %v929
    %v931 = vpop.f32.mrf.mxu0
    %v932 = vadd.f32 %v815, %v931
    %v933 = vpop.f32.mrf.mxu0
    %v934 = vadd.f32 %v817, %v933
    %935 = vdwg.mxu0
    %936 = vmatprep.subr.mxu0 0.0
    %937 = vmatpush1.msra.mxu0 0.0
    %938 = vmatprep.subr.mxu0 0.0
    %939 = vmatpush1.msra.mxu0 0.0
    %940 = vmatprep.subr.mxu0 0.0
    %941 = vmatpush1.msra.mxu0 0.0
    %942 = vmatprep.subr.mxu0 0.0
    %943 = vmatpush1.msra.mxu0 0.0
    %944 = vmatprep.subr.mxu0 0.0
    %945 = vmatpush1.msra.mxu0 0.0
    %946 = vmatprep.subr.mxu0 0.0
    %947 = vmatpush1.msra.mxu0 0.0
    %948 = vmatprep.subr.mxu0 0.0
    %949 = vmatpush1.msra.mxu0 0.0
    %950 = vmatprep.subr.mxu0 0.0
    %951 = vmatpush1.msra.mxu0 0.0
    %952 = vmatprep.subr.mxu0 0.0
    %953 = vmatpush1.msra.mxu0 0.0
    %954 = vmatprep.subr.mxu0 0.0
    %955 = vmatpush1.msra.mxu0 0.0
    %956 = vmatprep.subr.mxu0 0.0
    %957 = vmatpush1.msra.mxu0 0.0
    %958 = vmatprep.subr.mxu0 0.0
    %959 = vmatpush1.msra.mxu0 0.0
    %v960 = vand.u32 %v299, 4294901760
    %961 = vmatprep.subr.mxu0 %v960
    %v962 = vand.u32 %v298, 4294901760
    %963 = vmatpush1.msra.mxu0 %v962
    %v964 = vand.u32 %v291, 4294901760
    %965 = vmatprep.subr.mxu0 %v964
    %v966 = vand.u32 %v290, 4294901760
    %967 = vmatpush1.msra.mxu0 %v966
    %v968 = vand.u32 %v283, 4294901760
    %969 = vmatprep.subr.mxu0 %v968
    %v970 = vand.u32 %v282, 4294901760
    %971 = vmatpush1.msra.mxu0 %v970
    %v972 = vand.u32 %v275, 4294901760
    %973 = vmatprep.subr.mxu0 %v972
    %v974 = vand.u32 %v274, 4294901760
    %975 = vmatpush1.msra.mxu0 %v974
    %976 = vmatprep.subr.mxu0 0.0
    %977 = vmatpush2.msra.mxu0 0.0
    %978 = vmatprep.subr.mxu0 0.0
    %979 = vmatpush2.msra.mxu0 0.0
    %980 = vmatprep.subr.mxu0 0.0
    %981 = vmatpush2.msra.mxu0 0.0
    %982 = vmatprep.subr.mxu0 0.0
    %983 = vmatpush2.msra.mxu0 0.0
    %984 = vmatprep.subr.mxu0 0.0
    %985 = vmatpush2.msra.mxu0 0.0
    %986 = vmatprep.subr.mxu0 0.0
    %987 = vmatpush2.msra.mxu0 0.0
    %988 = vmatprep.subr.mxu0 0.0
    %989 = vmatpush2.msra.mxu0 0.0
    %990 = vmatprep.subr.mxu0 0.0
    %991 = vmatpush2.msra.mxu0 0.0
    %992 = vmatprep.subr.mxu0 0.0
    %993 = vmatpush2.msra.mxu0 0.0
    %994 = vmatprep.subr.mxu0 0.0
    %995 = vmatpush2.msra.mxu0 0.0
    %996 = vmatprep.subr.mxu0 0.0
    %997 = vmatpush2.msra.mxu0 0.0
    %998 = vmatprep.subr.mxu0 0.0
    %999 = vmatpush2.msra.mxu0 0.0
    %1000 = vmatprep.subr.mxu0 0.0
    %1001 = vmatpush2.msra.mxu0 0.0
    %1002 = vmatprep.subr.mxu0 0.0
    %1003 = vmatpush2.msra.mxu0 0.0
    %1004 = vmatprep.subr.mxu0 0.0
    %1005 = vmatpush2.msra.mxu0 0.0
    %1006 = vmatprep.subr.mxu0 0.0
    %1007 = vmatpush2.msra.mxu0 0.0
    %1008 = vmatprep.mubr.f32.mxu0 0.0
    %v1009 = vand.u32 %v336, 4294901760
    %1010 = vmatmul.mubr.f32.gmra.mxu0 %v1009
    %v1011 = vpop.f32.mrf.mxu0
    %v1012 = vadd.f32 %v911, %v1011
    %v1013 = vpop.f32.mrf.mxu0
    %v1014 = vadd.f32 %v913, %v1013
    %1015 = vmatprep.mubr.f32.mxu0 0.0
    %v1016 = vand.u32 %v339, 4294901760
    %1017 = vmatmul.mubr.f32.gmra.mxu0 %v1016
    %v1018 = vpop.f32.mrf.mxu0
    %v1019 = vadd.f32 %v918, %v1018
    %v1020 = vpop.f32.mrf.mxu0
    %v1021 = vadd.f32 %v920, %v1020
    %1022 = vmatprep.mubr.f32.mxu0 0.0
    %v1023 = vand.u32 %v342, 4294901760
    %1024 = vmatmul.mubr.f32.gmra.mxu0 %v1023
    %v1025 = vpop.f32.mrf.mxu0
    %v1026 = vadd.f32 %v925, %v1025
    %v1027 = vpop.f32.mrf.mxu0
    %v1028 = vadd.f32 %v927, %v1027
    %1029 = vmatprep.mubr.f32.mxu0 0.0
    %v1030 = vand.u32 %v345, 4294901760
    %1031 = vmatmul.mubr.f32.gmra.mxu0 %v1030
    %v1032 = vpop.f32.mrf.mxu0
    %v1033 = vadd.f32 %v932, %v1032
    %v1034 = vpop.f32.mrf.mxu0
    %v1035 = vadd.f32 %v934, %v1034
    %1036 = vdwg.mxu0
    %1037 = vmatprep.subr.mxu0 0.0
    %1038 = vmatpush1.msra.mxu0 0.0
    %1039 = vmatprep.subr.mxu0 0.0
    %1040 = vmatpush1.msra.mxu0 0.0
    %1041 = vmatprep.subr.mxu0 0.0
    %1042 = vmatpush1.msra.mxu0 0.0
    %1043 = vmatprep.subr.mxu0 0.0
    %1044 = vmatpush1.msra.mxu0 0.0
    %1045 = vmatprep.subr.mxu0 0.0
    %1046 = vmatpush1.msra.mxu0 0.0
    %1047 = vmatprep.subr.mxu0 0.0
    %1048 = vmatpush1.msra.mxu0 0.0
    %1049 = vmatprep.subr.mxu0 0.0
    %1050 = vmatpush1.msra.mxu0 0.0
    %1051 = vmatprep.subr.mxu0 0.0
    %1052 = vmatpush1.msra.mxu0 0.0
    %1053 = vmatprep.subr.mxu0 0.0
    %1054 = vmatpush1.msra.mxu0 0.0
    %1055 = vmatprep.subr.mxu0 0.0
    %1056 = vmatpush1.msra.mxu0 0.0
    %1057 = vmatprep.subr.mxu0 0.0
    %1058 = vmatpush1.msra.mxu0 0.0
    %1059 = vmatprep.subr.mxu0 0.0
    %1060 = vmatpush1.msra.mxu0 0.0
    %v1061 = vand.u32 %v301, 4294901760
    %1062 = vmatprep.subr.mxu0 %v1061
    %v1063 = vand.u32 %v300, 4294901760
    %1064 = vmatpush1.msra.mxu0 %v1063
    %v1065 = vand.u32 %v293, 4294901760
    %1066 = vmatprep.subr.mxu0 %v1065
    %v1067 = vand.u32 %v292, 4294901760
    %1068 = vmatpush1.msra.mxu0 %v1067
    %v1069 = vand.u32 %v285, 4294901760
    %1070 = vmatprep.subr.mxu0 %v1069
    %v1071 = vand.u32 %v284, 4294901760
    %1072 = vmatpush1.msra.mxu0 %v1071
    %v1073 = vand.u32 %v277, 4294901760
    %1074 = vmatprep.subr.mxu0 %v1073
    %v1075 = vand.u32 %v276, 4294901760
    %1076 = vmatpush1.msra.mxu0 %v1075
    %1077 = vmatprep.subr.mxu0 0.0
    %1078 = vmatpush2.msra.mxu0 0.0
    %1079 = vmatprep.subr.mxu0 0.0
    %1080 = vmatpush2.msra.mxu0 0.0
    %1081 = vmatprep.subr.mxu0 0.0
    %1082 = vmatpush2.msra.mxu0 0.0
    %1083 = vmatprep.subr.mxu0 0.0
    %1084 = vmatpush2.msra.mxu0 0.0
    %1085 = vmatprep.subr.mxu0 0.0
    %1086 = vmatpush2.msra.mxu0 0.0
    %1087 = vmatprep.subr.mxu0 0.0
    %1088 = vmatpush2.msra.mxu0 0.0
    %1089 = vmatprep.subr.mxu0 0.0
    %1090 = vmatpush2.msra.mxu0 0.0
    %1091 = vmatprep.subr.mxu0 0.0
    %1092 = vmatpush2.msra.mxu0 0.0
    %1093 = vmatprep.subr.mxu0 0.0
    %1094 = vmatpush2.msra.mxu0 0.0
    %1095 = vmatprep.subr.mxu0 0.0
    %1096 = vmatpush2.msra.mxu0 0.0
    %1097 = vmatprep.subr.mxu0 0.0
    %1098 = vmatpush2.msra.mxu0 0.0
    %1099 = vmatprep.subr.mxu0 0.0
    %1100 = vmatpush2.msra.mxu0 0.0
    %1101 = vmatprep.subr.mxu0 0.0
    %1102 = vmatpush2.msra.mxu0 0.0
    %1103 = vmatprep.subr.mxu0 0.0
    %1104 = vmatpush2.msra.mxu0 0.0
    %1105 = vmatprep.subr.mxu0 0.0
    %1106 = vmatpush2.msra.mxu0 0.0
    %1107 = vmatprep.subr.mxu0 0.0
    %1108 = vmatpush2.msra.mxu0 0.0
    %1109 = vmatprep.mubr.f32.mxu0 0.0
    %v1110 = vand.u32 %v336, 4294901760
    %v1111 = vsub.f32 %v336, %v1110
    %v1112 = vand.u32 %v1111, 4294901760
    %v1113 = vsub.f32 %v1111, %v1112
    %v1114 = vand.u32 %v1113, 4294901760
    %1115 = vmatmul.mubr.f32.gmra.mxu0 %v1114
    %v1116 = vpop.f32.mrf.mxu0
    %v1117 = vadd.f32 %v317, %v1116
    %v1118 = vpop.f32.mrf.mxu0
    %v1119 = vadd.f32 %v317, %v1118
    %1120 = vmatprep.mubr.f32.mxu0 0.0
    %v1121 = vand.u32 %v339, 4294901760
    %v1122 = vsub.f32 %v339, %v1121
    %v1123 = vand.u32 %v1122, 4294901760
    %v1124 = vsub.f32 %v1122, %v1123
    %v1125 = vand.u32 %v1124, 4294901760
    %1126 = vmatmul.mubr.f32.gmra.mxu0 %v1125
    %v1127 = vpop.f32.mrf.mxu0
    %v1128 = vadd.f32 %v322, %v1127
    %v1129 = vpop.f32.mrf.mxu0
    %v1130 = vadd.f32 %v322, %v1129
    %1131 = vmatprep.mubr.f32.mxu0 0.0
    %v1132 = vand.u32 %v342, 4294901760
    %v1133 = vsub.f32 %v342, %v1132
    %v1134 = vand.u32 %v1133, 4294901760
    %v1135 = vsub.f32 %v1133, %v1134
    %v1136 = vand.u32 %v1135, 4294901760
    %1137 = vmatmul.mubr.f32.gmra.mxu0 %v1136
    %v1138 = vpop.f32.mrf.mxu0
    %v1139 = vadd.f32 %v327, %v1138
    %v1140 = vpop.f32.mrf.mxu0
    %v1141 = vadd.f32 %v327, %v1140
    %1142 = vmatprep.mubr.f32.mxu0 0.0
    %v1143 = vand.u32 %v345, 4294901760
    %v1144 = vsub.f32 %v345, %v1143
    %v1145 = vand.u32 %v1144, 4294901760
    %v1146 = vsub.f32 %v1144, %v1145
    %v1147 = vand.u32 %v1146, 4294901760
    %1148 = vmatmul.mubr.f32.gmra.mxu0 %v1147
    %v1149 = vpop.f32.mrf.mxu0
    %v1150 = vadd.f32 %v332, %v1149
    %v1151 = vpop.f32.mrf.mxu0
    %v1152 = vadd.f32 %v332, %v1151
    %1153 = vdwg.mxu0
    %1154 = vmatprep.subr.mxu0 0.0
    %1155 = vmatpush1.msra.mxu0 0.0
    %1156 = vmatprep.subr.mxu0 0.0
    %1157 = vmatpush1.msra.mxu0 0.0
    %1158 = vmatprep.subr.mxu0 0.0
    %1159 = vmatpush1.msra.mxu0 0.0
    %1160 = vmatprep.subr.mxu0 0.0
    %1161 = vmatpush1.msra.mxu0 0.0
    %1162 = vmatprep.subr.mxu0 0.0
    %1163 = vmatpush1.msra.mxu0 0.0
    %1164 = vmatprep.subr.mxu0 0.0
    %1165 = vmatpush1.msra.mxu0 0.0
    %1166 = vmatprep.subr.mxu0 0.0
    %1167 = vmatpush1.msra.mxu0 0.0
    %1168 = vmatprep.subr.mxu0 0.0
    %1169 = vmatpush1.msra.mxu0 0.0
    %1170 = vmatprep.subr.mxu0 0.0
    %1171 = vmatpush1.msra.mxu0 0.0
    %1172 = vmatprep.subr.mxu0 0.0
    %1173 = vmatpush1.msra.mxu0 0.0
    %1174 = vmatprep.subr.mxu0 0.0
    %1175 = vmatpush1.msra.mxu0 0.0
    %1176 = vmatprep.subr.mxu0 0.0
    %1177 = vmatpush1.msra.mxu0 0.0
    %v1178 = vand.u32 %v301, 4294901760
    %v1179 = vsub.f32 %v301, %v1178
    %v1180 = vand.u32 %v1179, 4294901760
    %v1181 = vsub.f32 %v1179, %v1180
    %v1182 = vand.u32 %v1181, 4294901760
    %1183 = vmatprep.subr.mxu0 %v1182
    %v1184 = vand.u32 %v300, 4294901760
    %v1185 = vsub.f32 %v300, %v1184
    %v1186 = vand.u32 %v1185, 4294901760
    %v1187 = vsub.f32 %v1185, %v1186
    %v1188 = vand.u32 %v1187, 4294901760
    %1189 = vmatpush1.msra.mxu0 %v1188
    %v1190 = vand.u32 %v293, 4294901760
    %v1191 = vsub.f32 %v293, %v1190
    %v1192 = vand.u32 %v1191, 4294901760
    %v1193 = vsub.f32 %v1191, %v1192
    %v1194 = vand.u32 %v1193, 4294901760
    %1195 = vmatprep.subr.mxu0 %v1194
    %v1196 = vand.u32 %v292, 4294901760
    %v1197 = vsub.f32 %v292, %v1196
    %v1198 = vand.u32 %v1197, 4294901760
    %v1199 = vsub.f32 %v1197, %v1198
    %v1200 = vand.u32 %v1199, 4294901760
    %1201 = vmatpush1.msra.mxu0 %v1200
    %v1202 = vand.u32 %v285, 4294901760
    %v1203 = vsub.f32 %v285, %v1202
    %v1204 = vand.u32 %v1203, 4294901760
    %v1205 = vsub.f32 %v1203, %v1204
    %v1206 = vand.u32 %v1205, 4294901760
    %1207 = vmatprep.subr.mxu0 %v1206
    %v1208 = vand.u32 %v284, 4294901760
    %v1209 = vsub.f32 %v284, %v1208
    %v1210 = vand.u32 %v1209, 4294901760
    %v1211 = vsub.f32 %v1209, %v1210
    %v1212 = vand.u32 %v1211, 4294901760
    %1213 = vmatpush1.msra.mxu0 %v1212
    %v1214 = vand.u32 %v277, 4294901760
    %v1215 = vsub.f32 %v277, %v1214
    %v1216 = vand.u32 %v1215, 4294901760
    %v1217 = vsub.f32 %v1215, %v1216
    %v1218 = vand.u32 %v1217, 4294901760
    %1219 = vmatprep.subr.mxu0 %v1218
    %v1220 = vand.u32 %v276, 4294901760
    %v1221 = vsub.f32 %v276, %v1220
    %v1222 = vand.u32 %v1221, 4294901760
    %v1223 = vsub.f32 %v1221, %v1222
    %v1224 = vand.u32 %v1223, 4294901760
    %1225 = vmatpush1.msra.mxu0 %v1224
    %1226 = vmatprep.subr.mxu0 0.0
    %1227 = vmatpush2.msra.mxu0 0.0
    %1228 = vmatprep.subr.mxu0 0.0
    %1229 = vmatpush2.msra.mxu0 0.0
    %1230 = vmatprep.subr.mxu0 0.0
    %1231 = vmatpush2.msra.mxu0 0.0
    %1232 = vmatprep.subr.mxu0 0.0
    %1233 = vmatpush2.msra.mxu0 0.0
    %1234 = vmatprep.subr.mxu0 0.0
    %1235 = vmatpush2.msra.mxu0 0.0
    %1236 = vmatprep.subr.mxu0 0.0
    %1237 = vmatpush2.msra.mxu0 0.0
    %1238 = vmatprep.subr.mxu0 0.0
    %1239 = vmatpush2.msra.mxu0 0.0
    %1240 = vmatprep.subr.mxu0 0.0
    %1241 = vmatpush2.msra.mxu0 0.0
    %1242 = vmatprep.subr.mxu0 0.0
    %1243 = vmatpush2.msra.mxu0 0.0
    %1244 = vmatprep.subr.mxu0 0.0
    %1245 = vmatpush2.msra.mxu0 0.0
    %1246 = vmatprep.subr.mxu0 0.0
    %1247 = vmatpush2.msra.mxu0 0.0
    %1248 = vmatprep.subr.mxu0 0.0
    %1249 = vmatpush2.msra.mxu0 0.0
    %1250 = vmatprep.subr.mxu0 0.0
    %1251 = vmatpush2.msra.mxu0 0.0
    %1252 = vmatprep.subr.mxu0 0.0
    %1253 = vmatpush2.msra.mxu0 0.0
    %1254 = vmatprep.subr.mxu0 0.0
    %1255 = vmatpush2.msra.mxu0 0.0
    %1256 = vmatprep.subr.mxu0 0.0
    %1257 = vmatpush2.msra.mxu0 0.0
    %1258 = vmatprep.mubr.f32.mxu0 0.0
    %v1259 = vand.u32 %v336, 4294901760
    %1260 = vmatmul.mubr.f32.gmra.mxu0 %v1259
    %v1261 = vpop.f32.mrf.mxu0
    %v1262 = vadd.f32 %v1117, %v1261
    %v1263 = vpop.f32.mrf.mxu0
    %v1264 = vadd.f32 %v1119, %v1263
    %1265 = vmatprep.mubr.f32.mxu0 0.0
    %v1266 = vand.u32 %v339, 4294901760
    %1267 = vmatmul.mubr.f32.gmra.mxu0 %v1266
    %v1268 = vpop.f32.mrf.mxu0
    %v1269 = vadd.f32 %v1128, %v1268
    %v1270 = vpop.f32.mrf.mxu0
    %v1271 = vadd.f32 %v1130, %v1270
    %1272 = vmatprep.mubr.f32.mxu0 0.0
    %v1273 = vand.u32 %v342, 4294901760
    %1274 = vmatmul.mubr.f32.gmra.mxu0 %v1273
    %v1275 = vpop.f32.mrf.mxu0
    %v1276 = vadd.f32 %v1139, %v1275
    %v1277 = vpop.f32.mrf.mxu0
    %v1278 = vadd.f32 %v1141, %v1277
    %1279 = vmatprep.mubr.f32.mxu0 0.0
    %v1280 = vand.u32 %v345, 4294901760
    %1281 = vmatmul.mubr.f32.gmra.mxu0 %v1280
    %v1282 = vpop.f32.mrf.mxu0
    %v1283 = vadd.f32 %v1150, %v1282
    %v1284 = vpop.f32.mrf.mxu0
    %v1285 = vadd.f32 %v1152, %v1284
    %1286 = vdwg.mxu0
    %1287 = vmatprep.subr.mxu0 0.0
    %1288 = vmatpush1.msra.mxu0 0.0
    %1289 = vmatprep.subr.mxu0 0.0
    %1290 = vmatpush1.msra.mxu0 0.0
    %1291 = vmatprep.subr.mxu0 0.0
    %1292 = vmatpush1.msra.mxu0 0.0
    %1293 = vmatprep.subr.mxu0 0.0
    %1294 = vmatpush1.msra.mxu0 0.0
    %1295 = vmatprep.subr.mxu0 0.0
    %1296 = vmatpush1.msra.mxu0 0.0
    %1297 = vmatprep.subr.mxu0 0.0
    %1298 = vmatpush1.msra.mxu0 0.0
    %1299 = vmatprep.subr.mxu0 0.0
    %1300 = vmatpush1.msra.mxu0 0.0
    %1301 = vmatprep.subr.mxu0 0.0
    %1302 = vmatpush1.msra.mxu0 0.0
    %1303 = vmatprep.subr.mxu0 0.0
    %1304 = vmatpush1.msra.mxu0 0.0
    %1305 = vmatprep.subr.mxu0 0.0
    %1306 = vmatpush1.msra.mxu0 0.0
    %1307 = vmatprep.subr.mxu0 0.0
    %1308 = vmatpush1.msra.mxu0 0.0
    %1309 = vmatprep.subr.mxu0 0.0
    %1310 = vmatpush1.msra.mxu0 0.0
    %v1311 = vand.u32 %v301, 4294901760
    %v1312 = vsub.f32 %v301, %v1311
    %1313 = vmatprep.subr.mxu0 %v1312
    %v1314 = vand.u32 %v300, 4294901760
    %v1315 = vsub.f32 %v300, %v1314
    %1316 = vmatpush1.msra.mxu0 %v1315
    %v1317 = vand.u32 %v293, 4294901760
    %v1318 = vsub.f32 %v293, %v1317
    %1319 = vmatprep.subr.mxu0 %v1318
    %v1320 = vand.u32 %v292, 4294901760
    %v1321 = vsub.f32 %v292, %v1320
    %1322 = vmatpush1.msra.mxu0 %v1321
    %v1323 = vand.u32 %v285, 4294901760
    %v1324 = vsub.f32 %v285, %v1323
    %1325 = vmatprep.subr.mxu0 %v1324
    %v1326 = vand.u32 %v284, 4294901760
    %v1327 = vsub.f32 %v284, %v1326
    %1328 = vmatpush1.msra.mxu0 %v1327
    %v1329 = vand.u32 %v277, 4294901760
    %v1330 = vsub.f32 %v277, %v1329
    %1331 = vmatprep.subr.mxu0 %v1330
    %v1332 = vand.u32 %v276, 4294901760
    %v1333 = vsub.f32 %v276, %v1332
    %1334 = vmatpush1.msra.mxu0 %v1333
    %1335 = vmatprep.subr.mxu0 0.0
    %1336 = vmatpush2.msra.mxu0 0.0
    %1337 = vmatprep.subr.mxu0 0.0
    %1338 = vmatpush2.msra.mxu0 0.0
    %1339 = vmatprep.subr.mxu0 0.0
    %1340 = vmatpush2.msra.mxu0 0.0
    %1341 = vmatprep.subr.mxu0 0.0
    %1342 = vmatpush2.msra.mxu0 0.0
    %1343 = vmatprep.subr.mxu0 0.0
    %1344 = vmatpush2.msra.mxu0 0.0
    %1345 = vmatprep.subr.mxu0 0.0
    %1346 = vmatpush2.msra.mxu0 0.0
    %1347 = vmatprep.subr.mxu0 0.0
    %1348 = vmatpush2.msra.mxu0 0.0
    %1349 = vmatprep.subr.mxu0 0.0
    %1350 = vmatpush2.msra.mxu0 0.0
    %1351 = vmatprep.subr.mxu0 0.0
    %1352 = vmatpush2.msra.mxu0 0.0
    %1353 = vmatprep.subr.mxu0 0.0
    %1354 = vmatpush2.msra.mxu0 0.0
    %1355 = vmatprep.subr.mxu0 0.0
    %1356 = vmatpush2.msra.mxu0 0.0
    %1357 = vmatprep.subr.mxu0 0.0
    %1358 = vmatpush2.msra.mxu0 0.0
    %1359 = vmatprep.subr.mxu0 0.0
    %1360 = vmatpush2.msra.mxu0 0.0
    %1361 = vmatprep.subr.mxu0 0.0
    %1362 = vmatpush2.msra.mxu0 0.0
    %1363 = vmatprep.subr.mxu0 0.0
    %1364 = vmatpush2.msra.mxu0 0.0
    %1365 = vmatprep.subr.mxu0 0.0
    %1366 = vmatpush2.msra.mxu0 0.0
    %1367 = vmatprep.mubr.f32.mxu0 0.0
    %v1368 = vand.u32 %v336, 4294901760
    %v1369 = vsub.f32 %v336, %v1368
    %1370 = vmatmul.mubr.f32.gmra.mxu0 %v1369
    %v1371 = vpop.f32.mrf.mxu0
    %v1372 = vadd.f32 %v1262, %v1371
    %v1373 = vpop.f32.mrf.mxu0
    %v1374 = vadd.f32 %v1264, %v1373
    %1375 = vmatprep.mubr.f32.mxu0 0.0
    %v1376 = vand.u32 %v339, 4294901760
    %v1377 = vsub.f32 %v339, %v1376
    %1378 = vmatmul.mubr.f32.gmra.mxu0 %v1377
    %v1379 = vpop.f32.mrf.mxu0
    %v1380 = vadd.f32 %v1269, %v1379
    %v1381 = vpop.f32.mrf.mxu0
    %v1382 = vadd.f32 %v1271, %v1381
    %1383 = vmatprep.mubr.f32.mxu0 0.0
    %v1384 = vand.u32 %v342, 4294901760
    %v1385 = vsub.f32 %v342, %v1384
    %1386 = vmatmul.mubr.f32.gmra.mxu0 %v1385
    %v1387 = vpop.f32.mrf.mxu0
    %v1388 = vadd.f32 %v1276, %v1387
    %v1389 = vpop.f32.mrf.mxu0
    %v1390 = vadd.f32 %v1278, %v1389
    %1391 = vmatprep.mubr.f32.mxu0 0.0
    %v1392 = vand.u32 %v345, 4294901760
    %v1393 = vsub.f32 %v345, %v1392
    %1394 = vmatmul.mubr.f32.gmra.mxu0 %v1393
    %v1395 = vpop.f32.mrf.mxu0
    %v1396 = vadd.f32 %v1283, %v1395
    %v1397 = vpop.f32.mrf.mxu0
    %v1398 = vadd.f32 %v1285, %v1397
    %1399 = vdwg.mxu0
    %1400 = vmatprep.subr.mxu0 0.0
    %1401 = vmatpush1.msra.mxu0 0.0
    %1402 = vmatprep.subr.mxu0 0.0
    %1403 = vmatpush1.msra.mxu0 0.0
    %1404 = vmatprep.subr.mxu0 0.0
    %1405 = vmatpush1.msra.mxu0 0.0
    %1406 = vmatprep.subr.mxu0 0.0
    %1407 = vmatpush1.msra.mxu0 0.0
    %1408 = vmatprep.subr.mxu0 0.0
    %1409 = vmatpush1.msra.mxu0 0.0
    %1410 = vmatprep.subr.mxu0 0.0
    %1411 = vmatpush1.msra.mxu0 0.0
    %1412 = vmatprep.subr.mxu0 0.0
    %1413 = vmatpush1.msra.mxu0 0.0
    %1414 = vmatprep.subr.mxu0 0.0
    %1415 = vmatpush1.msra.mxu0 0.0
    %1416 = vmatprep.subr.mxu0 0.0
    %1417 = vmatpush1.msra.mxu0 0.0
    %1418 = vmatprep.subr.mxu0 0.0
    %1419 = vmatpush1.msra.mxu0 0.0
    %1420 = vmatprep.subr.mxu0 0.0
    %1421 = vmatpush1.msra.mxu0 0.0
    %1422 = vmatprep.subr.mxu0 0.0
    %1423 = vmatpush1.msra.mxu0 0.0
    %v1424 = vand.u32 %v301, 4294901760
    %1425 = vmatprep.subr.mxu0 %v1424
    %v1426 = vand.u32 %v300, 4294901760
    %1427 = vmatpush1.msra.mxu0 %v1426
    %v1428 = vand.u32 %v293, 4294901760
    %1429 = vmatprep.subr.mxu0 %v1428
    %v1430 = vand.u32 %v292, 4294901760
    %1431 = vmatpush1.msra.mxu0 %v1430
    %v1432 = vand.u32 %v285, 4294901760
    %1433 = vmatprep.subr.mxu0 %v1432
    %v1434 = vand.u32 %v284, 4294901760
    %1435 = vmatpush1.msra.mxu0 %v1434
    %v1436 = vand.u32 %v277, 4294901760
    %1437 = vmatprep.subr.mxu0 %v1436
    %v1438 = vand.u32 %v276, 4294901760
    %1439 = vmatpush1.msra.mxu0 %v1438
    %1440 = vmatprep.subr.mxu0 0.0
    %1441 = vmatpush2.msra.mxu0 0.0
    %1442 = vmatprep.subr.mxu0 0.0
    %1443 = vmatpush2.msra.mxu0 0.0
    %1444 = vmatprep.subr.mxu0 0.0
    %1445 = vmatpush2.msra.mxu0 0.0
    %1446 = vmatprep.subr.mxu0 0.0
    %1447 = vmatpush2.msra.mxu0 0.0
    %1448 = vmatprep.subr.mxu0 0.0
    %1449 = vmatpush2.msra.mxu0 0.0
    %1450 = vmatprep.subr.mxu0 0.0
    %1451 = vmatpush2.msra.mxu0 0.0
    %1452 = vmatprep.subr.mxu0 0.0
    %1453 = vmatpush2.msra.mxu0 0.0
    %1454 = vmatprep.subr.mxu0 0.0
    %1455 = vmatpush2.msra.mxu0 0.0
    %1456 = vmatprep.subr.mxu0 0.0
    %1457 = vmatpush2.msra.mxu0 0.0
    %1458 = vmatprep.subr.mxu0 0.0
    %1459 = vmatpush2.msra.mxu0 0.0
    %1460 = vmatprep.subr.mxu0 0.0
    %1461 = vmatpush2.msra.mxu0 0.0
    %1462 = vmatprep.subr.mxu0 0.0
    %1463 = vmatpush2.msra.mxu0 0.0
    %1464 = vmatprep.subr.mxu0 0.0
    %1465 = vmatpush2.msra.mxu0 0.0
    %1466 = vmatprep.subr.mxu0 0.0
    %1467 = vmatpush2.msra.mxu0 0.0
    %1468 = vmatprep.subr.mxu0 0.0
    %1469 = vmatpush2.msra.mxu0 0.0
    %1470 = vmatprep.subr.mxu0 0.0
    %1471 = vmatpush2.msra.mxu0 0.0
    %1472 = vmatprep.mubr.f32.mxu0 0.0
    %v1473 = vand.u32 %v336, 4294901760
    %v1474 = vsub.f32 %v336, %v1473
    %v1475 = vand.u32 %v1474, 4294901760
    %1476 = vmatmul.mubr.f32.gmra.mxu0 %v1475
    %v1477 = vpop.f32.mrf.mxu0
    %v1478 = vadd.f32 %v1372, %v1477
    %v1479 = vpop.f32.mrf.mxu0
    %v1480 = vadd.f32 %v1374, %v1479
    %1481 = vmatprep.mubr.f32.mxu0 0.0
    %v1482 = vand.u32 %v339, 4294901760
    %v1483 = vsub.f32 %v339, %v1482
    %v1484 = vand.u32 %v1483, 4294901760
    %1485 = vmatmul.mubr.f32.gmra.mxu0 %v1484
    %v1486 = vpop.f32.mrf.mxu0
    %v1487 = vadd.f32 %v1380, %v1486
    %v1488 = vpop.f32.mrf.mxu0
    %v1489 = vadd.f32 %v1382, %v1488
    %1490 = vmatprep.mubr.f32.mxu0 0.0
    %v1491 = vand.u32 %v342, 4294901760
    %v1492 = vsub.f32 %v342, %v1491
    %v1493 = vand.u32 %v1492, 4294901760
    %1494 = vmatmul.mubr.f32.gmra.mxu0 %v1493
    %v1495 = vpop.f32.mrf.mxu0
    %v1496 = vadd.f32 %v1388, %v1495
    %v1497 = vpop.f32.mrf.mxu0
    %v1498 = vadd.f32 %v1390, %v1497
    %1499 = vmatprep.mubr.f32.mxu0 0.0
    %v1500 = vand.u32 %v345, 4294901760
    %v1501 = vsub.f32 %v345, %v1500
    %v1502 = vand.u32 %v1501, 4294901760
    %1503 = vmatmul.mubr.f32.gmra.mxu0 %v1502
    %v1504 = vpop.f32.mrf.mxu0
    %v1505 = vadd.f32 %v1396, %v1504
    %v1506 = vpop.f32.mrf.mxu0
    %v1507 = vadd.f32 %v1398, %v1506
    %1508 = vdwg.mxu0
    %1509 = vmatprep.subr.mxu0 0.0
    %1510 = vmatpush1.msra.mxu0 0.0
    %1511 = vmatprep.subr.mxu0 0.0
    %1512 = vmatpush1.msra.mxu0 0.0
    %1513 = vmatprep.subr.mxu0 0.0
    %1514 = vmatpush1.msra.mxu0 0.0
    %1515 = vmatprep.subr.mxu0 0.0
    %1516 = vmatpush1.msra.mxu0 0.0
    %1517 = vmatprep.subr.mxu0 0.0
    %1518 = vmatpush1.msra.mxu0 0.0
    %1519 = vmatprep.subr.mxu0 0.0
    %1520 = vmatpush1.msra.mxu0 0.0
    %1521 = vmatprep.subr.mxu0 0.0
    %1522 = vmatpush1.msra.mxu0 0.0
    %1523 = vmatprep.subr.mxu0 0.0
    %1524 = vmatpush1.msra.mxu0 0.0
    %1525 = vmatprep.subr.mxu0 0.0
    %1526 = vmatpush1.msra.mxu0 0.0
    %1527 = vmatprep.subr.mxu0 0.0
    %1528 = vmatpush1.msra.mxu0 0.0
    %1529 = vmatprep.subr.mxu0 0.0
    %1530 = vmatpush1.msra.mxu0 0.0
    %1531 = vmatprep.subr.mxu0 0.0
    %1532 = vmatpush1.msra.mxu0 0.0
    %v1533 = vand.u32 %v301, 4294901760
    %v1534 = vsub.f32 %v301, %v1533
    %v1535 = vand.u32 %v1534, 4294901760
    %1536 = vmatprep.subr.mxu0 %v1535
    %v1537 = vand.u32 %v300, 4294901760
    %v1538 = vsub.f32 %v300, %v1537
    %v1539 = vand.u32 %v1538, 4294901760
    %1540 = vmatpush1.msra.mxu0 %v1539
    %v1541 = vand.u32 %v293, 4294901760
    %v1542 = vsub.f32 %v293, %v1541
    %v1543 = vand.u32 %v1542, 4294901760
    %1544 = vmatprep.subr.mxu0 %v1543
    %v1545 = vand.u32 %v292, 4294901760
    %v1546 = vsub.f32 %v292, %v1545
    %v1547 = vand.u32 %v1546, 4294901760
    %1548 = vmatpush1.msra.mxu0 %v1547
    %v1549 = vand.u32 %v285, 4294901760
    %v1550 = vsub.f32 %v285, %v1549
    %v1551 = vand.u32 %v1550, 4294901760
    %1552 = vmatprep.subr.mxu0 %v1551
    %v1553 = vand.u32 %v284, 4294901760
    %v1554 = vsub.f32 %v284, %v1553
    %v1555 = vand.u32 %v1554, 4294901760
    %1556 = vmatpush1.msra.mxu0 %v1555
    %v1557 = vand.u32 %v277, 4294901760
    %v1558 = vsub.f32 %v277, %v1557
    %v1559 = vand.u32 %v1558, 4294901760
    %1560 = vmatprep.subr.mxu0 %v1559
    %v1561 = vand.u32 %v276, 4294901760
    %v1562 = vsub.f32 %v276, %v1561
    %v1563 = vand.u32 %v1562, 4294901760
    %1564 = vmatpush1.msra.mxu0 %v1563
    %1565 = vmatprep.subr.mxu0 0.0
    %1566 = vmatpush2.msra.mxu0 0.0
    %1567 = vmatprep.subr.mxu0 0.0
    %1568 = vmatpush2.msra.mxu0 0.0
    %1569 = vmatprep.subr.mxu0 0.0
    %1570 = vmatpush2.msra.mxu0 0.0
    %1571 = vmatprep.subr.mxu0 0.0
    %1572 = vmatpush2.msra.mxu0 0.0
    %1573 = vmatprep.subr.mxu0 0.0
    %1574 = vmatpush2.msra.mxu0 0.0
    %1575 = vmatprep.subr.mxu0 0.0
    %1576 = vmatpush2.msra.mxu0 0.0
    %1577 = vmatprep.subr.mxu0 0.0
    %1578 = vmatpush2.msra.mxu0 0.0
    %1579 = vmatprep.subr.mxu0 0.0
    %1580 = vmatpush2.msra.mxu0 0.0
    %1581 = vmatprep.subr.mxu0 0.0
    %1582 = vmatpush2.msra.mxu0 0.0
    %1583 = vmatprep.subr.mxu0 0.0
    %1584 = vmatpush2.msra.mxu0 0.0
    %1585 = vmatprep.subr.mxu0 0.0
    %1586 = vmatpush2.msra.mxu0 0.0
    %1587 = vmatprep.subr.mxu0 0.0
    %1588 = vmatpush2.msra.mxu0 0.0
    %1589 = vmatprep.subr.mxu0 0.0
    %1590 = vmatpush2.msra.mxu0 0.0
    %1591 = vmatprep.subr.mxu0 0.0
    %1592 = vmatpush2.msra.mxu0 0.0
    %1593 = vmatprep.subr.mxu0 0.0
    %1594 = vmatpush2.msra.mxu0 0.0
    %1595 = vmatprep.subr.mxu0 0.0
    %1596 = vmatpush2.msra.mxu0 0.0
    %1597 = vmatprep.mubr.f32.mxu0 0.0
    %v1598 = vand.u32 %v336, 4294901760
    %1599 = vmatmul.mubr.f32.gmra.mxu0 %v1598
    %v1600 = vpop.f32.mrf.mxu0
    %v1601 = vadd.f32 %v1478, %v1600
    %v1602 = vpop.f32.mrf.mxu0
    %v1603 = vadd.f32 %v1480, %v1602
    %1604 = vmatprep.mubr.f32.mxu0 0.0
    %v1605 = vand.u32 %v339, 4294901760
    %1606 = vmatmul.mubr.f32.gmra.mxu0 %v1605
    %v1607 = vpop.f32.mrf.mxu0
    %v1608 = vadd.f32 %v1487, %v1607
    %v1609 = vpop.f32.mrf.mxu0
    %v1610 = vadd.f32 %v1489, %v1609
    %1611 = vmatprep.mubr.f32.mxu0 0.0
    %v1612 = vand.u32 %v342, 4294901760
    %1613 = vmatmul.mubr.f32.gmra.mxu0 %v1612
    %v1614 = vpop.f32.mrf.mxu0
    %v1615 = vadd.f32 %v1496, %v1614
    %v1616 = vpop.f32.mrf.mxu0
    %v1617 = vadd.f32 %v1498, %v1616
    %1618 = vmatprep.mubr.f32.mxu0 0.0
    %v1619 = vand.u32 %v345, 4294901760
    %1620 = vmatmul.mubr.f32.gmra.mxu0 %v1619
    %v1621 = vpop.f32.mrf.mxu0
    %v1622 = vadd.f32 %v1505, %v1621
    %v1623 = vpop.f32.mrf.mxu0
    %v1624 = vadd.f32 %v1507, %v1623
    %1625 = vdwg.mxu0
    %1626 = vmatprep.subr.mxu0 0.0
    %1627 = vmatpush1.msra.mxu0 0.0
    %1628 = vmatprep.subr.mxu0 0.0
    %1629 = vmatpush1.msra.mxu0 0.0
    %1630 = vmatprep.subr.mxu0 0.0
    %1631 = vmatpush1.msra.mxu0 0.0
    %1632 = vmatprep.subr.mxu0 0.0
    %1633 = vmatpush1.msra.mxu0 0.0
    %1634 = vmatprep.subr.mxu0 0.0
    %1635 = vmatpush1.msra.mxu0 0.0
    %1636 = vmatprep.subr.mxu0 0.0
    %1637 = vmatpush1.msra.mxu0 0.0
    %1638 = vmatprep.subr.mxu0 0.0
    %1639 = vmatpush1.msra.mxu0 0.0
    %1640 = vmatprep.subr.mxu0 0.0
    %1641 = vmatpush1.msra.mxu0 0.0
    %1642 = vmatprep.subr.mxu0 0.0
    %1643 = vmatpush1.msra.mxu0 0.0
    %1644 = vmatprep.subr.mxu0 0.0
    %1645 = vmatpush1.msra.mxu0 0.0
    %1646 = vmatprep.subr.mxu0 0.0
    %1647 = vmatpush1.msra.mxu0 0.0
    %1648 = vmatprep.subr.mxu0 0.0
    %1649 = vmatpush1.msra.mxu0 0.0
    %v1650 = vand.u32 %v301, 4294901760
    %1651 = vmatprep.subr.mxu0 %v1650
    %v1652 = vand.u32 %v300, 4294901760
    %1653 = vmatpush1.msra.mxu0 %v1652
    %v1654 = vand.u32 %v293, 4294901760
    %1655 = vmatprep.subr.mxu0 %v1654
    %v1656 = vand.u32 %v292, 4294901760
    %1657 = vmatpush1.msra.mxu0 %v1656
    %v1658 = vand.u32 %v285, 4294901760
    %1659 = vmatprep.subr.mxu0 %v1658
    %v1660 = vand.u32 %v284, 4294901760
    %1661 = vmatpush1.msra.mxu0 %v1660
    %v1662 = vand.u32 %v277, 4294901760
    %1663 = vmatprep.subr.mxu0 %v1662
    %v1664 = vand.u32 %v276, 4294901760
    %1665 = vmatpush1.msra.mxu0 %v1664
    %1666 = vmatprep.subr.mxu0 0.0
    %1667 = vmatpush2.msra.mxu0 0.0
    %1668 = vmatprep.subr.mxu0 0.0
    %1669 = vmatpush2.msra.mxu0 0.0
    %1670 = vmatprep.subr.mxu0 0.0
    %1671 = vmatpush2.msra.mxu0 0.0
    %1672 = vmatprep.subr.mxu0 0.0
    %1673 = vmatpush2.msra.mxu0 0.0
    %1674 = vmatprep.subr.mxu0 0.0
    %1675 = vmatpush2.msra.mxu0 0.0
    %1676 = vmatprep.subr.mxu0 0.0
    %1677 = vmatpush2.msra.mxu0 0.0
    %1678 = vmatprep.subr.mxu0 0.0
    %1679 = vmatpush2.msra.mxu0 0.0
    %1680 = vmatprep.subr.mxu0 0.0
    %1681 = vmatpush2.msra.mxu0 0.0
    %1682 = vmatprep.subr.mxu0 0.0
    %1683 = vmatpush2.msra.mxu0 0.0
    %1684 = vmatprep.subr.mxu0 0.0
    %1685 = vmatpush2.msra.mxu0 0.0
    %1686 = vmatprep.subr.mxu0 0.0
    %1687 = vmatpush2.msra.mxu0 0.0
    %1688 = vmatprep.subr.mxu0 0.0
    %1689 = vmatpush2.msra.mxu0 0.0
    %1690 = vmatprep.subr.mxu0 0.0
    %1691 = vmatpush2.msra.mxu0 0.0
    %1692 = vmatprep.subr.mxu0 0.0
    %1693 = vmatpush2.msra.mxu0 0.0
    %1694 = vmatprep.subr.mxu0 0.0
    %1695 = vmatpush2.msra.mxu0 0.0
    %1696 = vmatprep.subr.mxu0 0.0
    %1697 = vmatpush2.msra.mxu0 0.0
    %1698 = vmatprep.mubr.f32.mxu0 0.0
    %v1699 = vand.u32 %v336, 4294901760
    %1700 = vmatmul.mubr.f32.gmra.mxu0 %v1699
    %v1701 = vpop.f32.mrf.mxu0
    %v1702 = vadd.f32 %v1601, %v1701
    %v1703 = vpop.f32.mrf.mxu0
    %v1704 = vadd.f32 %v1603, %v1703
    %1705 = vmatprep.mubr.f32.mxu0 0.0
    %v1706 = vand.u32 %v339, 4294901760
    %1707 = vmatmul.mubr.f32.gmra.mxu0 %v1706
    %v1708 = vpop.f32.mrf.mxu0
    %v1709 = vadd.f32 %v1608, %v1708
    %v1710 = vpop.f32.mrf.mxu0
    %v1711 = vadd.f32 %v1610, %v1710
    %1712 = vmatprep.mubr.f32.mxu0 0.0
    %v1713 = vand.u32 %v342, 4294901760
    %1714 = vmatmul.mubr.f32.gmra.mxu0 %v1713
    %v1715 = vpop.f32.mrf.mxu0
    %v1716 = vadd.f32 %v1615, %v1715
    %v1717 = vpop.f32.mrf.mxu0
    %v1718 = vadd.f32 %v1617, %v1717
    %1719 = vmatprep.mubr.f32.mxu0 0.0
    %v1720 = vand.u32 %v345, 4294901760
    %1721 = vmatmul.mubr.f32.gmra.mxu0 %v1720
    %v1722 = vpop.f32.mrf.mxu0
    %v1723 = vadd.f32 %v1622, %v1722
    %v1724 = vpop.f32.mrf.mxu0
    %v1725 = vadd.f32 %v1624, %v1724
    %1726 = vdwg.mxu0
    %1727 = vmatprep.subr.mxu0 0.0
    %1728 = vmatpush1.msra.mxu0 0.0
    %1729 = vmatprep.subr.mxu0 0.0
    %1730 = vmatpush1.msra.mxu0 0.0
    %1731 = vmatprep.subr.mxu0 0.0
    %1732 = vmatpush1.msra.mxu0 0.0
    %1733 = vmatprep.subr.mxu0 0.0
    %1734 = vmatpush1.msra.mxu0 0.0
    %1735 = vmatprep.subr.mxu0 0.0
    %1736 = vmatpush1.msra.mxu0 0.0
    %1737 = vmatprep.subr.mxu0 0.0
    %1738 = vmatpush1.msra.mxu0 0.0
    %1739 = vmatprep.subr.mxu0 0.0
    %1740 = vmatpush1.msra.mxu0 0.0
    %1741 = vmatprep.subr.mxu0 0.0
    %1742 = vmatpush1.msra.mxu0 0.0
    %1743 = vmatprep.subr.mxu0 0.0
    %1744 = vmatpush1.msra.mxu0 0.0
    %1745 = vmatprep.subr.mxu0 0.0
    %1746 = vmatpush1.msra.mxu0 0.0
    %1747 = vmatprep.subr.mxu0 0.0
    %1748 = vmatpush1.msra.mxu0 0.0
    %1749 = vmatprep.subr.mxu0 0.0
    %1750 = vmatpush1.msra.mxu0 0.0
    %v1751 = vand.u32 %v303, 4294901760
    %1752 = vmatprep.subr.mxu0 %v1751
    %v1753 = vand.u32 %v302, 4294901760
    %1754 = vmatpush1.msra.mxu0 %v1753
    %v1755 = vand.u32 %v295, 4294901760
    %1756 = vmatprep.subr.mxu0 %v1755
    %v1757 = vand.u32 %v294, 4294901760
    %1758 = vmatpush1.msra.mxu0 %v1757
    %v1759 = vand.u32 %v287, 4294901760
    %1760 = vmatprep.subr.mxu0 %v1759
    %v1761 = vand.u32 %v286, 4294901760
    %1762 = vmatpush1.msra.mxu0 %v1761
    %v1763 = vand.u32 %v279, 4294901760
    %1764 = vmatprep.subr.mxu0 %v1763
    %v1765 = vand.u32 %v278, 4294901760
    %1766 = vmatpush1.msra.mxu0 %v1765
    %1767 = vmatprep.subr.mxu0 0.0
    %1768 = vmatpush2.msra.mxu0 0.0
    %1769 = vmatprep.subr.mxu0 0.0
    %1770 = vmatpush2.msra.mxu0 0.0
    %1771 = vmatprep.subr.mxu0 0.0
    %1772 = vmatpush2.msra.mxu0 0.0
    %1773 = vmatprep.subr.mxu0 0.0
    %1774 = vmatpush2.msra.mxu0 0.0
    %1775 = vmatprep.subr.mxu0 0.0
    %1776 = vmatpush2.msra.mxu0 0.0
    %1777 = vmatprep.subr.mxu0 0.0
    %1778 = vmatpush2.msra.mxu0 0.0
    %1779 = vmatprep.subr.mxu0 0.0
    %1780 = vmatpush2.msra.mxu0 0.0
    %1781 = vmatprep.subr.mxu0 0.0
    %1782 = vmatpush2.msra.mxu0 0.0
    %1783 = vmatprep.subr.mxu0 0.0
    %1784 = vmatpush2.msra.mxu0 0.0
    %1785 = vmatprep.subr.mxu0 0.0
    %1786 = vmatpush2.msra.mxu0 0.0
    %1787 = vmatprep.subr.mxu0 0.0
    %1788 = vmatpush2.msra.mxu0 0.0
    %1789 = vmatprep.subr.mxu0 0.0
    %1790 = vmatpush2.msra.mxu0 0.0
    %1791 = vmatprep.subr.mxu0 0.0
    %1792 = vmatpush2.msra.mxu0 0.0
    %1793 = vmatprep.subr.mxu0 0.0
    %1794 = vmatpush2.msra.mxu0 0.0
    %1795 = vmatprep.subr.mxu0 0.0
    %1796 = vmatpush2.msra.mxu0 0.0
    %1797 = vmatprep.subr.mxu0 0.0
    %1798 = vmatpush2.msra.mxu0 0.0
    %1799 = vmatprep.mubr.f32.mxu0 0.0
    %v1800 = vand.u32 %v336, 4294901760
    %v1801 = vsub.f32 %v336, %v1800
    %v1802 = vand.u32 %v1801, 4294901760
    %v1803 = vsub.f32 %v1801, %v1802
    %v1804 = vand.u32 %v1803, 4294901760
    %1805 = vmatmul.mubr.f32.gmra.mxu0 %v1804
    %v1806 = vpop.f32.mrf.mxu0
    %v1807 = vadd.f32 %v317, %v1806
    %v1808 = vpop.f32.mrf.mxu0
    %v1809 = vadd.f32 %v317, %v1808
    %1810 = vmatprep.mubr.f32.mxu0 0.0
    %v1811 = vand.u32 %v339, 4294901760
    %v1812 = vsub.f32 %v339, %v1811
    %v1813 = vand.u32 %v1812, 4294901760
    %v1814 = vsub.f32 %v1812, %v1813
    %v1815 = vand.u32 %v1814, 4294901760
    %1816 = vmatmul.mubr.f32.gmra.mxu0 %v1815
    %v1817 = vpop.f32.mrf.mxu0
    %v1818 = vadd.f32 %v322, %v1817
    %v1819 = vpop.f32.mrf.mxu0
    %v1820 = vadd.f32 %v322, %v1819
    %1821 = vmatprep.mubr.f32.mxu0 0.0
    %v1822 = vand.u32 %v342, 4294901760
    %v1823 = vsub.f32 %v342, %v1822
    %v1824 = vand.u32 %v1823, 4294901760
    %v1825 = vsub.f32 %v1823, %v1824
    %v1826 = vand.u32 %v1825, 4294901760
    %1827 = vmatmul.mubr.f32.gmra.mxu0 %v1826
    %v1828 = vpop.f32.mrf.mxu0
    %v1829 = vadd.f32 %v327, %v1828
    %v1830 = vpop.f32.mrf.mxu0
    %v1831 = vadd.f32 %v327, %v1830
    %1832 = vmatprep.mubr.f32.mxu0 0.0
    %v1833 = vand.u32 %v345, 4294901760
    %v1834 = vsub.f32 %v345, %v1833
    %v1835 = vand.u32 %v1834, 4294901760
    %v1836 = vsub.f32 %v1834, %v1835
    %v1837 = vand.u32 %v1836, 4294901760
    %1838 = vmatmul.mubr.f32.gmra.mxu0 %v1837
    %v1839 = vpop.f32.mrf.mxu0
    %v1840 = vadd.f32 %v332, %v1839
    %v1841 = vpop.f32.mrf.mxu0
    %v1842 = vadd.f32 %v332, %v1841
    %1843 = vdwg.mxu0
    %1844 = vmatprep.subr.mxu0 0.0
    %1845 = vmatpush1.msra.mxu0 0.0
    %1846 = vmatprep.subr.mxu0 0.0
    %1847 = vmatpush1.msra.mxu0 0.0
    %1848 = vmatprep.subr.mxu0 0.0
    %1849 = vmatpush1.msra.mxu0 0.0
    %1850 = vmatprep.subr.mxu0 0.0
    %1851 = vmatpush1.msra.mxu0 0.0
    %1852 = vmatprep.subr.mxu0 0.0
    %1853 = vmatpush1.msra.mxu0 0.0
    %1854 = vmatprep.subr.mxu0 0.0
    %1855 = vmatpush1.msra.mxu0 0.0
    %1856 = vmatprep.subr.mxu0 0.0
    %1857 = vmatpush1.msra.mxu0 0.0
    %1858 = vmatprep.subr.mxu0 0.0
    %1859 = vmatpush1.msra.mxu0 0.0
    %1860 = vmatprep.subr.mxu0 0.0
    %1861 = vmatpush1.msra.mxu0 0.0
    %1862 = vmatprep.subr.mxu0 0.0
    %1863 = vmatpush1.msra.mxu0 0.0
    %1864 = vmatprep.subr.mxu0 0.0
    %1865 = vmatpush1.msra.mxu0 0.0
    %1866 = vmatprep.subr.mxu0 0.0
    %1867 = vmatpush1.msra.mxu0 0.0
    %v1868 = vand.u32 %v303, 4294901760
    %v1869 = vsub.f32 %v303, %v1868
    %v1870 = vand.u32 %v1869, 4294901760
    %v1871 = vsub.f32 %v1869, %v1870
    %v1872 = vand.u32 %v1871, 4294901760
    %1873 = vmatprep.subr.mxu0 %v1872
    %v1874 = vand.u32 %v302, 4294901760
    %v1875 = vsub.f32 %v302, %v1874
    %v1876 = vand.u32 %v1875, 4294901760
    %v1877 = vsub.f32 %v1875, %v1876
    %v1878 = vand.u32 %v1877, 4294901760
    %1879 = vmatpush1.msra.mxu0 %v1878
    %v1880 = vand.u32 %v295, 4294901760
    %v1881 = vsub.f32 %v295, %v1880
    %v1882 = vand.u32 %v1881, 4294901760
    %v1883 = vsub.f32 %v1881, %v1882
    %v1884 = vand.u32 %v1883, 4294901760
    %1885 = vmatprep.subr.mxu0 %v1884
    %v1886 = vand.u32 %v294, 4294901760
    %v1887 = vsub.f32 %v294, %v1886
    %v1888 = vand.u32 %v1887, 4294901760
    %v1889 = vsub.f32 %v1887, %v1888
    %v1890 = vand.u32 %v1889, 4294901760
    %1891 = vmatpush1.msra.mxu0 %v1890
    %v1892 = vand.u32 %v287, 4294901760
    %v1893 = vsub.f32 %v287, %v1892
    %v1894 = vand.u32 %v1893, 4294901760
    %v1895 = vsub.f32 %v1893, %v1894
    %v1896 = vand.u32 %v1895, 4294901760
    %1897 = vmatprep.subr.mxu0 %v1896
    %v1898 = vand.u32 %v286, 4294901760
    %v1899 = vsub.f32 %v286, %v1898
    %v1900 = vand.u32 %v1899, 4294901760
    %v1901 = vsub.f32 %v1899, %v1900
    %v1902 = vand.u32 %v1901, 4294901760
    %1903 = vmatpush1.msra.mxu0 %v1902
    %v1904 = vand.u32 %v279, 4294901760
    %v1905 = vsub.f32 %v279, %v1904
    %v1906 = vand.u32 %v1905, 4294901760
    %v1907 = vsub.f32 %v1905, %v1906
    %v1908 = vand.u32 %v1907, 4294901760
    %1909 = vmatprep.subr.mxu0 %v1908
    %v1910 = vand.u32 %v278, 4294901760
    %v1911 = vsub.f32 %v278, %v1910
    %v1912 = vand.u32 %v1911, 4294901760
    %v1913 = vsub.f32 %v1911, %v1912
    %v1914 = vand.u32 %v1913, 4294901760
    %1915 = vmatpush1.msra.mxu0 %v1914
    %1916 = vmatprep.subr.mxu0 0.0
    %1917 = vmatpush2.msra.mxu0 0.0
    %1918 = vmatprep.subr.mxu0 0.0
    %1919 = vmatpush2.msra.mxu0 0.0
    %1920 = vmatprep.subr.mxu0 0.0
    %1921 = vmatpush2.msra.mxu0 0.0
    %1922 = vmatprep.subr.mxu0 0.0
    %1923 = vmatpush2.msra.mxu0 0.0
    %1924 = vmatprep.subr.mxu0 0.0
    %1925 = vmatpush2.msra.mxu0 0.0
    %1926 = vmatprep.subr.mxu0 0.0
    %1927 = vmatpush2.msra.mxu0 0.0
    %1928 = vmatprep.subr.mxu0 0.0
    %1929 = vmatpush2.msra.mxu0 0.0
    %1930 = vmatprep.subr.mxu0 0.0
    %1931 = vmatpush2.msra.mxu0 0.0
    %1932 = vmatprep.subr.mxu0 0.0
    %1933 = vmatpush2.msra.mxu0 0.0
    %1934 = vmatprep.subr.mxu0 0.0
    %1935 = vmatpush2.msra.mxu0 0.0
    %1936 = vmatprep.subr.mxu0 0.0
    %1937 = vmatpush2.msra.mxu0 0.0
    %1938 = vmatprep.subr.mxu0 0.0
    %1939 = vmatpush2.msra.mxu0 0.0
    %1940 = vmatprep.subr.mxu0 0.0
    %1941 = vmatpush2.msra.mxu0 0.0
    %1942 = vmatprep.subr.mxu0 0.0
    %1943 = vmatpush2.msra.mxu0 0.0
    %1944 = vmatprep.subr.mxu0 0.0
    %1945 = vmatpush2.msra.mxu0 0.0
    %1946 = vmatprep.subr.mxu0 0.0
    %1947 = vmatpush2.msra.mxu0 0.0
    %1948 = vmatprep.mubr.f32.mxu0 0.0
    %v1949 = vand.u32 %v336, 4294901760
    %1950 = vmatmul.mubr.f32.gmra.mxu0 %v1949
    %v1951 = vpop.f32.mrf.mxu0
    %v1952 = vadd.f32 %v1807, %v1951
    %v1953 = vpop.f32.mrf.mxu0
    %v1954 = vadd.f32 %v1809, %v1953
    %1955 = vmatprep.mubr.f32.mxu0 0.0
    %v1956 = vand.u32 %v339, 4294901760
    %1957 = vmatmul.mubr.f32.gmra.mxu0 %v1956
    %v1958 = vpop.f32.mrf.mxu0
    %v1959 = vadd.f32 %v1818, %v1958
    %v1960 = vpop.f32.mrf.mxu0
    %v1961 = vadd.f32 %v1820, %v1960
    %1962 = vmatprep.mubr.f32.mxu0 0.0
    %v1963 = vand.u32 %v342, 4294901760
    %1964 = vmatmul.mubr.f32.gmra.mxu0 %v1963
    %v1965 = vpop.f32.mrf.mxu0
    %v1966 = vadd.f32 %v1829, %v1965
    %v1967 = vpop.f32.mrf.mxu0
    %v1968 = vadd.f32 %v1831, %v1967
    %1969 = vmatprep.mubr.f32.mxu0 0.0
    %v1970 = vand.u32 %v345, 4294901760
    %1971 = vmatmul.mubr.f32.gmra.mxu0 %v1970
    %v1972 = vpop.f32.mrf.mxu0
    %v1973 = vadd.f32 %v1840, %v1972
    %v1974 = vpop.f32.mrf.mxu0
    %v1975 = vadd.f32 %v1842, %v1974
    %1976 = vdwg.mxu0
    %1977 = vmatprep.subr.mxu0 0.0
    %1978 = vmatpush1.msra.mxu0 0.0
    %1979 = vmatprep.subr.mxu0 0.0
    %1980 = vmatpush1.msra.mxu0 0.0
    %1981 = vmatprep.subr.mxu0 0.0
    %1982 = vmatpush1.msra.mxu0 0.0
    %1983 = vmatprep.subr.mxu0 0.0
    %1984 = vmatpush1.msra.mxu0 0.0
    %1985 = vmatprep.subr.mxu0 0.0
    %1986 = vmatpush1.msra.mxu0 0.0
    %1987 = vmatprep.subr.mxu0 0.0
    %1988 = vmatpush1.msra.mxu0 0.0
    %1989 = vmatprep.subr.mxu0 0.0
    %1990 = vmatpush1.msra.mxu0 0.0
    %1991 = vmatprep.subr.mxu0 0.0
    %1992 = vmatpush1.msra.mxu0 0.0
    %1993 = vmatprep.subr.mxu0 0.0
    %1994 = vmatpush1.msra.mxu0 0.0
    %1995 = vmatprep.subr.mxu0 0.0
    %1996 = vmatpush1.msra.mxu0 0.0
    %1997 = vmatprep.subr.mxu0 0.0
    %1998 = vmatpush1.msra.mxu0 0.0
    %1999 = vmatprep.subr.mxu0 0.0
    %2000 = vmatpush1.msra.mxu0 0.0
    %v2001 = vand.u32 %v303, 4294901760
    %v2002 = vsub.f32 %v303, %v2001
    %2003 = vmatprep.subr.mxu0 %v2002
    %v2004 = vand.u32 %v302, 4294901760
    %v2005 = vsub.f32 %v302, %v2004
    %2006 = vmatpush1.msra.mxu0 %v2005
    %v2007 = vand.u32 %v295, 4294901760
    %v2008 = vsub.f32 %v295, %v2007
    %2009 = vmatprep.subr.mxu0 %v2008
    %v2010 = vand.u32 %v294, 4294901760
    %v2011 = vsub.f32 %v294, %v2010
    %2012 = vmatpush1.msra.mxu0 %v2011
    %v2013 = vand.u32 %v287, 4294901760
    %v2014 = vsub.f32 %v287, %v2013
    %2015 = vmatprep.subr.mxu0 %v2014
    %v2016 = vand.u32 %v286, 4294901760
    %v2017 = vsub.f32 %v286, %v2016
    %2018 = vmatpush1.msra.mxu0 %v2017
    %v2019 = vand.u32 %v279, 4294901760
    %v2020 = vsub.f32 %v279, %v2019
    %2021 = vmatprep.subr.mxu0 %v2020
    %v2022 = vand.u32 %v278, 4294901760
    %v2023 = vsub.f32 %v278, %v2022
    %2024 = vmatpush1.msra.mxu0 %v2023
    %2025 = vmatprep.subr.mxu0 0.0
    %2026 = vmatpush2.msra.mxu0 0.0
    %2027 = vmatprep.subr.mxu0 0.0
    %2028 = vmatpush2.msra.mxu0 0.0
    %2029 = vmatprep.subr.mxu0 0.0
    %2030 = vmatpush2.msra.mxu0 0.0
    %2031 = vmatprep.subr.mxu0 0.0
    %2032 = vmatpush2.msra.mxu0 0.0
    %2033 = vmatprep.subr.mxu0 0.0
    %2034 = vmatpush2.msra.mxu0 0.0
    %2035 = vmatprep.subr.mxu0 0.0
    %2036 = vmatpush2.msra.mxu0 0.0
    %2037 = vmatprep.subr.mxu0 0.0
    %2038 = vmatpush2.msra.mxu0 0.0
    %2039 = vmatprep.subr.mxu0 0.0
    %2040 = vmatpush2.msra.mxu0 0.0
    %2041 = vmatprep.subr.mxu0 0.0
    %2042 = vmatpush2.msra.mxu0 0.0
    %2043 = vmatprep.subr.mxu0 0.0
    %2044 = vmatpush2.msra.mxu0 0.0
    %2045 = vmatprep.subr.mxu0 0.0
    %2046 = vmatpush2.msra.mxu0 0.0
    %2047 = vmatprep.subr.mxu0 0.0
    %2048 = vmatpush2.msra.mxu0 0.0
    %2049 = vmatprep.subr.mxu0 0.0
    %2050 = vmatpush2.msra.mxu0 0.0
    %2051 = vmatprep.subr.mxu0 0.0
    %2052 = vmatpush2.msra.mxu0 0.0
    %2053 = vmatprep.subr.mxu0 0.0
    %2054 = vmatpush2.msra.mxu0 0.0
    %2055 = vmatprep.subr.mxu0 0.0
    %2056 = vmatpush2.msra.mxu0 0.0
    %2057 = vmatprep.mubr.f32.mxu0 0.0
    %v2058 = vand.u32 %v336, 4294901760
    %v2059 = vsub.f32 %v336, %v2058
    %2060 = vmatmul.mubr.f32.gmra.mxu0 %v2059
    %v2061 = vpop.f32.mrf.mxu0
    %v2062 = vadd.f32 %v1952, %v2061
    %v2063 = vpop.f32.mrf.mxu0
    %v2064 = vadd.f32 %v1954, %v2063
    %2065 = vmatprep.mubr.f32.mxu0 0.0
    %v2066 = vand.u32 %v339, 4294901760
    %v2067 = vsub.f32 %v339, %v2066
    %2068 = vmatmul.mubr.f32.gmra.mxu0 %v2067
    %v2069 = vpop.f32.mrf.mxu0
    %v2070 = vadd.f32 %v1959, %v2069
    %v2071 = vpop.f32.mrf.mxu0
    %v2072 = vadd.f32 %v1961, %v2071
    %2073 = vmatprep.mubr.f32.mxu0 0.0
    %v2074 = vand.u32 %v342, 4294901760
    %v2075 = vsub.f32 %v342, %v2074
    %2076 = vmatmul.mubr.f32.gmra.mxu0 %v2075
    %v2077 = vpop.f32.mrf.mxu0
    %v2078 = vadd.f32 %v1966, %v2077
    %v2079 = vpop.f32.mrf.mxu0
    %v2080 = vadd.f32 %v1968, %v2079
    %2081 = vmatprep.mubr.f32.mxu0 0.0
    %v2082 = vand.u32 %v345, 4294901760
    %v2083 = vsub.f32 %v345, %v2082
    %2084 = vmatmul.mubr.f32.gmra.mxu0 %v2083
    %v2085 = vpop.f32.mrf.mxu0
    %v2086 = vadd.f32 %v1973, %v2085
    %v2087 = vpop.f32.mrf.mxu0
    %v2088 = vadd.f32 %v1975, %v2087
    %2089 = vdwg.mxu0
    %2090 = vmatprep.subr.mxu0 0.0
    %2091 = vmatpush1.msra.mxu0 0.0
    %2092 = vmatprep.subr.mxu0 0.0
    %2093 = vmatpush1.msra.mxu0 0.0
    %2094 = vmatprep.subr.mxu0 0.0
    %2095 = vmatpush1.msra.mxu0 0.0
    %2096 = vmatprep.subr.mxu0 0.0
    %2097 = vmatpush1.msra.mxu0 0.0
    %2098 = vmatprep.subr.mxu0 0.0
    %2099 = vmatpush1.msra.mxu0 0.0
    %2100 = vmatprep.subr.mxu0 0.0
    %2101 = vmatpush1.msra.mxu0 0.0
    %2102 = vmatprep.subr.mxu0 0.0
    %2103 = vmatpush1.msra.mxu0 0.0
    %2104 = vmatprep.subr.mxu0 0.0
    %2105 = vmatpush1.msra.mxu0 0.0
    %2106 = vmatprep.subr.mxu0 0.0
    %2107 = vmatpush1.msra.mxu0 0.0
    %2108 = vmatprep.subr.mxu0 0.0
    %2109 = vmatpush1.msra.mxu0 0.0
    %2110 = vmatprep.subr.mxu0 0.0
    %2111 = vmatpush1.msra.mxu0 0.0
    %2112 = vmatprep.subr.mxu0 0.0
    %2113 = vmatpush1.msra.mxu0 0.0
    %v2114 = vand.u32 %v303, 4294901760
    %2115 = vmatprep.subr.mxu0 %v2114
    %v2116 = vand.u32 %v302, 4294901760
    %2117 = vmatpush1.msra.mxu0 %v2116
    %v2118 = vand.u32 %v295, 4294901760
    %2119 = vmatprep.subr.mxu0 %v2118
    %v2120 = vand.u32 %v294, 4294901760
    %2121 = vmatpush1.msra.mxu0 %v2120
    %v2122 = vand.u32 %v287, 4294901760
    %2123 = vmatprep.subr.mxu0 %v2122
    %v2124 = vand.u32 %v286, 4294901760
    %2125 = vmatpush1.msra.mxu0 %v2124
    %v2126 = vand.u32 %v279, 4294901760
    %2127 = vmatprep.subr.mxu0 %v2126
    %v2128 = vand.u32 %v278, 4294901760
    %2129 = vmatpush1.msra.mxu0 %v2128
    %2130 = vmatprep.subr.mxu0 0.0
    %2131 = vmatpush2.msra.mxu0 0.0
    %2132 = vmatprep.subr.mxu0 0.0
    %2133 = vmatpush2.msra.mxu0 0.0
    %2134 = vmatprep.subr.mxu0 0.0
    %2135 = vmatpush2.msra.mxu0 0.0
    %2136 = vmatprep.subr.mxu0 0.0
    %2137 = vmatpush2.msra.mxu0 0.0
    %2138 = vmatprep.subr.mxu0 0.0
    %2139 = vmatpush2.msra.mxu0 0.0
    %2140 = vmatprep.subr.mxu0 0.0
    %2141 = vmatpush2.msra.mxu0 0.0
    %2142 = vmatprep.subr.mxu0 0.0
    %2143 = vmatpush2.msra.mxu0 0.0
    %2144 = vmatprep.subr.mxu0 0.0
    %2145 = vmatpush2.msra.mxu0 0.0
    %2146 = vmatprep.subr.mxu0 0.0
    %2147 = vmatpush2.msra.mxu0 0.0
    %2148 = vmatprep.subr.mxu0 0.0
    %2149 = vmatpush2.msra.mxu0 0.0
    %2150 = vmatprep.subr.mxu0 0.0
    %2151 = vmatpush2.msra.mxu0 0.0
    %2152 = vmatprep.subr.mxu0 0.0
    %2153 = vmatpush2.msra.mxu0 0.0
    %2154 = vmatprep.subr.mxu0 0.0
    %2155 = vmatpush2.msra.mxu0 0.0
    %2156 = vmatprep.subr.mxu0 0.0
    %2157 = vmatpush2.msra.mxu0 0.0
    %2158 = vmatprep.subr.mxu0 0.0
    %2159 = vmatpush2.msra.mxu0 0.0
    %2160 = vmatprep.subr.mxu0 0.0
    %2161 = vmatpush2.msra.mxu0 0.0
    %2162 = vmatprep.mubr.f32.mxu0 0.0
    %v2163 = vand.u32 %v336, 4294901760
    %v2164 = vsub.f32 %v336, %v2163
    %v2165 = vand.u32 %v2164, 4294901760
    %2166 = vmatmul.mubr.f32.gmra.mxu0 %v2165
    %v2167 = vpop.f32.mrf.mxu0
    %v2168 = vadd.f32 %v2062, %v2167
    %v2169 = vpop.f32.mrf.mxu0
    %v2170 = vadd.f32 %v2064, %v2169
    %2171 = vmatprep.mubr.f32.mxu0 0.0
    %v2172 = vand.u32 %v339, 4294901760
    %v2173 = vsub.f32 %v339, %v2172
    %v2174 = vand.u32 %v2173, 4294901760
    %2175 = vmatmul.mubr.f32.gmra.mxu0 %v2174
    %v2176 = vpop.f32.mrf.mxu0
    %v2177 = vadd.f32 %v2070, %v2176
    %v2178 = vpop.f32.mrf.mxu0
    %v2179 = vadd.f32 %v2072, %v2178
    %2180 = vmatprep.mubr.f32.mxu0 0.0
    %v2181 = vand.u32 %v342, 4294901760
    %v2182 = vsub.f32 %v342, %v2181
    %v2183 = vand.u32 %v2182, 4294901760
    %2184 = vmatmul.mubr.f32.gmra.mxu0 %v2183
    %v2185 = vpop.f32.mrf.mxu0
    %v2186 = vadd.f32 %v2078, %v2185
    %v2187 = vpop.f32.mrf.mxu0
    %v2188 = vadd.f32 %v2080, %v2187
    %2189 = vmatprep.mubr.f32.mxu0 0.0
    %v2190 = vand.u32 %v345, 4294901760
    %v2191 = vsub.f32 %v345, %v2190
    %v2192 = vand.u32 %v2191, 4294901760
    %2193 = vmatmul.mubr.f32.gmra.mxu0 %v2192
    %v2194 = vpop.f32.mrf.mxu0
    %v2195 = vadd.f32 %v2086, %v2194
    %v2196 = vpop.f32.mrf.mxu0
    %v2197 = vadd.f32 %v2088, %v2196
    %2198 = vdwg.mxu0
    %2199 = vmatprep.subr.mxu0 0.0
    %2200 = vmatpush1.msra.mxu0 0.0
    %2201 = vmatprep.subr.mxu0 0.0
    %2202 = vmatpush1.msra.mxu0 0.0
    %2203 = vmatprep.subr.mxu0 0.0
    %2204 = vmatpush1.msra.mxu0 0.0
    %2205 = vmatprep.subr.mxu0 0.0
    %2206 = vmatpush1.msra.mxu0 0.0
    %2207 = vmatprep.subr.mxu0 0.0
    %2208 = vmatpush1.msra.mxu0 0.0
    %2209 = vmatprep.subr.mxu0 0.0
    %2210 = vmatpush1.msra.mxu0 0.0
    %2211 = vmatprep.subr.mxu0 0.0
    %2212 = vmatpush1.msra.mxu0 0.0
    %2213 = vmatprep.subr.mxu0 0.0
    %2214 = vmatpush1.msra.mxu0 0.0
    %2215 = vmatprep.subr.mxu0 0.0
    %2216 = vmatpush1.msra.mxu0 0.0
    %2217 = vmatprep.subr.mxu0 0.0
    %2218 = vmatpush1.msra.mxu0 0.0
    %2219 = vmatprep.subr.mxu0 0.0
    %2220 = vmatpush1.msra.mxu0 0.0
    %2221 = vmatprep.subr.mxu0 0.0
    %2222 = vmatpush1.msra.mxu0 0.0
    %v2223 = vand.u32 %v303, 4294901760
    %v2224 = vsub.f32 %v303, %v2223
    %v2225 = vand.u32 %v2224, 4294901760
    %2226 = vmatprep.subr.mxu0 %v2225
    %v2227 = vand.u32 %v302, 4294901760
    %v2228 = vsub.f32 %v302, %v2227
    %v2229 = vand.u32 %v2228, 4294901760
    %2230 = vmatpush1.msra.mxu0 %v2229
    %v2231 = vand.u32 %v295, 4294901760
    %v2232 = vsub.f32 %v295, %v2231
    %v2233 = vand.u32 %v2232, 4294901760
    %2234 = vmatprep.subr.mxu0 %v2233
    %v2235 = vand.u32 %v294, 4294901760
    %v2236 = vsub.f32 %v294, %v2235
    %v2237 = vand.u32 %v2236, 4294901760
    %2238 = vmatpush1.msra.mxu0 %v2237
    %v2239 = vand.u32 %v287, 4294901760
    %v2240 = vsub.f32 %v287, %v2239
    %v2241 = vand.u32 %v2240, 4294901760
    %2242 = vmatprep.subr.mxu0 %v2241
    %v2243 = vand.u32 %v286, 4294901760
    %v2244 = vsub.f32 %v286, %v2243
    %v2245 = vand.u32 %v2244, 4294901760
    %2246 = vmatpush1.msra.mxu0 %v2245
    %v2247 = vand.u32 %v279, 4294901760
    %v2248 = vsub.f32 %v279, %v2247
    %v2249 = vand.u32 %v2248, 4294901760
    %2250 = vmatprep.subr.mxu0 %v2249
    %v2251 = vand.u32 %v278, 4294901760
    %v2252 = vsub.f32 %v278, %v2251
    %v2253 = vand.u32 %v2252, 4294901760
    %2254 = vmatpush1.msra.mxu0 %v2253
    %2255 = vmatprep.subr.mxu0 0.0
    %2256 = vmatpush2.msra.mxu0 0.0
    %2257 = vmatprep.subr.mxu0 0.0
    %2258 = vmatpush2.msra.mxu0 0.0
    %2259 = vmatprep.subr.mxu0 0.0
    %2260 = vmatpush2.msra.mxu0 0.0
    %2261 = vmatprep.subr.mxu0 0.0
    %2262 = vmatpush2.msra.mxu0 0.0
    %2263 = vmatprep.subr.mxu0 0.0
    %2264 = vmatpush2.msra.mxu0 0.0
    %2265 = vmatprep.subr.mxu0 0.0
    %2266 = vmatpush2.msra.mxu0 0.0
    %2267 = vmatprep.subr.mxu0 0.0
    %2268 = vmatpush2.msra.mxu0 0.0
    %2269 = vmatprep.subr.mxu0 0.0
    %2270 = vmatpush2.msra.mxu0 0.0
    %2271 = vmatprep.subr.mxu0 0.0
    %2272 = vmatpush2.msra.mxu0 0.0
    %2273 = vmatprep.subr.mxu0 0.0
    %2274 = vmatpush2.msra.mxu0 0.0
    %2275 = vmatprep.subr.mxu0 0.0
    %2276 = vmatpush2.msra.mxu0 0.0
    %2277 = vmatprep.subr.mxu0 0.0
    %2278 = vmatpush2.msra.mxu0 0.0
    %2279 = vmatprep.subr.mxu0 0.0
    %2280 = vmatpush2.msra.mxu0 0.0
    %2281 = vmatprep.subr.mxu0 0.0
    %2282 = vmatpush2.msra.mxu0 0.0
    %2283 = vmatprep.subr.mxu0 0.0
    %2284 = vmatpush2.msra.mxu0 0.0
    %2285 = vmatprep.subr.mxu0 0.0
    %2286 = vmatpush2.msra.mxu0 0.0
    %2287 = vmatprep.mubr.f32.mxu0 0.0
    %v2288 = vand.u32 %v336, 4294901760
    %2289 = vmatmul.mubr.f32.gmra.mxu0 %v2288
    %v2290 = vpop.f32.mrf.mxu0
    %v2291 = vadd.f32 %v2168, %v2290
    %v2292 = vpop.f32.mrf.mxu0
    %v2293 = vadd.f32 %v2170, %v2292
    %2294 = vmatprep.mubr.f32.mxu0 0.0
    %v2295 = vand.u32 %v339, 4294901760
    %2296 = vmatmul.mubr.f32.gmra.mxu0 %v2295
    %v2297 = vpop.f32.mrf.mxu0
    %v2298 = vadd.f32 %v2177, %v2297
    %v2299 = vpop.f32.mrf.mxu0
    %v2300 = vadd.f32 %v2179, %v2299
    %2301 = vmatprep.mubr.f32.mxu0 0.0
    %v2302 = vand.u32 %v342, 4294901760
    %2303 = vmatmul.mubr.f32.gmra.mxu0 %v2302
    %v2304 = vpop.f32.mrf.mxu0
    %v2305 = vadd.f32 %v2186, %v2304
    %v2306 = vpop.f32.mrf.mxu0
    %v2307 = vadd.f32 %v2188, %v2306
    %2308 = vmatprep.mubr.f32.mxu0 0.0
    %v2309 = vand.u32 %v345, 4294901760
    %2310 = vmatmul.mubr.f32.gmra.mxu0 %v2309
    %v2311 = vpop.f32.mrf.mxu0
    %v2312 = vadd.f32 %v2195, %v2311
    %v2313 = vpop.f32.mrf.mxu0
    %v2314 = vadd.f32 %v2197, %v2313
    %2315 = vdwg.mxu0
    %2316 = vmatprep.subr.mxu0 0.0
    %2317 = vmatpush1.msra.mxu0 0.0
    %2318 = vmatprep.subr.mxu0 0.0
    %2319 = vmatpush1.msra.mxu0 0.0
    %2320 = vmatprep.subr.mxu0 0.0
    %2321 = vmatpush1.msra.mxu0 0.0
    %2322 = vmatprep.subr.mxu0 0.0
    %2323 = vmatpush1.msra.mxu0 0.0
    %2324 = vmatprep.subr.mxu0 0.0
    %2325 = vmatpush1.msra.mxu0 0.0
    %2326 = vmatprep.subr.mxu0 0.0
    %2327 = vmatpush1.msra.mxu0 0.0
    %2328 = vmatprep.subr.mxu0 0.0
    %2329 = vmatpush1.msra.mxu0 0.0
    %2330 = vmatprep.subr.mxu0 0.0
    %2331 = vmatpush1.msra.mxu0 0.0
    %2332 = vmatprep.subr.mxu0 0.0
    %2333 = vmatpush1.msra.mxu0 0.0
    %2334 = vmatprep.subr.mxu0 0.0
    %2335 = vmatpush1.msra.mxu0 0.0
    %2336 = vmatprep.subr.mxu0 0.0
    %2337 = vmatpush1.msra.mxu0 0.0
    %2338 = vmatprep.subr.mxu0 0.0
    %2339 = vmatpush1.msra.mxu0 0.0
    %v2340 = vand.u32 %v303, 4294901760
    %2341 = vmatprep.subr.mxu0 %v2340
    %v2342 = vand.u32 %v302, 4294901760
    %2343 = vmatpush1.msra.mxu0 %v2342
    %v2344 = vand.u32 %v295, 4294901760
    %2345 = vmatprep.subr.mxu0 %v2344
    %v2346 = vand.u32 %v294, 4294901760
    %2347 = vmatpush1.msra.mxu0 %v2346
    %v2348 = vand.u32 %v287, 4294901760
    %2349 = vmatprep.subr.mxu0 %v2348
    %v2350 = vand.u32 %v286, 4294901760
    %2351 = vmatpush1.msra.mxu0 %v2350
    %v2352 = vand.u32 %v279, 4294901760
    %2353 = vmatprep.subr.mxu0 %v2352
    %v2354 = vand.u32 %v278, 4294901760
    %2355 = vmatpush1.msra.mxu0 %v2354
    %2356 = vmatprep.subr.mxu0 0.0
    %2357 = vmatpush2.msra.mxu0 0.0
    %2358 = vmatprep.subr.mxu0 0.0
    %2359 = vmatpush2.msra.mxu0 0.0
    %2360 = vmatprep.subr.mxu0 0.0
    %2361 = vmatpush2.msra.mxu0 0.0
    %2362 = vmatprep.subr.mxu0 0.0
    %2363 = vmatpush2.msra.mxu0 0.0
    %2364 = vmatprep.subr.mxu0 0.0
    %2365 = vmatpush2.msra.mxu0 0.0
    %2366 = vmatprep.subr.mxu0 0.0
    %2367 = vmatpush2.msra.mxu0 0.0
    %2368 = vmatprep.subr.mxu0 0.0
    %2369 = vmatpush2.msra.mxu0 0.0
    %2370 = vmatprep.subr.mxu0 0.0
    %2371 = vmatpush2.msra.mxu0 0.0
    %2372 = vmatprep.subr.mxu0 0.0
    %2373 = vmatpush2.msra.mxu0 0.0
    %2374 = vmatprep.subr.mxu0 0.0
    %2375 = vmatpush2.msra.mxu0 0.0
    %2376 = vmatprep.subr.mxu0 0.0
    %2377 = vmatpush2.msra.mxu0 0.0
    %2378 = vmatprep.subr.mxu0 0.0
    %2379 = vmatpush2.msra.mxu0 0.0
    %2380 = vmatprep.subr.mxu0 0.0
    %2381 = vmatpush2.msra.mxu0 0.0
    %2382 = vmatprep.subr.mxu0 0.0
    %2383 = vmatpush2.msra.mxu0 0.0
    %2384 = vmatprep.subr.mxu0 0.0
    %2385 = vmatpush2.msra.mxu0 0.0
    %2386 = vmatprep.subr.mxu0 0.0
    %2387 = vmatpush2.msra.mxu0 0.0
    %2388 = vmatprep.mubr.f32.mxu0 0.0
    %v2389 = vand.u32 %v336, 4294901760
    %2390 = vmatmul.mubr.f32.gmra.mxu0 %v2389
    %v2391 = vpop.f32.mrf.mxu0
    %v2392 = vadd.f32 %v2291, %v2391
    %v2393 = vpop.f32.mrf.mxu0
    %v2394 = vadd.f32 %v2293, %v2393
    %2395 = vmatprep.mubr.f32.mxu0 0.0
    %v2396 = vand.u32 %v339, 4294901760
    %2397 = vmatmul.mubr.f32.gmra.mxu0 %v2396
    %v2398 = vpop.f32.mrf.mxu0
    %v2399 = vadd.f32 %v2298, %v2398
    %v2400 = vpop.f32.mrf.mxu0
    %v2401 = vadd.f32 %v2300, %v2400
    %2402 = vmatprep.mubr.f32.mxu0 0.0
    %v2403 = vand.u32 %v342, 4294901760
    %2404 = vmatmul.mubr.f32.gmra.mxu0 %v2403
    %v2405 = vpop.f32.mrf.mxu0
    %v2406 = vadd.f32 %v2305, %v2405
    %v2407 = vpop.f32.mrf.mxu0
    %v2408 = vadd.f32 %v2307, %v2407
    %2409 = vmatprep.mubr.f32.mxu0 0.0
    %v2410 = vand.u32 %v345, 4294901760
    %2411 = vmatmul.mubr.f32.gmra.mxu0 %v2410
    %v2412 = vpop.f32.mrf.mxu0
    %v2413 = vadd.f32 %v2312, %v2412
    %v2414 = vpop.f32.mrf.mxu0
    %v2415 = vadd.f32 %v2314, %v2414
    %2416 = vdwg.mxu0
    %2417 = vmatprep.subr.mxu0 0.0
    %2418 = vmatpush1.msra.mxu0 0.0
    %2419 = vmatprep.subr.mxu0 0.0
    %2420 = vmatpush1.msra.mxu0 0.0
    %2421 = vmatprep.subr.mxu0 0.0
    %2422 = vmatpush1.msra.mxu0 0.0
    %2423 = vmatprep.subr.mxu0 0.0
    %2424 = vmatpush1.msra.mxu0 0.0
    %2425 = vmatprep.subr.mxu0 0.0
    %2426 = vmatpush1.msra.mxu0 0.0
    %2427 = vmatprep.subr.mxu0 0.0
    %2428 = vmatpush1.msra.mxu0 0.0
    %2429 = vmatprep.subr.mxu0 0.0
    %2430 = vmatpush1.msra.mxu0 0.0
    %2431 = vmatprep.subr.mxu0 0.0
    %2432 = vmatpush1.msra.mxu0 0.0
    %2433 = vmatprep.subr.mxu0 0.0
    %2434 = vmatpush1.msra.mxu0 0.0
    %2435 = vmatprep.subr.mxu0 0.0
    %2436 = vmatpush1.msra.mxu0 0.0
    %2437 = vmatprep.subr.mxu0 0.0
    %2438 = vmatpush1.msra.mxu0 0.0
    %2439 = vmatprep.subr.mxu0 0.0
    %2440 = vmatpush1.msra.mxu0 0.0
    %v2441 = vand.u32 %v305, 4294901760
    %2442 = vmatprep.subr.mxu0 %v2441
    %v2443 = vand.u32 %v304, 4294901760
    %2444 = vmatpush1.msra.mxu0 %v2443
    %v2445 = vand.u32 %v297, 4294901760
    %2446 = vmatprep.subr.mxu0 %v2445
    %v2447 = vand.u32 %v296, 4294901760
    %2448 = vmatpush1.msra.mxu0 %v2447
    %v2449 = vand.u32 %v289, 4294901760
    %2450 = vmatprep.subr.mxu0 %v2449
    %v2451 = vand.u32 %v288, 4294901760
    %2452 = vmatpush1.msra.mxu0 %v2451
    %v2453 = vand.u32 %v281, 4294901760
    %2454 = vmatprep.subr.mxu0 %v2453
    %v2455 = vand.u32 %v280, 4294901760
    %2456 = vmatpush1.msra.mxu0 %v2455
    %2457 = vmatprep.subr.mxu0 0.0
    %2458 = vmatpush2.msra.mxu0 0.0
    %2459 = vmatprep.subr.mxu0 0.0
    %2460 = vmatpush2.msra.mxu0 0.0
    %2461 = vmatprep.subr.mxu0 0.0
    %2462 = vmatpush2.msra.mxu0 0.0
    %2463 = vmatprep.subr.mxu0 0.0
    %2464 = vmatpush2.msra.mxu0 0.0
    %2465 = vmatprep.subr.mxu0 0.0
    %2466 = vmatpush2.msra.mxu0 0.0
    %2467 = vmatprep.subr.mxu0 0.0
    %2468 = vmatpush2.msra.mxu0 0.0
    %2469 = vmatprep.subr.mxu0 0.0
    %2470 = vmatpush2.msra.mxu0 0.0
    %2471 = vmatprep.subr.mxu0 0.0
    %2472 = vmatpush2.msra.mxu0 0.0
    %2473 = vmatprep.subr.mxu0 0.0
    %2474 = vmatpush2.msra.mxu0 0.0
    %2475 = vmatprep.subr.mxu0 0.0
    %2476 = vmatpush2.msra.mxu0 0.0
    %2477 = vmatprep.subr.mxu0 0.0
    %2478 = vmatpush2.msra.mxu0 0.0
    %2479 = vmatprep.subr.mxu0 0.0
    %2480 = vmatpush2.msra.mxu0 0.0
    %2481 = vmatprep.subr.mxu0 0.0
    %2482 = vmatpush2.msra.mxu0 0.0
    %2483 = vmatprep.subr.mxu0 0.0
    %2484 = vmatpush2.msra.mxu0 0.0
    %2485 = vmatprep.subr.mxu0 0.0
    %2486 = vmatpush2.msra.mxu0 0.0
    %2487 = vmatprep.subr.mxu0 0.0
    %2488 = vmatpush2.msra.mxu0 0.0
    %2489 = vmatprep.mubr.f32.mxu0 0.0
    %v2490 = vand.u32 %v336, 4294901760
    %v2491 = vsub.f32 %v336, %v2490
    %v2492 = vand.u32 %v2491, 4294901760
    %v2493 = vsub.f32 %v2491, %v2492
    %v2494 = vand.u32 %v2493, 4294901760
    %2495 = vmatmul.mubr.f32.gmra.mxu0 %v2494
    %v2496 = vpop.f32.mrf.mxu0
    %v2497 = vadd.f32 %v317, %v2496
    %v2498 = vpop.f32.mrf.mxu0
    %v2499 = vadd.f32 %v317, %v2498
    %2500 = vmatprep.mubr.f32.mxu0 0.0
    %v2501 = vand.u32 %v339, 4294901760
    %v2502 = vsub.f32 %v339, %v2501
    %v2503 = vand.u32 %v2502, 4294901760
    %v2504 = vsub.f32 %v2502, %v2503
    %v2505 = vand.u32 %v2504, 4294901760
    %2506 = vmatmul.mubr.f32.gmra.mxu0 %v2505
    %v2507 = vpop.f32.mrf.mxu0
    %v2508 = vadd.f32 %v322, %v2507
    %v2509 = vpop.f32.mrf.mxu0
    %v2510 = vadd.f32 %v322, %v2509
    %2511 = vmatprep.mubr.f32.mxu0 0.0
    %v2512 = vand.u32 %v342, 4294901760
    %v2513 = vsub.f32 %v342, %v2512
    %v2514 = vand.u32 %v2513, 4294901760
    %v2515 = vsub.f32 %v2513, %v2514
    %v2516 = vand.u32 %v2515, 4294901760
    %2517 = vmatmul.mubr.f32.gmra.mxu0 %v2516
    %v2518 = vpop.f32.mrf.mxu0
    %v2519 = vadd.f32 %v327, %v2518
    %v2520 = vpop.f32.mrf.mxu0
    %v2521 = vadd.f32 %v327, %v2520
    %2522 = vmatprep.mubr.f32.mxu0 0.0
    %v2523 = vand.u32 %v345, 4294901760
    %v2524 = vsub.f32 %v345, %v2523
    %v2525 = vand.u32 %v2524, 4294901760
    %v2526 = vsub.f32 %v2524, %v2525
    %v2527 = vand.u32 %v2526, 4294901760
    %2528 = vmatmul.mubr.f32.gmra.mxu0 %v2527
    %v2529 = vpop.f32.mrf.mxu0
    %v2530 = vadd.f32 %v332, %v2529
    %v2531 = vpop.f32.mrf.mxu0
    %v2532 = vadd.f32 %v332, %v2531
    %2533 = vdwg.mxu0
    %2534 = vmatprep.subr.mxu0 0.0
    %2535 = vmatpush1.msra.mxu0 0.0
    %2536 = vmatprep.subr.mxu0 0.0
    %2537 = vmatpush1.msra.mxu0 0.0
    %2538 = vmatprep.subr.mxu0 0.0
    %2539 = vmatpush1.msra.mxu0 0.0
    %2540 = vmatprep.subr.mxu0 0.0
    %2541 = vmatpush1.msra.mxu0 0.0
    %2542 = vmatprep.subr.mxu0 0.0
    %2543 = vmatpush1.msra.mxu0 0.0
    %2544 = vmatprep.subr.mxu0 0.0
    %2545 = vmatpush1.msra.mxu0 0.0
    %2546 = vmatprep.subr.mxu0 0.0
    %2547 = vmatpush1.msra.mxu0 0.0
    %2548 = vmatprep.subr.mxu0 0.0
    %2549 = vmatpush1.msra.mxu0 0.0
    %2550 = vmatprep.subr.mxu0 0.0
    %2551 = vmatpush1.msra.mxu0 0.0
    %2552 = vmatprep.subr.mxu0 0.0
    %2553 = vmatpush1.msra.mxu0 0.0
    %2554 = vmatprep.subr.mxu0 0.0
    %2555 = vmatpush1.msra.mxu0 0.0
    %2556 = vmatprep.subr.mxu0 0.0
    %2557 = vmatpush1.msra.mxu0 0.0
    %v2558 = vand.u32 %v305, 4294901760
    %v2559 = vsub.f32 %v305, %v2558
    %v2560 = vand.u32 %v2559, 4294901760
    %v2561 = vsub.f32 %v2559, %v2560
    %v2562 = vand.u32 %v2561, 4294901760
    %2563 = vmatprep.subr.mxu0 %v2562
    %v2564 = vand.u32 %v304, 4294901760
    %v2565 = vsub.f32 %v304, %v2564
    %v2566 = vand.u32 %v2565, 4294901760
    %v2567 = vsub.f32 %v2565, %v2566
    %v2568 = vand.u32 %v2567, 4294901760
    %2569 = vmatpush1.msra.mxu0 %v2568
    %v2570 = vand.u32 %v297, 4294901760
    %v2571 = vsub.f32 %v297, %v2570
    %v2572 = vand.u32 %v2571, 4294901760
    %v2573 = vsub.f32 %v2571, %v2572
    %v2574 = vand.u32 %v2573, 4294901760
    %2575 = vmatprep.subr.mxu0 %v2574
    %v2576 = vand.u32 %v296, 4294901760
    %v2577 = vsub.f32 %v296, %v2576
    %v2578 = vand.u32 %v2577, 4294901760
    %v2579 = vsub.f32 %v2577, %v2578
    %v2580 = vand.u32 %v2579, 4294901760
    %2581 = vmatpush1.msra.mxu0 %v2580
    %v2582 = vand.u32 %v289, 4294901760
    %v2583 = vsub.f32 %v289, %v2582
    %v2584 = vand.u32 %v2583, 4294901760
    %v2585 = vsub.f32 %v2583, %v2584
    %v2586 = vand.u32 %v2585, 4294901760
    %2587 = vmatprep.subr.mxu0 %v2586
    %v2588 = vand.u32 %v288, 4294901760
    %v2589 = vsub.f32 %v288, %v2588
    %v2590 = vand.u32 %v2589, 4294901760
    %v2591 = vsub.f32 %v2589, %v2590
    %v2592 = vand.u32 %v2591, 4294901760
    %2593 = vmatpush1.msra.mxu0 %v2592
    %v2594 = vand.u32 %v281, 4294901760
    %v2595 = vsub.f32 %v281, %v2594
    %v2596 = vand.u32 %v2595, 4294901760
    %v2597 = vsub.f32 %v2595, %v2596
    %v2598 = vand.u32 %v2597, 4294901760
    %2599 = vmatprep.subr.mxu0 %v2598
    %v2600 = vand.u32 %v280, 4294901760
    %v2601 = vsub.f32 %v280, %v2600
    %v2602 = vand.u32 %v2601, 4294901760
    %v2603 = vsub.f32 %v2601, %v2602
    %v2604 = vand.u32 %v2603, 4294901760
    %2605 = vmatpush1.msra.mxu0 %v2604
    %2606 = vmatprep.subr.mxu0 0.0
    %2607 = vmatpush2.msra.mxu0 0.0
    %2608 = vmatprep.subr.mxu0 0.0
    %2609 = vmatpush2.msra.mxu0 0.0
    %2610 = vmatprep.subr.mxu0 0.0
    %2611 = vmatpush2.msra.mxu0 0.0
    %2612 = vmatprep.subr.mxu0 0.0
    %2613 = vmatpush2.msra.mxu0 0.0
    %2614 = vmatprep.subr.mxu0 0.0
    %2615 = vmatpush2.msra.mxu0 0.0
    %2616 = vmatprep.subr.mxu0 0.0
    %2617 = vmatpush2.msra.mxu0 0.0
    %2618 = vmatprep.subr.mxu0 0.0
    %2619 = vmatpush2.msra.mxu0 0.0
    %2620 = vmatprep.subr.mxu0 0.0
    %2621 = vmatpush2.msra.mxu0 0.0
    %2622 = vmatprep.subr.mxu0 0.0
    %2623 = vmatpush2.msra.mxu0 0.0
    %2624 = vmatprep.subr.mxu0 0.0
    %2625 = vmatpush2.msra.mxu0 0.0
    %2626 = vmatprep.subr.mxu0 0.0
    %2627 = vmatpush2.msra.mxu0 0.0
    %2628 = vmatprep.subr.mxu0 0.0
    %2629 = vmatpush2.msra.mxu0 0.0
    %2630 = vmatprep.subr.mxu0 0.0
    %2631 = vmatpush2.msra.mxu0 0.0
    %2632 = vmatprep.subr.mxu0 0.0
    %2633 = vmatpush2.msra.mxu0 0.0
    %2634 = vmatprep.subr.mxu0 0.0
    %2635 = vmatpush2.msra.mxu0 0.0
    %2636 = vmatprep.subr.mxu0 0.0
    %2637 = vmatpush2.msra.mxu0 0.0
    %2638 = vmatprep.mubr.f32.mxu0 0.0
    %v2639 = vand.u32 %v336, 4294901760
    %2640 = vmatmul.mubr.f32.gmra.mxu0 %v2639
    %v2641 = vpop.f32.mrf.mxu0
    %v2642 = vadd.f32 %v2497, %v2641
    %v2643 = vpop.f32.mrf.mxu0
    %v2644 = vadd.f32 %v2499, %v2643
    %2645 = vmatprep.mubr.f32.mxu0 0.0
    %v2646 = vand.u32 %v339, 4294901760
    %2647 = vmatmul.mubr.f32.gmra.mxu0 %v2646
    %v2648 = vpop.f32.mrf.mxu0
    %v2649 = vadd.f32 %v2508, %v2648
    %v2650 = vpop.f32.mrf.mxu0
    %v2651 = vadd.f32 %v2510, %v2650
    %2652 = vmatprep.mubr.f32.mxu0 0.0
    %v2653 = vand.u32 %v342, 4294901760
    %2654 = vmatmul.mubr.f32.gmra.mxu0 %v2653
    %v2655 = vpop.f32.mrf.mxu0
    %v2656 = vadd.f32 %v2519, %v2655
    %v2657 = vpop.f32.mrf.mxu0
    %v2658 = vadd.f32 %v2521, %v2657
    %2659 = vmatprep.mubr.f32.mxu0 0.0
    %v2660 = vand.u32 %v345, 4294901760
    %2661 = vmatmul.mubr.f32.gmra.mxu0 %v2660
    %v2662 = vpop.f32.mrf.mxu0
    %v2663 = vadd.f32 %v2530, %v2662
    %v2664 = vpop.f32.mrf.mxu0
    %v2665 = vadd.f32 %v2532, %v2664
    %2666 = vdwg.mxu0
    %2667 = vmatprep.subr.mxu0 0.0
    %2668 = vmatpush1.msra.mxu0 0.0
    %2669 = vmatprep.subr.mxu0 0.0
    %2670 = vmatpush1.msra.mxu0 0.0
    %2671 = vmatprep.subr.mxu0 0.0
    %2672 = vmatpush1.msra.mxu0 0.0
    %2673 = vmatprep.subr.mxu0 0.0
    %2674 = vmatpush1.msra.mxu0 0.0
    %2675 = vmatprep.subr.mxu0 0.0
    %2676 = vmatpush1.msra.mxu0 0.0
    %2677 = vmatprep.subr.mxu0 0.0
    %2678 = vmatpush1.msra.mxu0 0.0
    %2679 = vmatprep.subr.mxu0 0.0
    %2680 = vmatpush1.msra.mxu0 0.0
    %2681 = vmatprep.subr.mxu0 0.0
    %2682 = vmatpush1.msra.mxu0 0.0
    %2683 = vmatprep.subr.mxu0 0.0
    %2684 = vmatpush1.msra.mxu0 0.0
    %2685 = vmatprep.subr.mxu0 0.0
    %2686 = vmatpush1.msra.mxu0 0.0
    %2687 = vmatprep.subr.mxu0 0.0
    %2688 = vmatpush1.msra.mxu0 0.0
    %2689 = vmatprep.subr.mxu0 0.0
    %2690 = vmatpush1.msra.mxu0 0.0
    %v2691 = vand.u32 %v305, 4294901760
    %v2692 = vsub.f32 %v305, %v2691
    %2693 = vmatprep.subr.mxu0 %v2692
    %v2694 = vand.u32 %v304, 4294901760
    %v2695 = vsub.f32 %v304, %v2694
    %2696 = vmatpush1.msra.mxu0 %v2695
    %v2697 = vand.u32 %v297, 4294901760
    %v2698 = vsub.f32 %v297, %v2697
    %2699 = vmatprep.subr.mxu0 %v2698
    %v2700 = vand.u32 %v296, 4294901760
    %v2701 = vsub.f32 %v296, %v2700
    %2702 = vmatpush1.msra.mxu0 %v2701
    %v2703 = vand.u32 %v289, 4294901760
    %v2704 = vsub.f32 %v289, %v2703
    %2705 = vmatprep.subr.mxu0 %v2704
    %v2706 = vand.u32 %v288, 4294901760
    %v2707 = vsub.f32 %v288, %v2706
    %2708 = vmatpush1.msra.mxu0 %v2707
    %v2709 = vand.u32 %v281, 4294901760
    %v2710 = vsub.f32 %v281, %v2709
    %2711 = vmatprep.subr.mxu0 %v2710
    %v2712 = vand.u32 %v280, 4294901760
    %v2713 = vsub.f32 %v280, %v2712
    %2714 = vmatpush1.msra.mxu0 %v2713
    %2715 = vmatprep.subr.mxu0 0.0
    %2716 = vmatpush2.msra.mxu0 0.0
    %2717 = vmatprep.subr.mxu0 0.0
    %2718 = vmatpush2.msra.mxu0 0.0
    %2719 = vmatprep.subr.mxu0 0.0
    %2720 = vmatpush2.msra.mxu0 0.0
    %2721 = vmatprep.subr.mxu0 0.0
    %2722 = vmatpush2.msra.mxu0 0.0
    %2723 = vmatprep.subr.mxu0 0.0
    %2724 = vmatpush2.msra.mxu0 0.0
    %2725 = vmatprep.subr.mxu0 0.0
    %2726 = vmatpush2.msra.mxu0 0.0
    %2727 = vmatprep.subr.mxu0 0.0
    %2728 = vmatpush2.msra.mxu0 0.0
    %2729 = vmatprep.subr.mxu0 0.0
    %2730 = vmatpush2.msra.mxu0 0.0
    %2731 = vmatprep.subr.mxu0 0.0
    %2732 = vmatpush2.msra.mxu0 0.0
    %2733 = vmatprep.subr.mxu0 0.0
    %2734 = vmatpush2.msra.mxu0 0.0
    %2735 = vmatprep.subr.mxu0 0.0
    %2736 = vmatpush2.msra.mxu0 0.0
    %2737 = vmatprep.subr.mxu0 0.0
    %2738 = vmatpush2.msra.mxu0 0.0
    %2739 = vmatprep.subr.mxu0 0.0
    %2740 = vmatpush2.msra.mxu0 0.0
    %2741 = vmatprep.subr.mxu0 0.0
    %2742 = vmatpush2.msra.mxu0 0.0
    %2743 = vmatprep.subr.mxu0 0.0
    %2744 = vmatpush2.msra.mxu0 0.0
    %2745 = vmatprep.subr.mxu0 0.0
    %2746 = vmatpush2.msra.mxu0 0.0
    %2747 = vmatprep.mubr.f32.mxu0 0.0
    %v2748 = vand.u32 %v336, 4294901760
    %v2749 = vsub.f32 %v336, %v2748
    %2750 = vmatmul.mubr.f32.gmra.mxu0 %v2749
    %v2751 = vpop.f32.mrf.mxu0
    %v2752 = vadd.f32 %v2642, %v2751
    %v2753 = vpop.f32.mrf.mxu0
    %v2754 = vadd.f32 %v2644, %v2753
    %2755 = vmatprep.mubr.f32.mxu0 0.0
    %v2756 = vand.u32 %v339, 4294901760
    %v2757 = vsub.f32 %v339, %v2756
    %2758 = vmatmul.mubr.f32.gmra.mxu0 %v2757
    %v2759 = vpop.f32.mrf.mxu0
    %v2760 = vadd.f32 %v2649, %v2759
    %v2761 = vpop.f32.mrf.mxu0
    %v2762 = vadd.f32 %v2651, %v2761
    %2763 = vmatprep.mubr.f32.mxu0 0.0
    %v2764 = vand.u32 %v342, 4294901760
    %v2765 = vsub.f32 %v342, %v2764
    %2766 = vmatmul.mubr.f32.gmra.mxu0 %v2765
    %v2767 = vpop.f32.mrf.mxu0
    %v2768 = vadd.f32 %v2656, %v2767
    %v2769 = vpop.f32.mrf.mxu0
    %v2770 = vadd.f32 %v2658, %v2769
    %2771 = vmatprep.mubr.f32.mxu0 0.0
    %v2772 = vand.u32 %v345, 4294901760
    %v2773 = vsub.f32 %v345, %v2772
    %2774 = vmatmul.mubr.f32.gmra.mxu0 %v2773
    %v2775 = vpop.f32.mrf.mxu0
    %v2776 = vadd.f32 %v2663, %v2775
    %v2777 = vpop.f32.mrf.mxu0
    %v2778 = vadd.f32 %v2665, %v2777
    %2779 = vdwg.mxu0
    %2780 = vmatprep.subr.mxu0 0.0
    %2781 = vmatpush1.msra.mxu0 0.0
    %2782 = vmatprep.subr.mxu0 0.0
    %2783 = vmatpush1.msra.mxu0 0.0
    %2784 = vmatprep.subr.mxu0 0.0
    %2785 = vmatpush1.msra.mxu0 0.0
    %2786 = vmatprep.subr.mxu0 0.0
    %2787 = vmatpush1.msra.mxu0 0.0
    %2788 = vmatprep.subr.mxu0 0.0
    %2789 = vmatpush1.msra.mxu0 0.0
    %2790 = vmatprep.subr.mxu0 0.0
    %2791 = vmatpush1.msra.mxu0 0.0
    %2792 = vmatprep.subr.mxu0 0.0
    %2793 = vmatpush1.msra.mxu0 0.0
    %2794 = vmatprep.subr.mxu0 0.0
    %2795 = vmatpush1.msra.mxu0 0.0
    %2796 = vmatprep.subr.mxu0 0.0
    %2797 = vmatpush1.msra.mxu0 0.0
    %2798 = vmatprep.subr.mxu0 0.0
    %2799 = vmatpush1.msra.mxu0 0.0
    %2800 = vmatprep.subr.mxu0 0.0
    %2801 = vmatpush1.msra.mxu0 0.0
    %2802 = vmatprep.subr.mxu0 0.0
    %2803 = vmatpush1.msra.mxu0 0.0
    %v2804 = vand.u32 %v305, 4294901760
    %2805 = vmatprep.subr.mxu0 %v2804
    %v2806 = vand.u32 %v304, 4294901760
    %2807 = vmatpush1.msra.mxu0 %v2806
    %v2808 = vand.u32 %v297, 4294901760
    %2809 = vmatprep.subr.mxu0 %v2808
    %v2810 = vand.u32 %v296, 4294901760
    %2811 = vmatpush1.msra.mxu0 %v2810
    %v2812 = vand.u32 %v289, 4294901760
    %2813 = vmatprep.subr.mxu0 %v2812
    %v2814 = vand.u32 %v288, 4294901760
    %2815 = vmatpush1.msra.mxu0 %v2814
    %v2816 = vand.u32 %v281, 4294901760
    %2817 = vmatprep.subr.mxu0 %v2816
    %v2818 = vand.u32 %v280, 4294901760
    %2819 = vmatpush1.msra.mxu0 %v2818
    %2820 = vmatprep.subr.mxu0 0.0
    %2821 = vmatpush2.msra.mxu0 0.0
    %2822 = vmatprep.subr.mxu0 0.0
    %2823 = vmatpush2.msra.mxu0 0.0
    %2824 = vmatprep.subr.mxu0 0.0
    %2825 = vmatpush2.msra.mxu0 0.0
    %2826 = vmatprep.subr.mxu0 0.0
    %2827 = vmatpush2.msra.mxu0 0.0
    %2828 = vmatprep.subr.mxu0 0.0
    %2829 = vmatpush2.msra.mxu0 0.0
    %2830 = vmatprep.subr.mxu0 0.0
    %2831 = vmatpush2.msra.mxu0 0.0
    %2832 = vmatprep.subr.mxu0 0.0
    %2833 = vmatpush2.msra.mxu0 0.0
    %2834 = vmatprep.subr.mxu0 0.0
    %2835 = vmatpush2.msra.mxu0 0.0
    %2836 = vmatprep.subr.mxu0 0.0
    %2837 = vmatpush2.msra.mxu0 0.0
    %2838 = vmatprep.subr.mxu0 0.0
    %2839 = vmatpush2.msra.mxu0 0.0
    %2840 = vmatprep.subr.mxu0 0.0
    %2841 = vmatpush2.msra.mxu0 0.0
    %2842 = vmatprep.subr.mxu0 0.0
    %2843 = vmatpush2.msra.mxu0 0.0
    %2844 = vmatprep.subr.mxu0 0.0
    %2845 = vmatpush2.msra.mxu0 0.0
    %2846 = vmatprep.subr.mxu0 0.0
    %2847 = vmatpush2.msra.mxu0 0.0
    %2848 = vmatprep.subr.mxu0 0.0
    %2849 = vmatpush2.msra.mxu0 0.0
    %2850 = vmatprep.subr.mxu0 0.0
    %2851 = vmatpush2.msra.mxu0 0.0
    %2852 = vmatprep.mubr.f32.mxu0 0.0
    %v2853 = vand.u32 %v336, 4294901760
    %v2854 = vsub.f32 %v336, %v2853
    %v2855 = vand.u32 %v2854, 4294901760
    %2856 = vmatmul.mubr.f32.gmra.mxu0 %v2855
    %v2857 = vpop.f32.mrf.mxu0
    %v2858 = vadd.f32 %v2752, %v2857
    %v2859 = vpop.f32.mrf.mxu0
    %v2860 = vadd.f32 %v2754, %v2859
    %2861 = vmatprep.mubr.f32.mxu0 0.0
    %v2862 = vand.u32 %v339, 4294901760
    %v2863 = vsub.f32 %v339, %v2862
    %v2864 = vand.u32 %v2863, 4294901760
    %2865 = vmatmul.mubr.f32.gmra.mxu0 %v2864
    %v2866 = vpop.f32.mrf.mxu0
    %v2867 = vadd.f32 %v2760, %v2866
    %v2868 = vpop.f32.mrf.mxu0
    %v2869 = vadd.f32 %v2762, %v2868
    %2870 = vmatprep.mubr.f32.mxu0 0.0
    %v2871 = vand.u32 %v342, 4294901760
    %v2872 = vsub.f32 %v342, %v2871
    %v2873 = vand.u32 %v2872, 4294901760
    %2874 = vmatmul.mubr.f32.gmra.mxu0 %v2873
    %v2875 = vpop.f32.mrf.mxu0
    %v2876 = vadd.f32 %v2768, %v2875
    %v2877 = vpop.f32.mrf.mxu0
    %v2878 = vadd.f32 %v2770, %v2877
    %2879 = vmatprep.mubr.f32.mxu0 0.0
    %v2880 = vand.u32 %v345, 4294901760
    %v2881 = vsub.f32 %v345, %v2880
    %v2882 = vand.u32 %v2881, 4294901760
    %2883 = vmatmul.mubr.f32.gmra.mxu0 %v2882
    %v2884 = vpop.f32.mrf.mxu0
    %v2885 = vadd.f32 %v2776, %v2884
    %v2886 = vpop.f32.mrf.mxu0
    %v2887 = vadd.f32 %v2778, %v2886
    %2888 = vdwg.mxu0
    %2889 = vmatprep.subr.mxu0 0.0
    %2890 = vmatpush1.msra.mxu0 0.0
    %2891 = vmatprep.subr.mxu0 0.0
    %2892 = vmatpush1.msra.mxu0 0.0
    %2893 = vmatprep.subr.mxu0 0.0
    %2894 = vmatpush1.msra.mxu0 0.0
    %2895 = vmatprep.subr.mxu0 0.0
    %2896 = vmatpush1.msra.mxu0 0.0
    %2897 = vmatprep.subr.mxu0 0.0
    %2898 = vmatpush1.msra.mxu0 0.0
    %2899 = vmatprep.subr.mxu0 0.0
    %2900 = vmatpush1.msra.mxu0 0.0
    %2901 = vmatprep.subr.mxu0 0.0
    %2902 = vmatpush1.msra.mxu0 0.0
    %2903 = vmatprep.subr.mxu0 0.0
    %2904 = vmatpush1.msra.mxu0 0.0
    %2905 = vmatprep.subr.mxu0 0.0
    %2906 = vmatpush1.msra.mxu0 0.0
    %2907 = vmatprep.subr.mxu0 0.0
    %2908 = vmatpush1.msra.mxu0 0.0
    %2909 = vmatprep.subr.mxu0 0.0
    %2910 = vmatpush1.msra.mxu0 0.0
    %2911 = vmatprep.subr.mxu0 0.0
    %2912 = vmatpush1.msra.mxu0 0.0
    %v2913 = vand.u32 %v305, 4294901760
    %v2914 = vsub.f32 %v305, %v2913
    %v2915 = vand.u32 %v2914, 4294901760
    %2916 = vmatprep.subr.mxu0 %v2915
    %v2917 = vand.u32 %v304, 4294901760
    %v2918 = vsub.f32 %v304, %v2917
    %v2919 = vand.u32 %v2918, 4294901760
    %2920 = vmatpush1.msra.mxu0 %v2919
    %v2921 = vand.u32 %v297, 4294901760
    %v2922 = vsub.f32 %v297, %v2921
    %v2923 = vand.u32 %v2922, 4294901760
    %2924 = vmatprep.subr.mxu0 %v2923
    %v2925 = vand.u32 %v296, 4294901760
    %v2926 = vsub.f32 %v296, %v2925
    %v2927 = vand.u32 %v2926, 4294901760
    %2928 = vmatpush1.msra.mxu0 %v2927
    %v2929 = vand.u32 %v289, 4294901760
    %v2930 = vsub.f32 %v289, %v2929
    %v2931 = vand.u32 %v2930, 4294901760
    %2932 = vmatprep.subr.mxu0 %v2931
    %v2933 = vand.u32 %v288, 4294901760
    %v2934 = vsub.f32 %v288, %v2933
    %v2935 = vand.u32 %v2934, 4294901760
    %2936 = vmatpush1.msra.mxu0 %v2935
    %v2937 = vand.u32 %v281, 4294901760
    %v2938 = vsub.f32 %v281, %v2937
    %v2939 = vand.u32 %v2938, 4294901760
    %2940 = vmatprep.subr.mxu0 %v2939
    %v2941 = vand.u32 %v280, 4294901760
    %v2942 = vsub.f32 %v280, %v2941
    %v2943 = vand.u32 %v2942, 4294901760
    %2944 = vmatpush1.msra.mxu0 %v2943
    %2945 = vmatprep.subr.mxu0 0.0
    %2946 = vmatpush2.msra.mxu0 0.0
    %2947 = vmatprep.subr.mxu0 0.0
    %2948 = vmatpush2.msra.mxu0 0.0
    %2949 = vmatprep.subr.mxu0 0.0
    %2950 = vmatpush2.msra.mxu0 0.0
    %2951 = vmatprep.subr.mxu0 0.0
    %2952 = vmatpush2.msra.mxu0 0.0
    %2953 = vmatprep.subr.mxu0 0.0
    %2954 = vmatpush2.msra.mxu0 0.0
    %2955 = vmatprep.subr.mxu0 0.0
    %2956 = vmatpush2.msra.mxu0 0.0
    %2957 = vmatprep.subr.mxu0 0.0
    %2958 = vmatpush2.msra.mxu0 0.0
    %2959 = vmatprep.subr.mxu0 0.0
    %2960 = vmatpush2.msra.mxu0 0.0
    %2961 = vmatprep.subr.mxu0 0.0
    %2962 = vmatpush2.msra.mxu0 0.0
    %2963 = vmatprep.subr.mxu0 0.0
    %2964 = vmatpush2.msra.mxu0 0.0
    %2965 = vmatprep.subr.mxu0 0.0
    %2966 = vmatpush2.msra.mxu0 0.0
    %2967 = vmatprep.subr.mxu0 0.0
    %2968 = vmatpush2.msra.mxu0 0.0
    %2969 = vmatprep.subr.mxu0 0.0
    %2970 = vmatpush2.msra.mxu0 0.0
    %2971 = vmatprep.subr.mxu0 0.0
    %2972 = vmatpush2.msra.mxu0 0.0
    %2973 = vmatprep.subr.mxu0 0.0
    %2974 = vmatpush2.msra.mxu0 0.0
    %2975 = vmatprep.subr.mxu0 0.0
    %2976 = vmatpush2.msra.mxu0 0.0
    %2977 = vmatprep.mubr.f32.mxu0 0.0
    %v2978 = vand.u32 %v336, 4294901760
    %2979 = vmatmul.mubr.f32.gmra.mxu0 %v2978
    %v2980 = vpop.f32.mrf.mxu0
    %v2981 = vadd.f32 %v2858, %v2980
    %v2982 = vpop.f32.mrf.mxu0
    %v2983 = vadd.f32 %v2860, %v2982
    %2984 = vmatprep.mubr.f32.mxu0 0.0
    %v2985 = vand.u32 %v339, 4294901760
    %2986 = vmatmul.mubr.f32.gmra.mxu0 %v2985
    %v2987 = vpop.f32.mrf.mxu0
    %v2988 = vadd.f32 %v2867, %v2987
    %v2989 = vpop.f32.mrf.mxu0
    %v2990 = vadd.f32 %v2869, %v2989
    %2991 = vmatprep.mubr.f32.mxu0 0.0
    %v2992 = vand.u32 %v342, 4294901760
    %2993 = vmatmul.mubr.f32.gmra.mxu0 %v2992
    %v2994 = vpop.f32.mrf.mxu0
    %v2995 = vadd.f32 %v2876, %v2994
    %v2996 = vpop.f32.mrf.mxu0
    %v2997 = vadd.f32 %v2878, %v2996
    %2998 = vmatprep.mubr.f32.mxu0 0.0
    %v2999 = vand.u32 %v345, 4294901760
    %3000 = vmatmul.mubr.f32.gmra.mxu0 %v2999
    %v3001 = vpop.f32.mrf.mxu0
    %v3002 = vadd.f32 %v2885, %v3001
    %v3003 = vpop.f32.mrf.mxu0
    %v3004 = vadd.f32 %v2887, %v3003
    %3005 = vdwg.mxu0
    %3006 = vmatprep.subr.mxu0 0.0
    %3007 = vmatpush1.msra.mxu0 0.0
    %3008 = vmatprep.subr.mxu0 0.0
    %3009 = vmatpush1.msra.mxu0 0.0
    %3010 = vmatprep.subr.mxu0 0.0
    %3011 = vmatpush1.msra.mxu0 0.0
    %3012 = vmatprep.subr.mxu0 0.0
    %3013 = vmatpush1.msra.mxu0 0.0
    %3014 = vmatprep.subr.mxu0 0.0
    %3015 = vmatpush1.msra.mxu0 0.0
    %3016 = vmatprep.subr.mxu0 0.0
    %3017 = vmatpush1.msra.mxu0 0.0
    %3018 = vmatprep.subr.mxu0 0.0
    %3019 = vmatpush1.msra.mxu0 0.0
    %3020 = vmatprep.subr.mxu0 0.0
    %3021 = vmatpush1.msra.mxu0 0.0
    %3022 = vmatprep.subr.mxu0 0.0
    %3023 = vmatpush1.msra.mxu0 0.0
    %3024 = vmatprep.subr.mxu0 0.0
    %3025 = vmatpush1.msra.mxu0 0.0
    %3026 = vmatprep.subr.mxu0 0.0
    %3027 = vmatpush1.msra.mxu0 0.0
    %3028 = vmatprep.subr.mxu0 0.0
    %3029 = vmatpush1.msra.mxu0 0.0
    %v3030 = vand.u32 %v305, 4294901760
    %3031 = vmatprep.subr.mxu0 %v3030
    %v3032 = vand.u32 %v304, 4294901760
    %3033 = vmatpush1.msra.mxu0 %v3032
    %v3034 = vand.u32 %v297, 4294901760
    %3035 = vmatprep.subr.mxu0 %v3034
    %v3036 = vand.u32 %v296, 4294901760
    %3037 = vmatpush1.msra.mxu0 %v3036
    %v3038 = vand.u32 %v289, 4294901760
    %3039 = vmatprep.subr.mxu0 %v3038
    %v3040 = vand.u32 %v288, 4294901760
    %3041 = vmatpush1.msra.mxu0 %v3040
    %v3042 = vand.u32 %v281, 4294901760
    %3043 = vmatprep.subr.mxu0 %v3042
    %v3044 = vand.u32 %v280, 4294901760
    %3045 = vmatpush1.msra.mxu0 %v3044
    %3046 = vmatprep.subr.mxu0 0.0
    %3047 = vmatpush2.msra.mxu0 0.0
    %3048 = vmatprep.subr.mxu0 0.0
    %3049 = vmatpush2.msra.mxu0 0.0
    %3050 = vmatprep.subr.mxu0 0.0
    %3051 = vmatpush2.msra.mxu0 0.0
    %3052 = vmatprep.subr.mxu0 0.0
    %3053 = vmatpush2.msra.mxu0 0.0
    %3054 = vmatprep.subr.mxu0 0.0
    %3055 = vmatpush2.msra.mxu0 0.0
    %3056 = vmatprep.subr.mxu0 0.0
    %3057 = vmatpush2.msra.mxu0 0.0
    %3058 = vmatprep.subr.mxu0 0.0
    %3059 = vmatpush2.msra.mxu0 0.0
    %3060 = vmatprep.subr.mxu0 0.0
    %3061 = vmatpush2.msra.mxu0 0.0
    %3062 = vmatprep.subr.mxu0 0.0
    %3063 = vmatpush2.msra.mxu0 0.0
    %3064 = vmatprep.subr.mxu0 0.0
    %3065 = vmatpush2.msra.mxu0 0.0
    %3066 = vmatprep.subr.mxu0 0.0
    %3067 = vmatpush2.msra.mxu0 0.0
    %3068 = vmatprep.subr.mxu0 0.0
    %3069 = vmatpush2.msra.mxu0 0.0
    %3070 = vmatprep.subr.mxu0 0.0
    %3071 = vmatpush2.msra.mxu0 0.0
    %3072 = vmatprep.subr.mxu0 0.0
    %3073 = vmatpush2.msra.mxu0 0.0
    %3074 = vmatprep.subr.mxu0 0.0
    %3075 = vmatpush2.msra.mxu0 0.0
    %3076 = vmatprep.subr.mxu0 0.0
    %3077 = vmatpush2.msra.mxu0 0.0
    %3078 = vmatprep.mubr.f32.mxu0 0.0
    %v3079 = vand.u32 %v336, 4294901760
    %3080 = vmatmul.mubr.f32.gmra.mxu0 %v3079
    %v3081 = vpop.f32.mrf.mxu0
    %v3082 = vadd.f32 %v2981, %v3081
    %v3083 = vpop.f32.mrf.mxu0
    %v3084 = vadd.f32 %v2983, %v3083
    %3085 = vmatprep.mubr.f32.mxu0 0.0
    %v3086 = vand.u32 %v339, 4294901760
    %3087 = vmatmul.mubr.f32.gmra.mxu0 %v3086
    %v3088 = vpop.f32.mrf.mxu0
    %v3089 = vadd.f32 %v2988, %v3088
    %v3090 = vpop.f32.mrf.mxu0
    %v3091 = vadd.f32 %v2990, %v3090
    %3092 = vmatprep.mubr.f32.mxu0 0.0
    %v3093 = vand.u32 %v342, 4294901760
    %3094 = vmatmul.mubr.f32.gmra.mxu0 %v3093
    %v3095 = vpop.f32.mrf.mxu0
    %v3096 = vadd.f32 %v2995, %v3095
    %v3097 = vpop.f32.mrf.mxu0
    %v3098 = vadd.f32 %v2997, %v3097
    %3099 = vmatprep.mubr.f32.mxu0 0.0
    %v3100 = vand.u32 %v345, 4294901760
    %3101 = vmatmul.mubr.f32.gmra.mxu0 %v3100
    %v3102 = vpop.f32.mrf.mxu0
    %v3103 = vadd.f32 %v3002, %v3102
    %v3104 = vpop.f32.mrf.mxu0
    %v3105 = vadd.f32 %v3004, %v3104
    %3106 = vdwg.mxu0
    %v3107 = vtanh.pop %v1012
    %v3108 = vtanh.pop %v1014
    %v3109 = vtanh.pop %v1702
    %v3110 = vtanh.pop %v1704
    %v3111 = vtanh.pop %v2392
    %v3112 = vtanh.pop %v2394
    %v3113 = vtanh.pop %v3082
    %v3114 = vtanh.pop %v3084
    %v3115 = vtanh.pop %v1019
    %v3116 = vtanh.pop %v1021
    %v3117 = vtanh.pop %v1709
    %v3118 = vtanh.pop %v1711
    %v3119 = vtanh.pop %v2399
    %v3120 = vtanh.pop %v2401
    %v3121 = vtanh.pop %v3089
    %v3122 = vtanh.pop %v3091
    %v3123 = vtanh.pop %v1026
    %v3124 = vtanh.pop %v1028
    %v3125 = vtanh.pop %v1716
    %v3126 = vtanh.pop %v1718
    %v3127 = vtanh.pop %v2406
    %v3128 = vtanh.pop %v2408
    %v3129 = vtanh.pop %v3096
    %v3130 = vtanh.pop %v3098
    %v3131 = vtanh.pop %v1033
    %v3132 = vtanh.pop %v1035
    %v3133 = vtanh.pop %v1723
    %v3134 = vtanh.pop %v1725
    %v3135 = vtanh.pop %v2413
    %v3136 = vtanh.pop %v2415
    %v3137 = vtanh.pop %v3103
    %v3138 = vtanh.pop %v3105
    %v3139 = vmul.f32 %v3107, %v3107
    %v3140 = vmul.f32 %v3108, %v3108
    %v3141 = vmul.f32 %v3109, %v3109
    %v3142 = vmul.f32 %v3110, %v3110
    %v3143 = vmul.f32 %v3111, %v3111
    %v3144 = vmul.f32 %v3112, %v3112
    %v3145 = vmul.f32 %v3113, %v3113
    %v3146 = vmul.f32 %v3114, %v3114
    %v3147 = vmul.f32 %v3115, %v3115
    %v3148 = vmul.f32 %v3116, %v3116
    %v3149 = vmul.f32 %v3117, %v3117
    %v3150 = vmul.f32 %v3118, %v3118
    %v3151 = vmul.f32 %v3119, %v3119
    %v3152 = vmul.f32 %v3120, %v3120
    %v3153 = vmul.f32 %v3121, %v3121
    %v3154 = vmul.f32 %v3122, %v3122
    %v3155 = vmul.f32 %v3123, %v3123
    %v3156 = vmul.f32 %v3124, %v3124
    %v3157 = vmul.f32 %v3125, %v3125
    %v3158 = vmul.f32 %v3126, %v3126
    %v3159 = vmul.f32 %v3127, %v3127
    %v3160 = vmul.f32 %v3128, %v3128
    %v3161 = vmul.f32 %v3129, %v3129
    %v3162 = vmul.f32 %v3130, %v3130
    %v3163 = vmul.f32 %v3131, %v3131
    %v3164 = vmul.f32 %v3132, %v3132
    %v3165 = vmul.f32 %v3133, %v3133
    %v3166 = vmul.f32 %v3134, %v3134
    %v3167 = vmul.f32 %v3135, %v3135
    %v3168 = vmul.f32 %v3136, %v3136
    %v3169 = vmul.f32 %v3137, %v3137
    %v3170 = vmul.f32 %v3138, %v3138
    %v3171 = vmul.f32 %v3139, %v3107
    %v3172 = vmul.f32 %v3140, %v3108
    %v3173 = vmul.f32 %v3141, %v3109
    %v3174 = vmul.f32 %v3142, %v3110
    %v3175 = vmul.f32 %v3143, %v3111
    %v3176 = vmul.f32 %v3144, %v3112
    %v3177 = vmul.f32 %v3145, %v3113
    %v3178 = vmul.f32 %v3146, %v3114
    %v3179 = vmul.f32 %v3147, %v3115
    %v3180 = vmul.f32 %v3148, %v3116
    %v3181 = vmul.f32 %v3149, %v3117
    %v3182 = vmul.f32 %v3150, %v3118
    %v3183 = vmul.f32 %v3151, %v3119
    %v3184 = vmul.f32 %v3152, %v3120
    %v3185 = vmul.f32 %v3153, %v3121
    %v3186 = vmul.f32 %v3154, %v3122
    %v3187 = vmul.f32 %v3155, %v3123
    %v3188 = vmul.f32 %v3156, %v3124
    %v3189 = vmul.f32 %v3157, %v3125
    %v3190 = vmul.f32 %v3158, %v3126
    %v3191 = vmul.f32 %v3159, %v3127
    %v3192 = vmul.f32 %v3160, %v3128
    %v3193 = vmul.f32 %v3161, %v3129
    %v3194 = vmul.f32 %v3162, %v3130
    %v3195 = vmul.f32 %v3163, %v3131
    %v3196 = vmul.f32 %v3164, %v3132
    %v3197 = vmul.f32 %v3165, %v3133
    %v3198 = vmul.f32 %v3166, %v3134
    %v3199 = vmul.f32 %v3167, %v3135
    %v3200 = vmul.f32 %v3168, %v3136
    %v3201 = vmul.f32 %v3169, %v3137
    %v3202 = vmul.f32 %v3170, %v3138
    %v3203 = vadd.f32 %v3171, %v274
    %v3204 = vadd.f32 %v3172, %v275
    %v3205 = vadd.f32 %v3173, %v276
    %v3206 = vadd.f32 %v3174, %v277
    %v3207 = vadd.f32 %v3175, %v278
    %v3208 = vadd.f32 %v3176, %v279
    %v3209 = vadd.f32 %v3177, %v280
    %v3210 = vadd.f32 %v3178, %v281
    %v3211 = vadd.f32 %v3179, %v282
    %v3212 = vadd.f32 %v3180, %v283
    %v3213 = vadd.f32 %v3181, %v284
    %v3214 = vadd.f32 %v3182, %v285
    %v3215 = vadd.f32 %v3183, %v286
    %v3216 = vadd.f32 %v3184, %v287
    %v3217 = vadd.f32 %v3185, %v288
    %v3218 = vadd.f32 %v3186, %v289
    %v3219 = vadd.f32 %v3187, %v290
    %v3220 = vadd.f32 %v3188, %v291
    %v3221 = vadd.f32 %v3189, %v292
    %v3222 = vadd.f32 %v3190, %v293
    %v3223 = vadd.f32 %v3191, %v294
    %v3224 = vadd.f32 %v3192, %v295
    %v3225 = vadd.f32 %v3193, %v296
    %v3226 = vadd.f32 %v3194, %v297
    %v3227 = vadd.f32 %v3195, %v298
    %v3228 = vadd.f32 %v3196, %v299
    %v3229 = vadd.f32 %v3197, %v300
    %v3230 = vadd.f32 %v3198, %v301
    %v3231 = vadd.f32 %v3199, %v302
    %v3232 = vadd.f32 %v3200, %v303
    %v3233 = vadd.f32 %v3201, %v304
    %v3234 = vadd.f32 %v3202, %v305
    %s3235 = scalar_lea.vmem %s3, 32
    %v3236 = vld [vmem:[%s3235] sm:$0xff]
    %v3237 = vld [vmem:[%s3235 + $0x8] sm:$0xff]
    %v3238 = vld [vmem:[%s3235 + $0x10] sm:$0xff]
    %v3239 = vld [vmem:[%s3235 + $0x18] sm:$0xff]
    %s3240 = scalar_lea.vmem %s4, 32
    %v3241 = vld [vmem:[%s3240] sm:$0xff]
    %v3242 = vld [vmem:[%s3240 + $0x8] sm:$0xff]
    %v3243 = vld [vmem:[%s3240 + $0x10] sm:$0xff]
    %v3244 = vld [vmem:[%s3240 + $0x18] sm:$0xff]
    %3246 = vset.pattern.permute.xlu0 0
    %3247 = vperm.xlu0 %3246, %v3241
    %v3248 = vpop.permute.xlu0 %3247
    %3251 = vset.pattern.permute.xlu0 0
    %3252 = vperm.xlu0 %3251, %v3242
    %v3253 = vpop.permute.xlu0 %3252
    %3256 = vset.pattern.permute.xlu0 0
    %3257 = vperm.xlu0 %3256, %v3243
    %v3258 = vpop.permute.xlu0 %3257
    %3261 = vset.pattern.permute.xlu0 0
    %3262 = vperm.xlu0 %3261, %v3244
    %v3263 = vpop.permute.xlu0 %3262
    %v3266 = vsel %vm334, %v3236, 0
    %v3269 = vsel %vm334, %v3237, 0
    %v3272 = vsel %vm334, %v3238, 0
    %v3275 = vsel %vm334, %v3239, 0
    %3277 = vmatprep.subr.mxu0 0.0
    %3278 = vmatpush1.msra.mxu0 0.0
    %3279 = vmatprep.subr.mxu0 0.0
    %3280 = vmatpush1.msra.mxu0 0.0
    %3281 = vmatprep.subr.mxu0 0.0
    %3282 = vmatpush1.msra.mxu0 0.0
    %3283 = vmatprep.subr.mxu0 0.0
    %3284 = vmatpush1.msra.mxu0 0.0
    %3285 = vmatprep.subr.mxu0 0.0
    %3286 = vmatpush1.msra.mxu0 0.0
    %3287 = vmatprep.subr.mxu0 0.0
    %3288 = vmatpush1.msra.mxu0 0.0
    %3289 = vmatprep.subr.mxu0 0.0
    %3290 = vmatpush1.msra.mxu0 0.0
    %3291 = vmatprep.subr.mxu0 0.0
    %3292 = vmatpush1.msra.mxu0 0.0
    %3293 = vmatprep.subr.mxu0 0.0
    %3294 = vmatpush1.msra.mxu0 0.0
    %3295 = vmatprep.subr.mxu0 0.0
    %3296 = vmatpush1.msra.mxu0 0.0
    %3297 = vmatprep.subr.mxu0 0.0
    %3298 = vmatpush1.msra.mxu0 0.0
    %3299 = vmatprep.subr.mxu0 0.0
    %3300 = vmatpush1.msra.mxu0 0.0
    %v3301 = vand.u32 %v3228, 4294901760
    %3302 = vmatprep.subr.mxu0 %v3301
    %v3303 = vand.u32 %v3227, 4294901760
    %3304 = vmatpush1.msra.mxu0 %v3303
    %v3305 = vand.u32 %v3220, 4294901760
    %3306 = vmatprep.subr.mxu0 %v3305
    %v3307 = vand.u32 %v3219, 4294901760
    %3308 = vmatpush1.msra.mxu0 %v3307
    %v3309 = vand.u32 %v3212, 4294901760
    %3310 = vmatprep.subr.mxu0 %v3309
    %v3311 = vand.u32 %v3211, 4294901760
    %3312 = vmatpush1.msra.mxu0 %v3311
    %v3313 = vand.u32 %v3204, 4294901760
    %3314 = vmatprep.subr.mxu0 %v3313
    %v3315 = vand.u32 %v3203, 4294901760
    %3316 = vmatpush1.msra.mxu0 %v3315
    %3317 = vmatprep.subr.mxu0 0.0
    %3318 = vmatpush2.msra.mxu0 0.0
    %3319 = vmatprep.subr.mxu0 0.0
    %3320 = vmatpush2.msra.mxu0 0.0
    %3321 = vmatprep.subr.mxu0 0.0
    %3322 = vmatpush2.msra.mxu0 0.0
    %3323 = vmatprep.subr.mxu0 0.0
    %3324 = vmatpush2.msra.mxu0 0.0
    %3325 = vmatprep.subr.mxu0 0.0
    %3326 = vmatpush2.msra.mxu0 0.0
    %3327 = vmatprep.subr.mxu0 0.0
    %3328 = vmatpush2.msra.mxu0 0.0
    %3329 = vmatprep.subr.mxu0 0.0
    %3330 = vmatpush2.msra.mxu0 0.0
    %3331 = vmatprep.subr.mxu0 0.0
    %3332 = vmatpush2.msra.mxu0 0.0
    %3333 = vmatprep.subr.mxu0 0.0
    %3334 = vmatpush2.msra.mxu0 0.0
    %3335 = vmatprep.subr.mxu0 0.0
    %3336 = vmatpush2.msra.mxu0 0.0
    %3337 = vmatprep.subr.mxu0 0.0
    %3338 = vmatpush2.msra.mxu0 0.0
    %3339 = vmatprep.subr.mxu0 0.0
    %3340 = vmatpush2.msra.mxu0 0.0
    %3341 = vmatprep.subr.mxu0 0.0
    %3342 = vmatpush2.msra.mxu0 0.0
    %3343 = vmatprep.subr.mxu0 0.0
    %3344 = vmatpush2.msra.mxu0 0.0
    %3345 = vmatprep.subr.mxu0 0.0
    %3346 = vmatpush2.msra.mxu0 0.0
    %3347 = vmatprep.subr.mxu0 0.0
    %3348 = vmatpush2.msra.mxu0 0.0
    %3349 = vmatprep.mubr.f32.mxu0 0.0
    %v3350 = vand.u32 %v3266, 4294901760
    %v3351 = vsub.f32 %v3266, %v3350
    %v3352 = vand.u32 %v3351, 4294901760
    %v3353 = vsub.f32 %v3351, %v3352
    %v3354 = vand.u32 %v3353, 4294901760
    %3355 = vmatmul.mubr.f32.gmra.mxu0 %v3354
    %v3356 = vpop.f32.mrf.mxu0
    %v3357 = vadd.f32 %v3248, %v3356
    %v3358 = vpop.f32.mrf.mxu0
    %v3359 = vadd.f32 %v3248, %v3358
    %3360 = vmatprep.mubr.f32.mxu0 0.0
    %v3361 = vand.u32 %v3269, 4294901760
    %v3362 = vsub.f32 %v3269, %v3361
    %v3363 = vand.u32 %v3362, 4294901760
    %v3364 = vsub.f32 %v3362, %v3363
    %v3365 = vand.u32 %v3364, 4294901760
    %3366 = vmatmul.mubr.f32.gmra.mxu0 %v3365
    %v3367 = vpop.f32.mrf.mxu0
    %v3368 = vadd.f32 %v3253, %v3367
    %v3369 = vpop.f32.mrf.mxu0
    %v3370 = vadd.f32 %v3253, %v3369
    %3371 = vmatprep.mubr.f32.mxu0 0.0
    %v3372 = vand.u32 %v3272, 4294901760
    %v3373 = vsub.f32 %v3272, %v3372
    %v3374 = vand.u32 %v3373, 4294901760
    %v3375 = vsub.f32 %v3373, %v3374
    %v3376 = vand.u32 %v3375, 4294901760
    %3377 = vmatmul.mubr.f32.gmra.mxu0 %v3376
    %v3378 = vpop.f32.mrf.mxu0
    %v3379 = vadd.f32 %v3258, %v3378
    %v3380 = vpop.f32.mrf.mxu0
    %v3381 = vadd.f32 %v3258, %v3380
    %3382 = vmatprep.mubr.f32.mxu0 0.0
    %v3383 = vand.u32 %v3275, 4294901760
    %v3384 = vsub.f32 %v3275, %v3383
    %v3385 = vand.u32 %v3384, 4294901760
    %v3386 = vsub.f32 %v3384, %v3385
    %v3387 = vand.u32 %v3386, 4294901760
    %3388 = vmatmul.mubr.f32.gmra.mxu0 %v3387
    %v3389 = vpop.f32.mrf.mxu0
    %v3390 = vadd.f32 %v3263, %v3389
    %v3391 = vpop.f32.mrf.mxu0
    %v3392 = vadd.f32 %v3263, %v3391
    %3393 = vdwg.mxu0
    %3394 = vmatprep.subr.mxu0 0.0
    %3395 = vmatpush1.msra.mxu0 0.0
    %3396 = vmatprep.subr.mxu0 0.0
    %3397 = vmatpush1.msra.mxu0 0.0
    %3398 = vmatprep.subr.mxu0 0.0
    %3399 = vmatpush1.msra.mxu0 0.0
    %3400 = vmatprep.subr.mxu0 0.0
    %3401 = vmatpush1.msra.mxu0 0.0
    %3402 = vmatprep.subr.mxu0 0.0
    %3403 = vmatpush1.msra.mxu0 0.0
    %3404 = vmatprep.subr.mxu0 0.0
    %3405 = vmatpush1.msra.mxu0 0.0
    %3406 = vmatprep.subr.mxu0 0.0
    %3407 = vmatpush1.msra.mxu0 0.0
    %3408 = vmatprep.subr.mxu0 0.0
    %3409 = vmatpush1.msra.mxu0 0.0
    %3410 = vmatprep.subr.mxu0 0.0
    %3411 = vmatpush1.msra.mxu0 0.0
    %3412 = vmatprep.subr.mxu0 0.0
    %3413 = vmatpush1.msra.mxu0 0.0
    %3414 = vmatprep.subr.mxu0 0.0
    %3415 = vmatpush1.msra.mxu0 0.0
    %3416 = vmatprep.subr.mxu0 0.0
    %3417 = vmatpush1.msra.mxu0 0.0
    %v3418 = vand.u32 %v3228, 4294901760
    %v3419 = vsub.f32 %v3228, %v3418
    %v3420 = vand.u32 %v3419, 4294901760
    %v3421 = vsub.f32 %v3419, %v3420
    %v3422 = vand.u32 %v3421, 4294901760
    %3423 = vmatprep.subr.mxu0 %v3422
    %v3424 = vand.u32 %v3227, 4294901760
    %v3425 = vsub.f32 %v3227, %v3424
    %v3426 = vand.u32 %v3425, 4294901760
    %v3427 = vsub.f32 %v3425, %v3426
    %v3428 = vand.u32 %v3427, 4294901760
    %3429 = vmatpush1.msra.mxu0 %v3428
    %v3430 = vand.u32 %v3220, 4294901760
    %v3431 = vsub.f32 %v3220, %v3430
    %v3432 = vand.u32 %v3431, 4294901760
    %v3433 = vsub.f32 %v3431, %v3432
    %v3434 = vand.u32 %v3433, 4294901760
    %3435 = vmatprep.subr.mxu0 %v3434
    %v3436 = vand.u32 %v3219, 4294901760
    %v3437 = vsub.f32 %v3219, %v3436
    %v3438 = vand.u32 %v3437, 4294901760
    %v3439 = vsub.f32 %v3437, %v3438
    %v3440 = vand.u32 %v3439, 4294901760
    %3441 = vmatpush1.msra.mxu0 %v3440
    %v3442 = vand.u32 %v3212, 4294901760
    %v3443 = vsub.f32 %v3212, %v3442
    %v3444 = vand.u32 %v3443, 4294901760
    %v3445 = vsub.f32 %v3443, %v3444
    %v3446 = vand.u32 %v3445, 4294901760
    %3447 = vmatprep.subr.mxu0 %v3446
    %v3448 = vand.u32 %v3211, 4294901760
    %v3449 = vsub.f32 %v3211, %v3448
    %v3450 = vand.u32 %v3449, 4294901760
    %v3451 = vsub.f32 %v3449, %v3450
    %v3452 = vand.u32 %v3451, 4294901760
    %3453 = vmatpush1.msra.mxu0 %v3452
    %v3454 = vand.u32 %v3204, 4294901760
    %v3455 = vsub.f32 %v3204, %v3454
    %v3456 = vand.u32 %v3455, 4294901760
    %v3457 = vsub.f32 %v3455, %v3456
    %v3458 = vand.u32 %v3457, 4294901760
    %3459 = vmatprep.subr.mxu0 %v3458
    %v3460 = vand.u32 %v3203, 4294901760
    %v3461 = vsub.f32 %v3203, %v3460
    %v3462 = vand.u32 %v3461, 4294901760
    %v3463 = vsub.f32 %v3461, %v3462
    %v3464 = vand.u32 %v3463, 4294901760
    %3465 = vmatpush1.msra.mxu0 %v3464
    %3466 = vmatprep.subr.mxu0 0.0
    %3467 = vmatpush2.msra.mxu0 0.0
    %3468 = vmatprep.subr.mxu0 0.0
    %3469 = vmatpush2.msra.mxu0 0.0
    %3470 = vmatprep.subr.mxu0 0.0
    %3471 = vmatpush2.msra.mxu0 0.0
    %3472 = vmatprep.subr.mxu0 0.0
    %3473 = vmatpush2.msra.mxu0 0.0
    %3474 = vmatprep.subr.mxu0 0.0
    %3475 = vmatpush2.msra.mxu0 0.0
    %3476 = vmatprep.subr.mxu0 0.0
    %3477 = vmatpush2.msra.mxu0 0.0
    %3478 = vmatprep.subr.mxu0 0.0
    %3479 = vmatpush2.msra.mxu0 0.0
    %3480 = vmatprep.subr.mxu0 0.0
    %3481 = vmatpush2.msra.mxu0 0.0
    %3482 = vmatprep.subr.mxu0 0.0
    %3483 = vmatpush2.msra.mxu0 0.0
    %3484 = vmatprep.subr.mxu0 0.0
    %3485 = vmatpush2.msra.mxu0 0.0
    %3486 = vmatprep.subr.mxu0 0.0
    %3487 = vmatpush2.msra.mxu0 0.0
    %3488 = vmatprep.subr.mxu0 0.0
    %3489 = vmatpush2.msra.mxu0 0.0
    %3490 = vmatprep.subr.mxu0 0.0
    %3491 = vmatpush2.msra.mxu0 0.0
    %3492 = vmatprep.subr.mxu0 0.0
    %3493 = vmatpush2.msra.mxu0 0.0
    %3494 = vmatprep.subr.mxu0 0.0
    %3495 = vmatpush2.msra.mxu0 0.0
    %3496 = vmatprep.subr.mxu0 0.0
    %3497 = vmatpush2.msra.mxu0 0.0
    %3498 = vmatprep.mubr.f32.mxu0 0.0
    %v3499 = vand.u32 %v3266, 4294901760
    %3500 = vmatmul.mubr.f32.gmra.mxu0 %v3499
    %v3501 = vpop.f32.mrf.mxu0
    %v3502 = vadd.f32 %v3357, %v3501
    %v3503 = vpop.f32.mrf.mxu0
    %v3504 = vadd.f32 %v3359, %v3503
    %3505 = vmatprep.mubr.f32.mxu0 0.0
    %v3506 = vand.u32 %v3269, 4294901760
    %3507 = vmatmul.mubr.f32.gmra.mxu0 %v3506
    %v3508 = vpop.f32.mrf.mxu0
    %v3509 = vadd.f32 %v3368, %v3508
    %v3510 = vpop.f32.mrf.mxu0
    %v3511 = vadd.f32 %v3370, %v3510
    %3512 = vmatprep.mubr.f32.mxu0 0.0
    %v3513 = vand.u32 %v3272, 4294901760
    %3514 = vmatmul.mubr.f32.gmra.mxu0 %v3513
    %v3515 = vpop.f32.mrf.mxu0
    %v3516 = vadd.f32 %v3379, %v3515
    %v3517 = vpop.f32.mrf.mxu0
    %v3518 = vadd.f32 %v3381, %v3517
    %3519 = vmatprep.mubr.f32.mxu0 0.0
    %v3520 = vand.u32 %v3275, 4294901760
    %3521 = vmatmul.mubr.f32.gmra.mxu0 %v3520
    %v3522 = vpop.f32.mrf.mxu0
    %v3523 = vadd.f32 %v3390, %v3522
    %v3524 = vpop.f32.mrf.mxu0
    %v3525 = vadd.f32 %v3392, %v3524
    %3526 = vdwg.mxu0
    %3527 = vmatprep.subr.mxu0 0.0
    %3528 = vmatpush1.msra.mxu0 0.0
    %3529 = vmatprep.subr.mxu0 0.0
    %3530 = vmatpush1.msra.mxu0 0.0
    %3531 = vmatprep.subr.mxu0 0.0
    %3532 = vmatpush1.msra.mxu0 0.0
    %3533 = vmatprep.subr.mxu0 0.0
    %3534 = vmatpush1.msra.mxu0 0.0
    %3535 = vmatprep.subr.mxu0 0.0
    %3536 = vmatpush1.msra.mxu0 0.0
    %3537 = vmatprep.subr.mxu0 0.0
    %3538 = vmatpush1.msra.mxu0 0.0
    %3539 = vmatprep.subr.mxu0 0.0
    %3540 = vmatpush1.msra.mxu0 0.0
    %3541 = vmatprep.subr.mxu0 0.0
    %3542 = vmatpush1.msra.mxu0 0.0
    %3543 = vmatprep.subr.mxu0 0.0
    %3544 = vmatpush1.msra.mxu0 0.0
    %3545 = vmatprep.subr.mxu0 0.0
    %3546 = vmatpush1.msra.mxu0 0.0
    %3547 = vmatprep.subr.mxu0 0.0
    %3548 = vmatpush1.msra.mxu0 0.0
    %3549 = vmatprep.subr.mxu0 0.0
    %3550 = vmatpush1.msra.mxu0 0.0
    %v3551 = vand.u32 %v3228, 4294901760
    %v3552 = vsub.f32 %v3228, %v3551
    %3553 = vmatprep.subr.mxu0 %v3552
    %v3554 = vand.u32 %v3227, 4294901760
    %v3555 = vsub.f32 %v3227, %v3554
    %3556 = vmatpush1.msra.mxu0 %v3555
    %v3557 = vand.u32 %v3220, 4294901760
    %v3558 = vsub.f32 %v3220, %v3557
    %3559 = vmatprep.subr.mxu0 %v3558
    %v3560 = vand.u32 %v3219, 4294901760
    %v3561 = vsub.f32 %v3219, %v3560
    %3562 = vmatpush1.msra.mxu0 %v3561
    %v3563 = vand.u32 %v3212, 4294901760
    %v3564 = vsub.f32 %v3212, %v3563
    %3565 = vmatprep.subr.mxu0 %v3564
    %v3566 = vand.u32 %v3211, 4294901760
    %v3567 = vsub.f32 %v3211, %v3566
    %3568 = vmatpush1.msra.mxu0 %v3567
    %v3569 = vand.u32 %v3204, 4294901760
    %v3570 = vsub.f32 %v3204, %v3569
    %3571 = vmatprep.subr.mxu0 %v3570
    %v3572 = vand.u32 %v3203, 4294901760
    %v3573 = vsub.f32 %v3203, %v3572
    %3574 = vmatpush1.msra.mxu0 %v3573
    %3575 = vmatprep.subr.mxu0 0.0
    %3576 = vmatpush2.msra.mxu0 0.0
    %3577 = vmatprep.subr.mxu0 0.0
    %3578 = vmatpush2.msra.mxu0 0.0
    %3579 = vmatprep.subr.mxu0 0.0
    %3580 = vmatpush2.msra.mxu0 0.0
    %3581 = vmatprep.subr.mxu0 0.0
    %3582 = vmatpush2.msra.mxu0 0.0
    %3583 = vmatprep.subr.mxu0 0.0
    %3584 = vmatpush2.msra.mxu0 0.0
    %3585 = vmatprep.subr.mxu0 0.0
    %3586 = vmatpush2.msra.mxu0 0.0
    %3587 = vmatprep.subr.mxu0 0.0
    %3588 = vmatpush2.msra.mxu0 0.0
    %3589 = vmatprep.subr.mxu0 0.0
    %3590 = vmatpush2.msra.mxu0 0.0
    %3591 = vmatprep.subr.mxu0 0.0
    %3592 = vmatpush2.msra.mxu0 0.0
    %3593 = vmatprep.subr.mxu0 0.0
    %3594 = vmatpush2.msra.mxu0 0.0
    %3595 = vmatprep.subr.mxu0 0.0
    %3596 = vmatpush2.msra.mxu0 0.0
    %3597 = vmatprep.subr.mxu0 0.0
    %3598 = vmatpush2.msra.mxu0 0.0
    %3599 = vmatprep.subr.mxu0 0.0
    %3600 = vmatpush2.msra.mxu0 0.0
    %3601 = vmatprep.subr.mxu0 0.0
    %3602 = vmatpush2.msra.mxu0 0.0
    %3603 = vmatprep.subr.mxu0 0.0
    %3604 = vmatpush2.msra.mxu0 0.0
    %3605 = vmatprep.subr.mxu0 0.0
    %3606 = vmatpush2.msra.mxu0 0.0
    %3607 = vmatprep.mubr.f32.mxu0 0.0
    %v3608 = vand.u32 %v3266, 4294901760
    %v3609 = vsub.f32 %v3266, %v3608
    %3610 = vmatmul.mubr.f32.gmra.mxu0 %v3609
    %v3611 = vpop.f32.mrf.mxu0
    %v3612 = vadd.f32 %v3502, %v3611
    %v3613 = vpop.f32.mrf.mxu0
    %v3614 = vadd.f32 %v3504, %v3613
    %3615 = vmatprep.mubr.f32.mxu0 0.0
    %v3616 = vand.u32 %v3269, 4294901760
    %v3617 = vsub.f32 %v3269, %v3616
    %3618 = vmatmul.mubr.f32.gmra.mxu0 %v3617
    %v3619 = vpop.f32.mrf.mxu0
    %v3620 = vadd.f32 %v3509, %v3619
    %v3621 = vpop.f32.mrf.mxu0
    %v3622 = vadd.f32 %v3511, %v3621
    %3623 = vmatprep.mubr.f32.mxu0 0.0
    %v3624 = vand.u32 %v3272, 4294901760
    %v3625 = vsub.f32 %v3272, %v3624
    %3626 = vmatmul.mubr.f32.gmra.mxu0 %v3625
    %v3627 = vpop.f32.mrf.mxu0
    %v3628 = vadd.f32 %v3516, %v3627
    %v3629 = vpop.f32.mrf.mxu0
    %v3630 = vadd.f32 %v3518, %v3629
    %3631 = vmatprep.mubr.f32.mxu0 0.0
    %v3632 = vand.u32 %v3275, 4294901760
    %v3633 = vsub.f32 %v3275, %v3632
    %3634 = vmatmul.mubr.f32.gmra.mxu0 %v3633
    %v3635 = vpop.f32.mrf.mxu0
    %v3636 = vadd.f32 %v3523, %v3635
    %v3637 = vpop.f32.mrf.mxu0
    %v3638 = vadd.f32 %v3525, %v3637
    %3639 = vdwg.mxu0
    %3640 = vmatprep.subr.mxu0 0.0
    %3641 = vmatpush1.msra.mxu0 0.0
    %3642 = vmatprep.subr.mxu0 0.0
    %3643 = vmatpush1.msra.mxu0 0.0
    %3644 = vmatprep.subr.mxu0 0.0
    %3645 = vmatpush1.msra.mxu0 0.0
    %3646 = vmatprep.subr.mxu0 0.0
    %3647 = vmatpush1.msra.mxu0 0.0
    %3648 = vmatprep.subr.mxu0 0.0
    %3649 = vmatpush1.msra.mxu0 0.0
    %3650 = vmatprep.subr.mxu0 0.0
    %3651 = vmatpush1.msra.mxu0 0.0
    %3652 = vmatprep.subr.mxu0 0.0
    %3653 = vmatpush1.msra.mxu0 0.0
    %3654 = vmatprep.subr.mxu0 0.0
    %3655 = vmatpush1.msra.mxu0 0.0
    %3656 = vmatprep.subr.mxu0 0.0
    %3657 = vmatpush1.msra.mxu0 0.0
    %3658 = vmatprep.subr.mxu0 0.0
    %3659 = vmatpush1.msra.mxu0 0.0
    %3660 = vmatprep.subr.mxu0 0.0
    %3661 = vmatpush1.msra.mxu0 0.0
    %3662 = vmatprep.subr.mxu0 0.0
    %3663 = vmatpush1.msra.mxu0 0.0
    %v3664 = vand.u32 %v3228, 4294901760
    %3665 = vmatprep.subr.mxu0 %v3664
    %v3666 = vand.u32 %v3227, 4294901760
    %3667 = vmatpush1.msra.mxu0 %v3666
    %v3668 = vand.u32 %v3220, 4294901760
    %3669 = vmatprep.subr.mxu0 %v3668
    %v3670 = vand.u32 %v3219, 4294901760
    %3671 = vmatpush1.msra.mxu0 %v3670
    %v3672 = vand.u32 %v3212, 4294901760
    %3673 = vmatprep.subr.mxu0 %v3672
    %v3674 = vand.u32 %v3211, 4294901760
    %3675 = vmatpush1.msra.mxu0 %v3674
    %v3676 = vand.u32 %v3204, 4294901760
    %3677 = vmatprep.subr.mxu0 %v3676
    %v3678 = vand.u32 %v3203, 4294901760
    %3679 = vmatpush1.msra.mxu0 %v3678
    %3680 = vmatprep.subr.mxu0 0.0
    %3681 = vmatpush2.msra.mxu0 0.0
    %3682 = vmatprep.subr.mxu0 0.0
    %3683 = vmatpush2.msra.mxu0 0.0
    %3684 = vmatprep.subr.mxu0 0.0
    %3685 = vmatpush2.msra.mxu0 0.0
    %3686 = vmatprep.subr.mxu0 0.0
    %3687 = vmatpush2.msra.mxu0 0.0
    %3688 = vmatprep.subr.mxu0 0.0
    %3689 = vmatpush2.msra.mxu0 0.0
    %3690 = vmatprep.subr.mxu0 0.0
    %3691 = vmatpush2.msra.mxu0 0.0
    %3692 = vmatprep.subr.mxu0 0.0
    %3693 = vmatpush2.msra.mxu0 0.0
    %3694 = vmatprep.subr.mxu0 0.0
    %3695 = vmatpush2.msra.mxu0 0.0
    %3696 = vmatprep.subr.mxu0 0.0
    %3697 = vmatpush2.msra.mxu0 0.0
    %3698 = vmatprep.subr.mxu0 0.0
    %3699 = vmatpush2.msra.mxu0 0.0
    %3700 = vmatprep.subr.mxu0 0.0
    %3701 = vmatpush2.msra.mxu0 0.0
    %3702 = vmatprep.subr.mxu0 0.0
    %3703 = vmatpush2.msra.mxu0 0.0
    %3704 = vmatprep.subr.mxu0 0.0
    %3705 = vmatpush2.msra.mxu0 0.0
    %3706 = vmatprep.subr.mxu0 0.0
    %3707 = vmatpush2.msra.mxu0 0.0
    %3708 = vmatprep.subr.mxu0 0.0
    %3709 = vmatpush2.msra.mxu0 0.0
    %3710 = vmatprep.subr.mxu0 0.0
    %3711 = vmatpush2.msra.mxu0 0.0
    %3712 = vmatprep.mubr.f32.mxu0 0.0
    %v3713 = vand.u32 %v3266, 4294901760
    %v3714 = vsub.f32 %v3266, %v3713
    %v3715 = vand.u32 %v3714, 4294901760
    %3716 = vmatmul.mubr.f32.gmra.mxu0 %v3715
    %v3717 = vpop.f32.mrf.mxu0
    %v3718 = vadd.f32 %v3612, %v3717
    %v3719 = vpop.f32.mrf.mxu0
    %v3720 = vadd.f32 %v3614, %v3719
    %3721 = vmatprep.mubr.f32.mxu0 0.0
    %v3722 = vand.u32 %v3269, 4294901760
    %v3723 = vsub.f32 %v3269, %v3722
    %v3724 = vand.u32 %v3723, 4294901760
    %3725 = vmatmul.mubr.f32.gmra.mxu0 %v3724
    %v3726 = vpop.f32.mrf.mxu0
    %v3727 = vadd.f32 %v3620, %v3726
    %v3728 = vpop.f32.mrf.mxu0
    %v3729 = vadd.f32 %v3622, %v3728
    %3730 = vmatprep.mubr.f32.mxu0 0.0
    %v3731 = vand.u32 %v3272, 4294901760
    %v3732 = vsub.f32 %v3272, %v3731
    %v3733 = vand.u32 %v3732, 4294901760
    %3734 = vmatmul.mubr.f32.gmra.mxu0 %v3733
    %v3735 = vpop.f32.mrf.mxu0
    %v3736 = vadd.f32 %v3628, %v3735
    %v3737 = vpop.f32.mrf.mxu0
    %v3738 = vadd.f32 %v3630, %v3737
    %3739 = vmatprep.mubr.f32.mxu0 0.0
    %v3740 = vand.u32 %v3275, 4294901760
    %v3741 = vsub.f32 %v3275, %v3740
    %v3742 = vand.u32 %v3741, 4294901760
    %3743 = vmatmul.mubr.f32.gmra.mxu0 %v3742
    %v3744 = vpop.f32.mrf.mxu0
    %v3745 = vadd.f32 %v3636, %v3744
    %v3746 = vpop.f32.mrf.mxu0
    %v3747 = vadd.f32 %v3638, %v3746
    %3748 = vdwg.mxu0
    %3749 = vmatprep.subr.mxu0 0.0
    %3750 = vmatpush1.msra.mxu0 0.0
    %3751 = vmatprep.subr.mxu0 0.0
    %3752 = vmatpush1.msra.mxu0 0.0
    %3753 = vmatprep.subr.mxu0 0.0
    %3754 = vmatpush1.msra.mxu0 0.0
    %3755 = vmatprep.subr.mxu0 0.0
    %3756 = vmatpush1.msra.mxu0 0.0
    %3757 = vmatprep.subr.mxu0 0.0
    %3758 = vmatpush1.msra.mxu0 0.0
    %3759 = vmatprep.subr.mxu0 0.0
    %3760 = vmatpush1.msra.mxu0 0.0
    %3761 = vmatprep.subr.mxu0 0.0
    %3762 = vmatpush1.msra.mxu0 0.0
    %3763 = vmatprep.subr.mxu0 0.0
    %3764 = vmatpush1.msra.mxu0 0.0
    %3765 = vmatprep.subr.mxu0 0.0
    %3766 = vmatpush1.msra.mxu0 0.0
    %3767 = vmatprep.subr.mxu0 0.0
    %3768 = vmatpush1.msra.mxu0 0.0
    %3769 = vmatprep.subr.mxu0 0.0
    %3770 = vmatpush1.msra.mxu0 0.0
    %3771 = vmatprep.subr.mxu0 0.0
    %3772 = vmatpush1.msra.mxu0 0.0
    %v3773 = vand.u32 %v3228, 4294901760
    %v3774 = vsub.f32 %v3228, %v3773
    %v3775 = vand.u32 %v3774, 4294901760
    %3776 = vmatprep.subr.mxu0 %v3775
    %v3777 = vand.u32 %v3227, 4294901760
    %v3778 = vsub.f32 %v3227, %v3777
    %v3779 = vand.u32 %v3778, 4294901760
    %3780 = vmatpush1.msra.mxu0 %v3779
    %v3781 = vand.u32 %v3220, 4294901760
    %v3782 = vsub.f32 %v3220, %v3781
    %v3783 = vand.u32 %v3782, 4294901760
    %3784 = vmatprep.subr.mxu0 %v3783
    %v3785 = vand.u32 %v3219, 4294901760
    %v3786 = vsub.f32 %v3219, %v3785
    %v3787 = vand.u32 %v3786, 4294901760
    %3788 = vmatpush1.msra.mxu0 %v3787
    %v3789 = vand.u32 %v3212, 4294901760
    %v3790 = vsub.f32 %v3212, %v3789
    %v3791 = vand.u32 %v3790, 4294901760
    %3792 = vmatprep.subr.mxu0 %v3791
    %v3793 = vand.u32 %v3211, 4294901760
    %v3794 = vsub.f32 %v3211, %v3793
    %v3795 = vand.u32 %v3794, 4294901760
    %3796 = vmatpush1.msra.mxu0 %v3795
    %v3797 = vand.u32 %v3204, 4294901760
    %v3798 = vsub.f32 %v3204, %v3797
    %v3799 = vand.u32 %v3798, 4294901760
    %3800 = vmatprep.subr.mxu0 %v3799
    %v3801 = vand.u32 %v3203, 4294901760
    %v3802 = vsub.f32 %v3203, %v3801
    %v3803 = vand.u32 %v3802, 4294901760
    %3804 = vmatpush1.msra.mxu0 %v3803
    %3805 = vmatprep.subr.mxu0 0.0
    %3806 = vmatpush2.msra.mxu0 0.0
    %3807 = vmatprep.subr.mxu0 0.0
    %3808 = vmatpush2.msra.mxu0 0.0
    %3809 = vmatprep.subr.mxu0 0.0
    %3810 = vmatpush2.msra.mxu0 0.0
    %3811 = vmatprep.subr.mxu0 0.0
    %3812 = vmatpush2.msra.mxu0 0.0
    %3813 = vmatprep.subr.mxu0 0.0
    %3814 = vmatpush2.msra.mxu0 0.0
    %3815 = vmatprep.subr.mxu0 0.0
    %3816 = vmatpush2.msra.mxu0 0.0
    %3817 = vmatprep.subr.mxu0 0.0
    %3818 = vmatpush2.msra.mxu0 0.0
    %3819 = vmatprep.subr.mxu0 0.0
    %3820 = vmatpush2.msra.mxu0 0.0
    %3821 = vmatprep.subr.mxu0 0.0
    %3822 = vmatpush2.msra.mxu0 0.0
    %3823 = vmatprep.subr.mxu0 0.0
    %3824 = vmatpush2.msra.mxu0 0.0
    %3825 = vmatprep.subr.mxu0 0.0
    %3826 = vmatpush2.msra.mxu0 0.0
    %3827 = vmatprep.subr.mxu0 0.0
    %3828 = vmatpush2.msra.mxu0 0.0
    %3829 = vmatprep.subr.mxu0 0.0
    %3830 = vmatpush2.msra.mxu0 0.0
    %3831 = vmatprep.subr.mxu0 0.0
    %3832 = vmatpush2.msra.mxu0 0.0
    %3833 = vmatprep.subr.mxu0 0.0
    %3834 = vmatpush2.msra.mxu0 0.0
    %3835 = vmatprep.subr.mxu0 0.0
    %3836 = vmatpush2.msra.mxu0 0.0
    %3837 = vmatprep.mubr.f32.mxu0 0.0
    %v3838 = vand.u32 %v3266, 4294901760
    %3839 = vmatmul.mubr.f32.gmra.mxu0 %v3838
    %v3840 = vpop.f32.mrf.mxu0
    %v3841 = vadd.f32 %v3718, %v3840
    %v3842 = vpop.f32.mrf.mxu0
    %v3843 = vadd.f32 %v3720, %v3842
    %3844 = vmatprep.mubr.f32.mxu0 0.0
    %v3845 = vand.u32 %v3269, 4294901760
    %3846 = vmatmul.mubr.f32.gmra.mxu0 %v3845
    %v3847 = vpop.f32.mrf.mxu0
    %v3848 = vadd.f32 %v3727, %v3847
    %v3849 = vpop.f32.mrf.mxu0
    %v3850 = vadd.f32 %v3729, %v3849
    %3851 = vmatprep.mubr.f32.mxu0 0.0
    %v3852 = vand.u32 %v3272, 4294901760
    %3853 = vmatmul.mubr.f32.gmra.mxu0 %v3852
    %v3854 = vpop.f32.mrf.mxu0
    %v3855 = vadd.f32 %v3736, %v3854
    %v3856 = vpop.f32.mrf.mxu0
    %v3857 = vadd.f32 %v3738, %v3856
    %3858 = vmatprep.mubr.f32.mxu0 0.0
    %v3859 = vand.u32 %v3275, 4294901760
    %3860 = vmatmul.mubr.f32.gmra.mxu0 %v3859
    %v3861 = vpop.f32.mrf.mxu0
    %v3862 = vadd.f32 %v3745, %v3861
    %v3863 = vpop.f32.mrf.mxu0
    %v3864 = vadd.f32 %v3747, %v3863
    %3865 = vdwg.mxu0
    %3866 = vmatprep.subr.mxu0 0.0
    %3867 = vmatpush1.msra.mxu0 0.0
    %3868 = vmatprep.subr.mxu0 0.0
    %3869 = vmatpush1.msra.mxu0 0.0
    %3870 = vmatprep.subr.mxu0 0.0
    %3871 = vmatpush1.msra.mxu0 0.0
    %3872 = vmatprep.subr.mxu0 0.0
    %3873 = vmatpush1.msra.mxu0 0.0
    %3874 = vmatprep.subr.mxu0 0.0
    %3875 = vmatpush1.msra.mxu0 0.0
    %3876 = vmatprep.subr.mxu0 0.0
    %3877 = vmatpush1.msra.mxu0 0.0
    %3878 = vmatprep.subr.mxu0 0.0
    %3879 = vmatpush1.msra.mxu0 0.0
    %3880 = vmatprep.subr.mxu0 0.0
    %3881 = vmatpush1.msra.mxu0 0.0
    %3882 = vmatprep.subr.mxu0 0.0
    %3883 = vmatpush1.msra.mxu0 0.0
    %3884 = vmatprep.subr.mxu0 0.0
    %3885 = vmatpush1.msra.mxu0 0.0
    %3886 = vmatprep.subr.mxu0 0.0
    %3887 = vmatpush1.msra.mxu0 0.0
    %3888 = vmatprep.subr.mxu0 0.0
    %3889 = vmatpush1.msra.mxu0 0.0
    %v3890 = vand.u32 %v3228, 4294901760
    %3891 = vmatprep.subr.mxu0 %v3890
    %v3892 = vand.u32 %v3227, 4294901760
    %3893 = vmatpush1.msra.mxu0 %v3892
    %v3894 = vand.u32 %v3220, 4294901760
    %3895 = vmatprep.subr.mxu0 %v3894
    %v3896 = vand.u32 %v3219, 4294901760
    %3897 = vmatpush1.msra.mxu0 %v3896
    %v3898 = vand.u32 %v3212, 4294901760
    %3899 = vmatprep.subr.mxu0 %v3898
    %v3900 = vand.u32 %v3211, 4294901760
    %3901 = vmatpush1.msra.mxu0 %v3900
    %v3902 = vand.u32 %v3204, 4294901760
    %3903 = vmatprep.subr.mxu0 %v3902
    %v3904 = vand.u32 %v3203, 4294901760
    %3905 = vmatpush1.msra.mxu0 %v3904
    %3906 = vmatprep.subr.mxu0 0.0
    %3907 = vmatpush2.msra.mxu0 0.0
    %3908 = vmatprep.subr.mxu0 0.0
    %3909 = vmatpush2.msra.mxu0 0.0
    %3910 = vmatprep.subr.mxu0 0.0
    %3911 = vmatpush2.msra.mxu0 0.0
    %3912 = vmatprep.subr.mxu0 0.0
    %3913 = vmatpush2.msra.mxu0 0.0
    %3914 = vmatprep.subr.mxu0 0.0
    %3915 = vmatpush2.msra.mxu0 0.0
    %3916 = vmatprep.subr.mxu0 0.0
    %3917 = vmatpush2.msra.mxu0 0.0
    %3918 = vmatprep.subr.mxu0 0.0
    %3919 = vmatpush2.msra.mxu0 0.0
    %3920 = vmatprep.subr.mxu0 0.0
    %3921 = vmatpush2.msra.mxu0 0.0
    %3922 = vmatprep.subr.mxu0 0.0
    %3923 = vmatpush2.msra.mxu0 0.0
    %3924 = vmatprep.subr.mxu0 0.0
    %3925 = vmatpush2.msra.mxu0 0.0
    %3926 = vmatprep.subr.mxu0 0.0
    %3927 = vmatpush2.msra.mxu0 0.0
    %3928 = vmatprep.subr.mxu0 0.0
    %3929 = vmatpush2.msra.mxu0 0.0
    %3930 = vmatprep.subr.mxu0 0.0
    %3931 = vmatpush2.msra.mxu0 0.0
    %3932 = vmatprep.subr.mxu0 0.0
    %3933 = vmatpush2.msra.mxu0 0.0
    %3934 = vmatprep.subr.mxu0 0.0
    %3935 = vmatpush2.msra.mxu0 0.0
    %3936 = vmatprep.subr.mxu0 0.0
    %3937 = vmatpush2.msra.mxu0 0.0
    %3938 = vmatprep.mubr.f32.mxu0 0.0
    %v3939 = vand.u32 %v3266, 4294901760
    %3940 = vmatmul.mubr.f32.gmra.mxu0 %v3939
    %v3941 = vpop.f32.mrf.mxu0
    %v3942 = vadd.f32 %v3841, %v3941
    %v3943 = vpop.f32.mrf.mxu0
    %v3944 = vadd.f32 %v3843, %v3943
    %3945 = vmatprep.mubr.f32.mxu0 0.0
    %v3946 = vand.u32 %v3269, 4294901760
    %3947 = vmatmul.mubr.f32.gmra.mxu0 %v3946
    %v3948 = vpop.f32.mrf.mxu0
    %v3949 = vadd.f32 %v3848, %v3948
    %v3950 = vpop.f32.mrf.mxu0
    %v3951 = vadd.f32 %v3850, %v3950
    %3952 = vmatprep.mubr.f32.mxu0 0.0
    %v3953 = vand.u32 %v3272, 4294901760
    %3954 = vmatmul.mubr.f32.gmra.mxu0 %v3953
    %v3955 = vpop.f32.mrf.mxu0
    %v3956 = vadd.f32 %v3855, %v3955
    %v3957 = vpop.f32.mrf.mxu0
    %v3958 = vadd.f32 %v3857, %v3957
    %3959 = vmatprep.mubr.f32.mxu0 0.0
    %v3960 = vand.u32 %v3275, 4294901760
    %3961 = vmatmul.mubr.f32.gmra.mxu0 %v3960
    %v3962 = vpop.f32.mrf.mxu0
    %v3963 = vadd.f32 %v3862, %v3962
    %v3964 = vpop.f32.mrf.mxu0
    %v3965 = vadd.f32 %v3864, %v3964
    %3966 = vdwg.mxu0
    %3967 = vmatprep.subr.mxu0 0.0
    %3968 = vmatpush1.msra.mxu0 0.0
    %3969 = vmatprep.subr.mxu0 0.0
    %3970 = vmatpush1.msra.mxu0 0.0
    %3971 = vmatprep.subr.mxu0 0.0
    %3972 = vmatpush1.msra.mxu0 0.0
    %3973 = vmatprep.subr.mxu0 0.0
    %3974 = vmatpush1.msra.mxu0 0.0
    %3975 = vmatprep.subr.mxu0 0.0
    %3976 = vmatpush1.msra.mxu0 0.0
    %3977 = vmatprep.subr.mxu0 0.0
    %3978 = vmatpush1.msra.mxu0 0.0
    %3979 = vmatprep.subr.mxu0 0.0
    %3980 = vmatpush1.msra.mxu0 0.0
    %3981 = vmatprep.subr.mxu0 0.0
    %3982 = vmatpush1.msra.mxu0 0.0
    %3983 = vmatprep.subr.mxu0 0.0
    %3984 = vmatpush1.msra.mxu0 0.0
    %3985 = vmatprep.subr.mxu0 0.0
    %3986 = vmatpush1.msra.mxu0 0.0
    %3987 = vmatprep.subr.mxu0 0.0
    %3988 = vmatpush1.msra.mxu0 0.0
    %3989 = vmatprep.subr.mxu0 0.0
    %3990 = vmatpush1.msra.mxu0 0.0
    %v3991 = vand.u32 %v3230, 4294901760
    %3992 = vmatprep.subr.mxu0 %v3991
    %v3993 = vand.u32 %v3229, 4294901760
    %3994 = vmatpush1.msra.mxu0 %v3993
    %v3995 = vand.u32 %v3222, 4294901760
    %3996 = vmatprep.subr.mxu0 %v3995
    %v3997 = vand.u32 %v3221, 4294901760
    %3998 = vmatpush1.msra.mxu0 %v3997
    %v3999 = vand.u32 %v3214, 4294901760
    %4000 = vmatprep.subr.mxu0 %v3999
    %v4001 = vand.u32 %v3213, 4294901760
    %4002 = vmatpush1.msra.mxu0 %v4001
    %v4003 = vand.u32 %v3206, 4294901760
    %4004 = vmatprep.subr.mxu0 %v4003
    %v4005 = vand.u32 %v3205, 4294901760
    %4006 = vmatpush1.msra.mxu0 %v4005
    %4007 = vmatprep.subr.mxu0 0.0
    %4008 = vmatpush2.msra.mxu0 0.0
    %4009 = vmatprep.subr.mxu0 0.0
    %4010 = vmatpush2.msra.mxu0 0.0
    %4011 = vmatprep.subr.mxu0 0.0
    %4012 = vmatpush2.msra.mxu0 0.0
    %4013 = vmatprep.subr.mxu0 0.0
    %4014 = vmatpush2.msra.mxu0 0.0
    %4015 = vmatprep.subr.mxu0 0.0
    %4016 = vmatpush2.msra.mxu0 0.0
    %4017 = vmatprep.subr.mxu0 0.0
    %4018 = vmatpush2.msra.mxu0 0.0
    %4019 = vmatprep.subr.mxu0 0.0
    %4020 = vmatpush2.msra.mxu0 0.0
    %4021 = vmatprep.subr.mxu0 0.0
    %4022 = vmatpush2.msra.mxu0 0.0
    %4023 = vmatprep.subr.mxu0 0.0
    %4024 = vmatpush2.msra.mxu0 0.0
    %4025 = vmatprep.subr.mxu0 0.0
    %4026 = vmatpush2.msra.mxu0 0.0
    %4027 = vmatprep.subr.mxu0 0.0
    %4028 = vmatpush2.msra.mxu0 0.0
    %4029 = vmatprep.subr.mxu0 0.0
    %4030 = vmatpush2.msra.mxu0 0.0
    %4031 = vmatprep.subr.mxu0 0.0
    %4032 = vmatpush2.msra.mxu0 0.0
    %4033 = vmatprep.subr.mxu0 0.0
    %4034 = vmatpush2.msra.mxu0 0.0
    %4035 = vmatprep.subr.mxu0 0.0
    %4036 = vmatpush2.msra.mxu0 0.0
    %4037 = vmatprep.subr.mxu0 0.0
    %4038 = vmatpush2.msra.mxu0 0.0
    %4039 = vmatprep.mubr.f32.mxu0 0.0
    %v4040 = vand.u32 %v3266, 4294901760
    %v4041 = vsub.f32 %v3266, %v4040
    %v4042 = vand.u32 %v4041, 4294901760
    %v4043 = vsub.f32 %v4041, %v4042
    %v4044 = vand.u32 %v4043, 4294901760
    %4045 = vmatmul.mubr.f32.gmra.mxu0 %v4044
    %v4046 = vpop.f32.mrf.mxu0
    %v4047 = vadd.f32 %v3248, %v4046
    %v4048 = vpop.f32.mrf.mxu0
    %v4049 = vadd.f32 %v3248, %v4048
    %4050 = vmatprep.mubr.f32.mxu0 0.0
    %v4051 = vand.u32 %v3269, 4294901760
    %v4052 = vsub.f32 %v3269, %v4051
    %v4053 = vand.u32 %v4052, 4294901760
    %v4054 = vsub.f32 %v4052, %v4053
    %v4055 = vand.u32 %v4054, 4294901760
    %4056 = vmatmul.mubr.f32.gmra.mxu0 %v4055
    %v4057 = vpop.f32.mrf.mxu0
    %v4058 = vadd.f32 %v3253, %v4057
    %v4059 = vpop.f32.mrf.mxu0
    %v4060 = vadd.f32 %v3253, %v4059
    %4061 = vmatprep.mubr.f32.mxu0 0.0
    %v4062 = vand.u32 %v3272, 4294901760
    %v4063 = vsub.f32 %v3272, %v4062
    %v4064 = vand.u32 %v4063, 4294901760
    %v4065 = vsub.f32 %v4063, %v4064
    %v4066 = vand.u32 %v4065, 4294901760
    %4067 = vmatmul.mubr.f32.gmra.mxu0 %v4066
    %v4068 = vpop.f32.mrf.mxu0
    %v4069 = vadd.f32 %v3258, %v4068
    %v4070 = vpop.f32.mrf.mxu0
    %v4071 = vadd.f32 %v3258, %v4070
    %4072 = vmatprep.mubr.f32.mxu0 0.0
    %v4073 = vand.u32 %v3275, 4294901760
    %v4074 = vsub.f32 %v3275, %v4073
    %v4075 = vand.u32 %v4074, 4294901760
    %v4076 = vsub.f32 %v4074, %v4075
    %v4077 = vand.u32 %v4076, 4294901760
    %4078 = vmatmul.mubr.f32.gmra.mxu0 %v4077
    %v4079 = vpop.f32.mrf.mxu0
    %v4080 = vadd.f32 %v3263, %v4079
    %v4081 = vpop.f32.mrf.mxu0
    %v4082 = vadd.f32 %v3263, %v4081
    %4083 = vdwg.mxu0
    %4084 = vmatprep.subr.mxu0 0.0
    %4085 = vmatpush1.msra.mxu0 0.0
    %4086 = vmatprep.subr.mxu0 0.0
    %4087 = vmatpush1.msra.mxu0 0.0
    %4088 = vmatprep.subr.mxu0 0.0
    %4089 = vmatpush1.msra.mxu0 0.0
    %4090 = vmatprep.subr.mxu0 0.0
    %4091 = vmatpush1.msra.mxu0 0.0
    %4092 = vmatprep.subr.mxu0 0.0
    %4093 = vmatpush1.msra.mxu0 0.0
    %4094 = vmatprep.subr.mxu0 0.0
    %4095 = vmatpush1.msra.mxu0 0.0
    %4096 = vmatprep.subr.mxu0 0.0
    %4097 = vmatpush1.msra.mxu0 0.0
    %4098 = vmatprep.subr.mxu0 0.0
    %4099 = vmatpush1.msra.mxu0 0.0
    %4100 = vmatprep.subr.mxu0 0.0
    %4101 = vmatpush1.msra.mxu0 0.0
    %4102 = vmatprep.subr.mxu0 0.0
    %4103 = vmatpush1.msra.mxu0 0.0
    %4104 = vmatprep.subr.mxu0 0.0
    %4105 = vmatpush1.msra.mxu0 0.0
    %4106 = vmatprep.subr.mxu0 0.0
    %4107 = vmatpush1.msra.mxu0 0.0
    %v4108 = vand.u32 %v3230, 4294901760
    %v4109 = vsub.f32 %v3230, %v4108
    %v4110 = vand.u32 %v4109, 4294901760
    %v4111 = vsub.f32 %v4109, %v4110
    %v4112 = vand.u32 %v4111, 4294901760
    %4113 = vmatprep.subr.mxu0 %v4112
    %v4114 = vand.u32 %v3229, 4294901760
    %v4115 = vsub.f32 %v3229, %v4114
    %v4116 = vand.u32 %v4115, 4294901760
    %v4117 = vsub.f32 %v4115, %v4116
    %v4118 = vand.u32 %v4117, 4294901760
    %4119 = vmatpush1.msra.mxu0 %v4118
    %v4120 = vand.u32 %v3222, 4294901760
    %v4121 = vsub.f32 %v3222, %v4120
    %v4122 = vand.u32 %v4121, 4294901760
    %v4123 = vsub.f32 %v4121, %v4122
    %v4124 = vand.u32 %v4123, 4294901760
    %4125 = vmatprep.subr.mxu0 %v4124
    %v4126 = vand.u32 %v3221, 4294901760
    %v4127 = vsub.f32 %v3221, %v4126
    %v4128 = vand.u32 %v4127, 4294901760
    %v4129 = vsub.f32 %v4127, %v4128
    %v4130 = vand.u32 %v4129, 4294901760
    %4131 = vmatpush1.msra.mxu0 %v4130
    %v4132 = vand.u32 %v3214, 4294901760
    %v4133 = vsub.f32 %v3214, %v4132
    %v4134 = vand.u32 %v4133, 4294901760
    %v4135 = vsub.f32 %v4133, %v4134
    %v4136 = vand.u32 %v4135, 4294901760
    %4137 = vmatprep.subr.mxu0 %v4136
    %v4138 = vand.u32 %v3213, 4294901760
    %v4139 = vsub.f32 %v3213, %v4138
    %v4140 = vand.u32 %v4139, 4294901760
    %v4141 = vsub.f32 %v4139, %v4140
    %v4142 = vand.u32 %v4141, 4294901760
    %4143 = vmatpush1.msra.mxu0 %v4142
    %v4144 = vand.u32 %v3206, 4294901760
    %v4145 = vsub.f32 %v3206, %v4144
    %v4146 = vand.u32 %v4145, 4294901760
    %v4147 = vsub.f32 %v4145, %v4146
    %v4148 = vand.u32 %v4147, 4294901760
    %4149 = vmatprep.subr.mxu0 %v4148
    %v4150 = vand.u32 %v3205, 4294901760
    %v4151 = vsub.f32 %v3205, %v4150
    %v4152 = vand.u32 %v4151, 4294901760
    %v4153 = vsub.f32 %v4151, %v4152
    %v4154 = vand.u32 %v4153, 4294901760
    %4155 = vmatpush1.msra.mxu0 %v4154
    %4156 = vmatprep.subr.mxu0 0.0
    %4157 = vmatpush2.msra.mxu0 0.0
    %4158 = vmatprep.subr.mxu0 0.0
    %4159 = vmatpush2.msra.mxu0 0.0
    %4160 = vmatprep.subr.mxu0 0.0
    %4161 = vmatpush2.msra.mxu0 0.0
    %4162 = vmatprep.subr.mxu0 0.0
    %4163 = vmatpush2.msra.mxu0 0.0
    %4164 = vmatprep.subr.mxu0 0.0
    %4165 = vmatpush2.msra.mxu0 0.0
    %4166 = vmatprep.subr.mxu0 0.0
    %4167 = vmatpush2.msra.mxu0 0.0
    %4168 = vmatprep.subr.mxu0 0.0
    %4169 = vmatpush2.msra.mxu0 0.0
    %4170 = vmatprep.subr.mxu0 0.0
    %4171 = vmatpush2.msra.mxu0 0.0
    %4172 = vmatprep.subr.mxu0 0.0
    %4173 = vmatpush2.msra.mxu0 0.0
    %4174 = vmatprep.subr.mxu0 0.0
    %4175 = vmatpush2.msra.mxu0 0.0
    %4176 = vmatprep.subr.mxu0 0.0
    %4177 = vmatpush2.msra.mxu0 0.0
    %4178 = vmatprep.subr.mxu0 0.0
    %4179 = vmatpush2.msra.mxu0 0.0
    %4180 = vmatprep.subr.mxu0 0.0
    %4181 = vmatpush2.msra.mxu0 0.0
    %4182 = vmatprep.subr.mxu0 0.0
    %4183 = vmatpush2.msra.mxu0 0.0
    %4184 = vmatprep.subr.mxu0 0.0
    %4185 = vmatpush2.msra.mxu0 0.0
    %4186 = vmatprep.subr.mxu0 0.0
    %4187 = vmatpush2.msra.mxu0 0.0
    %4188 = vmatprep.mubr.f32.mxu0 0.0
    %v4189 = vand.u32 %v3266, 4294901760
    %4190 = vmatmul.mubr.f32.gmra.mxu0 %v4189
    %v4191 = vpop.f32.mrf.mxu0
    %v4192 = vadd.f32 %v4047, %v4191
    %v4193 = vpop.f32.mrf.mxu0
    %v4194 = vadd.f32 %v4049, %v4193
    %4195 = vmatprep.mubr.f32.mxu0 0.0
    %v4196 = vand.u32 %v3269, 4294901760
    %4197 = vmatmul.mubr.f32.gmra.mxu0 %v4196
    %v4198 = vpop.f32.mrf.mxu0
    %v4199 = vadd.f32 %v4058, %v4198
    %v4200 = vpop.f32.mrf.mxu0
    %v4201 = vadd.f32 %v4060, %v4200
    %4202 = vmatprep.mubr.f32.mxu0 0.0
    %v4203 = vand.u32 %v3272, 4294901760
    %4204 = vmatmul.mubr.f32.gmra.mxu0 %v4203
    %v4205 = vpop.f32.mrf.mxu0
    %v4206 = vadd.f32 %v4069, %v4205
    %v4207 = vpop.f32.mrf.mxu0
    %v4208 = vadd.f32 %v4071, %v4207
    %4209 = vmatprep.mubr.f32.mxu0 0.0
    %v4210 = vand.u32 %v3275, 4294901760
    %4211 = vmatmul.mubr.f32.gmra.mxu0 %v4210
    %v4212 = vpop.f32.mrf.mxu0
    %v4213 = vadd.f32 %v4080, %v4212
    %v4214 = vpop.f32.mrf.mxu0
    %v4215 = vadd.f32 %v4082, %v4214
    %4216 = vdwg.mxu0
    %4217 = vmatprep.subr.mxu0 0.0
    %4218 = vmatpush1.msra.mxu0 0.0
    %4219 = vmatprep.subr.mxu0 0.0
    %4220 = vmatpush1.msra.mxu0 0.0
    %4221 = vmatprep.subr.mxu0 0.0
    %4222 = vmatpush1.msra.mxu0 0.0
    %4223 = vmatprep.subr.mxu0 0.0
    %4224 = vmatpush1.msra.mxu0 0.0
    %4225 = vmatprep.subr.mxu0 0.0
    %4226 = vmatpush1.msra.mxu0 0.0
    %4227 = vmatprep.subr.mxu0 0.0
    %4228 = vmatpush1.msra.mxu0 0.0
    %4229 = vmatprep.subr.mxu0 0.0
    %4230 = vmatpush1.msra.mxu0 0.0
    %4231 = vmatprep.subr.mxu0 0.0
    %4232 = vmatpush1.msra.mxu0 0.0
    %4233 = vmatprep.subr.mxu0 0.0
    %4234 = vmatpush1.msra.mxu0 0.0
    %4235 = vmatprep.subr.mxu0 0.0
    %4236 = vmatpush1.msra.mxu0 0.0
    %4237 = vmatprep.subr.mxu0 0.0
    %4238 = vmatpush1.msra.mxu0 0.0
    %4239 = vmatprep.subr.mxu0 0.0
    %4240 = vmatpush1.msra.mxu0 0.0
    %v4241 = vand.u32 %v3230, 4294901760
    %v4242 = vsub.f32 %v3230, %v4241
    %4243 = vmatprep.subr.mxu0 %v4242
    %v4244 = vand.u32 %v3229, 4294901760
    %v4245 = vsub.f32 %v3229, %v4244
    %4246 = vmatpush1.msra.mxu0 %v4245
    %v4247 = vand.u32 %v3222, 4294901760
    %v4248 = vsub.f32 %v3222, %v4247
    %4249 = vmatprep.subr.mxu0 %v4248
    %v4250 = vand.u32 %v3221, 4294901760
    %v4251 = vsub.f32 %v3221, %v4250
    %4252 = vmatpush1.msra.mxu0 %v4251
    %v4253 = vand.u32 %v3214, 4294901760
    %v4254 = vsub.f32 %v3214, %v4253
    %4255 = vmatprep.subr.mxu0 %v4254
    %v4256 = vand.u32 %v3213, 4294901760
    %v4257 = vsub.f32 %v3213, %v4256
    %4258 = vmatpush1.msra.mxu0 %v4257
    %v4259 = vand.u32 %v3206, 4294901760
    %v4260 = vsub.f32 %v3206, %v4259
    %4261 = vmatprep.subr.mxu0 %v4260
    %v4262 = vand.u32 %v3205, 4294901760
    %v4263 = vsub.f32 %v3205, %v4262
    %4264 = vmatpush1.msra.mxu0 %v4263
    %4265 = vmatprep.subr.mxu0 0.0
    %4266 = vmatpush2.msra.mxu0 0.0
    %4267 = vmatprep.subr.mxu0 0.0
    %4268 = vmatpush2.msra.mxu0 0.0
    %4269 = vmatprep.subr.mxu0 0.0
    %4270 = vmatpush2.msra.mxu0 0.0
    %4271 = vmatprep.subr.mxu0 0.0
    %4272 = vmatpush2.msra.mxu0 0.0
    %4273 = vmatprep.subr.mxu0 0.0
    %4274 = vmatpush2.msra.mxu0 0.0
    %4275 = vmatprep.subr.mxu0 0.0
    %4276 = vmatpush2.msra.mxu0 0.0
    %4277 = vmatprep.subr.mxu0 0.0
    %4278 = vmatpush2.msra.mxu0 0.0
    %4279 = vmatprep.subr.mxu0 0.0
    %4280 = vmatpush2.msra.mxu0 0.0
    %4281 = vmatprep.subr.mxu0 0.0
    %4282 = vmatpush2.msra.mxu0 0.0
    %4283 = vmatprep.subr.mxu0 0.0
    %4284 = vmatpush2.msra.mxu0 0.0
    %4285 = vmatprep.subr.mxu0 0.0
    %4286 = vmatpush2.msra.mxu0 0.0
    %4287 = vmatprep.subr.mxu0 0.0
    %4288 = vmatpush2.msra.mxu0 0.0
    %4289 = vmatprep.subr.mxu0 0.0
    %4290 = vmatpush2.msra.mxu0 0.0
    %4291 = vmatprep.subr.mxu0 0.0
    %4292 = vmatpush2.msra.mxu0 0.0
    %4293 = vmatprep.subr.mxu0 0.0
    %4294 = vmatpush2.msra.mxu0 0.0
    %4295 = vmatprep.subr.mxu0 0.0
    %4296 = vmatpush2.msra.mxu0 0.0
    %4297 = vmatprep.mubr.f32.mxu0 0.0
    %v4298 = vand.u32 %v3266, 4294901760
    %v4299 = vsub.f32 %v3266, %v4298
    %4300 = vmatmul.mubr.f32.gmra.mxu0 %v4299
    %v4301 = vpop.f32.mrf.mxu0
    %v4302 = vadd.f32 %v4192, %v4301
    %v4303 = vpop.f32.mrf.mxu0
    %v4304 = vadd.f32 %v4194, %v4303
    %4305 = vmatprep.mubr.f32.mxu0 0.0
    %v4306 = vand.u32 %v3269, 4294901760
    %v4307 = vsub.f32 %v3269, %v4306
    %4308 = vmatmul.mubr.f32.gmra.mxu0 %v4307
    %v4309 = vpop.f32.mrf.mxu0
    %v4310 = vadd.f32 %v4199, %v4309
    %v4311 = vpop.f32.mrf.mxu0
    %v4312 = vadd.f32 %v4201, %v4311
    %4313 = vmatprep.mubr.f32.mxu0 0.0
    %v4314 = vand.u32 %v3272, 4294901760
    %v4315 = vsub.f32 %v3272, %v4314
    %4316 = vmatmul.mubr.f32.gmra.mxu0 %v4315
    %v4317 = vpop.f32.mrf.mxu0
    %v4318 = vadd.f32 %v4206, %v4317
    %v4319 = vpop.f32.mrf.mxu0
    %v4320 = vadd.f32 %v4208, %v4319
    %4321 = vmatprep.mubr.f32.mxu0 0.0
    %v4322 = vand.u32 %v3275, 4294901760
    %v4323 = vsub.f32 %v3275, %v4322
    %4324 = vmatmul.mubr.f32.gmra.mxu0 %v4323
    %v4325 = vpop.f32.mrf.mxu0
    %v4326 = vadd.f32 %v4213, %v4325
    %v4327 = vpop.f32.mrf.mxu0
    %v4328 = vadd.f32 %v4215, %v4327
    %4329 = vdwg.mxu0
    %4330 = vmatprep.subr.mxu0 0.0
    %4331 = vmatpush1.msra.mxu0 0.0
    %4332 = vmatprep.subr.mxu0 0.0
    %4333 = vmatpush1.msra.mxu0 0.0
    %4334 = vmatprep.subr.mxu0 0.0
    %4335 = vmatpush1.msra.mxu0 0.0
    %4336 = vmatprep.subr.mxu0 0.0
    %4337 = vmatpush1.msra.mxu0 0.0
    %4338 = vmatprep.subr.mxu0 0.0
    %4339 = vmatpush1.msra.mxu0 0.0
    %4340 = vmatprep.subr.mxu0 0.0
    %4341 = vmatpush1.msra.mxu0 0.0
    %4342 = vmatprep.subr.mxu0 0.0
    %4343 = vmatpush1.msra.mxu0 0.0
    %4344 = vmatprep.subr.mxu0 0.0
    %4345 = vmatpush1.msra.mxu0 0.0
    %4346 = vmatprep.subr.mxu0 0.0
    %4347 = vmatpush1.msra.mxu0 0.0
    %4348 = vmatprep.subr.mxu0 0.0
    %4349 = vmatpush1.msra.mxu0 0.0
    %4350 = vmatprep.subr.mxu0 0.0
    %4351 = vmatpush1.msra.mxu0 0.0
    %4352 = vmatprep.subr.mxu0 0.0
    %4353 = vmatpush1.msra.mxu0 0.0
    %v4354 = vand.u32 %v3230, 4294901760
    %4355 = vmatprep.subr.mxu0 %v4354
    %v4356 = vand.u32 %v3229, 4294901760
    %4357 = vmatpush1.msra.mxu0 %v4356
    %v4358 = vand.u32 %v3222, 4294901760
    %4359 = vmatprep.subr.mxu0 %v4358
    %v4360 = vand.u32 %v3221, 4294901760
    %4361 = vmatpush1.msra.mxu0 %v4360
    %v4362 = vand.u32 %v3214, 4294901760
    %4363 = vmatprep.subr.mxu0 %v4362
    %v4364 = vand.u32 %v3213, 4294901760
    %4365 = vmatpush1.msra.mxu0 %v4364
    %v4366 = vand.u32 %v3206, 4294901760
    %4367 = vmatprep.subr.mxu0 %v4366
    %v4368 = vand.u32 %v3205, 4294901760
    %4369 = vmatpush1.msra.mxu0 %v4368
    %4370 = vmatprep.subr.mxu0 0.0
    %4371 = vmatpush2.msra.mxu0 0.0
    %4372 = vmatprep.subr.mxu0 0.0
    %4373 = vmatpush2.msra.mxu0 0.0
    %4374 = vmatprep.subr.mxu0 0.0
    %4375 = vmatpush2.msra.mxu0 0.0
    %4376 = vmatprep.subr.mxu0 0.0
    %4377 = vmatpush2.msra.mxu0 0.0
    %4378 = vmatprep.subr.mxu0 0.0
    %4379 = vmatpush2.msra.mxu0 0.0
    %4380 = vmatprep.subr.mxu0 0.0
    %4381 = vmatpush2.msra.mxu0 0.0
    %4382 = vmatprep.subr.mxu0 0.0
    %4383 = vmatpush2.msra.mxu0 0.0
    %4384 = vmatprep.subr.mxu0 0.0
    %4385 = vmatpush2.msra.mxu0 0.0
    %4386 = vmatprep.subr.mxu0 0.0
    %4387 = vmatpush2.msra.mxu0 0.0
    %4388 = vmatprep.subr.mxu0 0.0
    %4389 = vmatpush2.msra.mxu0 0.0
    %4390 = vmatprep.subr.mxu0 0.0
    %4391 = vmatpush2.msra.mxu0 0.0
    %4392 = vmatprep.subr.mxu0 0.0
    %4393 = vmatpush2.msra.mxu0 0.0
    %4394 = vmatprep.subr.mxu0 0.0
    %4395 = vmatpush2.msra.mxu0 0.0
    %4396 = vmatprep.subr.mxu0 0.0
    %4397 = vmatpush2.msra.mxu0 0.0
    %4398 = vmatprep.subr.mxu0 0.0
    %4399 = vmatpush2.msra.mxu0 0.0
    %4400 = vmatprep.subr.mxu0 0.0
    %4401 = vmatpush2.msra.mxu0 0.0
    %4402 = vmatprep.mubr.f32.mxu0 0.0
    %v4403 = vand.u32 %v3266, 4294901760
    %v4404 = vsub.f32 %v3266, %v4403
    %v4405 = vand.u32 %v4404, 4294901760
    %4406 = vmatmul.mubr.f32.gmra.mxu0 %v4405
    %v4407 = vpop.f32.mrf.mxu0
    %v4408 = vadd.f32 %v4302, %v4407
    %v4409 = vpop.f32.mrf.mxu0
    %v4410 = vadd.f32 %v4304, %v4409
    %4411 = vmatprep.mubr.f32.mxu0 0.0
    %v4412 = vand.u32 %v3269, 4294901760
    %v4413 = vsub.f32 %v3269, %v4412
    %v4414 = vand.u32 %v4413, 4294901760
    %4415 = vmatmul.mubr.f32.gmra.mxu0 %v4414
    %v4416 = vpop.f32.mrf.mxu0
    %v4417 = vadd.f32 %v4310, %v4416
    %v4418 = vpop.f32.mrf.mxu0
    %v4419 = vadd.f32 %v4312, %v4418
    %4420 = vmatprep.mubr.f32.mxu0 0.0
    %v4421 = vand.u32 %v3272, 4294901760
    %v4422 = vsub.f32 %v3272, %v4421
    %v4423 = vand.u32 %v4422, 4294901760
    %4424 = vmatmul.mubr.f32.gmra.mxu0 %v4423
    %v4425 = vpop.f32.mrf.mxu0
    %v4426 = vadd.f32 %v4318, %v4425
    %v4427 = vpop.f32.mrf.mxu0
    %v4428 = vadd.f32 %v4320, %v4427
    %4429 = vmatprep.mubr.f32.mxu0 0.0
    %v4430 = vand.u32 %v3275, 4294901760
    %v4431 = vsub.f32 %v3275, %v4430
    %v4432 = vand.u32 %v4431, 4294901760
    %4433 = vmatmul.mubr.f32.gmra.mxu0 %v4432
    %v4434 = vpop.f32.mrf.mxu0
    %v4435 = vadd.f32 %v4326, %v4434
    %v4436 = vpop.f32.mrf.mxu0
    %v4437 = vadd.f32 %v4328, %v4436
    %4438 = vdwg.mxu0
    %4439 = vmatprep.subr.mxu0 0.0
    %4440 = vmatpush1.msra.mxu0 0.0
    %4441 = vmatprep.subr.mxu0 0.0
    %4442 = vmatpush1.msra.mxu0 0.0
    %4443 = vmatprep.subr.mxu0 0.0
    %4444 = vmatpush1.msra.mxu0 0.0
    %4445 = vmatprep.subr.mxu0 0.0
    %4446 = vmatpush1.msra.mxu0 0.0
    %4447 = vmatprep.subr.mxu0 0.0
    %4448 = vmatpush1.msra.mxu0 0.0
    %4449 = vmatprep.subr.mxu0 0.0
    %4450 = vmatpush1.msra.mxu0 0.0
    %4451 = vmatprep.subr.mxu0 0.0
    %4452 = vmatpush1.msra.mxu0 0.0
    %4453 = vmatprep.subr.mxu0 0.0
    %4454 = vmatpush1.msra.mxu0 0.0
    %4455 = vmatprep.subr.mxu0 0.0
    %4456 = vmatpush1.msra.mxu0 0.0
    %4457 = vmatprep.subr.mxu0 0.0
    %4458 = vmatpush1.msra.mxu0 0.0
    %4459 = vmatprep.subr.mxu0 0.0
    %4460 = vmatpush1.msra.mxu0 0.0
    %4461 = vmatprep.subr.mxu0 0.0
    %4462 = vmatpush1.msra.mxu0 0.0
    %v4463 = vand.u32 %v3230, 4294901760
    %v4464 = vsub.f32 %v3230, %v4463
    %v4465 = vand.u32 %v4464, 4294901760
    %4466 = vmatprep.subr.mxu0 %v4465
    %v4467 = vand.u32 %v3229, 4294901760
    %v4468 = vsub.f32 %v3229, %v4467
    %v4469 = vand.u32 %v4468, 4294901760
    %4470 = vmatpush1.msra.mxu0 %v4469
    %v4471 = vand.u32 %v3222, 4294901760
    %v4472 = vsub.f32 %v3222, %v4471
    %v4473 = vand.u32 %v4472, 4294901760
    %4474 = vmatprep.subr.mxu0 %v4473
    %v4475 = vand.u32 %v3221, 4294901760
    %v4476 = vsub.f32 %v3221, %v4475
    %v4477 = vand.u32 %v4476, 4294901760
    %4478 = vmatpush1.msra.mxu0 %v4477
    %v4479 = vand.u32 %v3214, 4294901760
    %v4480 = vsub.f32 %v3214, %v4479
    %v4481 = vand.u32 %v4480, 4294901760
    %4482 = vmatprep.subr.mxu0 %v4481
    %v4483 = vand.u32 %v3213, 4294901760
    %v4484 = vsub.f32 %v3213, %v4483
    %v4485 = vand.u32 %v4484, 4294901760
    %4486 = vmatpush1.msra.mxu0 %v4485
    %v4487 = vand.u32 %v3206, 4294901760
    %v4488 = vsub.f32 %v3206, %v4487
    %v4489 = vand.u32 %v4488, 4294901760
    %4490 = vmatprep.subr.mxu0 %v4489
    %v4491 = vand.u32 %v3205, 4294901760
    %v4492 = vsub.f32 %v3205, %v4491
    %v4493 = vand.u32 %v4492, 4294901760
    %4494 = vmatpush1.msra.mxu0 %v4493
    %4495 = vmatprep.subr.mxu0 0.0
    %4496 = vmatpush2.msra.mxu0 0.0
    %4497 = vmatprep.subr.mxu0 0.0
    %4498 = vmatpush2.msra.mxu0 0.0
    %4499 = vmatprep.subr.mxu0 0.0
    %4500 = vmatpush2.msra.mxu0 0.0
    %4501 = vmatprep.subr.mxu0 0.0
    %4502 = vmatpush2.msra.mxu0 0.0
    %4503 = vmatprep.subr.mxu0 0.0
    %4504 = vmatpush2.msra.mxu0 0.0
    %4505 = vmatprep.subr.mxu0 0.0
    %4506 = vmatpush2.msra.mxu0 0.0
    %4507 = vmatprep.subr.mxu0 0.0
    %4508 = vmatpush2.msra.mxu0 0.0
    %4509 = vmatprep.subr.mxu0 0.0
    %4510 = vmatpush2.msra.mxu0 0.0
    %4511 = vmatprep.subr.mxu0 0.0
    %4512 = vmatpush2.msra.mxu0 0.0
    %4513 = vmatprep.subr.mxu0 0.0
    %4514 = vmatpush2.msra.mxu0 0.0
    %4515 = vmatprep.subr.mxu0 0.0
    %4516 = vmatpush2.msra.mxu0 0.0
    %4517 = vmatprep.subr.mxu0 0.0
    %4518 = vmatpush2.msra.mxu0 0.0
    %4519 = vmatprep.subr.mxu0 0.0
    %4520 = vmatpush2.msra.mxu0 0.0
    %4521 = vmatprep.subr.mxu0 0.0
    %4522 = vmatpush2.msra.mxu0 0.0
    %4523 = vmatprep.subr.mxu0 0.0
    %4524 = vmatpush2.msra.mxu0 0.0
    %4525 = vmatprep.subr.mxu0 0.0
    %4526 = vmatpush2.msra.mxu0 0.0
    %4527 = vmatprep.mubr.f32.mxu0 0.0
    %v4528 = vand.u32 %v3266, 4294901760
    %4529 = vmatmul.mubr.f32.gmra.mxu0 %v4528
    %v4530 = vpop.f32.mrf.mxu0
    %v4531 = vadd.f32 %v4408, %v4530
    %v4532 = vpop.f32.mrf.mxu0
    %v4533 = vadd.f32 %v4410, %v4532
    %4534 = vmatprep.mubr.f32.mxu0 0.0
    %v4535 = vand.u32 %v3269, 4294901760
    %4536 = vmatmul.mubr.f32.gmra.mxu0 %v4535
    %v4537 = vpop.f32.mrf.mxu0
    %v4538 = vadd.f32 %v4417, %v4537
    %v4539 = vpop.f32.mrf.mxu0
    %v4540 = vadd.f32 %v4419, %v4539
    %4541 = vmatprep.mubr.f32.mxu0 0.0
    %v4542 = vand.u32 %v3272, 4294901760
    %4543 = vmatmul.mubr.f32.gmra.mxu0 %v4542
    %v4544 = vpop.f32.mrf.mxu0
    %v4545 = vadd.f32 %v4426, %v4544
    %v4546 = vpop.f32.mrf.mxu0
    %v4547 = vadd.f32 %v4428, %v4546
    %4548 = vmatprep.mubr.f32.mxu0 0.0
    %v4549 = vand.u32 %v3275, 4294901760
    %4550 = vmatmul.mubr.f32.gmra.mxu0 %v4549
    %v4551 = vpop.f32.mrf.mxu0
    %v4552 = vadd.f32 %v4435, %v4551
    %v4553 = vpop.f32.mrf.mxu0
    %v4554 = vadd.f32 %v4437, %v4553
    %4555 = vdwg.mxu0
    %4556 = vmatprep.subr.mxu0 0.0
    %4557 = vmatpush1.msra.mxu0 0.0
    %4558 = vmatprep.subr.mxu0 0.0
    %4559 = vmatpush1.msra.mxu0 0.0
    %4560 = vmatprep.subr.mxu0 0.0
    %4561 = vmatpush1.msra.mxu0 0.0
    %4562 = vmatprep.subr.mxu0 0.0
    %4563 = vmatpush1.msra.mxu0 0.0
    %4564 = vmatprep.subr.mxu0 0.0
    %4565 = vmatpush1.msra.mxu0 0.0
    %4566 = vmatprep.subr.mxu0 0.0
    %4567 = vmatpush1.msra.mxu0 0.0
    %4568 = vmatprep.subr.mxu0 0.0
    %4569 = vmatpush1.msra.mxu0 0.0
    %4570 = vmatprep.subr.mxu0 0.0
    %4571 = vmatpush1.msra.mxu0 0.0
    %4572 = vmatprep.subr.mxu0 0.0
    %4573 = vmatpush1.msra.mxu0 0.0
    %4574 = vmatprep.subr.mxu0 0.0
    %4575 = vmatpush1.msra.mxu0 0.0
    %4576 = vmatprep.subr.mxu0 0.0
    %4577 = vmatpush1.msra.mxu0 0.0
    %4578 = vmatprep.subr.mxu0 0.0
    %4579 = vmatpush1.msra.mxu0 0.0
    %v4580 = vand.u32 %v3230, 4294901760
    %4581 = vmatprep.subr.mxu0 %v4580
    %v4582 = vand.u32 %v3229, 4294901760
    %4583 = vmatpush1.msra.mxu0 %v4582
    %v4584 = vand.u32 %v3222, 4294901760
    %4585 = vmatprep.subr.mxu0 %v4584
    %v4586 = vand.u32 %v3221, 4294901760
    %4587 = vmatpush1.msra.mxu0 %v4586
    %v4588 = vand.u32 %v3214, 4294901760
    %4589 = vmatprep.subr.mxu0 %v4588
    %v4590 = vand.u32 %v3213, 4294901760
    %4591 = vmatpush1.msra.mxu0 %v4590
    %v4592 = vand.u32 %v3206, 4294901760
    %4593 = vmatprep.subr.mxu0 %v4592
    %v4594 = vand.u32 %v3205, 4294901760
    %4595 = vmatpush1.msra.mxu0 %v4594
    %4596 = vmatprep.subr.mxu0 0.0
    %4597 = vmatpush2.msra.mxu0 0.0
    %4598 = vmatprep.subr.mxu0 0.0
    %4599 = vmatpush2.msra.mxu0 0.0
    %4600 = vmatprep.subr.mxu0 0.0
    %4601 = vmatpush2.msra.mxu0 0.0
    %4602 = vmatprep.subr.mxu0 0.0
    %4603 = vmatpush2.msra.mxu0 0.0
    %4604 = vmatprep.subr.mxu0 0.0
    %4605 = vmatpush2.msra.mxu0 0.0
    %4606 = vmatprep.subr.mxu0 0.0
    %4607 = vmatpush2.msra.mxu0 0.0
    %4608 = vmatprep.subr.mxu0 0.0
    %4609 = vmatpush2.msra.mxu0 0.0
    %4610 = vmatprep.subr.mxu0 0.0
    %4611 = vmatpush2.msra.mxu0 0.0
    %4612 = vmatprep.subr.mxu0 0.0
    %4613 = vmatpush2.msra.mxu0 0.0
    %4614 = vmatprep.subr.mxu0 0.0
    %4615 = vmatpush2.msra.mxu0 0.0
    %4616 = vmatprep.subr.mxu0 0.0
    %4617 = vmatpush2.msra.mxu0 0.0
    %4618 = vmatprep.subr.mxu0 0.0
    %4619 = vmatpush2.msra.mxu0 0.0
    %4620 = vmatprep.subr.mxu0 0.0
    %4621 = vmatpush2.msra.mxu0 0.0
    %4622 = vmatprep.subr.mxu0 0.0
    %4623 = vmatpush2.msra.mxu0 0.0
    %4624 = vmatprep.subr.mxu0 0.0
    %4625 = vmatpush2.msra.mxu0 0.0
    %4626 = vmatprep.subr.mxu0 0.0
    %4627 = vmatpush2.msra.mxu0 0.0
    %4628 = vmatprep.mubr.f32.mxu0 0.0
    %v4629 = vand.u32 %v3266, 4294901760
    %4630 = vmatmul.mubr.f32.gmra.mxu0 %v4629
    %v4631 = vpop.f32.mrf.mxu0
    %v4632 = vadd.f32 %v4531, %v4631
    %v4633 = vpop.f32.mrf.mxu0
    %v4634 = vadd.f32 %v4533, %v4633
    %4635 = vmatprep.mubr.f32.mxu0 0.0
    %v4636 = vand.u32 %v3269, 4294901760
    %4637 = vmatmul.mubr.f32.gmra.mxu0 %v4636
    %v4638 = vpop.f32.mrf.mxu0
    %v4639 = vadd.f32 %v4538, %v4638
    %v4640 = vpop.f32.mrf.mxu0
    %v4641 = vadd.f32 %v4540, %v4640
    %4642 = vmatprep.mubr.f32.mxu0 0.0
    %v4643 = vand.u32 %v3272, 4294901760
    %4644 = vmatmul.mubr.f32.gmra.mxu0 %v4643
    %v4645 = vpop.f32.mrf.mxu0
    %v4646 = vadd.f32 %v4545, %v4645
    %v4647 = vpop.f32.mrf.mxu0
    %v4648 = vadd.f32 %v4547, %v4647
    %4649 = vmatprep.mubr.f32.mxu0 0.0
    %v4650 = vand.u32 %v3275, 4294901760
    %4651 = vmatmul.mubr.f32.gmra.mxu0 %v4650
    %v4652 = vpop.f32.mrf.mxu0
    %v4653 = vadd.f32 %v4552, %v4652
    %v4654 = vpop.f32.mrf.mxu0
    %v4655 = vadd.f32 %v4554, %v4654
    %4656 = vdwg.mxu0
    %4657 = vmatprep.subr.mxu0 0.0
    %4658 = vmatpush1.msra.mxu0 0.0
    %4659 = vmatprep.subr.mxu0 0.0
    %4660 = vmatpush1.msra.mxu0 0.0
    %4661 = vmatprep.subr.mxu0 0.0
    %4662 = vmatpush1.msra.mxu0 0.0
    %4663 = vmatprep.subr.mxu0 0.0
    %4664 = vmatpush1.msra.mxu0 0.0
    %4665 = vmatprep.subr.mxu0 0.0
    %4666 = vmatpush1.msra.mxu0 0.0
    %4667 = vmatprep.subr.mxu0 0.0
    %4668 = vmatpush1.msra.mxu0 0.0
    %4669 = vmatprep.subr.mxu0 0.0
    %4670 = vmatpush1.msra.mxu0 0.0
    %4671 = vmatprep.subr.mxu0 0.0
    %4672 = vmatpush1.msra.mxu0 0.0
    %4673 = vmatprep.subr.mxu0 0.0
    %4674 = vmatpush1.msra.mxu0 0.0
    %4675 = vmatprep.subr.mxu0 0.0
    %4676 = vmatpush1.msra.mxu0 0.0
    %4677 = vmatprep.subr.mxu0 0.0
    %4678 = vmatpush1.msra.mxu0 0.0
    %4679 = vmatprep.subr.mxu0 0.0
    %4680 = vmatpush1.msra.mxu0 0.0
    %v4681 = vand.u32 %v3232, 4294901760
    %4682 = vmatprep.subr.mxu0 %v4681
    %v4683 = vand.u32 %v3231, 4294901760
    %4684 = vmatpush1.msra.mxu0 %v4683
    %v4685 = vand.u32 %v3224, 4294901760
    %4686 = vmatprep.subr.mxu0 %v4685
    %v4687 = vand.u32 %v3223, 4294901760
    %4688 = vmatpush1.msra.mxu0 %v4687
    %v4689 = vand.u32 %v3216, 4294901760
    %4690 = vmatprep.subr.mxu0 %v4689
    %v4691 = vand.u32 %v3215, 4294901760
    %4692 = vmatpush1.msra.mxu0 %v4691
    %v4693 = vand.u32 %v3208, 4294901760
    %4694 = vmatprep.subr.mxu0 %v4693
    %v4695 = vand.u32 %v3207, 4294901760
    %4696 = vmatpush1.msra.mxu0 %v4695
    %4697 = vmatprep.subr.mxu0 0.0
    %4698 = vmatpush2.msra.mxu0 0.0
    %4699 = vmatprep.subr.mxu0 0.0
    %4700 = vmatpush2.msra.mxu0 0.0
    %4701 = vmatprep.subr.mxu0 0.0
    %4702 = vmatpush2.msra.mxu0 0.0
    %4703 = vmatprep.subr.mxu0 0.0
    %4704 = vmatpush2.msra.mxu0 0.0
    %4705 = vmatprep.subr.mxu0 0.0
    %4706 = vmatpush2.msra.mxu0 0.0
    %4707 = vmatprep.subr.mxu0 0.0
    %4708 = vmatpush2.msra.mxu0 0.0
    %4709 = vmatprep.subr.mxu0 0.0
    %4710 = vmatpush2.msra.mxu0 0.0
    %4711 = vmatprep.subr.mxu0 0.0
    %4712 = vmatpush2.msra.mxu0 0.0
    %4713 = vmatprep.subr.mxu0 0.0
    %4714 = vmatpush2.msra.mxu0 0.0
    %4715 = vmatprep.subr.mxu0 0.0
    %4716 = vmatpush2.msra.mxu0 0.0
    %4717 = vmatprep.subr.mxu0 0.0
    %4718 = vmatpush2.msra.mxu0 0.0
    %4719 = vmatprep.subr.mxu0 0.0
    %4720 = vmatpush2.msra.mxu0 0.0
    %4721 = vmatprep.subr.mxu0 0.0
    %4722 = vmatpush2.msra.mxu0 0.0
    %4723 = vmatprep.subr.mxu0 0.0
    %4724 = vmatpush2.msra.mxu0 0.0
    %4725 = vmatprep.subr.mxu0 0.0
    %4726 = vmatpush2.msra.mxu0 0.0
    %4727 = vmatprep.subr.mxu0 0.0
    %4728 = vmatpush2.msra.mxu0 0.0
    %4729 = vmatprep.mubr.f32.mxu0 0.0
    %v4730 = vand.u32 %v3266, 4294901760
    %v4731 = vsub.f32 %v3266, %v4730
    %v4732 = vand.u32 %v4731, 4294901760
    %v4733 = vsub.f32 %v4731, %v4732
    %v4734 = vand.u32 %v4733, 4294901760
    %4735 = vmatmul.mubr.f32.gmra.mxu0 %v4734
    %v4736 = vpop.f32.mrf.mxu0
    %v4737 = vadd.f32 %v3248, %v4736
    %v4738 = vpop.f32.mrf.mxu0
    %v4739 = vadd.f32 %v3248, %v4738
    %4740 = vmatprep.mubr.f32.mxu0 0.0
    %v4741 = vand.u32 %v3269, 4294901760
    %v4742 = vsub.f32 %v3269, %v4741
    %v4743 = vand.u32 %v4742, 4294901760
    %v4744 = vsub.f32 %v4742, %v4743
    %v4745 = vand.u32 %v4744, 4294901760
    %4746 = vmatmul.mubr.f32.gmra.mxu0 %v4745
    %v4747 = vpop.f32.mrf.mxu0
    %v4748 = vadd.f32 %v3253, %v4747
    %v4749 = vpop.f32.mrf.mxu0
    %v4750 = vadd.f32 %v3253, %v4749
    %4751 = vmatprep.mubr.f32.mxu0 0.0
    %v4752 = vand.u32 %v3272, 4294901760
    %v4753 = vsub.f32 %v3272, %v4752
    %v4754 = vand.u32 %v4753, 4294901760
    %v4755 = vsub.f32 %v4753, %v4754
    %v4756 = vand.u32 %v4755, 4294901760
    %4757 = vmatmul.mubr.f32.gmra.mxu0 %v4756
    %v4758 = vpop.f32.mrf.mxu0
    %v4759 = vadd.f32 %v3258, %v4758
    %v4760 = vpop.f32.mrf.mxu0
    %v4761 = vadd.f32 %v3258, %v4760
    %4762 = vmatprep.mubr.f32.mxu0 0.0
    %v4763 = vand.u32 %v3275, 4294901760
    %v4764 = vsub.f32 %v3275, %v4763
    %v4765 = vand.u32 %v4764, 4294901760
    %v4766 = vsub.f32 %v4764, %v4765
    %v4767 = vand.u32 %v4766, 4294901760
    %4768 = vmatmul.mubr.f32.gmra.mxu0 %v4767
    %v4769 = vpop.f32.mrf.mxu0
    %v4770 = vadd.f32 %v3263, %v4769
    %v4771 = vpop.f32.mrf.mxu0
    %v4772 = vadd.f32 %v3263, %v4771
    %4773 = vdwg.mxu0
    %4774 = vmatprep.subr.mxu0 0.0
    %4775 = vmatpush1.msra.mxu0 0.0
    %4776 = vmatprep.subr.mxu0 0.0
    %4777 = vmatpush1.msra.mxu0 0.0
    %4778 = vmatprep.subr.mxu0 0.0
    %4779 = vmatpush1.msra.mxu0 0.0
    %4780 = vmatprep.subr.mxu0 0.0
    %4781 = vmatpush1.msra.mxu0 0.0
    %4782 = vmatprep.subr.mxu0 0.0
    %4783 = vmatpush1.msra.mxu0 0.0
    %4784 = vmatprep.subr.mxu0 0.0
    %4785 = vmatpush1.msra.mxu0 0.0
    %4786 = vmatprep.subr.mxu0 0.0
    %4787 = vmatpush1.msra.mxu0 0.0
    %4788 = vmatprep.subr.mxu0 0.0
    %4789 = vmatpush1.msra.mxu0 0.0
    %4790 = vmatprep.subr.mxu0 0.0
    %4791 = vmatpush1.msra.mxu0 0.0
    %4792 = vmatprep.subr.mxu0 0.0
    %4793 = vmatpush1.msra.mxu0 0.0
    %4794 = vmatprep.subr.mxu0 0.0
    %4795 = vmatpush1.msra.mxu0 0.0
    %4796 = vmatprep.subr.mxu0 0.0
    %4797 = vmatpush1.msra.mxu0 0.0
    %v4798 = vand.u32 %v3232, 4294901760
    %v4799 = vsub.f32 %v3232, %v4798
    %v4800 = vand.u32 %v4799, 4294901760
    %v4801 = vsub.f32 %v4799, %v4800
    %v4802 = vand.u32 %v4801, 4294901760
    %4803 = vmatprep.subr.mxu0 %v4802
    %v4804 = vand.u32 %v3231, 4294901760
    %v4805 = vsub.f32 %v3231, %v4804
    %v4806 = vand.u32 %v4805, 4294901760
    %v4807 = vsub.f32 %v4805, %v4806
    %v4808 = vand.u32 %v4807, 4294901760
    %4809 = vmatpush1.msra.mxu0 %v4808
    %v4810 = vand.u32 %v3224, 4294901760
    %v4811 = vsub.f32 %v3224, %v4810
    %v4812 = vand.u32 %v4811, 4294901760
    %v4813 = vsub.f32 %v4811, %v4812
    %v4814 = vand.u32 %v4813, 4294901760
    %4815 = vmatprep.subr.mxu0 %v4814
    %v4816 = vand.u32 %v3223, 4294901760
    %v4817 = vsub.f32 %v3223, %v4816
    %v4818 = vand.u32 %v4817, 4294901760
    %v4819 = vsub.f32 %v4817, %v4818
    %v4820 = vand.u32 %v4819, 4294901760
    %4821 = vmatpush1.msra.mxu0 %v4820
    %v4822 = vand.u32 %v3216, 4294901760
    %v4823 = vsub.f32 %v3216, %v4822
    %v4824 = vand.u32 %v4823, 4294901760
    %v4825 = vsub.f32 %v4823, %v4824
    %v4826 = vand.u32 %v4825, 4294901760
    %4827 = vmatprep.subr.mxu0 %v4826
    %v4828 = vand.u32 %v3215, 4294901760
    %v4829 = vsub.f32 %v3215, %v4828
    %v4830 = vand.u32 %v4829, 4294901760
    %v4831 = vsub.f32 %v4829, %v4830
    %v4832 = vand.u32 %v4831, 4294901760
    %4833 = vmatpush1.msra.mxu0 %v4832
    %v4834 = vand.u32 %v3208, 4294901760
    %v4835 = vsub.f32 %v3208, %v4834
    %v4836 = vand.u32 %v4835, 4294901760
    %v4837 = vsub.f32 %v4835, %v4836
    %v4838 = vand.u32 %v4837, 4294901760
    %4839 = vmatprep.subr.mxu0 %v4838
    %v4840 = vand.u32 %v3207, 4294901760
    %v4841 = vsub.f32 %v3207, %v4840
    %v4842 = vand.u32 %v4841, 4294901760
    %v4843 = vsub.f32 %v4841, %v4842
    %v4844 = vand.u32 %v4843, 4294901760
    %4845 = vmatpush1.msra.mxu0 %v4844
    %4846 = vmatprep.subr.mxu0 0.0
    %4847 = vmatpush2.msra.mxu0 0.0
    %4848 = vmatprep.subr.mxu0 0.0
    %4849 = vmatpush2.msra.mxu0 0.0
    %4850 = vmatprep.subr.mxu0 0.0
    %4851 = vmatpush2.msra.mxu0 0.0
    %4852 = vmatprep.subr.mxu0 0.0
    %4853 = vmatpush2.msra.mxu0 0.0
    %4854 = vmatprep.subr.mxu0 0.0
    %4855 = vmatpush2.msra.mxu0 0.0
    %4856 = vmatprep.subr.mxu0 0.0
    %4857 = vmatpush2.msra.mxu0 0.0
    %4858 = vmatprep.subr.mxu0 0.0
    %4859 = vmatpush2.msra.mxu0 0.0
    %4860 = vmatprep.subr.mxu0 0.0
    %4861 = vmatpush2.msra.mxu0 0.0
    %4862 = vmatprep.subr.mxu0 0.0
    %4863 = vmatpush2.msra.mxu0 0.0
    %4864 = vmatprep.subr.mxu0 0.0
    %4865 = vmatpush2.msra.mxu0 0.0
    %4866 = vmatprep.subr.mxu0 0.0
    %4867 = vmatpush2.msra.mxu0 0.0
    %4868 = vmatprep.subr.mxu0 0.0
    %4869 = vmatpush2.msra.mxu0 0.0
    %4870 = vmatprep.subr.mxu0 0.0
    %4871 = vmatpush2.msra.mxu0 0.0
    %4872 = vmatprep.subr.mxu0 0.0
    %4873 = vmatpush2.msra.mxu0 0.0
    %4874 = vmatprep.subr.mxu0 0.0
    %4875 = vmatpush2.msra.mxu0 0.0
    %4876 = vmatprep.subr.mxu0 0.0
    %4877 = vmatpush2.msra.mxu0 0.0
    %4878 = vmatprep.mubr.f32.mxu0 0.0
    %v4879 = vand.u32 %v3266, 4294901760
    %4880 = vmatmul.mubr.f32.gmra.mxu0 %v4879
    %v4881 = vpop.f32.mrf.mxu0
    %v4882 = vadd.f32 %v4737, %v4881
    %v4883 = vpop.f32.mrf.mxu0
    %v4884 = vadd.f32 %v4739, %v4883
    %4885 = vmatprep.mubr.f32.mxu0 0.0
    %v4886 = vand.u32 %v3269, 4294901760
    %4887 = vmatmul.mubr.f32.gmra.mxu0 %v4886
    %v4888 = vpop.f32.mrf.mxu0
    %v4889 = vadd.f32 %v4748, %v4888
    %v4890 = vpop.f32.mrf.mxu0
    %v4891 = vadd.f32 %v4750, %v4890
    %4892 = vmatprep.mubr.f32.mxu0 0.0
    %v4893 = vand.u32 %v3272, 4294901760
    %4894 = vmatmul.mubr.f32.gmra.mxu0 %v4893
    %v4895 = vpop.f32.mrf.mxu0
    %v4896 = vadd.f32 %v4759, %v4895
    %v4897 = vpop.f32.mrf.mxu0
    %v4898 = vadd.f32 %v4761, %v4897
    %4899 = vmatprep.mubr.f32.mxu0 0.0
    %v4900 = vand.u32 %v3275, 4294901760
    %4901 = vmatmul.mubr.f32.gmra.mxu0 %v4900
    %v4902 = vpop.f32.mrf.mxu0
    %v4903 = vadd.f32 %v4770, %v4902
    %v4904 = vpop.f32.mrf.mxu0
    %v4905 = vadd.f32 %v4772, %v4904
    %4906 = vdwg.mxu0
    %4907 = vmatprep.subr.mxu0 0.0
    %4908 = vmatpush1.msra.mxu0 0.0
    %4909 = vmatprep.subr.mxu0 0.0
    %4910 = vmatpush1.msra.mxu0 0.0
    %4911 = vmatprep.subr.mxu0 0.0
    %4912 = vmatpush1.msra.mxu0 0.0
    %4913 = vmatprep.subr.mxu0 0.0
    %4914 = vmatpush1.msra.mxu0 0.0
    %4915 = vmatprep.subr.mxu0 0.0
    %4916 = vmatpush1.msra.mxu0 0.0
    %4917 = vmatprep.subr.mxu0 0.0
    %4918 = vmatpush1.msra.mxu0 0.0
    %4919 = vmatprep.subr.mxu0 0.0
    %4920 = vmatpush1.msra.mxu0 0.0
    %4921 = vmatprep.subr.mxu0 0.0
    %4922 = vmatpush1.msra.mxu0 0.0
    %4923 = vmatprep.subr.mxu0 0.0
    %4924 = vmatpush1.msra.mxu0 0.0
    %4925 = vmatprep.subr.mxu0 0.0
    %4926 = vmatpush1.msra.mxu0 0.0
    %4927 = vmatprep.subr.mxu0 0.0
    %4928 = vmatpush1.msra.mxu0 0.0
    %4929 = vmatprep.subr.mxu0 0.0
    %4930 = vmatpush1.msra.mxu0 0.0
    %v4931 = vand.u32 %v3232, 4294901760
    %v4932 = vsub.f32 %v3232, %v4931
    %4933 = vmatprep.subr.mxu0 %v4932
    %v4934 = vand.u32 %v3231, 4294901760
    %v4935 = vsub.f32 %v3231, %v4934
    %4936 = vmatpush1.msra.mxu0 %v4935
    %v4937 = vand.u32 %v3224, 4294901760
    %v4938 = vsub.f32 %v3224, %v4937
    %4939 = vmatprep.subr.mxu0 %v4938
    %v4940 = vand.u32 %v3223, 4294901760
    %v4941 = vsub.f32 %v3223, %v4940
    %4942 = vmatpush1.msra.mxu0 %v4941
    %v4943 = vand.u32 %v3216, 4294901760
    %v4944 = vsub.f32 %v3216, %v4943
    %4945 = vmatprep.subr.mxu0 %v4944
    %v4946 = vand.u32 %v3215, 4294901760
    %v4947 = vsub.f32 %v3215, %v4946
    %4948 = vmatpush1.msra.mxu0 %v4947
    %v4949 = vand.u32 %v3208, 4294901760
    %v4950 = vsub.f32 %v3208, %v4949
    %4951 = vmatprep.subr.mxu0 %v4950
    %v4952 = vand.u32 %v3207, 4294901760
    %v4953 = vsub.f32 %v3207, %v4952
    %4954 = vmatpush1.msra.mxu0 %v4953
    %4955 = vmatprep.subr.mxu0 0.0
    %4956 = vmatpush2.msra.mxu0 0.0
    %4957 = vmatprep.subr.mxu0 0.0
    %4958 = vmatpush2.msra.mxu0 0.0
    %4959 = vmatprep.subr.mxu0 0.0
    %4960 = vmatpush2.msra.mxu0 0.0
    %4961 = vmatprep.subr.mxu0 0.0
    %4962 = vmatpush2.msra.mxu0 0.0
    %4963 = vmatprep.subr.mxu0 0.0
    %4964 = vmatpush2.msra.mxu0 0.0
    %4965 = vmatprep.subr.mxu0 0.0
    %4966 = vmatpush2.msra.mxu0 0.0
    %4967 = vmatprep.subr.mxu0 0.0
    %4968 = vmatpush2.msra.mxu0 0.0
    %4969 = vmatprep.subr.mxu0 0.0
    %4970 = vmatpush2.msra.mxu0 0.0
    %4971 = vmatprep.subr.mxu0 0.0
    %4972 = vmatpush2.msra.mxu0 0.0
    %4973 = vmatprep.subr.mxu0 0.0
    %4974 = vmatpush2.msra.mxu0 0.0
    %4975 = vmatprep.subr.mxu0 0.0
    %4976 = vmatpush2.msra.mxu0 0.0
    %4977 = vmatprep.subr.mxu0 0.0
    %4978 = vmatpush2.msra.mxu0 0.0
    %4979 = vmatprep.subr.mxu0 0.0
    %4980 = vmatpush2.msra.mxu0 0.0
    %4981 = vmatprep.subr.mxu0 0.0
    %4982 = vmatpush2.msra.mxu0 0.0
    %4983 = vmatprep.subr.mxu0 0.0
    %4984 = vmatpush2.msra.mxu0 0.0
    %4985 = vmatprep.subr.mxu0 0.0
    %4986 = vmatpush2.msra.mxu0 0.0
    %4987 = vmatprep.mubr.f32.mxu0 0.0
    %v4988 = vand.u32 %v3266, 4294901760
    %v4989 = vsub.f32 %v3266, %v4988
    %4990 = vmatmul.mubr.f32.gmra.mxu0 %v4989
    %v4991 = vpop.f32.mrf.mxu0
    %v4992 = vadd.f32 %v4882, %v4991
    %v4993 = vpop.f32.mrf.mxu0
    %v4994 = vadd.f32 %v4884, %v4993
    %4995 = vmatprep.mubr.f32.mxu0 0.0
    %v4996 = vand.u32 %v3269, 4294901760
    %v4997 = vsub.f32 %v3269, %v4996
    %4998 = vmatmul.mubr.f32.gmra.mxu0 %v4997
    %v4999 = vpop.f32.mrf.mxu0
    %v5000 = vadd.f32 %v4889, %v4999
    %v5001 = vpop.f32.mrf.mxu0
    %v5002 = vadd.f32 %v4891, %v5001
    %5003 = vmatprep.mubr.f32.mxu0 0.0
    %v5004 = vand.u32 %v3272, 4294901760
    %v5005 = vsub.f32 %v3272, %v5004
    %5006 = vmatmul.mubr.f32.gmra.mxu0 %v5005
    %v5007 = vpop.f32.mrf.mxu0
    %v5008 = vadd.f32 %v4896, %v5007
    %v5009 = vpop.f32.mrf.mxu0
    %v5010 = vadd.f32 %v4898, %v5009
    %5011 = vmatprep.mubr.f32.mxu0 0.0
    %v5012 = vand.u32 %v3275, 4294901760
    %v5013 = vsub.f32 %v3275, %v5012
    %5014 = vmatmul.mubr.f32.gmra.mxu0 %v5013
    %v5015 = vpop.f32.mrf.mxu0
    %v5016 = vadd.f32 %v4903, %v5015
    %v5017 = vpop.f32.mrf.mxu0
    %v5018 = vadd.f32 %v4905, %v5017
    %5019 = vdwg.mxu0
    %5020 = vmatprep.subr.mxu0 0.0
    %5021 = vmatpush1.msra.mxu0 0.0
    %5022 = vmatprep.subr.mxu0 0.0
    %5023 = vmatpush1.msra.mxu0 0.0
    %5024 = vmatprep.subr.mxu0 0.0
    %5025 = vmatpush1.msra.mxu0 0.0
    %5026 = vmatprep.subr.mxu0 0.0
    %5027 = vmatpush1.msra.mxu0 0.0
    %5028 = vmatprep.subr.mxu0 0.0
    %5029 = vmatpush1.msra.mxu0 0.0
    %5030 = vmatprep.subr.mxu0 0.0
    %5031 = vmatpush1.msra.mxu0 0.0
    %5032 = vmatprep.subr.mxu0 0.0
    %5033 = vmatpush1.msra.mxu0 0.0
    %5034 = vmatprep.subr.mxu0 0.0
    %5035 = vmatpush1.msra.mxu0 0.0
    %5036 = vmatprep.subr.mxu0 0.0
    %5037 = vmatpush1.msra.mxu0 0.0
    %5038 = vmatprep.subr.mxu0 0.0
    %5039 = vmatpush1.msra.mxu0 0.0
    %5040 = vmatprep.subr.mxu0 0.0
    %5041 = vmatpush1.msra.mxu0 0.0
    %5042 = vmatprep.subr.mxu0 0.0
    %5043 = vmatpush1.msra.mxu0 0.0
    %v5044 = vand.u32 %v3232, 4294901760
    %5045 = vmatprep.subr.mxu0 %v5044
    %v5046 = vand.u32 %v3231, 4294901760
    %5047 = vmatpush1.msra.mxu0 %v5046
    %v5048 = vand.u32 %v3224, 4294901760
    %5049 = vmatprep.subr.mxu0 %v5048
    %v5050 = vand.u32 %v3223, 4294901760
    %5051 = vmatpush1.msra.mxu0 %v5050
    %v5052 = vand.u32 %v3216, 4294901760
    %5053 = vmatprep.subr.mxu0 %v5052
    %v5054 = vand.u32 %v3215, 4294901760
    %5055 = vmatpush1.msra.mxu0 %v5054
    %v5056 = vand.u32 %v3208, 4294901760
    %5057 = vmatprep.subr.mxu0 %v5056
    %v5058 = vand.u32 %v3207, 4294901760
    %5059 = vmatpush1.msra.mxu0 %v5058
    %5060 = vmatprep.subr.mxu0 0.0
    %5061 = vmatpush2.msra.mxu0 0.0
    %5062 = vmatprep.subr.mxu0 0.0
    %5063 = vmatpush2.msra.mxu0 0.0
    %5064 = vmatprep.subr.mxu0 0.0
    %5065 = vmatpush2.msra.mxu0 0.0
    %5066 = vmatprep.subr.mxu0 0.0
    %5067 = vmatpush2.msra.mxu0 0.0
    %5068 = vmatprep.subr.mxu0 0.0
    %5069 = vmatpush2.msra.mxu0 0.0
    %5070 = vmatprep.subr.mxu0 0.0
    %5071 = vmatpush2.msra.mxu0 0.0
    %5072 = vmatprep.subr.mxu0 0.0
    %5073 = vmatpush2.msra.mxu0 0.0
    %5074 = vmatprep.subr.mxu0 0.0
    %5075 = vmatpush2.msra.mxu0 0.0
    %5076 = vmatprep.subr.mxu0 0.0
    %5077 = vmatpush2.msra.mxu0 0.0
    %5078 = vmatprep.subr.mxu0 0.0
    %5079 = vmatpush2.msra.mxu0 0.0
    %5080 = vmatprep.subr.mxu0 0.0
    %5081 = vmatpush2.msra.mxu0 0.0
    %5082 = vmatprep.subr.mxu0 0.0
    %5083 = vmatpush2.msra.mxu0 0.0
    %5084 = vmatprep.subr.mxu0 0.0
    %5085 = vmatpush2.msra.mxu0 0.0
    %5086 = vmatprep.subr.mxu0 0.0
    %5087 = vmatpush2.msra.mxu0 0.0
    %5088 = vmatprep.subr.mxu0 0.0
    %5089 = vmatpush2.msra.mxu0 0.0
    %5090 = vmatprep.subr.mxu0 0.0
    %5091 = vmatpush2.msra.mxu0 0.0
    %5092 = vmatprep.mubr.f32.mxu0 0.0
    %v5093 = vand.u32 %v3266, 4294901760
    %v5094 = vsub.f32 %v3266, %v5093
    %v5095 = vand.u32 %v5094, 4294901760
    %5096 = vmatmul.mubr.f32.gmra.mxu0 %v5095
    %v5097 = vpop.f32.mrf.mxu0
    %v5098 = vadd.f32 %v4992, %v5097
    %v5099 = vpop.f32.mrf.mxu0
    %v5100 = vadd.f32 %v4994, %v5099
    %5101 = vmatprep.mubr.f32.mxu0 0.0
    %v5102 = vand.u32 %v3269, 4294901760
    %v5103 = vsub.f32 %v3269, %v5102
    %v5104 = vand.u32 %v5103, 4294901760
    %5105 = vmatmul.mubr.f32.gmra.mxu0 %v5104
    %v5106 = vpop.f32.mrf.mxu0
    %v5107 = vadd.f32 %v5000, %v5106
    %v5108 = vpop.f32.mrf.mxu0
    %v5109 = vadd.f32 %v5002, %v5108
    %5110 = vmatprep.mubr.f32.mxu0 0.0
    %v5111 = vand.u32 %v3272, 4294901760
    %v5112 = vsub.f32 %v3272, %v5111
    %v5113 = vand.u32 %v5112, 4294901760
    %5114 = vmatmul.mubr.f32.gmra.mxu0 %v5113
    %v5115 = vpop.f32.mrf.mxu0
    %v5116 = vadd.f32 %v5008, %v5115
    %v5117 = vpop.f32.mrf.mxu0
    %v5118 = vadd.f32 %v5010, %v5117
    %5119 = vmatprep.mubr.f32.mxu0 0.0
    %v5120 = vand.u32 %v3275, 4294901760
    %v5121 = vsub.f32 %v3275, %v5120
    %v5122 = vand.u32 %v5121, 4294901760
    %5123 = vmatmul.mubr.f32.gmra.mxu0 %v5122
    %v5124 = vpop.f32.mrf.mxu0
    %v5125 = vadd.f32 %v5016, %v5124
    %v5126 = vpop.f32.mrf.mxu0
    %v5127 = vadd.f32 %v5018, %v5126
    %5128 = vdwg.mxu0
    %5129 = vmatprep.subr.mxu0 0.0
    %5130 = vmatpush1.msra.mxu0 0.0
    %5131 = vmatprep.subr.mxu0 0.0
    %5132 = vmatpush1.msra.mxu0 0.0
    %5133 = vmatprep.subr.mxu0 0.0
    %5134 = vmatpush1.msra.mxu0 0.0
    %5135 = vmatprep.subr.mxu0 0.0
    %5136 = vmatpush1.msra.mxu0 0.0
    %5137 = vmatprep.subr.mxu0 0.0
    %5138 = vmatpush1.msra.mxu0 0.0
    %5139 = vmatprep.subr.mxu0 0.0
    %5140 = vmatpush1.msra.mxu0 0.0
    %5141 = vmatprep.subr.mxu0 0.0
    %5142 = vmatpush1.msra.mxu0 0.0
    %5143 = vmatprep.subr.mxu0 0.0
    %5144 = vmatpush1.msra.mxu0 0.0
    %5145 = vmatprep.subr.mxu0 0.0
    %5146 = vmatpush1.msra.mxu0 0.0
    %5147 = vmatprep.subr.mxu0 0.0
    %5148 = vmatpush1.msra.mxu0 0.0
    %5149 = vmatprep.subr.mxu0 0.0
    %5150 = vmatpush1.msra.mxu0 0.0
    %5151 = vmatprep.subr.mxu0 0.0
    %5152 = vmatpush1.msra.mxu0 0.0
    %v5153 = vand.u32 %v3232, 4294901760
    %v5154 = vsub.f32 %v3232, %v5153
    %v5155 = vand.u32 %v5154, 4294901760
    %5156 = vmatprep.subr.mxu0 %v5155
    %v5157 = vand.u32 %v3231, 4294901760
    %v5158 = vsub.f32 %v3231, %v5157
    %v5159 = vand.u32 %v5158, 4294901760
    %5160 = vmatpush1.msra.mxu0 %v5159
    %v5161 = vand.u32 %v3224, 4294901760
    %v5162 = vsub.f32 %v3224, %v5161
    %v5163 = vand.u32 %v5162, 4294901760
    %5164 = vmatprep.subr.mxu0 %v5163
    %v5165 = vand.u32 %v3223, 4294901760
    %v5166 = vsub.f32 %v3223, %v5165
    %v5167 = vand.u32 %v5166, 4294901760
    %5168 = vmatpush1.msra.mxu0 %v5167
    %v5169 = vand.u32 %v3216, 4294901760
    %v5170 = vsub.f32 %v3216, %v5169
    %v5171 = vand.u32 %v5170, 4294901760
    %5172 = vmatprep.subr.mxu0 %v5171
    %v5173 = vand.u32 %v3215, 4294901760
    %v5174 = vsub.f32 %v3215, %v5173
    %v5175 = vand.u32 %v5174, 4294901760
    %5176 = vmatpush1.msra.mxu0 %v5175
    %v5177 = vand.u32 %v3208, 4294901760
    %v5178 = vsub.f32 %v3208, %v5177
    %v5179 = vand.u32 %v5178, 4294901760
    %5180 = vmatprep.subr.mxu0 %v5179
    %v5181 = vand.u32 %v3207, 4294901760
    %v5182 = vsub.f32 %v3207, %v5181
    %v5183 = vand.u32 %v5182, 4294901760
    %5184 = vmatpush1.msra.mxu0 %v5183
    %5185 = vmatprep.subr.mxu0 0.0
    %5186 = vmatpush2.msra.mxu0 0.0
    %5187 = vmatprep.subr.mxu0 0.0
    %5188 = vmatpush2.msra.mxu0 0.0
    %5189 = vmatprep.subr.mxu0 0.0
    %5190 = vmatpush2.msra.mxu0 0.0
    %5191 = vmatprep.subr.mxu0 0.0
    %5192 = vmatpush2.msra.mxu0 0.0
    %5193 = vmatprep.subr.mxu0 0.0
    %5194 = vmatpush2.msra.mxu0 0.0
    %5195 = vmatprep.subr.mxu0 0.0
    %5196 = vmatpush2.msra.mxu0 0.0
    %5197 = vmatprep.subr.mxu0 0.0
    %5198 = vmatpush2.msra.mxu0 0.0
    %5199 = vmatprep.subr.mxu0 0.0
    %5200 = vmatpush2.msra.mxu0 0.0
    %5201 = vmatprep.subr.mxu0 0.0
    %5202 = vmatpush2.msra.mxu0 0.0
    %5203 = vmatprep.subr.mxu0 0.0
    %5204 = vmatpush2.msra.mxu0 0.0
    %5205 = vmatprep.subr.mxu0 0.0
    %5206 = vmatpush2.msra.mxu0 0.0
    %5207 = vmatprep.subr.mxu0 0.0
    %5208 = vmatpush2.msra.mxu0 0.0
    %5209 = vmatprep.subr.mxu0 0.0
    %5210 = vmatpush2.msra.mxu0 0.0
    %5211 = vmatprep.subr.mxu0 0.0
    %5212 = vmatpush2.msra.mxu0 0.0
    %5213 = vmatprep.subr.mxu0 0.0
    %5214 = vmatpush2.msra.mxu0 0.0
    %5215 = vmatprep.subr.mxu0 0.0
    %5216 = vmatpush2.msra.mxu0 0.0
    %5217 = vmatprep.mubr.f32.mxu0 0.0
    %v5218 = vand.u32 %v3266, 4294901760
    %5219 = vmatmul.mubr.f32.gmra.mxu0 %v5218
    %v5220 = vpop.f32.mrf.mxu0
    %v5221 = vadd.f32 %v5098, %v5220
    %v5222 = vpop.f32.mrf.mxu0
    %v5223 = vadd.f32 %v5100, %v5222
    %5224 = vmatprep.mubr.f32.mxu0 0.0
    %v5225 = vand.u32 %v3269, 4294901760
    %5226 = vmatmul.mubr.f32.gmra.mxu0 %v5225
    %v5227 = vpop.f32.mrf.mxu0
    %v5228 = vadd.f32 %v5107, %v5227
    %v5229 = vpop.f32.mrf.mxu0
    %v5230 = vadd.f32 %v5109, %v5229
    %5231 = vmatprep.mubr.f32.mxu0 0.0
    %v5232 = vand.u32 %v3272, 4294901760
    %5233 = vmatmul.mubr.f32.gmra.mxu0 %v5232
    %v5234 = vpop.f32.mrf.mxu0
    %v5235 = vadd.f32 %v5116, %v5234
    %v5236 = vpop.f32.mrf.mxu0
    %v5237 = vadd.f32 %v5118, %v5236
    %5238 = vmatprep.mubr.f32.mxu0 0.0
    %v5239 = vand.u32 %v3275, 4294901760
    %5240 = vmatmul.mubr.f32.gmra.mxu0 %v5239
    %v5241 = vpop.f32.mrf.mxu0
    %v5242 = vadd.f32 %v5125, %v5241
    %v5243 = vpop.f32.mrf.mxu0
    %v5244 = vadd.f32 %v5127, %v5243
    %5245 = vdwg.mxu0
    %5246 = vmatprep.subr.mxu0 0.0
    %5247 = vmatpush1.msra.mxu0 0.0
    %5248 = vmatprep.subr.mxu0 0.0
    %5249 = vmatpush1.msra.mxu0 0.0
    %5250 = vmatprep.subr.mxu0 0.0
    %5251 = vmatpush1.msra.mxu0 0.0
    %5252 = vmatprep.subr.mxu0 0.0
    %5253 = vmatpush1.msra.mxu0 0.0
    %5254 = vmatprep.subr.mxu0 0.0
    %5255 = vmatpush1.msra.mxu0 0.0
    %5256 = vmatprep.subr.mxu0 0.0
    %5257 = vmatpush1.msra.mxu0 0.0
    %5258 = vmatprep.subr.mxu0 0.0
    %5259 = vmatpush1.msra.mxu0 0.0
    %5260 = vmatprep.subr.mxu0 0.0
    %5261 = vmatpush1.msra.mxu0 0.0
    %5262 = vmatprep.subr.mxu0 0.0
    %5263 = vmatpush1.msra.mxu0 0.0
    %5264 = vmatprep.subr.mxu0 0.0
    %5265 = vmatpush1.msra.mxu0 0.0
    %5266 = vmatprep.subr.mxu0 0.0
    %5267 = vmatpush1.msra.mxu0 0.0
    %5268 = vmatprep.subr.mxu0 0.0
    %5269 = vmatpush1.msra.mxu0 0.0
    %v5270 = vand.u32 %v3232, 4294901760
    %5271 = vmatprep.subr.mxu0 %v5270
    %v5272 = vand.u32 %v3231, 4294901760
    %5273 = vmatpush1.msra.mxu0 %v5272
    %v5274 = vand.u32 %v3224, 4294901760
    %5275 = vmatprep.subr.mxu0 %v5274
    %v5276 = vand.u32 %v3223, 4294901760
    %5277 = vmatpush1.msra.mxu0 %v5276
    %v5278 = vand.u32 %v3216, 4294901760
    %5279 = vmatprep.subr.mxu0 %v5278
    %v5280 = vand.u32 %v3215, 4294901760
    %5281 = vmatpush1.msra.mxu0 %v5280
    %v5282 = vand.u32 %v3208, 4294901760
    %5283 = vmatprep.subr.mxu0 %v5282
    %v5284 = vand.u32 %v3207, 4294901760
    %5285 = vmatpush1.msra.mxu0 %v5284
    %5286 = vmatprep.subr.mxu0 0.0
    %5287 = vmatpush2.msra.mxu0 0.0
    %5288 = vmatprep.subr.mxu0 0.0
    %5289 = vmatpush2.msra.mxu0 0.0
    %5290 = vmatprep.subr.mxu0 0.0
    %5291 = vmatpush2.msra.mxu0 0.0
    %5292 = vmatprep.subr.mxu0 0.0
    %5293 = vmatpush2.msra.mxu0 0.0
    %5294 = vmatprep.subr.mxu0 0.0
    %5295 = vmatpush2.msra.mxu0 0.0
    %5296 = vmatprep.subr.mxu0 0.0
    %5297 = vmatpush2.msra.mxu0 0.0
    %5298 = vmatprep.subr.mxu0 0.0
    %5299 = vmatpush2.msra.mxu0 0.0
    %5300 = vmatprep.subr.mxu0 0.0
    %5301 = vmatpush2.msra.mxu0 0.0
    %5302 = vmatprep.subr.mxu0 0.0
    %5303 = vmatpush2.msra.mxu0 0.0
    %5304 = vmatprep.subr.mxu0 0.0
    %5305 = vmatpush2.msra.mxu0 0.0
    %5306 = vmatprep.subr.mxu0 0.0
    %5307 = vmatpush2.msra.mxu0 0.0
    %5308 = vmatprep.subr.mxu0 0.0
    %5309 = vmatpush2.msra.mxu0 0.0
    %5310 = vmatprep.subr.mxu0 0.0
    %5311 = vmatpush2.msra.mxu0 0.0
    %5312 = vmatprep.subr.mxu0 0.0
    %5313 = vmatpush2.msra.mxu0 0.0
    %5314 = vmatprep.subr.mxu0 0.0
    %5315 = vmatpush2.msra.mxu0 0.0
    %5316 = vmatprep.subr.mxu0 0.0
    %5317 = vmatpush2.msra.mxu0 0.0
    %5318 = vmatprep.mubr.f32.mxu0 0.0
    %v5319 = vand.u32 %v3266, 4294901760
    %5320 = vmatmul.mubr.f32.gmra.mxu0 %v5319
    %v5321 = vpop.f32.mrf.mxu0
    %v5322 = vadd.f32 %v5221, %v5321
    %v5323 = vpop.f32.mrf.mxu0
    %v5324 = vadd.f32 %v5223, %v5323
    %5325 = vmatprep.mubr.f32.mxu0 0.0
    %v5326 = vand.u32 %v3269, 4294901760
    %5327 = vmatmul.mubr.f32.gmra.mxu0 %v5326
    %v5328 = vpop.f32.mrf.mxu0
    %v5329 = vadd.f32 %v5228, %v5328
    %v5330 = vpop.f32.mrf.mxu0
    %v5331 = vadd.f32 %v5230, %v5330
    %5332 = vmatprep.mubr.f32.mxu0 0.0
    %v5333 = vand.u32 %v3272, 4294901760
    %5334 = vmatmul.mubr.f32.gmra.mxu0 %v5333
    %v5335 = vpop.f32.mrf.mxu0
    %v5336 = vadd.f32 %v5235, %v5335
    %v5337 = vpop.f32.mrf.mxu0
    %v5338 = vadd.f32 %v5237, %v5337
    %5339 = vmatprep.mubr.f32.mxu0 0.0
    %v5340 = vand.u32 %v3275, 4294901760
    %5341 = vmatmul.mubr.f32.gmra.mxu0 %v5340
    %v5342 = vpop.f32.mrf.mxu0
    %v5343 = vadd.f32 %v5242, %v5342
    %v5344 = vpop.f32.mrf.mxu0
    %v5345 = vadd.f32 %v5244, %v5344
    %5346 = vdwg.mxu0
    %5347 = vmatprep.subr.mxu0 0.0
    %5348 = vmatpush1.msra.mxu0 0.0
    %5349 = vmatprep.subr.mxu0 0.0
    %5350 = vmatpush1.msra.mxu0 0.0
    %5351 = vmatprep.subr.mxu0 0.0
    %5352 = vmatpush1.msra.mxu0 0.0
    %5353 = vmatprep.subr.mxu0 0.0
    %5354 = vmatpush1.msra.mxu0 0.0
    %5355 = vmatprep.subr.mxu0 0.0
    %5356 = vmatpush1.msra.mxu0 0.0
    %5357 = vmatprep.subr.mxu0 0.0
    %5358 = vmatpush1.msra.mxu0 0.0
    %5359 = vmatprep.subr.mxu0 0.0
    %5360 = vmatpush1.msra.mxu0 0.0
    %5361 = vmatprep.subr.mxu0 0.0
    %5362 = vmatpush1.msra.mxu0 0.0
    %5363 = vmatprep.subr.mxu0 0.0
    %5364 = vmatpush1.msra.mxu0 0.0
    %5365 = vmatprep.subr.mxu0 0.0
    %5366 = vmatpush1.msra.mxu0 0.0
    %5367 = vmatprep.subr.mxu0 0.0
    %5368 = vmatpush1.msra.mxu0 0.0
    %5369 = vmatprep.subr.mxu0 0.0
    %5370 = vmatpush1.msra.mxu0 0.0
    %v5371 = vand.u32 %v3234, 4294901760
    %5372 = vmatprep.subr.mxu0 %v5371
    %v5373 = vand.u32 %v3233, 4294901760
    %5374 = vmatpush1.msra.mxu0 %v5373
    %v5375 = vand.u32 %v3226, 4294901760
    %5376 = vmatprep.subr.mxu0 %v5375
    %v5377 = vand.u32 %v3225, 4294901760
    %5378 = vmatpush1.msra.mxu0 %v5377
    %v5379 = vand.u32 %v3218, 4294901760
    %5380 = vmatprep.subr.mxu0 %v5379
    %v5381 = vand.u32 %v3217, 4294901760
    %5382 = vmatpush1.msra.mxu0 %v5381
    %v5383 = vand.u32 %v3210, 4294901760
    %5384 = vmatprep.subr.mxu0 %v5383
    %v5385 = vand.u32 %v3209, 4294901760
    %5386 = vmatpush1.msra.mxu0 %v5385
    %5387 = vmatprep.subr.mxu0 0.0
    %5388 = vmatpush2.msra.mxu0 0.0
    %5389 = vmatprep.subr.mxu0 0.0
    %5390 = vmatpush2.msra.mxu0 0.0
    %5391 = vmatprep.subr.mxu0 0.0
    %5392 = vmatpush2.msra.mxu0 0.0
    %5393 = vmatprep.subr.mxu0 0.0
    %5394 = vmatpush2.msra.mxu0 0.0
    %5395 = vmatprep.subr.mxu0 0.0
    %5396 = vmatpush2.msra.mxu0 0.0
    %5397 = vmatprep.subr.mxu0 0.0
    %5398 = vmatpush2.msra.mxu0 0.0
    %5399 = vmatprep.subr.mxu0 0.0
    %5400 = vmatpush2.msra.mxu0 0.0
    %5401 = vmatprep.subr.mxu0 0.0
    %5402 = vmatpush2.msra.mxu0 0.0
    %5403 = vmatprep.subr.mxu0 0.0
    %5404 = vmatpush2.msra.mxu0 0.0
    %5405 = vmatprep.subr.mxu0 0.0
    %5406 = vmatpush2.msra.mxu0 0.0
    %5407 = vmatprep.subr.mxu0 0.0
    %5408 = vmatpush2.msra.mxu0 0.0
    %5409 = vmatprep.subr.mxu0 0.0
    %5410 = vmatpush2.msra.mxu0 0.0
    %5411 = vmatprep.subr.mxu0 0.0
    %5412 = vmatpush2.msra.mxu0 0.0
    %5413 = vmatprep.subr.mxu0 0.0
    %5414 = vmatpush2.msra.mxu0 0.0
    %5415 = vmatprep.subr.mxu0 0.0
    %5416 = vmatpush2.msra.mxu0 0.0
    %5417 = vmatprep.subr.mxu0 0.0
    %5418 = vmatpush2.msra.mxu0 0.0
    %5419 = vmatprep.mubr.f32.mxu0 0.0
    %v5420 = vand.u32 %v3266, 4294901760
    %v5421 = vsub.f32 %v3266, %v5420
    %v5422 = vand.u32 %v5421, 4294901760
    %v5423 = vsub.f32 %v5421, %v5422
    %v5424 = vand.u32 %v5423, 4294901760
    %5425 = vmatmul.mubr.f32.gmra.mxu0 %v5424
    %v5426 = vpop.f32.mrf.mxu0
    %v5427 = vadd.f32 %v3248, %v5426
    %v5428 = vpop.f32.mrf.mxu0
    %v5429 = vadd.f32 %v3248, %v5428
    %5430 = vmatprep.mubr.f32.mxu0 0.0
    %v5431 = vand.u32 %v3269, 4294901760
    %v5432 = vsub.f32 %v3269, %v5431
    %v5433 = vand.u32 %v5432, 4294901760
    %v5434 = vsub.f32 %v5432, %v5433
    %v5435 = vand.u32 %v5434, 4294901760
    %5436 = vmatmul.mubr.f32.gmra.mxu0 %v5435
    %v5437 = vpop.f32.mrf.mxu0
    %v5438 = vadd.f32 %v3253, %v5437
    %v5439 = vpop.f32.mrf.mxu0
    %v5440 = vadd.f32 %v3253, %v5439
    %5441 = vmatprep.mubr.f32.mxu0 0.0
    %v5442 = vand.u32 %v3272, 4294901760
    %v5443 = vsub.f32 %v3272, %v5442
    %v5444 = vand.u32 %v5443, 4294901760
    %v5445 = vsub.f32 %v5443, %v5444
    %v5446 = vand.u32 %v5445, 4294901760
    %5447 = vmatmul.mubr.f32.gmra.mxu0 %v5446
    %v5448 = vpop.f32.mrf.mxu0
    %v5449 = vadd.f32 %v3258, %v5448
    %v5450 = vpop.f32.mrf.mxu0
    %v5451 = vadd.f32 %v3258, %v5450
    %5452 = vmatprep.mubr.f32.mxu0 0.0
    %v5453 = vand.u32 %v3275, 4294901760
    %v5454 = vsub.f32 %v3275, %v5453
    %v5455 = vand.u32 %v5454, 4294901760
    %v5456 = vsub.f32 %v5454, %v5455
    %v5457 = vand.u32 %v5456, 4294901760
    %5458 = vmatmul.mubr.f32.gmra.mxu0 %v5457
    %v5459 = vpop.f32.mrf.mxu0
    %v5460 = vadd.f32 %v3263, %v5459
    %v5461 = vpop.f32.mrf.mxu0
    %v5462 = vadd.f32 %v3263, %v5461
    %5463 = vdwg.mxu0
    %5464 = vmatprep.subr.mxu0 0.0
    %5465 = vmatpush1.msra.mxu0 0.0
    %5466 = vmatprep.subr.mxu0 0.0
    %5467 = vmatpush1.msra.mxu0 0.0
    %5468 = vmatprep.subr.mxu0 0.0
    %5469 = vmatpush1.msra.mxu0 0.0
    %5470 = vmatprep.subr.mxu0 0.0
    %5471 = vmatpush1.msra.mxu0 0.0
    %5472 = vmatprep.subr.mxu0 0.0
    %5473 = vmatpush1.msra.mxu0 0.0
    %5474 = vmatprep.subr.mxu0 0.0
    %5475 = vmatpush1.msra.mxu0 0.0
    %5476 = vmatprep.subr.mxu0 0.0
    %5477 = vmatpush1.msra.mxu0 0.0
    %5478 = vmatprep.subr.mxu0 0.0
    %5479 = vmatpush1.msra.mxu0 0.0
    %5480 = vmatprep.subr.mxu0 0.0
    %5481 = vmatpush1.msra.mxu0 0.0
    %5482 = vmatprep.subr.mxu0 0.0
    %5483 = vmatpush1.msra.mxu0 0.0
    %5484 = vmatprep.subr.mxu0 0.0
    %5485 = vmatpush1.msra.mxu0 0.0
    %5486 = vmatprep.subr.mxu0 0.0
    %5487 = vmatpush1.msra.mxu0 0.0
    %v5488 = vand.u32 %v3234, 4294901760
    %v5489 = vsub.f32 %v3234, %v5488
    %v5490 = vand.u32 %v5489, 4294901760
    %v5491 = vsub.f32 %v5489, %v5490
    %v5492 = vand.u32 %v5491, 4294901760
    %5493 = vmatprep.subr.mxu0 %v5492
    %v5494 = vand.u32 %v3233, 4294901760
    %v5495 = vsub.f32 %v3233, %v5494
    %v5496 = vand.u32 %v5495, 4294901760
    %v5497 = vsub.f32 %v5495, %v5496
    %v5498 = vand.u32 %v5497, 4294901760
    %5499 = vmatpush1.msra.mxu0 %v5498
    %v5500 = vand.u32 %v3226, 4294901760
    %v5501 = vsub.f32 %v3226, %v5500
    %v5502 = vand.u32 %v5501, 4294901760
    %v5503 = vsub.f32 %v5501, %v5502
    %v5504 = vand.u32 %v5503, 4294901760
    %5505 = vmatprep.subr.mxu0 %v5504
    %v5506 = vand.u32 %v3225, 4294901760
    %v5507 = vsub.f32 %v3225, %v5506
    %v5508 = vand.u32 %v5507, 4294901760
    %v5509 = vsub.f32 %v5507, %v5508
    %v5510 = vand.u32 %v5509, 4294901760
    %5511 = vmatpush1.msra.mxu0 %v5510
    %v5512 = vand.u32 %v3218, 4294901760
    %v5513 = vsub.f32 %v3218, %v5512
    %v5514 = vand.u32 %v5513, 4294901760
    %v5515 = vsub.f32 %v5513, %v5514
    %v5516 = vand.u32 %v5515, 4294901760
    %5517 = vmatprep.subr.mxu0 %v5516
    %v5518 = vand.u32 %v3217, 4294901760
    %v5519 = vsub.f32 %v3217, %v5518
    %v5520 = vand.u32 %v5519, 4294901760
    %v5521 = vsub.f32 %v5519, %v5520
    %v5522 = vand.u32 %v5521, 4294901760
    %5523 = vmatpush1.msra.mxu0 %v5522
    %v5524 = vand.u32 %v3210, 4294901760
    %v5525 = vsub.f32 %v3210, %v5524
    %v5526 = vand.u32 %v5525, 4294901760
    %v5527 = vsub.f32 %v5525, %v5526
    %v5528 = vand.u32 %v5527, 4294901760
    %5529 = vmatprep.subr.mxu0 %v5528
    %v5530 = vand.u32 %v3209, 4294901760
    %v5531 = vsub.f32 %v3209, %v5530
    %v5532 = vand.u32 %v5531, 4294901760
    %v5533 = vsub.f32 %v5531, %v5532
    %v5534 = vand.u32 %v5533, 4294901760
    %5535 = vmatpush1.msra.mxu0 %v5534
    %5536 = vmatprep.subr.mxu0 0.0
    %5537 = vmatpush2.msra.mxu0 0.0
    %5538 = vmatprep.subr.mxu0 0.0
    %5539 = vmatpush2.msra.mxu0 0.0
    %5540 = vmatprep.subr.mxu0 0.0
    %5541 = vmatpush2.msra.mxu0 0.0
    %5542 = vmatprep.subr.mxu0 0.0
    %5543 = vmatpush2.msra.mxu0 0.0
    %5544 = vmatprep.subr.mxu0 0.0
    %5545 = vmatpush2.msra.mxu0 0.0
    %5546 = vmatprep.subr.mxu0 0.0
    %5547 = vmatpush2.msra.mxu0 0.0
    %5548 = vmatprep.subr.mxu0 0.0
    %5549 = vmatpush2.msra.mxu0 0.0
    %5550 = vmatprep.subr.mxu0 0.0
    %5551 = vmatpush2.msra.mxu0 0.0
    %5552 = vmatprep.subr.mxu0 0.0
    %5553 = vmatpush2.msra.mxu0 0.0
    %5554 = vmatprep.subr.mxu0 0.0
    %5555 = vmatpush2.msra.mxu0 0.0
    %5556 = vmatprep.subr.mxu0 0.0
    %5557 = vmatpush2.msra.mxu0 0.0
    %5558 = vmatprep.subr.mxu0 0.0
    %5559 = vmatpush2.msra.mxu0 0.0
    %5560 = vmatprep.subr.mxu0 0.0
    %5561 = vmatpush2.msra.mxu0 0.0
    %5562 = vmatprep.subr.mxu0 0.0
    %5563 = vmatpush2.msra.mxu0 0.0
    %5564 = vmatprep.subr.mxu0 0.0
    %5565 = vmatpush2.msra.mxu0 0.0
    %5566 = vmatprep.subr.mxu0 0.0
    %5567 = vmatpush2.msra.mxu0 0.0
    %5568 = vmatprep.mubr.f32.mxu0 0.0
    %v5569 = vand.u32 %v3266, 4294901760
    %5570 = vmatmul.mubr.f32.gmra.mxu0 %v5569
    %v5571 = vpop.f32.mrf.mxu0
    %v5572 = vadd.f32 %v5427, %v5571
    %v5573 = vpop.f32.mrf.mxu0
    %v5574 = vadd.f32 %v5429, %v5573
    %5575 = vmatprep.mubr.f32.mxu0 0.0
    %v5576 = vand.u32 %v3269, 4294901760
    %5577 = vmatmul.mubr.f32.gmra.mxu0 %v5576
    %v5578 = vpop.f32.mrf.mxu0
    %v5579 = vadd.f32 %v5438, %v5578
    %v5580 = vpop.f32.mrf.mxu0
    %v5581 = vadd.f32 %v5440, %v5580
    %5582 = vmatprep.mubr.f32.mxu0 0.0
    %v5583 = vand.u32 %v3272, 4294901760
    %5584 = vmatmul.mubr.f32.gmra.mxu0 %v5583
    %v5585 = vpop.f32.mrf.mxu0
    %v5586 = vadd.f32 %v5449, %v5585
    %v5587 = vpop.f32.mrf.mxu0
    %v5588 = vadd.f32 %v5451, %v5587
    %5589 = vmatprep.mubr.f32.mxu0 0.0
    %v5590 = vand.u32 %v3275, 4294901760
    %5591 = vmatmul.mubr.f32.gmra.mxu0 %v5590
    %v5592 = vpop.f32.mrf.mxu0
    %v5593 = vadd.f32 %v5460, %v5592
    %v5594 = vpop.f32.mrf.mxu0
    %v5595 = vadd.f32 %v5462, %v5594
    %5596 = vdwg.mxu0
    %5597 = vmatprep.subr.mxu0 0.0
    %5598 = vmatpush1.msra.mxu0 0.0
    %5599 = vmatprep.subr.mxu0 0.0
    %5600 = vmatpush1.msra.mxu0 0.0
    %5601 = vmatprep.subr.mxu0 0.0
    %5602 = vmatpush1.msra.mxu0 0.0
    %5603 = vmatprep.subr.mxu0 0.0
    %5604 = vmatpush1.msra.mxu0 0.0
    %5605 = vmatprep.subr.mxu0 0.0
    %5606 = vmatpush1.msra.mxu0 0.0
    %5607 = vmatprep.subr.mxu0 0.0
    %5608 = vmatpush1.msra.mxu0 0.0
    %5609 = vmatprep.subr.mxu0 0.0
    %5610 = vmatpush1.msra.mxu0 0.0
    %5611 = vmatprep.subr.mxu0 0.0
    %5612 = vmatpush1.msra.mxu0 0.0
    %5613 = vmatprep.subr.mxu0 0.0
    %5614 = vmatpush1.msra.mxu0 0.0
    %5615 = vmatprep.subr.mxu0 0.0
    %5616 = vmatpush1.msra.mxu0 0.0
    %5617 = vmatprep.subr.mxu0 0.0
    %5618 = vmatpush1.msra.mxu0 0.0
    %5619 = vmatprep.subr.mxu0 0.0
    %5620 = vmatpush1.msra.mxu0 0.0
    %v5621 = vand.u32 %v3234, 4294901760
    %v5622 = vsub.f32 %v3234, %v5621
    %5623 = vmatprep.subr.mxu0 %v5622
    %v5624 = vand.u32 %v3233, 4294901760
    %v5625 = vsub.f32 %v3233, %v5624
    %5626 = vmatpush1.msra.mxu0 %v5625
    %v5627 = vand.u32 %v3226, 4294901760
    %v5628 = vsub.f32 %v3226, %v5627
    %5629 = vmatprep.subr.mxu0 %v5628
    %v5630 = vand.u32 %v3225, 4294901760
    %v5631 = vsub.f32 %v3225, %v5630
    %5632 = vmatpush1.msra.mxu0 %v5631
    %v5633 = vand.u32 %v3218, 4294901760
    %v5634 = vsub.f32 %v3218, %v5633
    %5635 = vmatprep.subr.mxu0 %v5634
    %v5636 = vand.u32 %v3217, 4294901760
    %v5637 = vsub.f32 %v3217, %v5636
    %5638 = vmatpush1.msra.mxu0 %v5637
    %v5639 = vand.u32 %v3210, 4294901760
    %v5640 = vsub.f32 %v3210, %v5639
    %5641 = vmatprep.subr.mxu0 %v5640
    %v5642 = vand.u32 %v3209, 4294901760
    %v5643 = vsub.f32 %v3209, %v5642
    %5644 = vmatpush1.msra.mxu0 %v5643
    %5645 = vmatprep.subr.mxu0 0.0
    %5646 = vmatpush2.msra.mxu0 0.0
    %5647 = vmatprep.subr.mxu0 0.0
    %5648 = vmatpush2.msra.mxu0 0.0
    %5649 = vmatprep.subr.mxu0 0.0
    %5650 = vmatpush2.msra.mxu0 0.0
    %5651 = vmatprep.subr.mxu0 0.0
    %5652 = vmatpush2.msra.mxu0 0.0
    %5653 = vmatprep.subr.mxu0 0.0
    %5654 = vmatpush2.msra.mxu0 0.0
    %5655 = vmatprep.subr.mxu0 0.0
    %5656 = vmatpush2.msra.mxu0 0.0
    %5657 = vmatprep.subr.mxu0 0.0
    %5658 = vmatpush2.msra.mxu0 0.0
    %5659 = vmatprep.subr.mxu0 0.0
    %5660 = vmatpush2.msra.mxu0 0.0
    %5661 = vmatprep.subr.mxu0 0.0
    %5662 = vmatpush2.msra.mxu0 0.0
    %5663 = vmatprep.subr.mxu0 0.0
    %5664 = vmatpush2.msra.mxu0 0.0
    %5665 = vmatprep.subr.mxu0 0.0
    %5666 = vmatpush2.msra.mxu0 0.0
    %5667 = vmatprep.subr.mxu0 0.0
    %5668 = vmatpush2.msra.mxu0 0.0
    %5669 = vmatprep.subr.mxu0 0.0
    %5670 = vmatpush2.msra.mxu0 0.0
    %5671 = vmatprep.subr.mxu0 0.0
    %5672 = vmatpush2.msra.mxu0 0.0
    %5673 = vmatprep.subr.mxu0 0.0
    %5674 = vmatpush2.msra.mxu0 0.0
    %5675 = vmatprep.subr.mxu0 0.0
    %5676 = vmatpush2.msra.mxu0 0.0
    %5677 = vmatprep.mubr.f32.mxu0 0.0
    %v5678 = vand.u32 %v3266, 4294901760
    %v5679 = vsub.f32 %v3266, %v5678
    %5680 = vmatmul.mubr.f32.gmra.mxu0 %v5679
    %v5681 = vpop.f32.mrf.mxu0
    %v5682 = vadd.f32 %v5572, %v5681
    %v5683 = vpop.f32.mrf.mxu0
    %v5684 = vadd.f32 %v5574, %v5683
    %5685 = vmatprep.mubr.f32.mxu0 0.0
    %v5686 = vand.u32 %v3269, 4294901760
    %v5687 = vsub.f32 %v3269, %v5686
    %5688 = vmatmul.mubr.f32.gmra.mxu0 %v5687
    %v5689 = vpop.f32.mrf.mxu0
    %v5690 = vadd.f32 %v5579, %v5689
    %v5691 = vpop.f32.mrf.mxu0
    %v5692 = vadd.f32 %v5581, %v5691
    %5693 = vmatprep.mubr.f32.mxu0 0.0
    %v5694 = vand.u32 %v3272, 4294901760
    %v5695 = vsub.f32 %v3272, %v5694
    %5696 = vmatmul.mubr.f32.gmra.mxu0 %v5695
    %v5697 = vpop.f32.mrf.mxu0
    %v5698 = vadd.f32 %v5586, %v5697
    %v5699 = vpop.f32.mrf.mxu0
    %v5700 = vadd.f32 %v5588, %v5699
    %5701 = vmatprep.mubr.f32.mxu0 0.0
    %v5702 = vand.u32 %v3275, 4294901760
    %v5703 = vsub.f32 %v3275, %v5702
    %5704 = vmatmul.mubr.f32.gmra.mxu0 %v5703
    %v5705 = vpop.f32.mrf.mxu0
    %v5706 = vadd.f32 %v5593, %v5705
    %v5707 = vpop.f32.mrf.mxu0
    %v5708 = vadd.f32 %v5595, %v5707
    %5709 = vdwg.mxu0
    %5710 = vmatprep.subr.mxu0 0.0
    %5711 = vmatpush1.msra.mxu0 0.0
    %5712 = vmatprep.subr.mxu0 0.0
    %5713 = vmatpush1.msra.mxu0 0.0
    %5714 = vmatprep.subr.mxu0 0.0
    %5715 = vmatpush1.msra.mxu0 0.0
    %5716 = vmatprep.subr.mxu0 0.0
    %5717 = vmatpush1.msra.mxu0 0.0
    %5718 = vmatprep.subr.mxu0 0.0
    %5719 = vmatpush1.msra.mxu0 0.0
    %5720 = vmatprep.subr.mxu0 0.0
    %5721 = vmatpush1.msra.mxu0 0.0
    %5722 = vmatprep.subr.mxu0 0.0
    %5723 = vmatpush1.msra.mxu0 0.0
    %5724 = vmatprep.subr.mxu0 0.0
    %5725 = vmatpush1.msra.mxu0 0.0
    %5726 = vmatprep.subr.mxu0 0.0
    %5727 = vmatpush1.msra.mxu0 0.0
    %5728 = vmatprep.subr.mxu0 0.0
    %5729 = vmatpush1.msra.mxu0 0.0
    %5730 = vmatprep.subr.mxu0 0.0
    %5731 = vmatpush1.msra.mxu0 0.0
    %5732 = vmatprep.subr.mxu0 0.0
    %5733 = vmatpush1.msra.mxu0 0.0
    %v5734 = vand.u32 %v3234, 4294901760
    %5735 = vmatprep.subr.mxu0 %v5734
    %v5736 = vand.u32 %v3233, 4294901760
    %5737 = vmatpush1.msra.mxu0 %v5736
    %v5738 = vand.u32 %v3226, 4294901760
    %5739 = vmatprep.subr.mxu0 %v5738
    %v5740 = vand.u32 %v3225, 4294901760
    %5741 = vmatpush1.msra.mxu0 %v5740
    %v5742 = vand.u32 %v3218, 4294901760
    %5743 = vmatprep.subr.mxu0 %v5742
    %v5744 = vand.u32 %v3217, 4294901760
    %5745 = vmatpush1.msra.mxu0 %v5744
    %v5746 = vand.u32 %v3210, 4294901760
    %5747 = vmatprep.subr.mxu0 %v5746
    %v5748 = vand.u32 %v3209, 4294901760
    %5749 = vmatpush1.msra.mxu0 %v5748
    %5750 = vmatprep.subr.mxu0 0.0
    %5751 = vmatpush2.msra.mxu0 0.0
    %5752 = vmatprep.subr.mxu0 0.0
    %5753 = vmatpush2.msra.mxu0 0.0
    %5754 = vmatprep.subr.mxu0 0.0
    %5755 = vmatpush2.msra.mxu0 0.0
    %5756 = vmatprep.subr.mxu0 0.0
    %5757 = vmatpush2.msra.mxu0 0.0
    %5758 = vmatprep.subr.mxu0 0.0
    %5759 = vmatpush2.msra.mxu0 0.0
    %5760 = vmatprep.subr.mxu0 0.0
    %5761 = vmatpush2.msra.mxu0 0.0
    %5762 = vmatprep.subr.mxu0 0.0
    %5763 = vmatpush2.msra.mxu0 0.0
    %5764 = vmatprep.subr.mxu0 0.0
    %5765 = vmatpush2.msra.mxu0 0.0
    %5766 = vmatprep.subr.mxu0 0.0
    %5767 = vmatpush2.msra.mxu0 0.0
    %5768 = vmatprep.subr.mxu0 0.0
    %5769 = vmatpush2.msra.mxu0 0.0
    %5770 = vmatprep.subr.mxu0 0.0
    %5771 = vmatpush2.msra.mxu0 0.0
    %5772 = vmatprep.subr.mxu0 0.0
    %5773 = vmatpush2.msra.mxu0 0.0
    %5774 = vmatprep.subr.mxu0 0.0
    %5775 = vmatpush2.msra.mxu0 0.0
    %5776 = vmatprep.subr.mxu0 0.0
    %5777 = vmatpush2.msra.mxu0 0.0
    %5778 = vmatprep.subr.mxu0 0.0
    %5779 = vmatpush2.msra.mxu0 0.0
    %5780 = vmatprep.subr.mxu0 0.0
    %5781 = vmatpush2.msra.mxu0 0.0
    %5782 = vmatprep.mubr.f32.mxu0 0.0
    %v5783 = vand.u32 %v3266, 4294901760
    %v5784 = vsub.f32 %v3266, %v5783
    %v5785 = vand.u32 %v5784, 4294901760
    %5786 = vmatmul.mubr.f32.gmra.mxu0 %v5785
    %v5787 = vpop.f32.mrf.mxu0
    %v5788 = vadd.f32 %v5682, %v5787
    %v5789 = vpop.f32.mrf.mxu0
    %v5790 = vadd.f32 %v5684, %v5789
    %5791 = vmatprep.mubr.f32.mxu0 0.0
    %v5792 = vand.u32 %v3269, 4294901760
    %v5793 = vsub.f32 %v3269, %v5792
    %v5794 = vand.u32 %v5793, 4294901760
    %5795 = vmatmul.mubr.f32.gmra.mxu0 %v5794
    %v5796 = vpop.f32.mrf.mxu0
    %v5797 = vadd.f32 %v5690, %v5796
    %v5798 = vpop.f32.mrf.mxu0
    %v5799 = vadd.f32 %v5692, %v5798
    %5800 = vmatprep.mubr.f32.mxu0 0.0
    %v5801 = vand.u32 %v3272, 4294901760
    %v5802 = vsub.f32 %v3272, %v5801
    %v5803 = vand.u32 %v5802, 4294901760
    %5804 = vmatmul.mubr.f32.gmra.mxu0 %v5803
    %v5805 = vpop.f32.mrf.mxu0
    %v5806 = vadd.f32 %v5698, %v5805
    %v5807 = vpop.f32.mrf.mxu0
    %v5808 = vadd.f32 %v5700, %v5807
    %5809 = vmatprep.mubr.f32.mxu0 0.0
    %v5810 = vand.u32 %v3275, 4294901760
    %v5811 = vsub.f32 %v3275, %v5810
    %v5812 = vand.u32 %v5811, 4294901760
    %5813 = vmatmul.mubr.f32.gmra.mxu0 %v5812
    %v5814 = vpop.f32.mrf.mxu0
    %v5815 = vadd.f32 %v5706, %v5814
    %v5816 = vpop.f32.mrf.mxu0
    %v5817 = vadd.f32 %v5708, %v5816
    %5818 = vdwg.mxu0
    %5819 = vmatprep.subr.mxu0 0.0
    %5820 = vmatpush1.msra.mxu0 0.0
    %5821 = vmatprep.subr.mxu0 0.0
    %5822 = vmatpush1.msra.mxu0 0.0
    %5823 = vmatprep.subr.mxu0 0.0
    %5824 = vmatpush1.msra.mxu0 0.0
    %5825 = vmatprep.subr.mxu0 0.0
    %5826 = vmatpush1.msra.mxu0 0.0
    %5827 = vmatprep.subr.mxu0 0.0
    %5828 = vmatpush1.msra.mxu0 0.0
    %5829 = vmatprep.subr.mxu0 0.0
    %5830 = vmatpush1.msra.mxu0 0.0
    %5831 = vmatprep.subr.mxu0 0.0
    %5832 = vmatpush1.msra.mxu0 0.0
    %5833 = vmatprep.subr.mxu0 0.0
    %5834 = vmatpush1.msra.mxu0 0.0
    %5835 = vmatprep.subr.mxu0 0.0
    %5836 = vmatpush1.msra.mxu0 0.0
    %5837 = vmatprep.subr.mxu0 0.0
    %5838 = vmatpush1.msra.mxu0 0.0
    %5839 = vmatprep.subr.mxu0 0.0
    %5840 = vmatpush1.msra.mxu0 0.0
    %5841 = vmatprep.subr.mxu0 0.0
    %5842 = vmatpush1.msra.mxu0 0.0
    %v5843 = vand.u32 %v3234, 4294901760
    %v5844 = vsub.f32 %v3234, %v5843
    %v5845 = vand.u32 %v5844, 4294901760
    %5846 = vmatprep.subr.mxu0 %v5845
    %v5847 = vand.u32 %v3233, 4294901760
    %v5848 = vsub.f32 %v3233, %v5847
    %v5849 = vand.u32 %v5848, 4294901760
    %5850 = vmatpush1.msra.mxu0 %v5849
    %v5851 = vand.u32 %v3226, 4294901760
    %v5852 = vsub.f32 %v3226, %v5851
    %v5853 = vand.u32 %v5852, 4294901760
    %5854 = vmatprep.subr.mxu0 %v5853
    %v5855 = vand.u32 %v3225, 4294901760
    %v5856 = vsub.f32 %v3225, %v5855
    %v5857 = vand.u32 %v5856, 4294901760
    %5858 = vmatpush1.msra.mxu0 %v5857
    %v5859 = vand.u32 %v3218, 4294901760
    %v5860 = vsub.f32 %v3218, %v5859
    %v5861 = vand.u32 %v5860, 4294901760
    %5862 = vmatprep.subr.mxu0 %v5861
    %v5863 = vand.u32 %v3217, 4294901760
    %v5864 = vsub.f32 %v3217, %v5863
    %v5865 = vand.u32 %v5864, 4294901760
    %5866 = vmatpush1.msra.mxu0 %v5865
    %v5867 = vand.u32 %v3210, 4294901760
    %v5868 = vsub.f32 %v3210, %v5867
    %v5869 = vand.u32 %v5868, 4294901760
    %5870 = vmatprep.subr.mxu0 %v5869
    %v5871 = vand.u32 %v3209, 4294901760
    %v5872 = vsub.f32 %v3209, %v5871
    %v5873 = vand.u32 %v5872, 4294901760
    %5874 = vmatpush1.msra.mxu0 %v5873
    %5875 = vmatprep.subr.mxu0 0.0
    %5876 = vmatpush2.msra.mxu0 0.0
    %5877 = vmatprep.subr.mxu0 0.0
    %5878 = vmatpush2.msra.mxu0 0.0
    %5879 = vmatprep.subr.mxu0 0.0
    %5880 = vmatpush2.msra.mxu0 0.0
    %5881 = vmatprep.subr.mxu0 0.0
    %5882 = vmatpush2.msra.mxu0 0.0
    %5883 = vmatprep.subr.mxu0 0.0
    %5884 = vmatpush2.msra.mxu0 0.0
    %5885 = vmatprep.subr.mxu0 0.0
    %5886 = vmatpush2.msra.mxu0 0.0
    %5887 = vmatprep.subr.mxu0 0.0
    %5888 = vmatpush2.msra.mxu0 0.0
    %5889 = vmatprep.subr.mxu0 0.0
    %5890 = vmatpush2.msra.mxu0 0.0
    %5891 = vmatprep.subr.mxu0 0.0
    %5892 = vmatpush2.msra.mxu0 0.0
    %5893 = vmatprep.subr.mxu0 0.0
    %5894 = vmatpush2.msra.mxu0 0.0
    %5895 = vmatprep.subr.mxu0 0.0
    %5896 = vmatpush2.msra.mxu0 0.0
    %5897 = vmatprep.subr.mxu0 0.0
    %5898 = vmatpush2.msra.mxu0 0.0
    %5899 = vmatprep.subr.mxu0 0.0
    %5900 = vmatpush2.msra.mxu0 0.0
    %5901 = vmatprep.subr.mxu0 0.0
    %5902 = vmatpush2.msra.mxu0 0.0
    %5903 = vmatprep.subr.mxu0 0.0
    %5904 = vmatpush2.msra.mxu0 0.0
    %5905 = vmatprep.subr.mxu0 0.0
    %5906 = vmatpush2.msra.mxu0 0.0
    %5907 = vmatprep.mubr.f32.mxu0 0.0
    %v5908 = vand.u32 %v3266, 4294901760
    %5909 = vmatmul.mubr.f32.gmra.mxu0 %v5908
    %v5910 = vpop.f32.mrf.mxu0
    %v5911 = vadd.f32 %v5788, %v5910
    %v5912 = vpop.f32.mrf.mxu0
    %v5913 = vadd.f32 %v5790, %v5912
    %5914 = vmatprep.mubr.f32.mxu0 0.0
    %v5915 = vand.u32 %v3269, 4294901760
    %5916 = vmatmul.mubr.f32.gmra.mxu0 %v5915
    %v5917 = vpop.f32.mrf.mxu0
    %v5918 = vadd.f32 %v5797, %v5917
    %v5919 = vpop.f32.mrf.mxu0
    %v5920 = vadd.f32 %v5799, %v5919
    %5921 = vmatprep.mubr.f32.mxu0 0.0
    %v5922 = vand.u32 %v3272, 4294901760
    %5923 = vmatmul.mubr.f32.gmra.mxu0 %v5922
    %v5924 = vpop.f32.mrf.mxu0
    %v5925 = vadd.f32 %v5806, %v5924
    %v5926 = vpop.f32.mrf.mxu0
    %v5927 = vadd.f32 %v5808, %v5926
    %5928 = vmatprep.mubr.f32.mxu0 0.0
    %v5929 = vand.u32 %v3275, 4294901760
    %5930 = vmatmul.mubr.f32.gmra.mxu0 %v5929
    %v5931 = vpop.f32.mrf.mxu0
    %v5932 = vadd.f32 %v5815, %v5931
    %v5933 = vpop.f32.mrf.mxu0
    %v5934 = vadd.f32 %v5817, %v5933
    %5935 = vdwg.mxu0
    %5936 = vmatprep.subr.mxu0 0.0
    %5937 = vmatpush1.msra.mxu0 0.0
    %5938 = vmatprep.subr.mxu0 0.0
    %5939 = vmatpush1.msra.mxu0 0.0
    %5940 = vmatprep.subr.mxu0 0.0
    %5941 = vmatpush1.msra.mxu0 0.0
    %5942 = vmatprep.subr.mxu0 0.0
    %5943 = vmatpush1.msra.mxu0 0.0
    %5944 = vmatprep.subr.mxu0 0.0
    %5945 = vmatpush1.msra.mxu0 0.0
    %5946 = vmatprep.subr.mxu0 0.0
    %5947 = vmatpush1.msra.mxu0 0.0
    %5948 = vmatprep.subr.mxu0 0.0
    %5949 = vmatpush1.msra.mxu0 0.0
    %5950 = vmatprep.subr.mxu0 0.0
    %5951 = vmatpush1.msra.mxu0 0.0
    %5952 = vmatprep.subr.mxu0 0.0
    %5953 = vmatpush1.msra.mxu0 0.0
    %5954 = vmatprep.subr.mxu0 0.0
    %5955 = vmatpush1.msra.mxu0 0.0
    %5956 = vmatprep.subr.mxu0 0.0
    %5957 = vmatpush1.msra.mxu0 0.0
    %5958 = vmatprep.subr.mxu0 0.0
    %5959 = vmatpush1.msra.mxu0 0.0
    %v5960 = vand.u32 %v3234, 4294901760
    %5961 = vmatprep.subr.mxu0 %v5960
    %v5962 = vand.u32 %v3233, 4294901760
    %5963 = vmatpush1.msra.mxu0 %v5962
    %v5964 = vand.u32 %v3226, 4294901760
    %5965 = vmatprep.subr.mxu0 %v5964
    %v5966 = vand.u32 %v3225, 4294901760
    %5967 = vmatpush1.msra.mxu0 %v5966
    %v5968 = vand.u32 %v3218, 4294901760
    %5969 = vmatprep.subr.mxu0 %v5968
    %v5970 = vand.u32 %v3217, 4294901760
    %5971 = vmatpush1.msra.mxu0 %v5970
    %v5972 = vand.u32 %v3210, 4294901760
    %5973 = vmatprep.subr.mxu0 %v5972
    %v5974 = vand.u32 %v3209, 4294901760
    %5975 = vmatpush1.msra.mxu0 %v5974
    %5976 = vmatprep.subr.mxu0 0.0
    %5977 = vmatpush2.msra.mxu0 0.0
    %5978 = vmatprep.subr.mxu0 0.0
    %5979 = vmatpush2.msra.mxu0 0.0
    %5980 = vmatprep.subr.mxu0 0.0
    %5981 = vmatpush2.msra.mxu0 0.0
    %5982 = vmatprep.subr.mxu0 0.0
    %5983 = vmatpush2.msra.mxu0 0.0
    %5984 = vmatprep.subr.mxu0 0.0
    %5985 = vmatpush2.msra.mxu0 0.0
    %5986 = vmatprep.subr.mxu0 0.0
    %5987 = vmatpush2.msra.mxu0 0.0
    %5988 = vmatprep.subr.mxu0 0.0
    %5989 = vmatpush2.msra.mxu0 0.0
    %5990 = vmatprep.subr.mxu0 0.0
    %5991 = vmatpush2.msra.mxu0 0.0
    %5992 = vmatprep.subr.mxu0 0.0
    %5993 = vmatpush2.msra.mxu0 0.0
    %5994 = vmatprep.subr.mxu0 0.0
    %5995 = vmatpush2.msra.mxu0 0.0
    %5996 = vmatprep.subr.mxu0 0.0
    %5997 = vmatpush2.msra.mxu0 0.0
    %5998 = vmatprep.subr.mxu0 0.0
    %5999 = vmatpush2.msra.mxu0 0.0
    %6000 = vmatprep.subr.mxu0 0.0
    %6001 = vmatpush2.msra.mxu0 0.0
    %6002 = vmatprep.subr.mxu0 0.0
    %6003 = vmatpush2.msra.mxu0 0.0
    %6004 = vmatprep.subr.mxu0 0.0
    %6005 = vmatpush2.msra.mxu0 0.0
    %6006 = vmatprep.subr.mxu0 0.0
    %6007 = vmatpush2.msra.mxu0 0.0
    %6008 = vmatprep.mubr.f32.mxu0 0.0
    %v6009 = vand.u32 %v3266, 4294901760
    %6010 = vmatmul.mubr.f32.gmra.mxu0 %v6009
    %v6011 = vpop.f32.mrf.mxu0
    %v6012 = vadd.f32 %v5911, %v6011
    %v6013 = vpop.f32.mrf.mxu0
    %v6014 = vadd.f32 %v5913, %v6013
    %6015 = vmatprep.mubr.f32.mxu0 0.0
    %v6016 = vand.u32 %v3269, 4294901760
    %6017 = vmatmul.mubr.f32.gmra.mxu0 %v6016
    %v6018 = vpop.f32.mrf.mxu0
    %v6019 = vadd.f32 %v5918, %v6018
    %v6020 = vpop.f32.mrf.mxu0
    %v6021 = vadd.f32 %v5920, %v6020
    %6022 = vmatprep.mubr.f32.mxu0 0.0
    %v6023 = vand.u32 %v3272, 4294901760
    %6024 = vmatmul.mubr.f32.gmra.mxu0 %v6023
    %v6025 = vpop.f32.mrf.mxu0
    %v6026 = vadd.f32 %v5925, %v6025
    %v6027 = vpop.f32.mrf.mxu0
    %v6028 = vadd.f32 %v5927, %v6027
    %6029 = vmatprep.mubr.f32.mxu0 0.0
    %v6030 = vand.u32 %v3275, 4294901760
    %6031 = vmatmul.mubr.f32.gmra.mxu0 %v6030
    %v6032 = vpop.f32.mrf.mxu0
    %v6033 = vadd.f32 %v5932, %v6032
    %v6034 = vpop.f32.mrf.mxu0
    %v6035 = vadd.f32 %v5934, %v6034
    %6036 = vdwg.mxu0
    %v6037 = vtanh.pop %v3942
    %v6038 = vtanh.pop %v3944
    %v6039 = vtanh.pop %v4632
    %v6040 = vtanh.pop %v4634
    %v6041 = vtanh.pop %v5322
    %v6042 = vtanh.pop %v5324
    %v6043 = vtanh.pop %v6012
    %v6044 = vtanh.pop %v6014
    %v6045 = vtanh.pop %v3949
    %v6046 = vtanh.pop %v3951
    %v6047 = vtanh.pop %v4639
    %v6048 = vtanh.pop %v4641
    %v6049 = vtanh.pop %v5329
    %v6050 = vtanh.pop %v5331
    %v6051 = vtanh.pop %v6019
    %v6052 = vtanh.pop %v6021
    %v6053 = vtanh.pop %v3956
    %v6054 = vtanh.pop %v3958
    %v6055 = vtanh.pop %v4646
    %v6056 = vtanh.pop %v4648
    %v6057 = vtanh.pop %v5336
    %v6058 = vtanh.pop %v5338
    %v6059 = vtanh.pop %v6026
    %v6060 = vtanh.pop %v6028
    %v6061 = vtanh.pop %v3963
    %v6062 = vtanh.pop %v3965
    %v6063 = vtanh.pop %v4653
    %v6064 = vtanh.pop %v4655
    %v6065 = vtanh.pop %v5343
    %v6066 = vtanh.pop %v5345
    %v6067 = vtanh.pop %v6033
    %v6068 = vtanh.pop %v6035
    %v6069 = vmul.f32 %v6037, %v6037
    %v6070 = vmul.f32 %v6038, %v6038
    %v6071 = vmul.f32 %v6039, %v6039
    %v6072 = vmul.f32 %v6040, %v6040
    %v6073 = vmul.f32 %v6041, %v6041
    %v6074 = vmul.f32 %v6042, %v6042
    %v6075 = vmul.f32 %v6043, %v6043
    %v6076 = vmul.f32 %v6044, %v6044
    %v6077 = vmul.f32 %v6045, %v6045
    %v6078 = vmul.f32 %v6046, %v6046
    %v6079 = vmul.f32 %v6047, %v6047
    %v6080 = vmul.f32 %v6048, %v6048
    %v6081 = vmul.f32 %v6049, %v6049
    %v6082 = vmul.f32 %v6050, %v6050
    %v6083 = vmul.f32 %v6051, %v6051
    %v6084 = vmul.f32 %v6052, %v6052
    %v6085 = vmul.f32 %v6053, %v6053
    %v6086 = vmul.f32 %v6054, %v6054
    %v6087 = vmul.f32 %v6055, %v6055
    %v6088 = vmul.f32 %v6056, %v6056
    %v6089 = vmul.f32 %v6057, %v6057
    %v6090 = vmul.f32 %v6058, %v6058
    %v6091 = vmul.f32 %v6059, %v6059
    %v6092 = vmul.f32 %v6060, %v6060
    %v6093 = vmul.f32 %v6061, %v6061
    %v6094 = vmul.f32 %v6062, %v6062
    %v6095 = vmul.f32 %v6063, %v6063
    %v6096 = vmul.f32 %v6064, %v6064
    %v6097 = vmul.f32 %v6065, %v6065
    %v6098 = vmul.f32 %v6066, %v6066
    %v6099 = vmul.f32 %v6067, %v6067
    %v6100 = vmul.f32 %v6068, %v6068
    %v6101 = vmul.f32 %v6069, %v6037
    %v6102 = vmul.f32 %v6070, %v6038
    %v6103 = vmul.f32 %v6071, %v6039
    %v6104 = vmul.f32 %v6072, %v6040
    %v6105 = vmul.f32 %v6073, %v6041
    %v6106 = vmul.f32 %v6074, %v6042
    %v6107 = vmul.f32 %v6075, %v6043
    %v6108 = vmul.f32 %v6076, %v6044
    %v6109 = vmul.f32 %v6077, %v6045
    %v6110 = vmul.f32 %v6078, %v6046
    %v6111 = vmul.f32 %v6079, %v6047
    %v6112 = vmul.f32 %v6080, %v6048
    %v6113 = vmul.f32 %v6081, %v6049
    %v6114 = vmul.f32 %v6082, %v6050
    %v6115 = vmul.f32 %v6083, %v6051
    %v6116 = vmul.f32 %v6084, %v6052
    %v6117 = vmul.f32 %v6085, %v6053
    %v6118 = vmul.f32 %v6086, %v6054
    %v6119 = vmul.f32 %v6087, %v6055
    %v6120 = vmul.f32 %v6088, %v6056
    %v6121 = vmul.f32 %v6089, %v6057
    %v6122 = vmul.f32 %v6090, %v6058
    %v6123 = vmul.f32 %v6091, %v6059
    %v6124 = vmul.f32 %v6092, %v6060
    %v6125 = vmul.f32 %v6093, %v6061
    %v6126 = vmul.f32 %v6094, %v6062
    %v6127 = vmul.f32 %v6095, %v6063
    %v6128 = vmul.f32 %v6096, %v6064
    %v6129 = vmul.f32 %v6097, %v6065
    %v6130 = vmul.f32 %v6098, %v6066
    %v6131 = vmul.f32 %v6099, %v6067
    %v6132 = vmul.f32 %v6100, %v6068
    %v6133 = vadd.f32 %v6101, %v3203
    %v6134 = vadd.f32 %v6102, %v3204
    %v6135 = vadd.f32 %v6103, %v3205
    %v6136 = vadd.f32 %v6104, %v3206
    %v6137 = vadd.f32 %v6105, %v3207
    %v6138 = vadd.f32 %v6106, %v3208
    %v6139 = vadd.f32 %v6107, %v3209
    %v6140 = vadd.f32 %v6108, %v3210
    %v6141 = vadd.f32 %v6109, %v3211
    %v6142 = vadd.f32 %v6110, %v3212
    %v6143 = vadd.f32 %v6111, %v3213
    %v6144 = vadd.f32 %v6112, %v3214
    %v6145 = vadd.f32 %v6113, %v3215
    %v6146 = vadd.f32 %v6114, %v3216
    %v6147 = vadd.f32 %v6115, %v3217
    %v6148 = vadd.f32 %v6116, %v3218
    %v6149 = vadd.f32 %v6117, %v3219
    %v6150 = vadd.f32 %v6118, %v3220
    %v6151 = vadd.f32 %v6119, %v3221
    %v6152 = vadd.f32 %v6120, %v3222
    %v6153 = vadd.f32 %v6121, %v3223
    %v6154 = vadd.f32 %v6122, %v3224
    %v6155 = vadd.f32 %v6123, %v3225
    %v6156 = vadd.f32 %v6124, %v3226
    %v6157 = vadd.f32 %v6125, %v3227
    %v6158 = vadd.f32 %v6126, %v3228
    %v6159 = vadd.f32 %v6127, %v3229
    %v6160 = vadd.f32 %v6128, %v3230
    %v6161 = vadd.f32 %v6129, %v3231
    %v6162 = vadd.f32 %v6130, %v3232
    %v6163 = vadd.f32 %v6131, %v3233
    %v6164 = vadd.f32 %v6132, %v3234
    %s6165 = scalar_lea.vmem %s3, 64
    %v6166 = vld [vmem:[%s6165] sm:$0xff]
    %v6167 = vld [vmem:[%s6165 + $0x8] sm:$0xff]
    %v6168 = vld [vmem:[%s6165 + $0x10] sm:$0xff]
    %v6169 = vld [vmem:[%s6165 + $0x18] sm:$0xff]
    %s6170 = scalar_lea.vmem %s4, 64
    %v6171 = vld [vmem:[%s6170] sm:$0xff]
    %v6172 = vld [vmem:[%s6170 + $0x8] sm:$0xff]
    %v6173 = vld [vmem:[%s6170 + $0x10] sm:$0xff]
    %v6174 = vld [vmem:[%s6170 + $0x18] sm:$0xff]
    %6176 = vset.pattern.permute.xlu0 0
    %6177 = vperm.xlu0 %6176, %v6171
    %v6178 = vpop.permute.xlu0 %6177
    %6181 = vset.pattern.permute.xlu0 0
    %6182 = vperm.xlu0 %6181, %v6172
    %v6183 = vpop.permute.xlu0 %6182
    %6186 = vset.pattern.permute.xlu0 0
    %6187 = vperm.xlu0 %6186, %v6173
    %v6188 = vpop.permute.xlu0 %6187
    %6191 = vset.pattern.permute.xlu0 0
    %6192 = vperm.xlu0 %6191, %v6174
    %v6193 = vpop.permute.xlu0 %6192
    %v6196 = vsel %vm334, %v6166, 0
    %v6199 = vsel %vm334, %v6167, 0
    %v6202 = vsel %vm334, %v6168, 0
    %v6205 = vsel %vm334, %v6169, 0
    %6207 = vmatprep.subr.mxu0 0.0
    %6208 = vmatpush1.msra.mxu0 0.0
    %6209 = vmatprep.subr.mxu0 0.0
    %6210 = vmatpush1.msra.mxu0 0.0
    %6211 = vmatprep.subr.mxu0 0.0
    %6212 = vmatpush1.msra.mxu0 0.0
    %6213 = vmatprep.subr.mxu0 0.0
    %6214 = vmatpush1.msra.mxu0 0.0
    %6215 = vmatprep.subr.mxu0 0.0
    %6216 = vmatpush1.msra.mxu0 0.0
    %6217 = vmatprep.subr.mxu0 0.0
    %6218 = vmatpush1.msra.mxu0 0.0
    %6219 = vmatprep.subr.mxu0 0.0
    %6220 = vmatpush1.msra.mxu0 0.0
    %6221 = vmatprep.subr.mxu0 0.0
    %6222 = vmatpush1.msra.mxu0 0.0
    %6223 = vmatprep.subr.mxu0 0.0
    %6224 = vmatpush1.msra.mxu0 0.0
    %6225 = vmatprep.subr.mxu0 0.0
    %6226 = vmatpush1.msra.mxu0 0.0
    %6227 = vmatprep.subr.mxu0 0.0
    %6228 = vmatpush1.msra.mxu0 0.0
    %6229 = vmatprep.subr.mxu0 0.0
    %6230 = vmatpush1.msra.mxu0 0.0
    %v6231 = vand.u32 %v6158, 4294901760
    %6232 = vmatprep.subr.mxu0 %v6231
    %v6233 = vand.u32 %v6157, 4294901760
    %6234 = vmatpush1.msra.mxu0 %v6233
    %v6235 = vand.u32 %v6150, 4294901760
    %6236 = vmatprep.subr.mxu0 %v6235
    %v6237 = vand.u32 %v6149, 4294901760
    %6238 = vmatpush1.msra.mxu0 %v6237
    %v6239 = vand.u32 %v6142, 4294901760
    %6240 = vmatprep.subr.mxu0 %v6239
    %v6241 = vand.u32 %v6141, 4294901760
    %6242 = vmatpush1.msra.mxu0 %v6241
    %v6243 = vand.u32 %v6134, 4294901760
    %6244 = vmatprep.subr.mxu0 %v6243
    %v6245 = vand.u32 %v6133, 4294901760
    %6246 = vmatpush1.msra.mxu0 %v6245
    %6247 = vmatprep.subr.mxu0 0.0
    %6248 = vmatpush2.msra.mxu0 0.0
    %6249 = vmatprep.subr.mxu0 0.0
    %6250 = vmatpush2.msra.mxu0 0.0
    %6251 = vmatprep.subr.mxu0 0.0
    %6252 = vmatpush2.msra.mxu0 0.0
    %6253 = vmatprep.subr.mxu0 0.0
    %6254 = vmatpush2.msra.mxu0 0.0
    %6255 = vmatprep.subr.mxu0 0.0
    %6256 = vmatpush2.msra.mxu0 0.0
    %6257 = vmatprep.subr.mxu0 0.0
    %6258 = vmatpush2.msra.mxu0 0.0
    %6259 = vmatprep.subr.mxu0 0.0
    %6260 = vmatpush2.msra.mxu0 0.0
    %6261 = vmatprep.subr.mxu0 0.0
    %6262 = vmatpush2.msra.mxu0 0.0
    %6263 = vmatprep.subr.mxu0 0.0
    %6264 = vmatpush2.msra.mxu0 0.0
    %6265 = vmatprep.subr.mxu0 0.0
    %6266 = vmatpush2.msra.mxu0 0.0
    %6267 = vmatprep.subr.mxu0 0.0
    %6268 = vmatpush2.msra.mxu0 0.0
    %6269 = vmatprep.subr.mxu0 0.0
    %6270 = vmatpush2.msra.mxu0 0.0
    %6271 = vmatprep.subr.mxu0 0.0
    %6272 = vmatpush2.msra.mxu0 0.0
    %6273 = vmatprep.subr.mxu0 0.0
    %6274 = vmatpush2.msra.mxu0 0.0
    %6275 = vmatprep.subr.mxu0 0.0
    %6276 = vmatpush2.msra.mxu0 0.0
    %6277 = vmatprep.subr.mxu0 0.0
    %6278 = vmatpush2.msra.mxu0 0.0
    %6279 = vmatprep.mubr.f32.mxu0 0.0
    %v6280 = vand.u32 %v6196, 4294901760
    %v6281 = vsub.f32 %v6196, %v6280
    %v6282 = vand.u32 %v6281, 4294901760
    %v6283 = vsub.f32 %v6281, %v6282
    %v6284 = vand.u32 %v6283, 4294901760
    %6285 = vmatmul.mubr.f32.gmra.mxu0 %v6284
    %v6286 = vpop.f32.mrf.mxu0
    %v6287 = vadd.f32 %v6178, %v6286
    %v6288 = vpop.f32.mrf.mxu0
    %v6289 = vadd.f32 %v6178, %v6288
    %6290 = vmatprep.mubr.f32.mxu0 0.0
    %v6291 = vand.u32 %v6199, 4294901760
    %v6292 = vsub.f32 %v6199, %v6291
    %v6293 = vand.u32 %v6292, 4294901760
    %v6294 = vsub.f32 %v6292, %v6293
    %v6295 = vand.u32 %v6294, 4294901760
    %6296 = vmatmul.mubr.f32.gmra.mxu0 %v6295
    %v6297 = vpop.f32.mrf.mxu0
    %v6298 = vadd.f32 %v6183, %v6297
    %v6299 = vpop.f32.mrf.mxu0
    %v6300 = vadd.f32 %v6183, %v6299
    %6301 = vmatprep.mubr.f32.mxu0 0.0
    %v6302 = vand.u32 %v6202, 4294901760
    %v6303 = vsub.f32 %v6202, %v6302
    %v6304 = vand.u32 %v6303, 4294901760
    %v6305 = vsub.f32 %v6303, %v6304
    %v6306 = vand.u32 %v6305, 4294901760
    %6307 = vmatmul.mubr.f32.gmra.mxu0 %v6306
    %v6308 = vpop.f32.mrf.mxu0
    %v6309 = vadd.f32 %v6188, %v6308
    %v6310 = vpop.f32.mrf.mxu0
    %v6311 = vadd.f32 %v6188, %v6310
    %6312 = vmatprep.mubr.f32.mxu0 0.0
    %v6313 = vand.u32 %v6205, 4294901760
    %v6314 = vsub.f32 %v6205, %v6313
    %v6315 = vand.u32 %v6314, 4294901760
    %v6316 = vsub.f32 %v6314, %v6315
    %v6317 = vand.u32 %v6316, 4294901760
    %6318 = vmatmul.mubr.f32.gmra.mxu0 %v6317
    %v6319 = vpop.f32.mrf.mxu0
    %v6320 = vadd.f32 %v6193, %v6319
    %v6321 = vpop.f32.mrf.mxu0
    %v6322 = vadd.f32 %v6193, %v6321
    %6323 = vdwg.mxu0
    %6324 = vmatprep.subr.mxu0 0.0
    %6325 = vmatpush1.msra.mxu0 0.0
    %6326 = vmatprep.subr.mxu0 0.0
    %6327 = vmatpush1.msra.mxu0 0.0
    %6328 = vmatprep.subr.mxu0 0.0
    %6329 = vmatpush1.msra.mxu0 0.0
    %6330 = vmatprep.subr.mxu0 0.0
    %6331 = vmatpush1.msra.mxu0 0.0
    %6332 = vmatprep.subr.mxu0 0.0
    %6333 = vmatpush1.msra.mxu0 0.0
    %6334 = vmatprep.subr.mxu0 0.0
    %6335 = vmatpush1.msra.mxu0 0.0
    %6336 = vmatprep.subr.mxu0 0.0
    %6337 = vmatpush1.msra.mxu0 0.0
    %6338 = vmatprep.subr.mxu0 0.0
    %6339 = vmatpush1.msra.mxu0 0.0
    %6340 = vmatprep.subr.mxu0 0.0
    %6341 = vmatpush1.msra.mxu0 0.0
    %6342 = vmatprep.subr.mxu0 0.0
    %6343 = vmatpush1.msra.mxu0 0.0
    %6344 = vmatprep.subr.mxu0 0.0
    %6345 = vmatpush1.msra.mxu0 0.0
    %6346 = vmatprep.subr.mxu0 0.0
    %6347 = vmatpush1.msra.mxu0 0.0
    %v6348 = vand.u32 %v6158, 4294901760
    %v6349 = vsub.f32 %v6158, %v6348
    %v6350 = vand.u32 %v6349, 4294901760
    %v6351 = vsub.f32 %v6349, %v6350
    %v6352 = vand.u32 %v6351, 4294901760
    %6353 = vmatprep.subr.mxu0 %v6352
    %v6354 = vand.u32 %v6157, 4294901760
    %v6355 = vsub.f32 %v6157, %v6354
    %v6356 = vand.u32 %v6355, 4294901760
    %v6357 = vsub.f32 %v6355, %v6356
    %v6358 = vand.u32 %v6357, 4294901760
    %6359 = vmatpush1.msra.mxu0 %v6358
    %v6360 = vand.u32 %v6150, 4294901760
    %v6361 = vsub.f32 %v6150, %v6360
    %v6362 = vand.u32 %v6361, 4294901760
    %v6363 = vsub.f32 %v6361, %v6362
    %v6364 = vand.u32 %v6363, 4294901760
    %6365 = vmatprep.subr.mxu0 %v6364
    %v6366 = vand.u32 %v6149, 4294901760
    %v6367 = vsub.f32 %v6149, %v6366
    %v6368 = vand.u32 %v6367, 4294901760
    %v6369 = vsub.f32 %v6367, %v6368
    %v6370 = vand.u32 %v6369, 4294901760
    %6371 = vmatpush1.msra.mxu0 %v6370
    %v6372 = vand.u32 %v6142, 4294901760
    %v6373 = vsub.f32 %v6142, %v6372
    %v6374 = vand.u32 %v6373, 4294901760
    %v6375 = vsub.f32 %v6373, %v6374
    %v6376 = vand.u32 %v6375, 4294901760
    %6377 = vmatprep.subr.mxu0 %v6376
    %v6378 = vand.u32 %v6141, 4294901760
    %v6379 = vsub.f32 %v6141, %v6378
    %v6380 = vand.u32 %v6379, 4294901760
    %v6381 = vsub.f32 %v6379, %v6380
    %v6382 = vand.u32 %v6381, 4294901760
    %6383 = vmatpush1.msra.mxu0 %v6382
    %v6384 = vand.u32 %v6134, 4294901760
    %v6385 = vsub.f32 %v6134, %v6384
    %v6386 = vand.u32 %v6385, 4294901760
    %v6387 = vsub.f32 %v6385, %v6386
    %v6388 = vand.u32 %v6387, 4294901760
    %6389 = vmatprep.subr.mxu0 %v6388
    %v6390 = vand.u32 %v6133, 4294901760
    %v6391 = vsub.f32 %v6133, %v6390
    %v6392 = vand.u32 %v6391, 4294901760
    %v6393 = vsub.f32 %v6391, %v6392
    %v6394 = vand.u32 %v6393, 4294901760
    %6395 = vmatpush1.msra.mxu0 %v6394
    %6396 = vmatprep.subr.mxu0 0.0
    %6397 = vmatpush2.msra.mxu0 0.0
    %6398 = vmatprep.subr.mxu0 0.0
    %6399 = vmatpush2.msra.mxu0 0.0
    %6400 = vmatprep.subr.mxu0 0.0
    %6401 = vmatpush2.msra.mxu0 0.0
    %6402 = vmatprep.subr.mxu0 0.0
    %6403 = vmatpush2.msra.mxu0 0.0
    %6404 = vmatprep.subr.mxu0 0.0
    %6405 = vmatpush2.msra.mxu0 0.0
    %6406 = vmatprep.subr.mxu0 0.0
    %6407 = vmatpush2.msra.mxu0 0.0
    %6408 = vmatprep.subr.mxu0 0.0
    %6409 = vmatpush2.msra.mxu0 0.0
    %6410 = vmatprep.subr.mxu0 0.0
    %6411 = vmatpush2.msra.mxu0 0.0
    %6412 = vmatprep.subr.mxu0 0.0
    %6413 = vmatpush2.msra.mxu0 0.0
    %6414 = vmatprep.subr.mxu0 0.0
    %6415 = vmatpush2.msra.mxu0 0.0
    %6416 = vmatprep.subr.mxu0 0.0
    %6417 = vmatpush2.msra.mxu0 0.0
    %6418 = vmatprep.subr.mxu0 0.0
    %6419 = vmatpush2.msra.mxu0 0.0
    %6420 = vmatprep.subr.mxu0 0.0
    %6421 = vmatpush2.msra.mxu0 0.0
    %6422 = vmatprep.subr.mxu0 0.0
    %6423 = vmatpush2.msra.mxu0 0.0
    %6424 = vmatprep.subr.mxu0 0.0
    %6425 = vmatpush2.msra.mxu0 0.0
    %6426 = vmatprep.subr.mxu0 0.0
    %6427 = vmatpush2.msra.mxu0 0.0
    %6428 = vmatprep.mubr.f32.mxu0 0.0
    %v6429 = vand.u32 %v6196, 4294901760
    %6430 = vmatmul.mubr.f32.gmra.mxu0 %v6429
    %v6431 = vpop.f32.mrf.mxu0
    %v6432 = vadd.f32 %v6287, %v6431
    %v6433 = vpop.f32.mrf.mxu0
    %v6434 = vadd.f32 %v6289, %v6433
    %6435 = vmatprep.mubr.f32.mxu0 0.0
    %v6436 = vand.u32 %v6199, 4294901760
    %6437 = vmatmul.mubr.f32.gmra.mxu0 %v6436
    %v6438 = vpop.f32.mrf.mxu0
    %v6439 = vadd.f32 %v6298, %v6438
    %v6440 = vpop.f32.mrf.mxu0
    %v6441 = vadd.f32 %v6300, %v6440
    %6442 = vmatprep.mubr.f32.mxu0 0.0
    %v6443 = vand.u32 %v6202, 4294901760
    %6444 = vmatmul.mubr.f32.gmra.mxu0 %v6443
    %v6445 = vpop.f32.mrf.mxu0
    %v6446 = vadd.f32 %v6309, %v6445
    %v6447 = vpop.f32.mrf.mxu0
    %v6448 = vadd.f32 %v6311, %v6447
    %6449 = vmatprep.mubr.f32.mxu0 0.0
    %v6450 = vand.u32 %v6205, 4294901760
    %6451 = vmatmul.mubr.f32.gmra.mxu0 %v6450
    %v6452 = vpop.f32.mrf.mxu0
    %v6453 = vadd.f32 %v6320, %v6452
    %v6454 = vpop.f32.mrf.mxu0
    %v6455 = vadd.f32 %v6322, %v6454
    %6456 = vdwg.mxu0
    %6457 = vmatprep.subr.mxu0 0.0
    %6458 = vmatpush1.msra.mxu0 0.0
    %6459 = vmatprep.subr.mxu0 0.0
    %6460 = vmatpush1.msra.mxu0 0.0
    %6461 = vmatprep.subr.mxu0 0.0
    %6462 = vmatpush1.msra.mxu0 0.0
    %6463 = vmatprep.subr.mxu0 0.0
    %6464 = vmatpush1.msra.mxu0 0.0
    %6465 = vmatprep.subr.mxu0 0.0
    %6466 = vmatpush1.msra.mxu0 0.0
    %6467 = vmatprep.subr.mxu0 0.0
    %6468 = vmatpush1.msra.mxu0 0.0
    %6469 = vmatprep.subr.mxu0 0.0
    %6470 = vmatpush1.msra.mxu0 0.0
    %6471 = vmatprep.subr.mxu0 0.0
    %6472 = vmatpush1.msra.mxu0 0.0
    %6473 = vmatprep.subr.mxu0 0.0
    %6474 = vmatpush1.msra.mxu0 0.0
    %6475 = vmatprep.subr.mxu0 0.0
    %6476 = vmatpush1.msra.mxu0 0.0
    %6477 = vmatprep.subr.mxu0 0.0
    %6478 = vmatpush1.msra.mxu0 0.0
    %6479 = vmatprep.subr.mxu0 0.0
    %6480 = vmatpush1.msra.mxu0 0.0
    %v6481 = vand.u32 %v6158, 4294901760
    %v6482 = vsub.f32 %v6158, %v6481
    %6483 = vmatprep.subr.mxu0 %v6482
    %v6484 = vand.u32 %v6157, 4294901760
    %v6485 = vsub.f32 %v6157, %v6484
    %6486 = vmatpush1.msra.mxu0 %v6485
    %v6487 = vand.u32 %v6150, 4294901760
    %v6488 = vsub.f32 %v6150, %v6487
    %6489 = vmatprep.subr.mxu0 %v6488
    %v6490 = vand.u32 %v6149, 4294901760
    %v6491 = vsub.f32 %v6149, %v6490
    %6492 = vmatpush1.msra.mxu0 %v6491
    %v6493 = vand.u32 %v6142, 4294901760
    %v6494 = vsub.f32 %v6142, %v6493
    %6495 = vmatprep.subr.mxu0 %v6494
    %v6496 = vand.u32 %v6141, 4294901760
    %v6497 = vsub.f32 %v6141, %v6496
    %6498 = vmatpush1.msra.mxu0 %v6497
    %v6499 = vand.u32 %v6134, 4294901760
    %v6500 = vsub.f32 %v6134, %v6499
    %6501 = vmatprep.subr.mxu0 %v6500
    %v6502 = vand.u32 %v6133, 4294901760
    %v6503 = vsub.f32 %v6133, %v6502
    %6504 = vmatpush1.msra.mxu0 %v6503
    %6505 = vmatprep.subr.mxu0 0.0
    %6506 = vmatpush2.msra.mxu0 0.0
    %6507 = vmatprep.subr.mxu0 0.0
    %6508 = vmatpush2.msra.mxu0 0.0
    %6509 = vmatprep.subr.mxu0 0.0
    %6510 = vmatpush2.msra.mxu0 0.0
    %6511 = vmatprep.subr.mxu0 0.0
    %6512 = vmatpush2.msra.mxu0 0.0
    %6513 = vmatprep.subr.mxu0 0.0
    %6514 = vmatpush2.msra.mxu0 0.0
    %6515 = vmatprep.subr.mxu0 0.0
    %6516 = vmatpush2.msra.mxu0 0.0
    %6517 = vmatprep.subr.mxu0 0.0
    %6518 = vmatpush2.msra.mxu0 0.0
    %6519 = vmatprep.subr.mxu0 0.0
    %6520 = vmatpush2.msra.mxu0 0.0
    %6521 = vmatprep.subr.mxu0 0.0
    %6522 = vmatpush2.msra.mxu0 0.0
    %6523 = vmatprep.subr.mxu0 0.0
    %6524 = vmatpush2.msra.mxu0 0.0
    %6525 = vmatprep.subr.mxu0 0.0
    %6526 = vmatpush2.msra.mxu0 0.0
    %6527 = vmatprep.subr.mxu0 0.0
    %6528 = vmatpush2.msra.mxu0 0.0
    %6529 = vmatprep.subr.mxu0 0.0
    %6530 = vmatpush2.msra.mxu0 0.0
    %6531 = vmatprep.subr.mxu0 0.0
    %6532 = vmatpush2.msra.mxu0 0.0
    %6533 = vmatprep.subr.mxu0 0.0
    %6534 = vmatpush2.msra.mxu0 0.0
    %6535 = vmatprep.subr.mxu0 0.0
    %6536 = vmatpush2.msra.mxu0 0.0
    %6537 = vmatprep.mubr.f32.mxu0 0.0
    %v6538 = vand.u32 %v6196, 4294901760
    %v6539 = vsub.f32 %v6196, %v6538
    %6540 = vmatmul.mubr.f32.gmra.mxu0 %v6539
    %v6541 = vpop.f32.mrf.mxu0
    %v6542 = vadd.f32 %v6432, %v6541
    %v6543 = vpop.f32.mrf.mxu0
    %v6544 = vadd.f32 %v6434, %v6543
    %6545 = vmatprep.mubr.f32.mxu0 0.0
    %v6546 = vand.u32 %v6199, 4294901760
    %v6547 = vsub.f32 %v6199, %v6546
    %6548 = vmatmul.mubr.f32.gmra.mxu0 %v6547
    %v6549 = vpop.f32.mrf.mxu0
    %v6550 = vadd.f32 %v6439, %v6549
    %v6551 = vpop.f32.mrf.mxu0
    %v6552 = vadd.f32 %v6441, %v6551
    %6553 = vmatprep.mubr.f32.mxu0 0.0
    %v6554 = vand.u32 %v6202, 4294901760
    %v6555 = vsub.f32 %v6202, %v6554
    %6556 = vmatmul.mubr.f32.gmra.mxu0 %v6555
    %v6557 = vpop.f32.mrf.mxu0
    %v6558 = vadd.f32 %v6446, %v6557
    %v6559 = vpop.f32.mrf.mxu0
    %v6560 = vadd.f32 %v6448, %v6559
    %6561 = vmatprep.mubr.f32.mxu0 0.0
    %v6562 = vand.u32 %v6205, 4294901760
    %v6563 = vsub.f32 %v6205, %v6562
    %6564 = vmatmul.mubr.f32.gmra.mxu0 %v6563
    %v6565 = vpop.f32.mrf.mxu0
    %v6566 = vadd.f32 %v6453, %v6565
    %v6567 = vpop.f32.mrf.mxu0
    %v6568 = vadd.f32 %v6455, %v6567
    %6569 = vdwg.mxu0
    %6570 = vmatprep.subr.mxu0 0.0
    %6571 = vmatpush1.msra.mxu0 0.0
    %6572 = vmatprep.subr.mxu0 0.0
    %6573 = vmatpush1.msra.mxu0 0.0
    %6574 = vmatprep.subr.mxu0 0.0
    %6575 = vmatpush1.msra.mxu0 0.0
    %6576 = vmatprep.subr.mxu0 0.0
    %6577 = vmatpush1.msra.mxu0 0.0
    %6578 = vmatprep.subr.mxu0 0.0
    %6579 = vmatpush1.msra.mxu0 0.0
    %6580 = vmatprep.subr.mxu0 0.0
    %6581 = vmatpush1.msra.mxu0 0.0
    %6582 = vmatprep.subr.mxu0 0.0
    %6583 = vmatpush1.msra.mxu0 0.0
    %6584 = vmatprep.subr.mxu0 0.0
    %6585 = vmatpush1.msra.mxu0 0.0
    %6586 = vmatprep.subr.mxu0 0.0
    %6587 = vmatpush1.msra.mxu0 0.0
    %6588 = vmatprep.subr.mxu0 0.0
    %6589 = vmatpush1.msra.mxu0 0.0
    %6590 = vmatprep.subr.mxu0 0.0
    %6591 = vmatpush1.msra.mxu0 0.0
    %6592 = vmatprep.subr.mxu0 0.0
    %6593 = vmatpush1.msra.mxu0 0.0
    %v6594 = vand.u32 %v6158, 4294901760
    %6595 = vmatprep.subr.mxu0 %v6594
    %v6596 = vand.u32 %v6157, 4294901760
    %6597 = vmatpush1.msra.mxu0 %v6596
    %v6598 = vand.u32 %v6150, 4294901760
    %6599 = vmatprep.subr.mxu0 %v6598
    %v6600 = vand.u32 %v6149, 4294901760
    %6601 = vmatpush1.msra.mxu0 %v6600
    %v6602 = vand.u32 %v6142, 4294901760
    %6603 = vmatprep.subr.mxu0 %v6602
    %v6604 = vand.u32 %v6141, 4294901760
    %6605 = vmatpush1.msra.mxu0 %v6604
    %v6606 = vand.u32 %v6134, 4294901760
    %6607 = vmatprep.subr.mxu0 %v6606
    %v6608 = vand.u32 %v6133, 4294901760
    %6609 = vmatpush1.msra.mxu0 %v6608
    %6610 = vmatprep.subr.mxu0 0.0
    %6611 = vmatpush2.msra.mxu0 0.0
    %6612 = vmatprep.subr.mxu0 0.0
    %6613 = vmatpush2.msra.mxu0 0.0
    %6614 = vmatprep.subr.mxu0 0.0
    %6615 = vmatpush2.msra.mxu0 0.0
    %6616 = vmatprep.subr.mxu0 0.0
    %6617 = vmatpush2.msra.mxu0 0.0
    %6618 = vmatprep.subr.mxu0 0.0
    %6619 = vmatpush2.msra.mxu0 0.0
    %6620 = vmatprep.subr.mxu0 0.0
    %6621 = vmatpush2.msra.mxu0 0.0
    %6622 = vmatprep.subr.mxu0 0.0
    %6623 = vmatpush2.msra.mxu0 0.0
    %6624 = vmatprep.subr.mxu0 0.0
    %6625 = vmatpush2.msra.mxu0 0.0
    %6626 = vmatprep.subr.mxu0 0.0
    %6627 = vmatpush2.msra.mxu0 0.0
    %6628 = vmatprep.subr.mxu0 0.0
    %6629 = vmatpush2.msra.mxu0 0.0
    %6630 = vmatprep.subr.mxu0 0.0
    %6631 = vmatpush2.msra.mxu0 0.0
    %6632 = vmatprep.subr.mxu0 0.0
    %6633 = vmatpush2.msra.mxu0 0.0
    %6634 = vmatprep.subr.mxu0 0.0
    %6635 = vmatpush2.msra.mxu0 0.0
    %6636 = vmatprep.subr.mxu0 0.0
    %6637 = vmatpush2.msra.mxu0 0.0
    %6638 = vmatprep.subr.mxu0 0.0
    %6639 = vmatpush2.msra.mxu0 0.0
    %6640 = vmatprep.subr.mxu0 0.0
    %6641 = vmatpush2.msra.mxu0 0.0
    %6642 = vmatprep.mubr.f32.mxu0 0.0
    %v6643 = vand.u32 %v6196, 4294901760
    %v6644 = vsub.f32 %v6196, %v6643
    %v6645 = vand.u32 %v6644, 4294901760
    %6646 = vmatmul.mubr.f32.gmra.mxu0 %v6645
    %v6647 = vpop.f32.mrf.mxu0
    %v6648 = vadd.f32 %v6542, %v6647
    %v6649 = vpop.f32.mrf.mxu0
    %v6650 = vadd.f32 %v6544, %v6649
    %6651 = vmatprep.mubr.f32.mxu0 0.0
    %v6652 = vand.u32 %v6199, 4294901760
    %v6653 = vsub.f32 %v6199, %v6652
    %v6654 = vand.u32 %v6653, 4294901760
    %6655 = vmatmul.mubr.f32.gmra.mxu0 %v6654
    %v6656 = vpop.f32.mrf.mxu0
    %v6657 = vadd.f32 %v6550, %v6656
    %v6658 = vpop.f32.mrf.mxu0
    %v6659 = vadd.f32 %v6552, %v6658
    %6660 = vmatprep.mubr.f32.mxu0 0.0
    %v6661 = vand.u32 %v6202, 4294901760
    %v6662 = vsub.f32 %v6202, %v6661
    %v6663 = vand.u32 %v6662, 4294901760
    %6664 = vmatmul.mubr.f32.gmra.mxu0 %v6663
    %v6665 = vpop.f32.mrf.mxu0
    %v6666 = vadd.f32 %v6558, %v6665
    %v6667 = vpop.f32.mrf.mxu0
    %v6668 = vadd.f32 %v6560, %v6667
    %6669 = vmatprep.mubr.f32.mxu0 0.0
    %v6670 = vand.u32 %v6205, 4294901760
    %v6671 = vsub.f32 %v6205, %v6670
    %v6672 = vand.u32 %v6671, 4294901760
    %6673 = vmatmul.mubr.f32.gmra.mxu0 %v6672
    %v6674 = vpop.f32.mrf.mxu0
    %v6675 = vadd.f32 %v6566, %v6674
    %v6676 = vpop.f32.mrf.mxu0
    %v6677 = vadd.f32 %v6568, %v6676
    %6678 = vdwg.mxu0
    %6679 = vmatprep.subr.mxu0 0.0
    %6680 = vmatpush1.msra.mxu0 0.0
    %6681 = vmatprep.subr.mxu0 0.0
    %6682 = vmatpush1.msra.mxu0 0.0
    %6683 = vmatprep.subr.mxu0 0.0
    %6684 = vmatpush1.msra.mxu0 0.0
    %6685 = vmatprep.subr.mxu0 0.0
    %6686 = vmatpush1.msra.mxu0 0.0
    %6687 = vmatprep.subr.mxu0 0.0
    %6688 = vmatpush1.msra.mxu0 0.0
    %6689 = vmatprep.subr.mxu0 0.0
    %6690 = vmatpush1.msra.mxu0 0.0
    %6691 = vmatprep.subr.mxu0 0.0
    %6692 = vmatpush1.msra.mxu0 0.0
    %6693 = vmatprep.subr.mxu0 0.0
    %6694 = vmatpush1.msra.mxu0 0.0
    %6695 = vmatprep.subr.mxu0 0.0
    %6696 = vmatpush1.msra.mxu0 0.0
    %6697 = vmatprep.subr.mxu0 0.0
    %6698 = vmatpush1.msra.mxu0 0.0
    %6699 = vmatprep.subr.mxu0 0.0
    %6700 = vmatpush1.msra.mxu0 0.0
    %6701 = vmatprep.subr.mxu0 0.0
    %6702 = vmatpush1.msra.mxu0 0.0
    %v6703 = vand.u32 %v6158, 4294901760
    %v6704 = vsub.f32 %v6158, %v6703
    %v6705 = vand.u32 %v6704, 4294901760
    %6706 = vmatprep.subr.mxu0 %v6705
    %v6707 = vand.u32 %v6157, 4294901760
    %v6708 = vsub.f32 %v6157, %v6707
    %v6709 = vand.u32 %v6708, 4294901760
    %6710 = vmatpush1.msra.mxu0 %v6709
    %v6711 = vand.u32 %v6150, 4294901760
    %v6712 = vsub.f32 %v6150, %v6711
    %v6713 = vand.u32 %v6712, 4294901760
    %6714 = vmatprep.subr.mxu0 %v6713
    %v6715 = vand.u32 %v6149, 4294901760
    %v6716 = vsub.f32 %v6149, %v6715
    %v6717 = vand.u32 %v6716, 4294901760
    %6718 = vmatpush1.msra.mxu0 %v6717
    %v6719 = vand.u32 %v6142, 4294901760
    %v6720 = vsub.f32 %v6142, %v6719
    %v6721 = vand.u32 %v6720, 4294901760
    %6722 = vmatprep.subr.mxu0 %v6721
    %v6723 = vand.u32 %v6141, 4294901760
    %v6724 = vsub.f32 %v6141, %v6723
    %v6725 = vand.u32 %v6724, 4294901760
    %6726 = vmatpush1.msra.mxu0 %v6725
    %v6727 = vand.u32 %v6134, 4294901760
    %v6728 = vsub.f32 %v6134, %v6727
    %v6729 = vand.u32 %v6728, 4294901760
    %6730 = vmatprep.subr.mxu0 %v6729
    %v6731 = vand.u32 %v6133, 4294901760
    %v6732 = vsub.f32 %v6133, %v6731
    %v6733 = vand.u32 %v6732, 4294901760
    %6734 = vmatpush1.msra.mxu0 %v6733
    %6735 = vmatprep.subr.mxu0 0.0
    %6736 = vmatpush2.msra.mxu0 0.0
    %6737 = vmatprep.subr.mxu0 0.0
    %6738 = vmatpush2.msra.mxu0 0.0
    %6739 = vmatprep.subr.mxu0 0.0
    %6740 = vmatpush2.msra.mxu0 0.0
    %6741 = vmatprep.subr.mxu0 0.0
    %6742 = vmatpush2.msra.mxu0 0.0
    %6743 = vmatprep.subr.mxu0 0.0
    %6744 = vmatpush2.msra.mxu0 0.0
    %6745 = vmatprep.subr.mxu0 0.0
    %6746 = vmatpush2.msra.mxu0 0.0
    %6747 = vmatprep.subr.mxu0 0.0
    %6748 = vmatpush2.msra.mxu0 0.0
    %6749 = vmatprep.subr.mxu0 0.0
    %6750 = vmatpush2.msra.mxu0 0.0
    %6751 = vmatprep.subr.mxu0 0.0
    %6752 = vmatpush2.msra.mxu0 0.0
    %6753 = vmatprep.subr.mxu0 0.0
    %6754 = vmatpush2.msra.mxu0 0.0
    %6755 = vmatprep.subr.mxu0 0.0
    %6756 = vmatpush2.msra.mxu0 0.0
    %6757 = vmatprep.subr.mxu0 0.0
    %6758 = vmatpush2.msra.mxu0 0.0
    %6759 = vmatprep.subr.mxu0 0.0
    %6760 = vmatpush2.msra.mxu0 0.0
    %6761 = vmatprep.subr.mxu0 0.0
    %6762 = vmatpush2.msra.mxu0 0.0
    %6763 = vmatprep.subr.mxu0 0.0
    %6764 = vmatpush2.msra.mxu0 0.0
    %6765 = vmatprep.subr.mxu0 0.0
    %6766 = vmatpush2.msra.mxu0 0.0
    %6767 = vmatprep.mubr.f32.mxu0 0.0
    %v6768 = vand.u32 %v6196, 4294901760
    %6769 = vmatmul.mubr.f32.gmra.mxu0 %v6768
    %v6770 = vpop.f32.mrf.mxu0
    %v6771 = vadd.f32 %v6648, %v6770
    %v6772 = vpop.f32.mrf.mxu0
    %v6773 = vadd.f32 %v6650, %v6772
    %6774 = vmatprep.mubr.f32.mxu0 0.0
    %v6775 = vand.u32 %v6199, 4294901760
    %6776 = vmatmul.mubr.f32.gmra.mxu0 %v6775
    %v6777 = vpop.f32.mrf.mxu0
    %v6778 = vadd.f32 %v6657, %v6777
    %v6779 = vpop.f32.mrf.mxu0
    %v6780 = vadd.f32 %v6659, %v6779
    %6781 = vmatprep.mubr.f32.mxu0 0.0
    %v6782 = vand.u32 %v6202, 4294901760
    %6783 = vmatmul.mubr.f32.gmra.mxu0 %v6782
    %v6784 = vpop.f32.mrf.mxu0
    %v6785 = vadd.f32 %v6666, %v6784
    %v6786 = vpop.f32.mrf.mxu0
    %v6787 = vadd.f32 %v6668, %v6786
    %6788 = vmatprep.mubr.f32.mxu0 0.0
    %v6789 = vand.u32 %v6205, 4294901760
    %6790 = vmatmul.mubr.f32.gmra.mxu0 %v6789
    %v6791 = vpop.f32.mrf.mxu0
    %v6792 = vadd.f32 %v6675, %v6791
    %v6793 = vpop.f32.mrf.mxu0
    %v6794 = vadd.f32 %v6677, %v6793
    %6795 = vdwg.mxu0
    %6796 = vmatprep.subr.mxu0 0.0
    %6797 = vmatpush1.msra.mxu0 0.0
    %6798 = vmatprep.subr.mxu0 0.0
    %6799 = vmatpush1.msra.mxu0 0.0
    %6800 = vmatprep.subr.mxu0 0.0
    %6801 = vmatpush1.msra.mxu0 0.0
    %6802 = vmatprep.subr.mxu0 0.0
    %6803 = vmatpush1.msra.mxu0 0.0
    %6804 = vmatprep.subr.mxu0 0.0
    %6805 = vmatpush1.msra.mxu0 0.0
    %6806 = vmatprep.subr.mxu0 0.0
    %6807 = vmatpush1.msra.mxu0 0.0
    %6808 = vmatprep.subr.mxu0 0.0
    %6809 = vmatpush1.msra.mxu0 0.0
    %6810 = vmatprep.subr.mxu0 0.0
    %6811 = vmatpush1.msra.mxu0 0.0
    %6812 = vmatprep.subr.mxu0 0.0
    %6813 = vmatpush1.msra.mxu0 0.0
    %6814 = vmatprep.subr.mxu0 0.0
    %6815 = vmatpush1.msra.mxu0 0.0
    %6816 = vmatprep.subr.mxu0 0.0
    %6817 = vmatpush1.msra.mxu0 0.0
    %6818 = vmatprep.subr.mxu0 0.0
    %6819 = vmatpush1.msra.mxu0 0.0
    %v6820 = vand.u32 %v6158, 4294901760
    %6821 = vmatprep.subr.mxu0 %v6820
    %v6822 = vand.u32 %v6157, 4294901760
    %6823 = vmatpush1.msra.mxu0 %v6822
    %v6824 = vand.u32 %v6150, 4294901760
    %6825 = vmatprep.subr.mxu0 %v6824
    %v6826 = vand.u32 %v6149, 4294901760
    %6827 = vmatpush1.msra.mxu0 %v6826
    %v6828 = vand.u32 %v6142, 4294901760
    %6829 = vmatprep.subr.mxu0 %v6828
    %v6830 = vand.u32 %v6141, 4294901760
    %6831 = vmatpush1.msra.mxu0 %v6830
    %v6832 = vand.u32 %v6134, 4294901760
    %6833 = vmatprep.subr.mxu0 %v6832
    %v6834 = vand.u32 %v6133, 4294901760
    %6835 = vmatpush1.msra.mxu0 %v6834
    %6836 = vmatprep.subr.mxu0 0.0
    %6837 = vmatpush2.msra.mxu0 0.0
    %6838 = vmatprep.subr.mxu0 0.0
    %6839 = vmatpush2.msra.mxu0 0.0
    %6840 = vmatprep.subr.mxu0 0.0
    %6841 = vmatpush2.msra.mxu0 0.0
    %6842 = vmatprep.subr.mxu0 0.0
    %6843 = vmatpush2.msra.mxu0 0.0
    %6844 = vmatprep.subr.mxu0 0.0
    %6845 = vmatpush2.msra.mxu0 0.0
    %6846 = vmatprep.subr.mxu0 0.0
    %6847 = vmatpush2.msra.mxu0 0.0
    %6848 = vmatprep.subr.mxu0 0.0
    %6849 = vmatpush2.msra.mxu0 0.0
    %6850 = vmatprep.subr.mxu0 0.0
    %6851 = vmatpush2.msra.mxu0 0.0
    %6852 = vmatprep.subr.mxu0 0.0
    %6853 = vmatpush2.msra.mxu0 0.0
    %6854 = vmatprep.subr.mxu0 0.0
    %6855 = vmatpush2.msra.mxu0 0.0
    %6856 = vmatprep.subr.mxu0 0.0
    %6857 = vmatpush2.msra.mxu0 0.0
    %6858 = vmatprep.subr.mxu0 0.0
    %6859 = vmatpush2.msra.mxu0 0.0
    %6860 = vmatprep.subr.mxu0 0.0
    %6861 = vmatpush2.msra.mxu0 0.0
    %6862 = vmatprep.subr.mxu0 0.0
    %6863 = vmatpush2.msra.mxu0 0.0
    %6864 = vmatprep.subr.mxu0 0.0
    %6865 = vmatpush2.msra.mxu0 0.0
    %6866 = vmatprep.subr.mxu0 0.0
    %6867 = vmatpush2.msra.mxu0 0.0
    %6868 = vmatprep.mubr.f32.mxu0 0.0
    %v6869 = vand.u32 %v6196, 4294901760
    %6870 = vmatmul.mubr.f32.gmra.mxu0 %v6869
    %v6871 = vpop.f32.mrf.mxu0
    %v6872 = vadd.f32 %v6771, %v6871
    %v6873 = vpop.f32.mrf.mxu0
    %v6874 = vadd.f32 %v6773, %v6873
    %6875 = vmatprep.mubr.f32.mxu0 0.0
    %v6876 = vand.u32 %v6199, 4294901760
    %6877 = vmatmul.mubr.f32.gmra.mxu0 %v6876
    %v6878 = vpop.f32.mrf.mxu0
    %v6879 = vadd.f32 %v6778, %v6878
    %v6880 = vpop.f32.mrf.mxu0
    %v6881 = vadd.f32 %v6780, %v6880
    %6882 = vmatprep.mubr.f32.mxu0 0.0
    %v6883 = vand.u32 %v6202, 4294901760
    %6884 = vmatmul.mubr.f32.gmra.mxu0 %v6883
    %v6885 = vpop.f32.mrf.mxu0
    %v6886 = vadd.f32 %v6785, %v6885
    %v6887 = vpop.f32.mrf.mxu0
    %v6888 = vadd.f32 %v6787, %v6887
    %6889 = vmatprep.mubr.f32.mxu0 0.0
    %v6890 = vand.u32 %v6205, 4294901760
    %6891 = vmatmul.mubr.f32.gmra.mxu0 %v6890
    %v6892 = vpop.f32.mrf.mxu0
    %v6893 = vadd.f32 %v6792, %v6892
    %v6894 = vpop.f32.mrf.mxu0
    %v6895 = vadd.f32 %v6794, %v6894
    %6896 = vdwg.mxu0
    %6897 = vmatprep.subr.mxu0 0.0
    %6898 = vmatpush1.msra.mxu0 0.0
    %6899 = vmatprep.subr.mxu0 0.0
    %6900 = vmatpush1.msra.mxu0 0.0
    %6901 = vmatprep.subr.mxu0 0.0
    %6902 = vmatpush1.msra.mxu0 0.0
    %6903 = vmatprep.subr.mxu0 0.0
    %6904 = vmatpush1.msra.mxu0 0.0
    %6905 = vmatprep.subr.mxu0 0.0
    %6906 = vmatpush1.msra.mxu0 0.0
    %6907 = vmatprep.subr.mxu0 0.0
    %6908 = vmatpush1.msra.mxu0 0.0
    %6909 = vmatprep.subr.mxu0 0.0
    %6910 = vmatpush1.msra.mxu0 0.0
    %6911 = vmatprep.subr.mxu0 0.0
    %6912 = vmatpush1.msra.mxu0 0.0
    %6913 = vmatprep.subr.mxu0 0.0
    %6914 = vmatpush1.msra.mxu0 0.0
    %6915 = vmatprep.subr.mxu0 0.0
    %6916 = vmatpush1.msra.mxu0 0.0
    %6917 = vmatprep.subr.mxu0 0.0
    %6918 = vmatpush1.msra.mxu0 0.0
    %6919 = vmatprep.subr.mxu0 0.0
    %6920 = vmatpush1.msra.mxu0 0.0
    %v6921 = vand.u32 %v6160, 4294901760
    %6922 = vmatprep.subr.mxu0 %v6921
    %v6923 = vand.u32 %v6159, 4294901760
    %6924 = vmatpush1.msra.mxu0 %v6923
    %v6925 = vand.u32 %v6152, 4294901760
    %6926 = vmatprep.subr.mxu0 %v6925
    %v6927 = vand.u32 %v6151, 4294901760
    %6928 = vmatpush1.msra.mxu0 %v6927
    %v6929 = vand.u32 %v6144, 4294901760
    %6930 = vmatprep.subr.mxu0 %v6929
    %v6931 = vand.u32 %v6143, 4294901760
    %6932 = vmatpush1.msra.mxu0 %v6931
    %v6933 = vand.u32 %v6136, 4294901760
    %6934 = vmatprep.subr.mxu0 %v6933
    %v6935 = vand.u32 %v6135, 4294901760
    %6936 = vmatpush1.msra.mxu0 %v6935
    %6937 = vmatprep.subr.mxu0 0.0
    %6938 = vmatpush2.msra.mxu0 0.0
    %6939 = vmatprep.subr.mxu0 0.0
    %6940 = vmatpush2.msra.mxu0 0.0
    %6941 = vmatprep.subr.mxu0 0.0
    %6942 = vmatpush2.msra.mxu0 0.0
    %6943 = vmatprep.subr.mxu0 0.0
    %6944 = vmatpush2.msra.mxu0 0.0
    %6945 = vmatprep.subr.mxu0 0.0
    %6946 = vmatpush2.msra.mxu0 0.0
    %6947 = vmatprep.subr.mxu0 0.0
    %6948 = vmatpush2.msra.mxu0 0.0
    %6949 = vmatprep.subr.mxu0 0.0
    %6950 = vmatpush2.msra.mxu0 0.0
    %6951 = vmatprep.subr.mxu0 0.0
    %6952 = vmatpush2.msra.mxu0 0.0
    %6953 = vmatprep.subr.mxu0 0.0
    %6954 = vmatpush2.msra.mxu0 0.0
    %6955 = vmatprep.subr.mxu0 0.0
    %6956 = vmatpush2.msra.mxu0 0.0
    %6957 = vmatprep.subr.mxu0 0.0
    %6958 = vmatpush2.msra.mxu0 0.0
    %6959 = vmatprep.subr.mxu0 0.0
    %6960 = vmatpush2.msra.mxu0 0.0
    %6961 = vmatprep.subr.mxu0 0.0
    %6962 = vmatpush2.msra.mxu0 0.0
    %6963 = vmatprep.subr.mxu0 0.0
    %6964 = vmatpush2.msra.mxu0 0.0
    %6965 = vmatprep.subr.mxu0 0.0
    %6966 = vmatpush2.msra.mxu0 0.0
    %6967 = vmatprep.subr.mxu0 0.0
    %6968 = vmatpush2.msra.mxu0 0.0
    %6969 = vmatprep.mubr.f32.mxu0 0.0
    %v6970 = vand.u32 %v6196, 4294901760
    %v6971 = vsub.f32 %v6196, %v6970
    %v6972 = vand.u32 %v6971, 4294901760
    %v6973 = vsub.f32 %v6971, %v6972
    %v6974 = vand.u32 %v6973, 4294901760
    %6975 = vmatmul.mubr.f32.gmra.mxu0 %v6974
    %v6976 = vpop.f32.mrf.mxu0
    %v6977 = vadd.f32 %v6178, %v6976
    %v6978 = vpop.f32.mrf.mxu0
    %v6979 = vadd.f32 %v6178, %v6978
    %6980 = vmatprep.mubr.f32.mxu0 0.0
    %v6981 = vand.u32 %v6199, 4294901760
    %v6982 = vsub.f32 %v6199, %v6981
    %v6983 = vand.u32 %v6982, 4294901760
    %v6984 = vsub.f32 %v6982, %v6983
    %v6985 = vand.u32 %v6984, 4294901760
    %6986 = vmatmul.mubr.f32.gmra.mxu0 %v6985
    %v6987 = vpop.f32.mrf.mxu0
    %v6988 = vadd.f32 %v6183, %v6987
    %v6989 = vpop.f32.mrf.mxu0
    %v6990 = vadd.f32 %v6183, %v6989
    %6991 = vmatprep.mubr.f32.mxu0 0.0
    %v6992 = vand.u32 %v6202, 4294901760
    %v6993 = vsub.f32 %v6202, %v6992
    %v6994 = vand.u32 %v6993, 4294901760
    %v6995 = vsub.f32 %v6993, %v6994
    %v6996 = vand.u32 %v6995, 4294901760
    %6997 = vmatmul.mubr.f32.gmra.mxu0 %v6996
    %v6998 = vpop.f32.mrf.mxu0
    %v6999 = vadd.f32 %v6188, %v6998
    %v7000 = vpop.f32.mrf.mxu0
    %v7001 = vadd.f32 %v6188, %v7000
    %7002 = vmatprep.mubr.f32.mxu0 0.0
    %v7003 = vand.u32 %v6205, 4294901760
    %v7004 = vsub.f32 %v6205, %v7003
    %v7005 = vand.u32 %v7004, 4294901760
    %v7006 = vsub.f32 %v7004, %v7005
    %v7007 = vand.u32 %v7006, 4294901760
    %7008 = vmatmul.mubr.f32.gmra.mxu0 %v7007
    %v7009 = vpop.f32.mrf.mxu0
    %v7010 = vadd.f32 %v6193, %v7009
    %v7011 = vpop.f32.mrf.mxu0
    %v7012 = vadd.f32 %v6193, %v7011
    %7013 = vdwg.mxu0
    %7014 = vmatprep.subr.mxu0 0.0
    %7015 = vmatpush1.msra.mxu0 0.0
    %7016 = vmatprep.subr.mxu0 0.0
    %7017 = vmatpush1.msra.mxu0 0.0
    %7018 = vmatprep.subr.mxu0 0.0
    %7019 = vmatpush1.msra.mxu0 0.0
    %7020 = vmatprep.subr.mxu0 0.0
    %7021 = vmatpush1.msra.mxu0 0.0
    %7022 = vmatprep.subr.mxu0 0.0
    %7023 = vmatpush1.msra.mxu0 0.0
    %7024 = vmatprep.subr.mxu0 0.0
    %7025 = vmatpush1.msra.mxu0 0.0
    %7026 = vmatprep.subr.mxu0 0.0
    %7027 = vmatpush1.msra.mxu0 0.0
    %7028 = vmatprep.subr.mxu0 0.0
    %7029 = vmatpush1.msra.mxu0 0.0
    %7030 = vmatprep.subr.mxu0 0.0
    %7031 = vmatpush1.msra.mxu0 0.0
    %7032 = vmatprep.subr.mxu0 0.0
    %7033 = vmatpush1.msra.mxu0 0.0
    %7034 = vmatprep.subr.mxu0 0.0
    %7035 = vmatpush1.msra.mxu0 0.0
    %7036 = vmatprep.subr.mxu0 0.0
    %7037 = vmatpush1.msra.mxu0 0.0
    %v7038 = vand.u32 %v6160, 4294901760
    %v7039 = vsub.f32 %v6160, %v7038
    %v7040 = vand.u32 %v7039, 4294901760
    %v7041 = vsub.f32 %v7039, %v7040
    %v7042 = vand.u32 %v7041, 4294901760
    %7043 = vmatprep.subr.mxu0 %v7042
    %v7044 = vand.u32 %v6159, 4294901760
    %v7045 = vsub.f32 %v6159, %v7044
    %v7046 = vand.u32 %v7045, 4294901760
    %v7047 = vsub.f32 %v7045, %v7046
    %v7048 = vand.u32 %v7047, 4294901760
    %7049 = vmatpush1.msra.mxu0 %v7048
    %v7050 = vand.u32 %v6152, 4294901760
    %v7051 = vsub.f32 %v6152, %v7050
    %v7052 = vand.u32 %v7051, 4294901760
    %v7053 = vsub.f32 %v7051, %v7052
    %v7054 = vand.u32 %v7053, 4294901760
    %7055 = vmatprep.subr.mxu0 %v7054
    %v7056 = vand.u32 %v6151, 4294901760
    %v7057 = vsub.f32 %v6151, %v7056
    %v7058 = vand.u32 %v7057, 4294901760
    %v7059 = vsub.f32 %v7057, %v7058
    %v7060 = vand.u32 %v7059, 4294901760
    %7061 = vmatpush1.msra.mxu0 %v7060
    %v7062 = vand.u32 %v6144, 4294901760
    %v7063 = vsub.f32 %v6144, %v7062
    %v7064 = vand.u32 %v7063, 4294901760
    %v7065 = vsub.f32 %v7063, %v7064
    %v7066 = vand.u32 %v7065, 4294901760
    %7067 = vmatprep.subr.mxu0 %v7066
    %v7068 = vand.u32 %v6143, 4294901760
    %v7069 = vsub.f32 %v6143, %v7068
    %v7070 = vand.u32 %v7069, 4294901760
    %v7071 = vsub.f32 %v7069, %v7070
    %v7072 = vand.u32 %v7071, 4294901760
    %7073 = vmatpush1.msra.mxu0 %v7072
    %v7074 = vand.u32 %v6136, 4294901760
    %v7075 = vsub.f32 %v6136, %v7074
    %v7076 = vand.u32 %v7075, 4294901760
    %v7077 = vsub.f32 %v7075, %v7076
    %v7078 = vand.u32 %v7077, 4294901760
    %7079 = vmatprep.subr.mxu0 %v7078
    %v7080 = vand.u32 %v6135, 4294901760
    %v7081 = vsub.f32 %v6135, %v7080
    %v7082 = vand.u32 %v7081, 4294901760
    %v7083 = vsub.f32 %v7081, %v7082
    %v7084 = vand.u32 %v7083, 4294901760
    %7085 = vmatpush1.msra.mxu0 %v7084
    %7086 = vmatprep.subr.mxu0 0.0
    %7087 = vmatpush2.msra.mxu0 0.0
    %7088 = vmatprep.subr.mxu0 0.0
    %7089 = vmatpush2.msra.mxu0 0.0
    %7090 = vmatprep.subr.mxu0 0.0
    %7091 = vmatpush2.msra.mxu0 0.0
    %7092 = vmatprep.subr.mxu0 0.0
    %7093 = vmatpush2.msra.mxu0 0.0
    %7094 = vmatprep.subr.mxu0 0.0
    %7095 = vmatpush2.msra.mxu0 0.0
    %7096 = vmatprep.subr.mxu0 0.0
    %7097 = vmatpush2.msra.mxu0 0.0
    %7098 = vmatprep.subr.mxu0 0.0
    %7099 = vmatpush2.msra.mxu0 0.0
    %7100 = vmatprep.subr.mxu0 0.0
    %7101 = vmatpush2.msra.mxu0 0.0
    %7102 = vmatprep.subr.mxu0 0.0
    %7103 = vmatpush2.msra.mxu0 0.0
    %7104 = vmatprep.subr.mxu0 0.0
    %7105 = vmatpush2.msra.mxu0 0.0
    %7106 = vmatprep.subr.mxu0 0.0
    %7107 = vmatpush2.msra.mxu0 0.0
    %7108 = vmatprep.subr.mxu0 0.0
    %7109 = vmatpush2.msra.mxu0 0.0
    %7110 = vmatprep.subr.mxu0 0.0
    %7111 = vmatpush2.msra.mxu0 0.0
    %7112 = vmatprep.subr.mxu0 0.0
    %7113 = vmatpush2.msra.mxu0 0.0
    %7114 = vmatprep.subr.mxu0 0.0
    %7115 = vmatpush2.msra.mxu0 0.0
    %7116 = vmatprep.subr.mxu0 0.0
    %7117 = vmatpush2.msra.mxu0 0.0
    %7118 = vmatprep.mubr.f32.mxu0 0.0
    %v7119 = vand.u32 %v6196, 4294901760
    %7120 = vmatmul.mubr.f32.gmra.mxu0 %v7119
    %v7121 = vpop.f32.mrf.mxu0
    %v7122 = vadd.f32 %v6977, %v7121
    %v7123 = vpop.f32.mrf.mxu0
    %v7124 = vadd.f32 %v6979, %v7123
    %7125 = vmatprep.mubr.f32.mxu0 0.0
    %v7126 = vand.u32 %v6199, 4294901760
    %7127 = vmatmul.mubr.f32.gmra.mxu0 %v7126
    %v7128 = vpop.f32.mrf.mxu0
    %v7129 = vadd.f32 %v6988, %v7128
    %v7130 = vpop.f32.mrf.mxu0
    %v7131 = vadd.f32 %v6990, %v7130
    %7132 = vmatprep.mubr.f32.mxu0 0.0
    %v7133 = vand.u32 %v6202, 4294901760
    %7134 = vmatmul.mubr.f32.gmra.mxu0 %v7133
    %v7135 = vpop.f32.mrf.mxu0
    %v7136 = vadd.f32 %v6999, %v7135
    %v7137 = vpop.f32.mrf.mxu0
    %v7138 = vadd.f32 %v7001, %v7137
    %7139 = vmatprep.mubr.f32.mxu0 0.0
    %v7140 = vand.u32 %v6205, 4294901760
    %7141 = vmatmul.mubr.f32.gmra.mxu0 %v7140
    %v7142 = vpop.f32.mrf.mxu0
    %v7143 = vadd.f32 %v7010, %v7142
    %v7144 = vpop.f32.mrf.mxu0
    %v7145 = vadd.f32 %v7012, %v7144
    %7146 = vdwg.mxu0
    %7147 = vmatprep.subr.mxu0 0.0
    %7148 = vmatpush1.msra.mxu0 0.0
    %7149 = vmatprep.subr.mxu0 0.0
    %7150 = vmatpush1.msra.mxu0 0.0
    %7151 = vmatprep.subr.mxu0 0.0
    %7152 = vmatpush1.msra.mxu0 0.0
    %7153 = vmatprep.subr.mxu0 0.0
    %7154 = vmatpush1.msra.mxu0 0.0
    %7155 = vmatprep.subr.mxu0 0.0
    %7156 = vmatpush1.msra.mxu0 0.0
    %7157 = vmatprep.subr.mxu0 0.0
    %7158 = vmatpush1.msra.mxu0 0.0
    %7159 = vmatprep.subr.mxu0 0.0
    %7160 = vmatpush1.msra.mxu0 0.0
    %7161 = vmatprep.subr.mxu0 0.0
    %7162 = vmatpush1.msra.mxu0 0.0
    %7163 = vmatprep.subr.mxu0 0.0
    %7164 = vmatpush1.msra.mxu0 0.0
    %7165 = vmatprep.subr.mxu0 0.0
    %7166 = vmatpush1.msra.mxu0 0.0
    %7167 = vmatprep.subr.mxu0 0.0
    %7168 = vmatpush1.msra.mxu0 0.0
    %7169 = vmatprep.subr.mxu0 0.0
    %7170 = vmatpush1.msra.mxu0 0.0
    %v7171 = vand.u32 %v6160, 4294901760
    %v7172 = vsub.f32 %v6160, %v7171
    %7173 = vmatprep.subr.mxu0 %v7172
    %v7174 = vand.u32 %v6159, 4294901760
    %v7175 = vsub.f32 %v6159, %v7174
    %7176 = vmatpush1.msra.mxu0 %v7175
    %v7177 = vand.u32 %v6152, 4294901760
    %v7178 = vsub.f32 %v6152, %v7177
    %7179 = vmatprep.subr.mxu0 %v7178
    %v7180 = vand.u32 %v6151, 4294901760
    %v7181 = vsub.f32 %v6151, %v7180
    %7182 = vmatpush1.msra.mxu0 %v7181
    %v7183 = vand.u32 %v6144, 4294901760
    %v7184 = vsub.f32 %v6144, %v7183
    %7185 = vmatprep.subr.mxu0 %v7184
    %v7186 = vand.u32 %v6143, 4294901760
    %v7187 = vsub.f32 %v6143, %v7186
    %7188 = vmatpush1.msra.mxu0 %v7187
    %v7189 = vand.u32 %v6136, 4294901760
    %v7190 = vsub.f32 %v6136, %v7189
    %7191 = vmatprep.subr.mxu0 %v7190
    %v7192 = vand.u32 %v6135, 4294901760
    %v7193 = vsub.f32 %v6135, %v7192
    %7194 = vmatpush1.msra.mxu0 %v7193
    %7195 = vmatprep.subr.mxu0 0.0
    %7196 = vmatpush2.msra.mxu0 0.0
    %7197 = vmatprep.subr.mxu0 0.0
    %7198 = vmatpush2.msra.mxu0 0.0
    %7199 = vmatprep.subr.mxu0 0.0
    %7200 = vmatpush2.msra.mxu0 0.0
    %7201 = vmatprep.subr.mxu0 0.0
    %7202 = vmatpush2.msra.mxu0 0.0
    %7203 = vmatprep.subr.mxu0 0.0
    %7204 = vmatpush2.msra.mxu0 0.0
    %7205 = vmatprep.subr.mxu0 0.0
    %7206 = vmatpush2.msra.mxu0 0.0
    %7207 = vmatprep.subr.mxu0 0.0
    %7208 = vmatpush2.msra.mxu0 0.0
    %7209 = vmatprep.subr.mxu0 0.0
    %7210 = vmatpush2.msra.mxu0 0.0
    %7211 = vmatprep.subr.mxu0 0.0
    %7212 = vmatpush2.msra.mxu0 0.0
    %7213 = vmatprep.subr.mxu0 0.0
    %7214 = vmatpush2.msra.mxu0 0.0
    %7215 = vmatprep.subr.mxu0 0.0
    %7216 = vmatpush2.msra.mxu0 0.0
    %7217 = vmatprep.subr.mxu0 0.0
    %7218 = vmatpush2.msra.mxu0 0.0
    %7219 = vmatprep.subr.mxu0 0.0
    %7220 = vmatpush2.msra.mxu0 0.0
    %7221 = vmatprep.subr.mxu0 0.0
    %7222 = vmatpush2.msra.mxu0 0.0
    %7223 = vmatprep.subr.mxu0 0.0
    %7224 = vmatpush2.msra.mxu0 0.0
    %7225 = vmatprep.subr.mxu0 0.0
    %7226 = vmatpush2.msra.mxu0 0.0
    %7227 = vmatprep.mubr.f32.mxu0 0.0
    %v7228 = vand.u32 %v6196, 4294901760
    %v7229 = vsub.f32 %v6196, %v7228
    %7230 = vmatmul.mubr.f32.gmra.mxu0 %v7229
    %v7231 = vpop.f32.mrf.mxu0
    %v7232 = vadd.f32 %v7122, %v7231
    %v7233 = vpop.f32.mrf.mxu0
    %v7234 = vadd.f32 %v7124, %v7233
    %7235 = vmatprep.mubr.f32.mxu0 0.0
    %v7236 = vand.u32 %v6199, 4294901760
    %v7237 = vsub.f32 %v6199, %v7236
    %7238 = vmatmul.mubr.f32.gmra.mxu0 %v7237
    %v7239 = vpop.f32.mrf.mxu0
    %v7240 = vadd.f32 %v7129, %v7239
    %v7241 = vpop.f32.mrf.mxu0
    %v7242 = vadd.f32 %v7131, %v7241
    %7243 = vmatprep.mubr.f32.mxu0 0.0
    %v7244 = vand.u32 %v6202, 4294901760
    %v7245 = vsub.f32 %v6202, %v7244
    %7246 = vmatmul.mubr.f32.gmra.mxu0 %v7245
    %v7247 = vpop.f32.mrf.mxu0
    %v7248 = vadd.f32 %v7136, %v7247
    %v7249 = vpop.f32.mrf.mxu0
    %v7250 = vadd.f32 %v7138, %v7249
    %7251 = vmatprep.mubr.f32.mxu0 0.0
    %v7252 = vand.u32 %v6205, 4294901760
    %v7253 = vsub.f32 %v6205, %v7252
    %7254 = vmatmul.mubr.f32.gmra.mxu0 %v7253
    %v7255 = vpop.f32.mrf.mxu0
    %v7256 = vadd.f32 %v7143, %v7255
    %v7257 = vpop.f32.mrf.mxu0
    %v7258 = vadd.f32 %v7145, %v7257
    %7259 = vdwg.mxu0
    %7260 = vmatprep.subr.mxu0 0.0
    %7261 = vmatpush1.msra.mxu0 0.0
    %7262 = vmatprep.subr.mxu0 0.0
    %7263 = vmatpush1.msra.mxu0 0.0
    %7264 = vmatprep.subr.mxu0 0.0
    %7265 = vmatpush1.msra.mxu0 0.0
    %7266 = vmatprep.subr.mxu0 0.0
    %7267 = vmatpush1.msra.mxu0 0.0
    %7268 = vmatprep.subr.mxu0 0.0
    %7269 = vmatpush1.msra.mxu0 0.0
    %7270 = vmatprep.subr.mxu0 0.0
    %7271 = vmatpush1.msra.mxu0 0.0
    %7272 = vmatprep.subr.mxu0 0.0
    %7273 = vmatpush1.msra.mxu0 0.0
    %7274 = vmatprep.subr.mxu0 0.0
    %7275 = vmatpush1.msra.mxu0 0.0
    %7276 = vmatprep.subr.mxu0 0.0
    %7277 = vmatpush1.msra.mxu0 0.0
    %7278 = vmatprep.subr.mxu0 0.0
    %7279 = vmatpush1.msra.mxu0 0.0
    %7280 = vmatprep.subr.mxu0 0.0
    %7281 = vmatpush1.msra.mxu0 0.0
    %7282 = vmatprep.subr.mxu0 0.0
    %7283 = vmatpush1.msra.mxu0 0.0
    %v7284 = vand.u32 %v6160, 4294901760
    %7285 = vmatprep.subr.mxu0 %v7284
    %v7286 = vand.u32 %v6159, 4294901760
    %7287 = vmatpush1.msra.mxu0 %v7286
    %v7288 = vand.u32 %v6152, 4294901760
    %7289 = vmatprep.subr.mxu0 %v7288
    %v7290 = vand.u32 %v6151, 4294901760
    %7291 = vmatpush1.msra.mxu0 %v7290
    %v7292 = vand.u32 %v6144, 4294901760
    %7293 = vmatprep.subr.mxu0 %v7292
    %v7294 = vand.u32 %v6143, 4294901760
    %7295 = vmatpush1.msra.mxu0 %v7294
    %v7296 = vand.u32 %v6136, 4294901760
    %7297 = vmatprep.subr.mxu0 %v7296
    %v7298 = vand.u32 %v6135, 4294901760
    %7299 = vmatpush1.msra.mxu0 %v7298
    %7300 = vmatprep.subr.mxu0 0.0
    %7301 = vmatpush2.msra.mxu0 0.0
    %7302 = vmatprep.subr.mxu0 0.0
    %7303 = vmatpush2.msra.mxu0 0.0
    %7304 = vmatprep.subr.mxu0 0.0
    %7305 = vmatpush2.msra.mxu0 0.0
    %7306 = vmatprep.subr.mxu0 0.0
    %7307 = vmatpush2.msra.mxu0 0.0
    %7308 = vmatprep.subr.mxu0 0.0
    %7309 = vmatpush2.msra.mxu0 0.0
    %7310 = vmatprep.subr.mxu0 0.0
    %7311 = vmatpush2.msra.mxu0 0.0
    %7312 = vmatprep.subr.mxu0 0.0
    %7313 = vmatpush2.msra.mxu0 0.0
    %7314 = vmatprep.subr.mxu0 0.0
    %7315 = vmatpush2.msra.mxu0 0.0
    %7316 = vmatprep.subr.mxu0 0.0
    %7317 = vmatpush2.msra.mxu0 0.0
    %7318 = vmatprep.subr.mxu0 0.0
    %7319 = vmatpush2.msra.mxu0 0.0
    %7320 = vmatprep.subr.mxu0 0.0
    %7321 = vmatpush2.msra.mxu0 0.0
    %7322 = vmatprep.subr.mxu0 0.0
    %7323 = vmatpush2.msra.mxu0 0.0
    %7324 = vmatprep.subr.mxu0 0.0
    %7325 = vmatpush2.msra.mxu0 0.0
    %7326 = vmatprep.subr.mxu0 0.0
    %7327 = vmatpush2.msra.mxu0 0.0
    %7328 = vmatprep.subr.mxu0 0.0
    %7329 = vmatpush2.msra.mxu0 0.0
    %7330 = vmatprep.subr.mxu0 0.0
    %7331 = vmatpush2.msra.mxu0 0.0
    %7332 = vmatprep.mubr.f32.mxu0 0.0
    %v7333 = vand.u32 %v6196, 4294901760
    %v7334 = vsub.f32 %v6196, %v7333
    %v7335 = vand.u32 %v7334, 4294901760
    %7336 = vmatmul.mubr.f32.gmra.mxu0 %v7335
    %v7337 = vpop.f32.mrf.mxu0
    %v7338 = vadd.f32 %v7232, %v7337
    %v7339 = vpop.f32.mrf.mxu0
    %v7340 = vadd.f32 %v7234, %v7339
    %7341 = vmatprep.mubr.f32.mxu0 0.0
    %v7342 = vand.u32 %v6199, 4294901760
    %v7343 = vsub.f32 %v6199, %v7342
    %v7344 = vand.u32 %v7343, 4294901760
    %7345 = vmatmul.mubr.f32.gmra.mxu0 %v7344
    %v7346 = vpop.f32.mrf.mxu0
    %v7347 = vadd.f32 %v7240, %v7346
    %v7348 = vpop.f32.mrf.mxu0
    %v7349 = vadd.f32 %v7242, %v7348
    %7350 = vmatprep.mubr.f32.mxu0 0.0
    %v7351 = vand.u32 %v6202, 4294901760
    %v7352 = vsub.f32 %v6202, %v7351
    %v7353 = vand.u32 %v7352, 4294901760
    %7354 = vmatmul.mubr.f32.gmra.mxu0 %v7353
    %v7355 = vpop.f32.mrf.mxu0
    %v7356 = vadd.f32 %v7248, %v7355
    %v7357 = vpop.f32.mrf.mxu0
    %v7358 = vadd.f32 %v7250, %v7357
    %7359 = vmatprep.mubr.f32.mxu0 0.0
    %v7360 = vand.u32 %v6205, 4294901760
    %v7361 = vsub.f32 %v6205, %v7360
    %v7362 = vand.u32 %v7361, 4294901760
    %7363 = vmatmul.mubr.f32.gmra.mxu0 %v7362
    %v7364 = vpop.f32.mrf.mxu0
    %v7365 = vadd.f32 %v7256, %v7364
    %v7366 = vpop.f32.mrf.mxu0
    %v7367 = vadd.f32 %v7258, %v7366
    %7368 = vdwg.mxu0
    %7369 = vmatprep.subr.mxu0 0.0
    %7370 = vmatpush1.msra.mxu0 0.0
    %7371 = vmatprep.subr.mxu0 0.0
    %7372 = vmatpush1.msra.mxu0 0.0
    %7373 = vmatprep.subr.mxu0 0.0
    %7374 = vmatpush1.msra.mxu0 0.0
    %7375 = vmatprep.subr.mxu0 0.0
    %7376 = vmatpush1.msra.mxu0 0.0
    %7377 = vmatprep.subr.mxu0 0.0
    %7378 = vmatpush1.msra.mxu0 0.0
    %7379 = vmatprep.subr.mxu0 0.0
    %7380 = vmatpush1.msra.mxu0 0.0
    %7381 = vmatprep.subr.mxu0 0.0
    %7382 = vmatpush1.msra.mxu0 0.0
    %7383 = vmatprep.subr.mxu0 0.0
    %7384 = vmatpush1.msra.mxu0 0.0
    %7385 = vmatprep.subr.mxu0 0.0
    %7386 = vmatpush1.msra.mxu0 0.0
    %7387 = vmatprep.subr.mxu0 0.0
    %7388 = vmatpush1.msra.mxu0 0.0
    %7389 = vmatprep.subr.mxu0 0.0
    %7390 = vmatpush1.msra.mxu0 0.0
    %7391 = vmatprep.subr.mxu0 0.0
    %7392 = vmatpush1.msra.mxu0 0.0
    %v7393 = vand.u32 %v6160, 4294901760
    %v7394 = vsub.f32 %v6160, %v7393
    %v7395 = vand.u32 %v7394, 4294901760
    %7396 = vmatprep.subr.mxu0 %v7395
    %v7397 = vand.u32 %v6159, 4294901760
    %v7398 = vsub.f32 %v6159, %v7397
    %v7399 = vand.u32 %v7398, 4294901760
    %7400 = vmatpush1.msra.mxu0 %v7399
    %v7401 = vand.u32 %v6152, 4294901760
    %v7402 = vsub.f32 %v6152, %v7401
    %v7403 = vand.u32 %v7402, 4294901760
    %7404 = vmatprep.subr.mxu0 %v7403
    %v7405 = vand.u32 %v6151, 4294901760
    %v7406 = vsub.f32 %v6151, %v7405
    %v7407 = vand.u32 %v7406, 4294901760
    %7408 = vmatpush1.msra.mxu0 %v7407
    %v7409 = vand.u32 %v6144, 4294901760
    %v7410 = vsub.f32 %v6144, %v7409
    %v7411 = vand.u32 %v7410, 4294901760
    %7412 = vmatprep.subr.mxu0 %v7411
    %v7413 = vand.u32 %v6143, 4294901760
    %v7414 = vsub.f32 %v6143, %v7413
    %v7415 = vand.u32 %v7414, 4294901760
    %7416 = vmatpush1.msra.mxu0 %v7415
    %v7417 = vand.u32 %v6136, 4294901760
    %v7418 = vsub.f32 %v6136, %v7417
    %v7419 = vand.u32 %v7418, 4294901760
    %7420 = vmatprep.subr.mxu0 %v7419
    %v7421 = vand.u32 %v6135, 4294901760
    %v7422 = vsub.f32 %v6135, %v7421
    %v7423 = vand.u32 %v7422, 4294901760
    %7424 = vmatpush1.msra.mxu0 %v7423
    %7425 = vmatprep.subr.mxu0 0.0
    %7426 = vmatpush2.msra.mxu0 0.0
    %7427 = vmatprep.subr.mxu0 0.0
    %7428 = vmatpush2.msra.mxu0 0.0
    %7429 = vmatprep.subr.mxu0 0.0
    %7430 = vmatpush2.msra.mxu0 0.0
    %7431 = vmatprep.subr.mxu0 0.0
    %7432 = vmatpush2.msra.mxu0 0.0
    %7433 = vmatprep.subr.mxu0 0.0
    %7434 = vmatpush2.msra.mxu0 0.0
    %7435 = vmatprep.subr.mxu0 0.0
    %7436 = vmatpush2.msra.mxu0 0.0
    %7437 = vmatprep.subr.mxu0 0.0
    %7438 = vmatpush2.msra.mxu0 0.0
    %7439 = vmatprep.subr.mxu0 0.0
    %7440 = vmatpush2.msra.mxu0 0.0
    %7441 = vmatprep.subr.mxu0 0.0
    %7442 = vmatpush2.msra.mxu0 0.0
    %7443 = vmatprep.subr.mxu0 0.0
    %7444 = vmatpush2.msra.mxu0 0.0
    %7445 = vmatprep.subr.mxu0 0.0
    %7446 = vmatpush2.msra.mxu0 0.0
    %7447 = vmatprep.subr.mxu0 0.0
    %7448 = vmatpush2.msra.mxu0 0.0
    %7449 = vmatprep.subr.mxu0 0.0
    %7450 = vmatpush2.msra.mxu0 0.0
    %7451 = vmatprep.subr.mxu0 0.0
    %7452 = vmatpush2.msra.mxu0 0.0
    %7453 = vmatprep.subr.mxu0 0.0
    %7454 = vmatpush2.msra.mxu0 0.0
    %7455 = vmatprep.subr.mxu0 0.0
    %7456 = vmatpush2.msra.mxu0 0.0
    %7457 = vmatprep.mubr.f32.mxu0 0.0
    %v7458 = vand.u32 %v6196, 4294901760
    %7459 = vmatmul.mubr.f32.gmra.mxu0 %v7458
    %v7460 = vpop.f32.mrf.mxu0
    %v7461 = vadd.f32 %v7338, %v7460
    %v7462 = vpop.f32.mrf.mxu0
    %v7463 = vadd.f32 %v7340, %v7462
    %7464 = vmatprep.mubr.f32.mxu0 0.0
    %v7465 = vand.u32 %v6199, 4294901760
    %7466 = vmatmul.mubr.f32.gmra.mxu0 %v7465
    %v7467 = vpop.f32.mrf.mxu0
    %v7468 = vadd.f32 %v7347, %v7467
    %v7469 = vpop.f32.mrf.mxu0
    %v7470 = vadd.f32 %v7349, %v7469
    %7471 = vmatprep.mubr.f32.mxu0 0.0
    %v7472 = vand.u32 %v6202, 4294901760
    %7473 = vmatmul.mubr.f32.gmra.mxu0 %v7472
    %v7474 = vpop.f32.mrf.mxu0
    %v7475 = vadd.f32 %v7356, %v7474
    %v7476 = vpop.f32.mrf.mxu0
    %v7477 = vadd.f32 %v7358, %v7476
    %7478 = vmatprep.mubr.f32.mxu0 0.0
    %v7479 = vand.u32 %v6205, 4294901760
    %7480 = vmatmul.mubr.f32.gmra.mxu0 %v7479
    %v7481 = vpop.f32.mrf.mxu0
    %v7482 = vadd.f32 %v7365, %v7481
    %v7483 = vpop.f32.mrf.mxu0
    %v7484 = vadd.f32 %v7367, %v7483
    %7485 = vdwg.mxu0
    %7486 = vmatprep.subr.mxu0 0.0
    %7487 = vmatpush1.msra.mxu0 0.0
    %7488 = vmatprep.subr.mxu0 0.0
    %7489 = vmatpush1.msra.mxu0 0.0
    %7490 = vmatprep.subr.mxu0 0.0
    %7491 = vmatpush1.msra.mxu0 0.0
    %7492 = vmatprep.subr.mxu0 0.0
    %7493 = vmatpush1.msra.mxu0 0.0
    %7494 = vmatprep.subr.mxu0 0.0
    %7495 = vmatpush1.msra.mxu0 0.0
    %7496 = vmatprep.subr.mxu0 0.0
    %7497 = vmatpush1.msra.mxu0 0.0
    %7498 = vmatprep.subr.mxu0 0.0
    %7499 = vmatpush1.msra.mxu0 0.0
    %7500 = vmatprep.subr.mxu0 0.0
    %7501 = vmatpush1.msra.mxu0 0.0
    %7502 = vmatprep.subr.mxu0 0.0
    %7503 = vmatpush1.msra.mxu0 0.0
    %7504 = vmatprep.subr.mxu0 0.0
    %7505 = vmatpush1.msra.mxu0 0.0
    %7506 = vmatprep.subr.mxu0 0.0
    %7507 = vmatpush1.msra.mxu0 0.0
    %7508 = vmatprep.subr.mxu0 0.0
    %7509 = vmatpush1.msra.mxu0 0.0
    %v7510 = vand.u32 %v6160, 4294901760
    %7511 = vmatprep.subr.mxu0 %v7510
    %v7512 = vand.u32 %v6159, 4294901760
    %7513 = vmatpush1.msra.mxu0 %v7512
    %v7514 = vand.u32 %v6152, 4294901760
    %7515 = vmatprep.subr.mxu0 %v7514
    %v7516 = vand.u32 %v6151, 4294901760
    %7517 = vmatpush1.msra.mxu0 %v7516
    %v7518 = vand.u32 %v6144, 4294901760
    %7519 = vmatprep.subr.mxu0 %v7518
    %v7520 = vand.u32 %v6143, 4294901760
    %7521 = vmatpush1.msra.mxu0 %v7520
    %v7522 = vand.u32 %v6136, 4294901760
    %7523 = vmatprep.subr.mxu0 %v7522
    %v7524 = vand.u32 %v6135, 4294901760
    %7525 = vmatpush1.msra.mxu0 %v7524
    %7526 = vmatprep.subr.mxu0 0.0
    %7527 = vmatpush2.msra.mxu0 0.0
    %7528 = vmatprep.subr.mxu0 0.0
    %7529 = vmatpush2.msra.mxu0 0.0
    %7530 = vmatprep.subr.mxu0 0.0
    %7531 = vmatpush2.msra.mxu0 0.0
    %7532 = vmatprep.subr.mxu0 0.0
    %7533 = vmatpush2.msra.mxu0 0.0
    %7534 = vmatprep.subr.mxu0 0.0
    %7535 = vmatpush2.msra.mxu0 0.0
    %7536 = vmatprep.subr.mxu0 0.0
    %7537 = vmatpush2.msra.mxu0 0.0
    %7538 = vmatprep.subr.mxu0 0.0
    %7539 = vmatpush2.msra.mxu0 0.0
    %7540 = vmatprep.subr.mxu0 0.0
    %7541 = vmatpush2.msra.mxu0 0.0
    %7542 = vmatprep.subr.mxu0 0.0
    %7543 = vmatpush2.msra.mxu0 0.0
    %7544 = vmatprep.subr.mxu0 0.0
    %7545 = vmatpush2.msra.mxu0 0.0
    %7546 = vmatprep.subr.mxu0 0.0
    %7547 = vmatpush2.msra.mxu0 0.0
    %7548 = vmatprep.subr.mxu0 0.0
    %7549 = vmatpush2.msra.mxu0 0.0
    %7550 = vmatprep.subr.mxu0 0.0
    %7551 = vmatpush2.msra.mxu0 0.0
    %7552 = vmatprep.subr.mxu0 0.0
    %7553 = vmatpush2.msra.mxu0 0.0
    %7554 = vmatprep.subr.mxu0 0.0
    %7555 = vmatpush2.msra.mxu0 0.0
    %7556 = vmatprep.subr.mxu0 0.0
    %7557 = vmatpush2.msra.mxu0 0.0
    %7558 = vmatprep.mubr.f32.mxu0 0.0
    %v7559 = vand.u32 %v6196, 4294901760
    %7560 = vmatmul.mubr.f32.gmra.mxu0 %v7559
    %v7561 = vpop.f32.mrf.mxu0
    %v7562 = vadd.f32 %v7461, %v7561
    %v7563 = vpop.f32.mrf.mxu0
    %v7564 = vadd.f32 %v7463, %v7563
    %7565 = vmatprep.mubr.f32.mxu0 0.0
    %v7566 = vand.u32 %v6199, 4294901760
    %7567 = vmatmul.mubr.f32.gmra.mxu0 %v7566
    %v7568 = vpop.f32.mrf.mxu0
    %v7569 = vadd.f32 %v7468, %v7568
    %v7570 = vpop.f32.mrf.mxu0
    %v7571 = vadd.f32 %v7470, %v7570
    %7572 = vmatprep.mubr.f32.mxu0 0.0
    %v7573 = vand.u32 %v6202, 4294901760
    %7574 = vmatmul.mubr.f32.gmra.mxu0 %v7573
    %v7575 = vpop.f32.mrf.mxu0
    %v7576 = vadd.f32 %v7475, %v7575
    %v7577 = vpop.f32.mrf.mxu0
    %v7578 = vadd.f32 %v7477, %v7577
    %7579 = vmatprep.mubr.f32.mxu0 0.0
    %v7580 = vand.u32 %v6205, 4294901760
    %7581 = vmatmul.mubr.f32.gmra.mxu0 %v7580
    %v7582 = vpop.f32.mrf.mxu0
    %v7583 = vadd.f32 %v7482, %v7582
    %v7584 = vpop.f32.mrf.mxu0
    %v7585 = vadd.f32 %v7484, %v7584
    %7586 = vdwg.mxu0
    %7587 = vmatprep.subr.mxu0 0.0
    %7588 = vmatpush1.msra.mxu0 0.0
    %7589 = vmatprep.subr.mxu0 0.0
    %7590 = vmatpush1.msra.mxu0 0.0
    %7591 = vmatprep.subr.mxu0 0.0
    %7592 = vmatpush1.msra.mxu0 0.0
    %7593 = vmatprep.subr.mxu0 0.0
    %7594 = vmatpush1.msra.mxu0 0.0
    %7595 = vmatprep.subr.mxu0 0.0
    %7596 = vmatpush1.msra.mxu0 0.0
    %7597 = vmatprep.subr.mxu0 0.0
    %7598 = vmatpush1.msra.mxu0 0.0
    %7599 = vmatprep.subr.mxu0 0.0
    %7600 = vmatpush1.msra.mxu0 0.0
    %7601 = vmatprep.subr.mxu0 0.0
    %7602 = vmatpush1.msra.mxu0 0.0
    %7603 = vmatprep.subr.mxu0 0.0
    %7604 = vmatpush1.msra.mxu0 0.0
    %7605 = vmatprep.subr.mxu0 0.0
    %7606 = vmatpush1.msra.mxu0 0.0
    %7607 = vmatprep.subr.mxu0 0.0
    %7608 = vmatpush1.msra.mxu0 0.0
    %7609 = vmatprep.subr.mxu0 0.0
    %7610 = vmatpush1.msra.mxu0 0.0
    %v7611 = vand.u32 %v6162, 4294901760
    %7612 = vmatprep.subr.mxu0 %v7611
    %v7613 = vand.u32 %v6161, 4294901760
    %7614 = vmatpush1.msra.mxu0 %v7613
    %v7615 = vand.u32 %v6154, 4294901760
    %7616 = vmatprep.subr.mxu0 %v7615
    %v7617 = vand.u32 %v6153, 4294901760
    %7618 = vmatpush1.msra.mxu0 %v7617
    %v7619 = vand.u32 %v6146, 4294901760
    %7620 = vmatprep.subr.mxu0 %v7619
    %v7621 = vand.u32 %v6145, 4294901760
    %7622 = vmatpush1.msra.mxu0 %v7621
    %v7623 = vand.u32 %v6138, 4294901760
    %7624 = vmatprep.subr.mxu0 %v7623
    %v7625 = vand.u32 %v6137, 4294901760
    %7626 = vmatpush1.msra.mxu0 %v7625
    %7627 = vmatprep.subr.mxu0 0.0
    %7628 = vmatpush2.msra.mxu0 0.0
    %7629 = vmatprep.subr.mxu0 0.0
    %7630 = vmatpush2.msra.mxu0 0.0
    %7631 = vmatprep.subr.mxu0 0.0
    %7632 = vmatpush2.msra.mxu0 0.0
    %7633 = vmatprep.subr.mxu0 0.0
    %7634 = vmatpush2.msra.mxu0 0.0
    %7635 = vmatprep.subr.mxu0 0.0
    %7636 = vmatpush2.msra.mxu0 0.0
    %7637 = vmatprep.subr.mxu0 0.0
    %7638 = vmatpush2.msra.mxu0 0.0
    %7639 = vmatprep.subr.mxu0 0.0
    %7640 = vmatpush2.msra.mxu0 0.0
    %7641 = vmatprep.subr.mxu0 0.0
    %7642 = vmatpush2.msra.mxu0 0.0
    %7643 = vmatprep.subr.mxu0 0.0
    %7644 = vmatpush2.msra.mxu0 0.0
    %7645 = vmatprep.subr.mxu0 0.0
    %7646 = vmatpush2.msra.mxu0 0.0
    %7647 = vmatprep.subr.mxu0 0.0
    %7648 = vmatpush2.msra.mxu0 0.0
    %7649 = vmatprep.subr.mxu0 0.0
    %7650 = vmatpush2.msra.mxu0 0.0
    %7651 = vmatprep.subr.mxu0 0.0
    %7652 = vmatpush2.msra.mxu0 0.0
    %7653 = vmatprep.subr.mxu0 0.0
    %7654 = vmatpush2.msra.mxu0 0.0
    %7655 = vmatprep.subr.mxu0 0.0
    %7656 = vmatpush2.msra.mxu0 0.0
    %7657 = vmatprep.subr.mxu0 0.0
    %7658 = vmatpush2.msra.mxu0 0.0
    %7659 = vmatprep.mubr.f32.mxu0 0.0
    %v7660 = vand.u32 %v6196, 4294901760
    %v7661 = vsub.f32 %v6196, %v7660
    %v7662 = vand.u32 %v7661, 4294901760
    %v7663 = vsub.f32 %v7661, %v7662
    %v7664 = vand.u32 %v7663, 4294901760
    %7665 = vmatmul.mubr.f32.gmra.mxu0 %v7664
    %v7666 = vpop.f32.mrf.mxu0
    %v7667 = vadd.f32 %v6178, %v7666
    %v7668 = vpop.f32.mrf.mxu0
    %v7669 = vadd.f32 %v6178, %v7668
    %7670 = vmatprep.mubr.f32.mxu0 0.0
    %v7671 = vand.u32 %v6199, 4294901760
    %v7672 = vsub.f32 %v6199, %v7671
    %v7673 = vand.u32 %v7672, 4294901760
    %v7674 = vsub.f32 %v7672, %v7673
    %v7675 = vand.u32 %v7674, 4294901760
    %7676 = vmatmul.mubr.f32.gmra.mxu0 %v7675
    %v7677 = vpop.f32.mrf.mxu0
    %v7678 = vadd.f32 %v6183, %v7677
    %v7679 = vpop.f32.mrf.mxu0
    %v7680 = vadd.f32 %v6183, %v7679
    %7681 = vmatprep.mubr.f32.mxu0 0.0
    %v7682 = vand.u32 %v6202, 4294901760
    %v7683 = vsub.f32 %v6202, %v7682
    %v7684 = vand.u32 %v7683, 4294901760
    %v7685 = vsub.f32 %v7683, %v7684
    %v7686 = vand.u32 %v7685, 4294901760
    %7687 = vmatmul.mubr.f32.gmra.mxu0 %v7686
    %v7688 = vpop.f32.mrf.mxu0
    %v7689 = vadd.f32 %v6188, %v7688
    %v7690 = vpop.f32.mrf.mxu0
    %v7691 = vadd.f32 %v6188, %v7690
    %7692 = vmatprep.mubr.f32.mxu0 0.0
    %v7693 = vand.u32 %v6205, 4294901760
    %v7694 = vsub.f32 %v6205, %v7693
    %v7695 = vand.u32 %v7694, 4294901760
    %v7696 = vsub.f32 %v7694, %v7695
    %v7697 = vand.u32 %v7696, 4294901760
    %7698 = vmatmul.mubr.f32.gmra.mxu0 %v7697
    %v7699 = vpop.f32.mrf.mxu0
    %v7700 = vadd.f32 %v6193, %v7699
    %v7701 = vpop.f32.mrf.mxu0
    %v7702 = vadd.f32 %v6193, %v7701
    %7703 = vdwg.mxu0
    %7704 = vmatprep.subr.mxu0 0.0
    %7705 = vmatpush1.msra.mxu0 0.0
    %7706 = vmatprep.subr.mxu0 0.0
    %7707 = vmatpush1.msra.mxu0 0.0
    %7708 = vmatprep.subr.mxu0 0.0
    %7709 = vmatpush1.msra.mxu0 0.0
    %7710 = vmatprep.subr.mxu0 0.0
    %7711 = vmatpush1.msra.mxu0 0.0
    %7712 = vmatprep.subr.mxu0 0.0
    %7713 = vmatpush1.msra.mxu0 0.0
    %7714 = vmatprep.subr.mxu0 0.0
    %7715 = vmatpush1.msra.mxu0 0.0
    %7716 = vmatprep.subr.mxu0 0.0
    %7717 = vmatpush1.msra.mxu0 0.0
    %7718 = vmatprep.subr.mxu0 0.0
    %7719 = vmatpush1.msra.mxu0 0.0
    %7720 = vmatprep.subr.mxu0 0.0
    %7721 = vmatpush1.msra.mxu0 0.0
    %7722 = vmatprep.subr.mxu0 0.0
    %7723 = vmatpush1.msra.mxu0 0.0
    %7724 = vmatprep.subr.mxu0 0.0
    %7725 = vmatpush1.msra.mxu0 0.0
    %7726 = vmatprep.subr.mxu0 0.0
    %7727 = vmatpush1.msra.mxu0 0.0
    %v7728 = vand.u32 %v6162, 4294901760
    %v7729 = vsub.f32 %v6162, %v7728
    %v7730 = vand.u32 %v7729, 4294901760
    %v7731 = vsub.f32 %v7729, %v7730
    %v7732 = vand.u32 %v7731, 4294901760
    %7733 = vmatprep.subr.mxu0 %v7732
    %v7734 = vand.u32 %v6161, 4294901760
    %v7735 = vsub.f32 %v6161, %v7734
    %v7736 = vand.u32 %v7735, 4294901760
    %v7737 = vsub.f32 %v7735, %v7736
    %v7738 = vand.u32 %v7737, 4294901760
    %7739 = vmatpush1.msra.mxu0 %v7738
    %v7740 = vand.u32 %v6154, 4294901760
    %v7741 = vsub.f32 %v6154, %v7740
    %v7742 = vand.u32 %v7741, 4294901760
    %v7743 = vsub.f32 %v7741, %v7742
    %v7744 = vand.u32 %v7743, 4294901760
    %7745 = vmatprep.subr.mxu0 %v7744
    %v7746 = vand.u32 %v6153, 4294901760
    %v7747 = vsub.f32 %v6153, %v7746
    %v7748 = vand.u32 %v7747, 4294901760
    %v7749 = vsub.f32 %v7747, %v7748
    %v7750 = vand.u32 %v7749, 4294901760
    %7751 = vmatpush1.msra.mxu0 %v7750
    %v7752 = vand.u32 %v6146, 4294901760
    %v7753 = vsub.f32 %v6146, %v7752
    %v7754 = vand.u32 %v7753, 4294901760
    %v7755 = vsub.f32 %v7753, %v7754
    %v7756 = vand.u32 %v7755, 4294901760
    %7757 = vmatprep.subr.mxu0 %v7756
    %v7758 = vand.u32 %v6145, 4294901760
    %v7759 = vsub.f32 %v6145, %v7758
    %v7760 = vand.u32 %v7759, 4294901760
    %v7761 = vsub.f32 %v7759, %v7760
    %v7762 = vand.u32 %v7761, 4294901760
    %7763 = vmatpush1.msra.mxu0 %v7762
    %v7764 = vand.u32 %v6138, 4294901760
    %v7765 = vsub.f32 %v6138, %v7764
    %v7766 = vand.u32 %v7765, 4294901760
    %v7767 = vsub.f32 %v7765, %v7766
    %v7768 = vand.u32 %v7767, 4294901760
    %7769 = vmatprep.subr.mxu0 %v7768
    %v7770 = vand.u32 %v6137, 4294901760
    %v7771 = vsub.f32 %v6137, %v7770
    %v7772 = vand.u32 %v7771, 4294901760
    %v7773 = vsub.f32 %v7771, %v7772
    %v7774 = vand.u32 %v7773, 4294901760
    %7775 = vmatpush1.msra.mxu0 %v7774
    %7776 = vmatprep.subr.mxu0 0.0
    %7777 = vmatpush2.msra.mxu0 0.0
    %7778 = vmatprep.subr.mxu0 0.0
    %7779 = vmatpush2.msra.mxu0 0.0
    %7780 = vmatprep.subr.mxu0 0.0
    %7781 = vmatpush2.msra.mxu0 0.0
    %7782 = vmatprep.subr.mxu0 0.0
    %7783 = vmatpush2.msra.mxu0 0.0
    %7784 = vmatprep.subr.mxu0 0.0
    %7785 = vmatpush2.msra.mxu0 0.0
    %7786 = vmatprep.subr.mxu0 0.0
    %7787 = vmatpush2.msra.mxu0 0.0
    %7788 = vmatprep.subr.mxu0 0.0
    %7789 = vmatpush2.msra.mxu0 0.0
    %7790 = vmatprep.subr.mxu0 0.0
    %7791 = vmatpush2.msra.mxu0 0.0
    %7792 = vmatprep.subr.mxu0 0.0
    %7793 = vmatpush2.msra.mxu0 0.0
    %7794 = vmatprep.subr.mxu0 0.0
    %7795 = vmatpush2.msra.mxu0 0.0
    %7796 = vmatprep.subr.mxu0 0.0
    %7797 = vmatpush2.msra.mxu0 0.0
    %7798 = vmatprep.subr.mxu0 0.0
    %7799 = vmatpush2.msra.mxu0 0.0
    %7800 = vmatprep.subr.mxu0 0.0
    %7801 = vmatpush2.msra.mxu0 0.0
    %7802 = vmatprep.subr.mxu0 0.0
    %7803 = vmatpush2.msra.mxu0 0.0
    %7804 = vmatprep.subr.mxu0 0.0
    %7805 = vmatpush2.msra.mxu0 0.0
    %7806 = vmatprep.subr.mxu0 0.0
    %7807 = vmatpush2.msra.mxu0 0.0
    %7808 = vmatprep.mubr.f32.mxu0 0.0
    %v7809 = vand.u32 %v6196, 4294901760
    %7810 = vmatmul.mubr.f32.gmra.mxu0 %v7809
    %v7811 = vpop.f32.mrf.mxu0
    %v7812 = vadd.f32 %v7667, %v7811
    %v7813 = vpop.f32.mrf.mxu0
    %v7814 = vadd.f32 %v7669, %v7813
    %7815 = vmatprep.mubr.f32.mxu0 0.0
    %v7816 = vand.u32 %v6199, 4294901760
    %7817 = vmatmul.mubr.f32.gmra.mxu0 %v7816
    %v7818 = vpop.f32.mrf.mxu0
    %v7819 = vadd.f32 %v7678, %v7818
    %v7820 = vpop.f32.mrf.mxu0
    %v7821 = vadd.f32 %v7680, %v7820
    %7822 = vmatprep.mubr.f32.mxu0 0.0
    %v7823 = vand.u32 %v6202, 4294901760
    %7824 = vmatmul.mubr.f32.gmra.mxu0 %v7823
    %v7825 = vpop.f32.mrf.mxu0
    %v7826 = vadd.f32 %v7689, %v7825
    %v7827 = vpop.f32.mrf.mxu0
    %v7828 = vadd.f32 %v7691, %v7827
    %7829 = vmatprep.mubr.f32.mxu0 0.0
    %v7830 = vand.u32 %v6205, 4294901760
    %7831 = vmatmul.mubr.f32.gmra.mxu0 %v7830
    %v7832 = vpop.f32.mrf.mxu0
    %v7833 = vadd.f32 %v7700, %v7832
    %v7834 = vpop.f32.mrf.mxu0
    %v7835 = vadd.f32 %v7702, %v7834
    %7836 = vdwg.mxu0
    %7837 = vmatprep.subr.mxu0 0.0
    %7838 = vmatpush1.msra.mxu0 0.0
    %7839 = vmatprep.subr.mxu0 0.0
    %7840 = vmatpush1.msra.mxu0 0.0
    %7841 = vmatprep.subr.mxu0 0.0
    %7842 = vmatpush1.msra.mxu0 0.0
    %7843 = vmatprep.subr.mxu0 0.0
    %7844 = vmatpush1.msra.mxu0 0.0
    %7845 = vmatprep.subr.mxu0 0.0
    %7846 = vmatpush1.msra.mxu0 0.0
    %7847 = vmatprep.subr.mxu0 0.0
    %7848 = vmatpush1.msra.mxu0 0.0
    %7849 = vmatprep.subr.mxu0 0.0
    %7850 = vmatpush1.msra.mxu0 0.0
    %7851 = vmatprep.subr.mxu0 0.0
    %7852 = vmatpush1.msra.mxu0 0.0
    %7853 = vmatprep.subr.mxu0 0.0
    %7854 = vmatpush1.msra.mxu0 0.0
    %7855 = vmatprep.subr.mxu0 0.0
    %7856 = vmatpush1.msra.mxu0 0.0
    %7857 = vmatprep.subr.mxu0 0.0
    %7858 = vmatpush1.msra.mxu0 0.0
    %7859 = vmatprep.subr.mxu0 0.0
    %7860 = vmatpush1.msra.mxu0 0.0
    %v7861 = vand.u32 %v6162, 4294901760
    %v7862 = vsub.f32 %v6162, %v7861
    %7863 = vmatprep.subr.mxu0 %v7862
    %v7864 = vand.u32 %v6161, 4294901760
    %v7865 = vsub.f32 %v6161, %v7864
    %7866 = vmatpush1.msra.mxu0 %v7865
    %v7867 = vand.u32 %v6154, 4294901760
    %v7868 = vsub.f32 %v6154, %v7867
    %7869 = vmatprep.subr.mxu0 %v7868
    %v7870 = vand.u32 %v6153, 4294901760
    %v7871 = vsub.f32 %v6153, %v7870
    %7872 = vmatpush1.msra.mxu0 %v7871
    %v7873 = vand.u32 %v6146, 4294901760
    %v7874 = vsub.f32 %v6146, %v7873
    %7875 = vmatprep.subr.mxu0 %v7874
    %v7876 = vand.u32 %v6145, 4294901760
    %v7877 = vsub.f32 %v6145, %v7876
    %7878 = vmatpush1.msra.mxu0 %v7877
    %v7879 = vand.u32 %v6138, 4294901760
    %v7880 = vsub.f32 %v6138, %v7879
    %7881 = vmatprep.subr.mxu0 %v7880
    %v7882 = vand.u32 %v6137, 4294901760
    %v7883 = vsub.f32 %v6137, %v7882
    %7884 = vmatpush1.msra.mxu0 %v7883
    %7885 = vmatprep.subr.mxu0 0.0
    %7886 = vmatpush2.msra.mxu0 0.0
    %7887 = vmatprep.subr.mxu0 0.0
    %7888 = vmatpush2.msra.mxu0 0.0
    %7889 = vmatprep.subr.mxu0 0.0
    %7890 = vmatpush2.msra.mxu0 0.0
    %7891 = vmatprep.subr.mxu0 0.0
    %7892 = vmatpush2.msra.mxu0 0.0
    %7893 = vmatprep.subr.mxu0 0.0
    %7894 = vmatpush2.msra.mxu0 0.0
    %7895 = vmatprep.subr.mxu0 0.0
    %7896 = vmatpush2.msra.mxu0 0.0
    %7897 = vmatprep.subr.mxu0 0.0
    %7898 = vmatpush2.msra.mxu0 0.0
    %7899 = vmatprep.subr.mxu0 0.0
    %7900 = vmatpush2.msra.mxu0 0.0
    %7901 = vmatprep.subr.mxu0 0.0
    %7902 = vmatpush2.msra.mxu0 0.0
    %7903 = vmatprep.subr.mxu0 0.0
    %7904 = vmatpush2.msra.mxu0 0.0
    %7905 = vmatprep.subr.mxu0 0.0
    %7906 = vmatpush2.msra.mxu0 0.0
    %7907 = vmatprep.subr.mxu0 0.0
    %7908 = vmatpush2.msra.mxu0 0.0
    %7909 = vmatprep.subr.mxu0 0.0
    %7910 = vmatpush2.msra.mxu0 0.0
    %7911 = vmatprep.subr.mxu0 0.0
    %7912 = vmatpush2.msra.mxu0 0.0
    %7913 = vmatprep.subr.mxu0 0.0
    %7914 = vmatpush2.msra.mxu0 0.0
    %7915 = vmatprep.subr.mxu0 0.0
    %7916 = vmatpush2.msra.mxu0 0.0
    %7917 = vmatprep.mubr.f32.mxu0 0.0
    %v7918 = vand.u32 %v6196, 4294901760
    %v7919 = vsub.f32 %v6196, %v7918
    %7920 = vmatmul.mubr.f32.gmra.mxu0 %v7919
    %v7921 = vpop.f32.mrf.mxu0
    %v7922 = vadd.f32 %v7812, %v7921
    %v7923 = vpop.f32.mrf.mxu0
    %v7924 = vadd.f32 %v7814, %v7923
    %7925 = vmatprep.mubr.f32.mxu0 0.0
    %v7926 = vand.u32 %v6199, 4294901760
    %v7927 = vsub.f32 %v6199, %v7926
    %7928 = vmatmul.mubr.f32.gmra.mxu0 %v7927
    %v7929 = vpop.f32.mrf.mxu0
    %v7930 = vadd.f32 %v7819, %v7929
    %v7931 = vpop.f32.mrf.mxu0
    %v7932 = vadd.f32 %v7821, %v7931
    %7933 = vmatprep.mubr.f32.mxu0 0.0
    %v7934 = vand.u32 %v6202, 4294901760
    %v7935 = vsub.f32 %v6202, %v7934
    %7936 = vmatmul.mubr.f32.gmra.mxu0 %v7935
    %v7937 = vpop.f32.mrf.mxu0
    %v7938 = vadd.f32 %v7826, %v7937
    %v7939 = vpop.f32.mrf.mxu0
    %v7940 = vadd.f32 %v7828, %v7939
    %7941 = vmatprep.mubr.f32.mxu0 0.0
    %v7942 = vand.u32 %v6205, 4294901760
    %v7943 = vsub.f32 %v6205, %v7942
    %7944 = vmatmul.mubr.f32.gmra.mxu0 %v7943
    %v7945 = vpop.f32.mrf.mxu0
    %v7946 = vadd.f32 %v7833, %v7945
    %v7947 = vpop.f32.mrf.mxu0
    %v7948 = vadd.f32 %v7835, %v7947
    %7949 = vdwg.mxu0
    %7950 = vmatprep.subr.mxu0 0.0
    %7951 = vmatpush1.msra.mxu0 0.0
    %7952 = vmatprep.subr.mxu0 0.0
    %7953 = vmatpush1.msra.mxu0 0.0
    %7954 = vmatprep.subr.mxu0 0.0
    %7955 = vmatpush1.msra.mxu0 0.0
    %7956 = vmatprep.subr.mxu0 0.0
    %7957 = vmatpush1.msra.mxu0 0.0
    %7958 = vmatprep.subr.mxu0 0.0
    %7959 = vmatpush1.msra.mxu0 0.0
    %7960 = vmatprep.subr.mxu0 0.0
    %7961 = vmatpush1.msra.mxu0 0.0
    %7962 = vmatprep.subr.mxu0 0.0
    %7963 = vmatpush1.msra.mxu0 0.0
    %7964 = vmatprep.subr.mxu0 0.0
    %7965 = vmatpush1.msra.mxu0 0.0
    %7966 = vmatprep.subr.mxu0 0.0
    %7967 = vmatpush1.msra.mxu0 0.0
    %7968 = vmatprep.subr.mxu0 0.0
    %7969 = vmatpush1.msra.mxu0 0.0
    %7970 = vmatprep.subr.mxu0 0.0
    %7971 = vmatpush1.msra.mxu0 0.0
    %7972 = vmatprep.subr.mxu0 0.0
    %7973 = vmatpush1.msra.mxu0 0.0
    %v7974 = vand.u32 %v6162, 4294901760
    %7975 = vmatprep.subr.mxu0 %v7974
    %v7976 = vand.u32 %v6161, 4294901760
    %7977 = vmatpush1.msra.mxu0 %v7976
    %v7978 = vand.u32 %v6154, 4294901760
    %7979 = vmatprep.subr.mxu0 %v7978
    %v7980 = vand.u32 %v6153, 4294901760
    %7981 = vmatpush1.msra.mxu0 %v7980
    %v7982 = vand.u32 %v6146, 4294901760
    %7983 = vmatprep.subr.mxu0 %v7982
    %v7984 = vand.u32 %v6145, 4294901760
    %7985 = vmatpush1.msra.mxu0 %v7984
    %v7986 = vand.u32 %v6138, 4294901760
    %7987 = vmatprep.subr.mxu0 %v7986
    %v7988 = vand.u32 %v6137, 4294901760
    %7989 = vmatpush1.msra.mxu0 %v7988
    %7990 = vmatprep.subr.mxu0 0.0
    %7991 = vmatpush2.msra.mxu0 0.0
    %7992 = vmatprep.subr.mxu0 0.0
    %7993 = vmatpush2.msra.mxu0 0.0
    %7994 = vmatprep.subr.mxu0 0.0
    %7995 = vmatpush2.msra.mxu0 0.0
    %7996 = vmatprep.subr.mxu0 0.0
    %7997 = vmatpush2.msra.mxu0 0.0
    %7998 = vmatprep.subr.mxu0 0.0
    %7999 = vmatpush2.msra.mxu0 0.0
    %8000 = vmatprep.subr.mxu0 0.0
    %8001 = vmatpush2.msra.mxu0 0.0
    %8002 = vmatprep.subr.mxu0 0.0
    %8003 = vmatpush2.msra.mxu0 0.0
    %8004 = vmatprep.subr.mxu0 0.0
    %8005 = vmatpush2.msra.mxu0 0.0
    %8006 = vmatprep.subr.mxu0 0.0
    %8007 = vmatpush2.msra.mxu0 0.0
    %8008 = vmatprep.subr.mxu0 0.0
    %8009 = vmatpush2.msra.mxu0 0.0
    %8010 = vmatprep.subr.mxu0 0.0
    %8011 = vmatpush2.msra.mxu0 0.0
    %8012 = vmatprep.subr.mxu0 0.0
    %8013 = vmatpush2.msra.mxu0 0.0
    %8014 = vmatprep.subr.mxu0 0.0
    %8015 = vmatpush2.msra.mxu0 0.0
    %8016 = vmatprep.subr.mxu0 0.0
    %8017 = vmatpush2.msra.mxu0 0.0
    %8018 = vmatprep.subr.mxu0 0.0
    %8019 = vmatpush2.msra.mxu0 0.0
    %8020 = vmatprep.subr.mxu0 0.0
    %8021 = vmatpush2.msra.mxu0 0.0
    %8022 = vmatprep.mubr.f32.mxu0 0.0
    %v8023 = vand.u32 %v6196, 4294901760
    %v8024 = vsub.f32 %v6196, %v8023
    %v8025 = vand.u32 %v8024, 4294901760
    %8026 = vmatmul.mubr.f32.gmra.mxu0 %v8025
    %v8027 = vpop.f32.mrf.mxu0
    %v8028 = vadd.f32 %v7922, %v8027
    %v8029 = vpop.f32.mrf.mxu0
    %v8030 = vadd.f32 %v7924, %v8029
    %8031 = vmatprep.mubr.f32.mxu0 0.0
    %v8032 = vand.u32 %v6199, 4294901760
    %v8033 = vsub.f32 %v6199, %v8032
    %v8034 = vand.u32 %v8033, 4294901760
    %8035 = vmatmul.mubr.f32.gmra.mxu0 %v8034
    %v8036 = vpop.f32.mrf.mxu0
    %v8037 = vadd.f32 %v7930, %v8036
    %v8038 = vpop.f32.mrf.mxu0
    %v8039 = vadd.f32 %v7932, %v8038
    %8040 = vmatprep.mubr.f32.mxu0 0.0
    %v8041 = vand.u32 %v6202, 4294901760
    %v8042 = vsub.f32 %v6202, %v8041
    %v8043 = vand.u32 %v8042, 4294901760
    %8044 = vmatmul.mubr.f32.gmra.mxu0 %v8043
    %v8045 = vpop.f32.mrf.mxu0
    %v8046 = vadd.f32 %v7938, %v8045
    %v8047 = vpop.f32.mrf.mxu0
    %v8048 = vadd.f32 %v7940, %v8047
    %8049 = vmatprep.mubr.f32.mxu0 0.0
    %v8050 = vand.u32 %v6205, 4294901760
    %v8051 = vsub.f32 %v6205, %v8050
    %v8052 = vand.u32 %v8051, 4294901760
    %8053 = vmatmul.mubr.f32.gmra.mxu0 %v8052
    %v8054 = vpop.f32.mrf.mxu0
    %v8055 = vadd.f32 %v7946, %v8054
    %v8056 = vpop.f32.mrf.mxu0
    %v8057 = vadd.f32 %v7948, %v8056
    %8058 = vdwg.mxu0
    %8059 = vmatprep.subr.mxu0 0.0
    %8060 = vmatpush1.msra.mxu0 0.0
    %8061 = vmatprep.subr.mxu0 0.0
    %8062 = vmatpush1.msra.mxu0 0.0
    %8063 = vmatprep.subr.mxu0 0.0
    %8064 = vmatpush1.msra.mxu0 0.0
    %8065 = vmatprep.subr.mxu0 0.0
    %8066 = vmatpush1.msra.mxu0 0.0
    %8067 = vmatprep.subr.mxu0 0.0
    %8068 = vmatpush1.msra.mxu0 0.0
    %8069 = vmatprep.subr.mxu0 0.0
    %8070 = vmatpush1.msra.mxu0 0.0
    %8071 = vmatprep.subr.mxu0 0.0
    %8072 = vmatpush1.msra.mxu0 0.0
    %8073 = vmatprep.subr.mxu0 0.0
    %8074 = vmatpush1.msra.mxu0 0.0
    %8075 = vmatprep.subr.mxu0 0.0
    %8076 = vmatpush1.msra.mxu0 0.0
    %8077 = vmatprep.subr.mxu0 0.0
    %8078 = vmatpush1.msra.mxu0 0.0
    %8079 = vmatprep.subr.mxu0 0.0
    %8080 = vmatpush1.msra.mxu0 0.0
    %8081 = vmatprep.subr.mxu0 0.0
    %8082 = vmatpush1.msra.mxu0 0.0
    %v8083 = vand.u32 %v6162, 4294901760
    %v8084 = vsub.f32 %v6162, %v8083
    %v8085 = vand.u32 %v8084, 4294901760
    %8086 = vmatprep.subr.mxu0 %v8085
    %v8087 = vand.u32 %v6161, 4294901760
    %v8088 = vsub.f32 %v6161, %v8087
    %v8089 = vand.u32 %v8088, 4294901760
    %8090 = vmatpush1.msra.mxu0 %v8089
    %v8091 = vand.u32 %v6154, 4294901760
    %v8092 = vsub.f32 %v6154, %v8091
    %v8093 = vand.u32 %v8092, 4294901760
    %8094 = vmatprep.subr.mxu0 %v8093
    %v8095 = vand.u32 %v6153, 4294901760
    %v8096 = vsub.f32 %v6153, %v8095
    %v8097 = vand.u32 %v8096, 4294901760
    %8098 = vmatpush1.msra.mxu0 %v8097
    %v8099 = vand.u32 %v6146, 4294901760
    %v8100 = vsub.f32 %v6146, %v8099
    %v8101 = vand.u32 %v8100, 4294901760
    %8102 = vmatprep.subr.mxu0 %v8101
    %v8103 = vand.u32 %v6145, 4294901760
    %v8104 = vsub.f32 %v6145, %v8103
    %v8105 = vand.u32 %v8104, 4294901760
    %8106 = vmatpush1.msra.mxu0 %v8105
    %v8107 = vand.u32 %v6138, 4294901760
    %v8108 = vsub.f32 %v6138, %v8107
    %v8109 = vand.u32 %v8108, 4294901760
    %8110 = vmatprep.subr.mxu0 %v8109
    %v8111 = vand.u32 %v6137, 4294901760
    %v8112 = vsub.f32 %v6137, %v8111
    %v8113 = vand.u32 %v8112, 4294901760
    %8114 = vmatpush1.msra.mxu0 %v8113
    %8115 = vmatprep.subr.mxu0 0.0
    %8116 = vmatpush2.msra.mxu0 0.0
    %8117 = vmatprep.subr.mxu0 0.0
    %8118 = vmatpush2.msra.mxu0 0.0
    %8119 = vmatprep.subr.mxu0 0.0
    %8120 = vmatpush2.msra.mxu0 0.0
    %8121 = vmatprep.subr.mxu0 0.0
    %8122 = vmatpush2.msra.mxu0 0.0
    %8123 = vmatprep.subr.mxu0 0.0
    %8124 = vmatpush2.msra.mxu0 0.0
    %8125 = vmatprep.subr.mxu0 0.0
    %8126 = vmatpush2.msra.mxu0 0.0
    %8127 = vmatprep.subr.mxu0 0.0
    %8128 = vmatpush2.msra.mxu0 0.0
    %8129 = vmatprep.subr.mxu0 0.0
    %8130 = vmatpush2.msra.mxu0 0.0
    %8131 = vmatprep.subr.mxu0 0.0
    %8132 = vmatpush2.msra.mxu0 0.0
    %8133 = vmatprep.subr.mxu0 0.0
    %8134 = vmatpush2.msra.mxu0 0.0
    %8135 = vmatprep.subr.mxu0 0.0
    %8136 = vmatpush2.msra.mxu0 0.0
    %8137 = vmatprep.subr.mxu0 0.0
    %8138 = vmatpush2.msra.mxu0 0.0
    %8139 = vmatprep.subr.mxu0 0.0
    %8140 = vmatpush2.msra.mxu0 0.0
    %8141 = vmatprep.subr.mxu0 0.0
    %8142 = vmatpush2.msra.mxu0 0.0
    %8143 = vmatprep.subr.mxu0 0.0
    %8144 = vmatpush2.msra.mxu0 0.0
    %8145 = vmatprep.subr.mxu0 0.0
    %8146 = vmatpush2.msra.mxu0 0.0
    %8147 = vmatprep.mubr.f32.mxu0 0.0
    %v8148 = vand.u32 %v6196, 4294901760
    %8149 = vmatmul.mubr.f32.gmra.mxu0 %v8148
    %v8150 = vpop.f32.mrf.mxu0
    %v8151 = vadd.f32 %v8028, %v8150
    %v8152 = vpop.f32.mrf.mxu0
    %v8153 = vadd.f32 %v8030, %v8152
    %8154 = vmatprep.mubr.f32.mxu0 0.0
    %v8155 = vand.u32 %v6199, 4294901760
    %8156 = vmatmul.mubr.f32.gmra.mxu0 %v8155
    %v8157 = vpop.f32.mrf.mxu0
    %v8158 = vadd.f32 %v8037, %v8157
    %v8159 = vpop.f32.mrf.mxu0
    %v8160 = vadd.f32 %v8039, %v8159
    %8161 = vmatprep.mubr.f32.mxu0 0.0
    %v8162 = vand.u32 %v6202, 4294901760
    %8163 = vmatmul.mubr.f32.gmra.mxu0 %v8162
    %v8164 = vpop.f32.mrf.mxu0
    %v8165 = vadd.f32 %v8046, %v8164
    %v8166 = vpop.f32.mrf.mxu0
    %v8167 = vadd.f32 %v8048, %v8166
    %8168 = vmatprep.mubr.f32.mxu0 0.0
    %v8169 = vand.u32 %v6205, 4294901760
    %8170 = vmatmul.mubr.f32.gmra.mxu0 %v8169
    %v8171 = vpop.f32.mrf.mxu0
    %v8172 = vadd.f32 %v8055, %v8171
    %v8173 = vpop.f32.mrf.mxu0
    %v8174 = vadd.f32 %v8057, %v8173
    %8175 = vdwg.mxu0
    %8176 = vmatprep.subr.mxu0 0.0
    %8177 = vmatpush1.msra.mxu0 0.0
    %8178 = vmatprep.subr.mxu0 0.0
    %8179 = vmatpush1.msra.mxu0 0.0
    %8180 = vmatprep.subr.mxu0 0.0
    %8181 = vmatpush1.msra.mxu0 0.0
    %8182 = vmatprep.subr.mxu0 0.0
    %8183 = vmatpush1.msra.mxu0 0.0
    %8184 = vmatprep.subr.mxu0 0.0
    %8185 = vmatpush1.msra.mxu0 0.0
    %8186 = vmatprep.subr.mxu0 0.0
    %8187 = vmatpush1.msra.mxu0 0.0
    %8188 = vmatprep.subr.mxu0 0.0
    %8189 = vmatpush1.msra.mxu0 0.0
    %8190 = vmatprep.subr.mxu0 0.0
    %8191 = vmatpush1.msra.mxu0 0.0
    %8192 = vmatprep.subr.mxu0 0.0
    %8193 = vmatpush1.msra.mxu0 0.0
    %8194 = vmatprep.subr.mxu0 0.0
    %8195 = vmatpush1.msra.mxu0 0.0
    %8196 = vmatprep.subr.mxu0 0.0
    %8197 = vmatpush1.msra.mxu0 0.0
    %8198 = vmatprep.subr.mxu0 0.0
    %8199 = vmatpush1.msra.mxu0 0.0
    %v8200 = vand.u32 %v6162, 4294901760
    %8201 = vmatprep.subr.mxu0 %v8200
    %v8202 = vand.u32 %v6161, 4294901760
    %8203 = vmatpush1.msra.mxu0 %v8202
    %v8204 = vand.u32 %v6154, 4294901760
    %8205 = vmatprep.subr.mxu0 %v8204
    %v8206 = vand.u32 %v6153, 4294901760
    %8207 = vmatpush1.msra.mxu0 %v8206
    %v8208 = vand.u32 %v6146, 4294901760
    %8209 = vmatprep.subr.mxu0 %v8208
    %v8210 = vand.u32 %v6145, 4294901760
    %8211 = vmatpush1.msra.mxu0 %v8210
    %v8212 = vand.u32 %v6138, 4294901760
    %8213 = vmatprep.subr.mxu0 %v8212
    %v8214 = vand.u32 %v6137, 4294901760
    %8215 = vmatpush1.msra.mxu0 %v8214
    %8216 = vmatprep.subr.mxu0 0.0
    %8217 = vmatpush2.msra.mxu0 0.0
    %8218 = vmatprep.subr.mxu0 0.0
    %8219 = vmatpush2.msra.mxu0 0.0
    %8220 = vmatprep.subr.mxu0 0.0
    %8221 = vmatpush2.msra.mxu0 0.0
    %8222 = vmatprep.subr.mxu0 0.0
    %8223 = vmatpush2.msra.mxu0 0.0
    %8224 = vmatprep.subr.mxu0 0.0
    %8225 = vmatpush2.msra.mxu0 0.0
    %8226 = vmatprep.subr.mxu0 0.0
    %8227 = vmatpush2.msra.mxu0 0.0
    %8228 = vmatprep.subr.mxu0 0.0
    %8229 = vmatpush2.msra.mxu0 0.0
    %8230 = vmatprep.subr.mxu0 0.0
    %8231 = vmatpush2.msra.mxu0 0.0
    %8232 = vmatprep.subr.mxu0 0.0
    %8233 = vmatpush2.msra.mxu0 0.0
    %8234 = vmatprep.subr.mxu0 0.0
    %8235 = vmatpush2.msra.mxu0 0.0
    %8236 = vmatprep.subr.mxu0 0.0
    %8237 = vmatpush2.msra.mxu0 0.0
    %8238 = vmatprep.subr.mxu0 0.0
    %8239 = vmatpush2.msra.mxu0 0.0
    %8240 = vmatprep.subr.mxu0 0.0
    %8241 = vmatpush2.msra.mxu0 0.0
    %8242 = vmatprep.subr.mxu0 0.0
    %8243 = vmatpush2.msra.mxu0 0.0
    %8244 = vmatprep.subr.mxu0 0.0
    %8245 = vmatpush2.msra.mxu0 0.0
    %8246 = vmatprep.subr.mxu0 0.0
    %8247 = vmatpush2.msra.mxu0 0.0
    %8248 = vmatprep.mubr.f32.mxu0 0.0
    %v8249 = vand.u32 %v6196, 4294901760
    %8250 = vmatmul.mubr.f32.gmra.mxu0 %v8249
    %v8251 = vpop.f32.mrf.mxu0
    %v8252 = vadd.f32 %v8151, %v8251
    %v8253 = vpop.f32.mrf.mxu0
    %v8254 = vadd.f32 %v8153, %v8253
    %8255 = vmatprep.mubr.f32.mxu0 0.0
    %v8256 = vand.u32 %v6199, 4294901760
    %8257 = vmatmul.mubr.f32.gmra.mxu0 %v8256
    %v8258 = vpop.f32.mrf.mxu0
    %v8259 = vadd.f32 %v8158, %v8258
    %v8260 = vpop.f32.mrf.mxu0
    %v8261 = vadd.f32 %v8160, %v8260
    %8262 = vmatprep.mubr.f32.mxu0 0.0
    %v8263 = vand.u32 %v6202, 4294901760
    %8264 = vmatmul.mubr.f32.gmra.mxu0 %v8263
    %v8265 = vpop.f32.mrf.mxu0
    %v8266 = vadd.f32 %v8165, %v8265
    %v8267 = vpop.f32.mrf.mxu0
    %v8268 = vadd.f32 %v8167, %v8267
    %8269 = vmatprep.mubr.f32.mxu0 0.0
    %v8270 = vand.u32 %v6205, 4294901760
    %8271 = vmatmul.mubr.f32.gmra.mxu0 %v8270
    %v8272 = vpop.f32.mrf.mxu0
    %v8273 = vadd.f32 %v8172, %v8272
    %v8274 = vpop.f32.mrf.mxu0
    %v8275 = vadd.f32 %v8174, %v8274
    %8276 = vdwg.mxu0
    %8277 = vmatprep.subr.mxu0 0.0
    %8278 = vmatpush1.msra.mxu0 0.0
    %8279 = vmatprep.subr.mxu0 0.0
    %8280 = vmatpush1.msra.mxu0 0.0
    %8281 = vmatprep.subr.mxu0 0.0
    %8282 = vmatpush1.msra.mxu0 0.0
    %8283 = vmatprep.subr.mxu0 0.0
    %8284 = vmatpush1.msra.mxu0 0.0
    %8285 = vmatprep.subr.mxu0 0.0
    %8286 = vmatpush1.msra.mxu0 0.0
    %8287 = vmatprep.subr.mxu0 0.0
    %8288 = vmatpush1.msra.mxu0 0.0
    %8289 = vmatprep.subr.mxu0 0.0
    %8290 = vmatpush1.msra.mxu0 0.0
    %8291 = vmatprep.subr.mxu0 0.0
    %8292 = vmatpush1.msra.mxu0 0.0
    %8293 = vmatprep.subr.mxu0 0.0
    %8294 = vmatpush1.msra.mxu0 0.0
    %8295 = vmatprep.subr.mxu0 0.0
    %8296 = vmatpush1.msra.mxu0 0.0
    %8297 = vmatprep.subr.mxu0 0.0
    %8298 = vmatpush1.msra.mxu0 0.0
    %8299 = vmatprep.subr.mxu0 0.0
    %8300 = vmatpush1.msra.mxu0 0.0
    %v8301 = vand.u32 %v6164, 4294901760
    %8302 = vmatprep.subr.mxu0 %v8301
    %v8303 = vand.u32 %v6163, 4294901760
    %8304 = vmatpush1.msra.mxu0 %v8303
    %v8305 = vand.u32 %v6156, 4294901760
    %8306 = vmatprep.subr.mxu0 %v8305
    %v8307 = vand.u32 %v6155, 4294901760
    %8308 = vmatpush1.msra.mxu0 %v8307
    %v8309 = vand.u32 %v6148, 4294901760
    %8310 = vmatprep.subr.mxu0 %v8309
    %v8311 = vand.u32 %v6147, 4294901760
    %8312 = vmatpush1.msra.mxu0 %v8311
    %v8313 = vand.u32 %v6140, 4294901760
    %8314 = vmatprep.subr.mxu0 %v8313
    %v8315 = vand.u32 %v6139, 4294901760
    %8316 = vmatpush1.msra.mxu0 %v8315
    %8317 = vmatprep.subr.mxu0 0.0
    %8318 = vmatpush2.msra.mxu0 0.0
    %8319 = vmatprep.subr.mxu0 0.0
    %8320 = vmatpush2.msra.mxu0 0.0
    %8321 = vmatprep.subr.mxu0 0.0
    %8322 = vmatpush2.msra.mxu0 0.0
    %8323 = vmatprep.subr.mxu0 0.0
    %8324 = vmatpush2.msra.mxu0 0.0
    %8325 = vmatprep.subr.mxu0 0.0
    %8326 = vmatpush2.msra.mxu0 0.0
    %8327 = vmatprep.subr.mxu0 0.0
    %8328 = vmatpush2.msra.mxu0 0.0
    %8329 = vmatprep.subr.mxu0 0.0
    %8330 = vmatpush2.msra.mxu0 0.0
    %8331 = vmatprep.subr.mxu0 0.0
    %8332 = vmatpush2.msra.mxu0 0.0
    %8333 = vmatprep.subr.mxu0 0.0
    %8334 = vmatpush2.msra.mxu0 0.0
    %8335 = vmatprep.subr.mxu0 0.0
    %8336 = vmatpush2.msra.mxu0 0.0
    %8337 = vmatprep.subr.mxu0 0.0
    %8338 = vmatpush2.msra.mxu0 0.0
    %8339 = vmatprep.subr.mxu0 0.0
    %8340 = vmatpush2.msra.mxu0 0.0
    %8341 = vmatprep.subr.mxu0 0.0
    %8342 = vmatpush2.msra.mxu0 0.0
    %8343 = vmatprep.subr.mxu0 0.0
    %8344 = vmatpush2.msra.mxu0 0.0
    %8345 = vmatprep.subr.mxu0 0.0
    %8346 = vmatpush2.msra.mxu0 0.0
    %8347 = vmatprep.subr.mxu0 0.0
    %8348 = vmatpush2.msra.mxu0 0.0
    %8349 = vmatprep.mubr.f32.mxu0 0.0
    %v8350 = vand.u32 %v6196, 4294901760
    %v8351 = vsub.f32 %v6196, %v8350
    %v8352 = vand.u32 %v8351, 4294901760
    %v8353 = vsub.f32 %v8351, %v8352
    %v8354 = vand.u32 %v8353, 4294901760
    %8355 = vmatmul.mubr.f32.gmra.mxu0 %v8354
    %v8356 = vpop.f32.mrf.mxu0
    %v8357 = vadd.f32 %v6178, %v8356
    %v8358 = vpop.f32.mrf.mxu0
    %v8359 = vadd.f32 %v6178, %v8358
    %8360 = vmatprep.mubr.f32.mxu0 0.0
    %v8361 = vand.u32 %v6199, 4294901760
    %v8362 = vsub.f32 %v6199, %v8361
    %v8363 = vand.u32 %v8362, 4294901760
    %v8364 = vsub.f32 %v8362, %v8363
    %v8365 = vand.u32 %v8364, 4294901760
    %8366 = vmatmul.mubr.f32.gmra.mxu0 %v8365
    %v8367 = vpop.f32.mrf.mxu0
    %v8368 = vadd.f32 %v6183, %v8367
    %v8369 = vpop.f32.mrf.mxu0
    %v8370 = vadd.f32 %v6183, %v8369
    %8371 = vmatprep.mubr.f32.mxu0 0.0
    %v8372 = vand.u32 %v6202, 4294901760
    %v8373 = vsub.f32 %v6202, %v8372
    %v8374 = vand.u32 %v8373, 4294901760
    %v8375 = vsub.f32 %v8373, %v8374
    %v8376 = vand.u32 %v8375, 4294901760
    %8377 = vmatmul.mubr.f32.gmra.mxu0 %v8376
    %v8378 = vpop.f32.mrf.mxu0
    %v8379 = vadd.f32 %v6188, %v8378
    %v8380 = vpop.f32.mrf.mxu0
    %v8381 = vadd.f32 %v6188, %v8380
    %8382 = vmatprep.mubr.f32.mxu0 0.0
    %v8383 = vand.u32 %v6205, 4294901760
    %v8384 = vsub.f32 %v6205, %v8383
    %v8385 = vand.u32 %v8384, 4294901760
    %v8386 = vsub.f32 %v8384, %v8385
    %v8387 = vand.u32 %v8386, 4294901760
    %8388 = vmatmul.mubr.f32.gmra.mxu0 %v8387
    %v8389 = vpop.f32.mrf.mxu0
    %v8390 = vadd.f32 %v6193, %v8389
    %v8391 = vpop.f32.mrf.mxu0
    %v8392 = vadd.f32 %v6193, %v8391
    %8393 = vdwg.mxu0
    %8394 = vmatprep.subr.mxu0 0.0
    %8395 = vmatpush1.msra.mxu0 0.0
    %8396 = vmatprep.subr.mxu0 0.0
    %8397 = vmatpush1.msra.mxu0 0.0
    %8398 = vmatprep.subr.mxu0 0.0
    %8399 = vmatpush1.msra.mxu0 0.0
    %8400 = vmatprep.subr.mxu0 0.0
    %8401 = vmatpush1.msra.mxu0 0.0
    %8402 = vmatprep.subr.mxu0 0.0
    %8403 = vmatpush1.msra.mxu0 0.0
    %8404 = vmatprep.subr.mxu0 0.0
    %8405 = vmatpush1.msra.mxu0 0.0
    %8406 = vmatprep.subr.mxu0 0.0
    %8407 = vmatpush1.msra.mxu0 0.0
    %8408 = vmatprep.subr.mxu0 0.0
    %8409 = vmatpush1.msra.mxu0 0.0
    %8410 = vmatprep.subr.mxu0 0.0
    %8411 = vmatpush1.msra.mxu0 0.0
    %8412 = vmatprep.subr.mxu0 0.0
    %8413 = vmatpush1.msra.mxu0 0.0
    %8414 = vmatprep.subr.mxu0 0.0
    %8415 = vmatpush1.msra.mxu0 0.0
    %8416 = vmatprep.subr.mxu0 0.0
    %8417 = vmatpush1.msra.mxu0 0.0
    %v8418 = vand.u32 %v6164, 4294901760
    %v8419 = vsub.f32 %v6164, %v8418
    %v8420 = vand.u32 %v8419, 4294901760
    %v8421 = vsub.f32 %v8419, %v8420
    %v8422 = vand.u32 %v8421, 4294901760
    %8423 = vmatprep.subr.mxu0 %v8422
    %v8424 = vand.u32 %v6163, 4294901760
    %v8425 = vsub.f32 %v6163, %v8424
    %v8426 = vand.u32 %v8425, 4294901760
    %v8427 = vsub.f32 %v8425, %v8426
    %v8428 = vand.u32 %v8427, 4294901760
    %8429 = vmatpush1.msra.mxu0 %v8428
    %v8430 = vand.u32 %v6156, 4294901760
    %v8431 = vsub.f32 %v6156, %v8430
    %v8432 = vand.u32 %v8431, 4294901760
    %v8433 = vsub.f32 %v8431, %v8432
    %v8434 = vand.u32 %v8433, 4294901760
    %8435 = vmatprep.subr.mxu0 %v8434
    %v8436 = vand.u32 %v6155, 4294901760
    %v8437 = vsub.f32 %v6155, %v8436
    %v8438 = vand.u32 %v8437, 4294901760
    %v8439 = vsub.f32 %v8437, %v8438
    %v8440 = vand.u32 %v8439, 4294901760
    %8441 = vmatpush1.msra.mxu0 %v8440
    %v8442 = vand.u32 %v6148, 4294901760
    %v8443 = vsub.f32 %v6148, %v8442
    %v8444 = vand.u32 %v8443, 4294901760
    %v8445 = vsub.f32 %v8443, %v8444
    %v8446 = vand.u32 %v8445, 4294901760
    %8447 = vmatprep.subr.mxu0 %v8446
    %v8448 = vand.u32 %v6147, 4294901760
    %v8449 = vsub.f32 %v6147, %v8448
    %v8450 = vand.u32 %v8449, 4294901760
    %v8451 = vsub.f32 %v8449, %v8450
    %v8452 = vand.u32 %v8451, 4294901760
    %8453 = vmatpush1.msra.mxu0 %v8452
    %v8454 = vand.u32 %v6140, 4294901760
    %v8455 = vsub.f32 %v6140, %v8454
    %v8456 = vand.u32 %v8455, 4294901760
    %v8457 = vsub.f32 %v8455, %v8456
    %v8458 = vand.u32 %v8457, 4294901760
    %8459 = vmatprep.subr.mxu0 %v8458
    %v8460 = vand.u32 %v6139, 4294901760
    %v8461 = vsub.f32 %v6139, %v8460
    %v8462 = vand.u32 %v8461, 4294901760
    %v8463 = vsub.f32 %v8461, %v8462
    %v8464 = vand.u32 %v8463, 4294901760
    %8465 = vmatpush1.msra.mxu0 %v8464
    %8466 = vmatprep.subr.mxu0 0.0
    %8467 = vmatpush2.msra.mxu0 0.0
    %8468 = vmatprep.subr.mxu0 0.0
    %8469 = vmatpush2.msra.mxu0 0.0
    %8470 = vmatprep.subr.mxu0 0.0
    %8471 = vmatpush2.msra.mxu0 0.0
    %8472 = vmatprep.subr.mxu0 0.0
    %8473 = vmatpush2.msra.mxu0 0.0
    %8474 = vmatprep.subr.mxu0 0.0
    %8475 = vmatpush2.msra.mxu0 0.0
    %8476 = vmatprep.subr.mxu0 0.0
    %8477 = vmatpush2.msra.mxu0 0.0
    %8478 = vmatprep.subr.mxu0 0.0
    %8479 = vmatpush2.msra.mxu0 0.0
    %8480 = vmatprep.subr.mxu0 0.0
    %8481 = vmatpush2.msra.mxu0 0.0
    %8482 = vmatprep.subr.mxu0 0.0
    %8483 = vmatpush2.msra.mxu0 0.0
    %8484 = vmatprep.subr.mxu0 0.0
    %8485 = vmatpush2.msra.mxu0 0.0
    %8486 = vmatprep.subr.mxu0 0.0
    %8487 = vmatpush2.msra.mxu0 0.0
    %8488 = vmatprep.subr.mxu0 0.0
    %8489 = vmatpush2.msra.mxu0 0.0
    %8490 = vmatprep.subr.mxu0 0.0
    %8491 = vmatpush2.msra.mxu0 0.0
    %8492 = vmatprep.subr.mxu0 0.0
    %8493 = vmatpush2.msra.mxu0 0.0
    %8494 = vmatprep.subr.mxu0 0.0
    %8495 = vmatpush2.msra.mxu0 0.0
    %8496 = vmatprep.subr.mxu0 0.0
    %8497 = vmatpush2.msra.mxu0 0.0
    %8498 = vmatprep.mubr.f32.mxu0 0.0
    %v8499 = vand.u32 %v6196, 4294901760
    %8500 = vmatmul.mubr.f32.gmra.mxu0 %v8499
    %v8501 = vpop.f32.mrf.mxu0
    %v8502 = vadd.f32 %v8357, %v8501
    %v8503 = vpop.f32.mrf.mxu0
    %v8504 = vadd.f32 %v8359, %v8503
    %8505 = vmatprep.mubr.f32.mxu0 0.0
    %v8506 = vand.u32 %v6199, 4294901760
    %8507 = vmatmul.mubr.f32.gmra.mxu0 %v8506
    %v8508 = vpop.f32.mrf.mxu0
    %v8509 = vadd.f32 %v8368, %v8508
    %v8510 = vpop.f32.mrf.mxu0
    %v8511 = vadd.f32 %v8370, %v8510
    %8512 = vmatprep.mubr.f32.mxu0 0.0
    %v8513 = vand.u32 %v6202, 4294901760
    %8514 = vmatmul.mubr.f32.gmra.mxu0 %v8513
    %v8515 = vpop.f32.mrf.mxu0
    %v8516 = vadd.f32 %v8379, %v8515
    %v8517 = vpop.f32.mrf.mxu0
    %v8518 = vadd.f32 %v8381, %v8517
    %8519 = vmatprep.mubr.f32.mxu0 0.0
    %v8520 = vand.u32 %v6205, 4294901760
    %8521 = vmatmul.mubr.f32.gmra.mxu0 %v8520
    %v8522 = vpop.f32.mrf.mxu0
    %v8523 = vadd.f32 %v8390, %v8522
    %v8524 = vpop.f32.mrf.mxu0
    %v8525 = vadd.f32 %v8392, %v8524
    %8526 = vdwg.mxu0
    %8527 = vmatprep.subr.mxu0 0.0
    %8528 = vmatpush1.msra.mxu0 0.0
    %8529 = vmatprep.subr.mxu0 0.0
    %8530 = vmatpush1.msra.mxu0 0.0
    %8531 = vmatprep.subr.mxu0 0.0
    %8532 = vmatpush1.msra.mxu0 0.0
    %8533 = vmatprep.subr.mxu0 0.0
    %8534 = vmatpush1.msra.mxu0 0.0
    %8535 = vmatprep.subr.mxu0 0.0
    %8536 = vmatpush1.msra.mxu0 0.0
    %8537 = vmatprep.subr.mxu0 0.0
    %8538 = vmatpush1.msra.mxu0 0.0
    %8539 = vmatprep.subr.mxu0 0.0
    %8540 = vmatpush1.msra.mxu0 0.0
    %8541 = vmatprep.subr.mxu0 0.0
    %8542 = vmatpush1.msra.mxu0 0.0
    %8543 = vmatprep.subr.mxu0 0.0
    %8544 = vmatpush1.msra.mxu0 0.0
    %8545 = vmatprep.subr.mxu0 0.0
    %8546 = vmatpush1.msra.mxu0 0.0
    %8547 = vmatprep.subr.mxu0 0.0
    %8548 = vmatpush1.msra.mxu0 0.0
    %8549 = vmatprep.subr.mxu0 0.0
    %8550 = vmatpush1.msra.mxu0 0.0
    %v8551 = vand.u32 %v6164, 4294901760
    %v8552 = vsub.f32 %v6164, %v8551
    %8553 = vmatprep.subr.mxu0 %v8552
    %v8554 = vand.u32 %v6163, 4294901760
    %v8555 = vsub.f32 %v6163, %v8554
    %8556 = vmatpush1.msra.mxu0 %v8555
    %v8557 = vand.u32 %v6156, 4294901760
    %v8558 = vsub.f32 %v6156, %v8557
    %8559 = vmatprep.subr.mxu0 %v8558
    %v8560 = vand.u32 %v6155, 4294901760
    %v8561 = vsub.f32 %v6155, %v8560
    %8562 = vmatpush1.msra.mxu0 %v8561
    %v8563 = vand.u32 %v6148, 4294901760
    %v8564 = vsub.f32 %v6148, %v8563
    %8565 = vmatprep.subr.mxu0 %v8564
    %v8566 = vand.u32 %v6147, 4294901760
    %v8567 = vsub.f32 %v6147, %v8566
    %8568 = vmatpush1.msra.mxu0 %v8567
    %v8569 = vand.u32 %v6140, 4294901760
    %v8570 = vsub.f32 %v6140, %v8569
    %8571 = vmatprep.subr.mxu0 %v8570
    %v8572 = vand.u32 %v6139, 4294901760
    %v8573 = vsub.f32 %v6139, %v8572
    %8574 = vmatpush1.msra.mxu0 %v8573
    %8575 = vmatprep.subr.mxu0 0.0
    %8576 = vmatpush2.msra.mxu0 0.0
    %8577 = vmatprep.subr.mxu0 0.0
    %8578 = vmatpush2.msra.mxu0 0.0
    %8579 = vmatprep.subr.mxu0 0.0
    %8580 = vmatpush2.msra.mxu0 0.0
    %8581 = vmatprep.subr.mxu0 0.0
    %8582 = vmatpush2.msra.mxu0 0.0
    %8583 = vmatprep.subr.mxu0 0.0
    %8584 = vmatpush2.msra.mxu0 0.0
    %8585 = vmatprep.subr.mxu0 0.0
    %8586 = vmatpush2.msra.mxu0 0.0
    %8587 = vmatprep.subr.mxu0 0.0
    %8588 = vmatpush2.msra.mxu0 0.0
    %8589 = vmatprep.subr.mxu0 0.0
    %8590 = vmatpush2.msra.mxu0 0.0
    %8591 = vmatprep.subr.mxu0 0.0
    %8592 = vmatpush2.msra.mxu0 0.0
    %8593 = vmatprep.subr.mxu0 0.0
    %8594 = vmatpush2.msra.mxu0 0.0
    %8595 = vmatprep.subr.mxu0 0.0
    %8596 = vmatpush2.msra.mxu0 0.0
    %8597 = vmatprep.subr.mxu0 0.0
    %8598 = vmatpush2.msra.mxu0 0.0
    %8599 = vmatprep.subr.mxu0 0.0
    %8600 = vmatpush2.msra.mxu0 0.0
    %8601 = vmatprep.subr.mxu0 0.0
    %8602 = vmatpush2.msra.mxu0 0.0
    %8603 = vmatprep.subr.mxu0 0.0
    %8604 = vmatpush2.msra.mxu0 0.0
    %8605 = vmatprep.subr.mxu0 0.0
    %8606 = vmatpush2.msra.mxu0 0.0
    %8607 = vmatprep.mubr.f32.mxu0 0.0
    %v8608 = vand.u32 %v6196, 4294901760
    %v8609 = vsub.f32 %v6196, %v8608
    %8610 = vmatmul.mubr.f32.gmra.mxu0 %v8609
    %v8611 = vpop.f32.mrf.mxu0
    %v8612 = vadd.f32 %v8502, %v8611
    %v8613 = vpop.f32.mrf.mxu0
    %v8614 = vadd.f32 %v8504, %v8613
    %8615 = vmatprep.mubr.f32.mxu0 0.0
    %v8616 = vand.u32 %v6199, 4294901760
    %v8617 = vsub.f32 %v6199, %v8616
    %8618 = vmatmul.mubr.f32.gmra.mxu0 %v8617
    %v8619 = vpop.f32.mrf.mxu0
    %v8620 = vadd.f32 %v8509, %v8619
    %v8621 = vpop.f32.mrf.mxu0
    %v8622 = vadd.f32 %v8511, %v8621
    %8623 = vmatprep.mubr.f32.mxu0 0.0
    %v8624 = vand.u32 %v6202, 4294901760
    %v8625 = vsub.f32 %v6202, %v8624
    %8626 = vmatmul.mubr.f32.gmra.mxu0 %v8625
    %v8627 = vpop.f32.mrf.mxu0
    %v8628 = vadd.f32 %v8516, %v8627
    %v8629 = vpop.f32.mrf.mxu0
    %v8630 = vadd.f32 %v8518, %v8629
    %8631 = vmatprep.mubr.f32.mxu0 0.0
    %v8632 = vand.u32 %v6205, 4294901760
    %v8633 = vsub.f32 %v6205, %v8632
    %8634 = vmatmul.mubr.f32.gmra.mxu0 %v8633
    %v8635 = vpop.f32.mrf.mxu0
    %v8636 = vadd.f32 %v8523, %v8635
    %v8637 = vpop.f32.mrf.mxu0
    %v8638 = vadd.f32 %v8525, %v8637
    %8639 = vdwg.mxu0
    %8640 = vmatprep.subr.mxu0 0.0
    %8641 = vmatpush1.msra.mxu0 0.0
    %8642 = vmatprep.subr.mxu0 0.0
    %8643 = vmatpush1.msra.mxu0 0.0
    %8644 = vmatprep.subr.mxu0 0.0
    %8645 = vmatpush1.msra.mxu0 0.0
    %8646 = vmatprep.subr.mxu0 0.0
    %8647 = vmatpush1.msra.mxu0 0.0
    %8648 = vmatprep.subr.mxu0 0.0
    %8649 = vmatpush1.msra.mxu0 0.0
    %8650 = vmatprep.subr.mxu0 0.0
    %8651 = vmatpush1.msra.mxu0 0.0
    %8652 = vmatprep.subr.mxu0 0.0
    %8653 = vmatpush1.msra.mxu0 0.0
    %8654 = vmatprep.subr.mxu0 0.0
    %8655 = vmatpush1.msra.mxu0 0.0
    %8656 = vmatprep.subr.mxu0 0.0
    %8657 = vmatpush1.msra.mxu0 0.0
    %8658 = vmatprep.subr.mxu0 0.0
    %8659 = vmatpush1.msra.mxu0 0.0
    %8660 = vmatprep.subr.mxu0 0.0
    %8661 = vmatpush1.msra.mxu0 0.0
    %8662 = vmatprep.subr.mxu0 0.0
    %8663 = vmatpush1.msra.mxu0 0.0
    %v8664 = vand.u32 %v6164, 4294901760
    %8665 = vmatprep.subr.mxu0 %v8664
    %v8666 = vand.u32 %v6163, 4294901760
    %8667 = vmatpush1.msra.mxu0 %v8666
    %v8668 = vand.u32 %v6156, 4294901760
    %8669 = vmatprep.subr.mxu0 %v8668
    %v8670 = vand.u32 %v6155, 4294901760
    %8671 = vmatpush1.msra.mxu0 %v8670
    %v8672 = vand.u32 %v6148, 4294901760
    %8673 = vmatprep.subr.mxu0 %v8672
    %v8674 = vand.u32 %v6147, 4294901760
    %8675 = vmatpush1.msra.mxu0 %v8674
    %v8676 = vand.u32 %v6140, 4294901760
    %8677 = vmatprep.subr.mxu0 %v8676
    %v8678 = vand.u32 %v6139, 4294901760
    %8679 = vmatpush1.msra.mxu0 %v8678
    %8680 = vmatprep.subr.mxu0 0.0
    %8681 = vmatpush2.msra.mxu0 0.0
    %8682 = vmatprep.subr.mxu0 0.0
    %8683 = vmatpush2.msra.mxu0 0.0
    %8684 = vmatprep.subr.mxu0 0.0
    %8685 = vmatpush2.msra.mxu0 0.0
    %8686 = vmatprep.subr.mxu0 0.0
    %8687 = vmatpush2.msra.mxu0 0.0
    %8688 = vmatprep.subr.mxu0 0.0
    %8689 = vmatpush2.msra.mxu0 0.0
    %8690 = vmatprep.subr.mxu0 0.0
    %8691 = vmatpush2.msra.mxu0 0.0
    %8692 = vmatprep.subr.mxu0 0.0
    %8693 = vmatpush2.msra.mxu0 0.0
    %8694 = vmatprep.subr.mxu0 0.0
    %8695 = vmatpush2.msra.mxu0 0.0
    %8696 = vmatprep.subr.mxu0 0.0
    %8697 = vmatpush2.msra.mxu0 0.0
    %8698 = vmatprep.subr.mxu0 0.0
    %8699 = vmatpush2.msra.mxu0 0.0
    %8700 = vmatprep.subr.mxu0 0.0
    %8701 = vmatpush2.msra.mxu0 0.0
    %8702 = vmatprep.subr.mxu0 0.0
    %8703 = vmatpush2.msra.mxu0 0.0
    %8704 = vmatprep.subr.mxu0 0.0
    %8705 = vmatpush2.msra.mxu0 0.0
    %8706 = vmatprep.subr.mxu0 0.0
    %8707 = vmatpush2.msra.mxu0 0.0
    %8708 = vmatprep.subr.mxu0 0.0
    %8709 = vmatpush2.msra.mxu0 0.0
    %8710 = vmatprep.subr.mxu0 0.0
    %8711 = vmatpush2.msra.mxu0 0.0
    %8712 = vmatprep.mubr.f32.mxu0 0.0
    %v8713 = vand.u32 %v6196, 4294901760
    %v8714 = vsub.f32 %v6196, %v8713
    %v8715 = vand.u32 %v8714, 4294901760
    %8716 = vmatmul.mubr.f32.gmra.mxu0 %v8715
    %v8717 = vpop.f32.mrf.mxu0
    %v8718 = vadd.f32 %v8612, %v8717
    %v8719 = vpop.f32.mrf.mxu0
    %v8720 = vadd.f32 %v8614, %v8719
    %8721 = vmatprep.mubr.f32.mxu0 0.0
    %v8722 = vand.u32 %v6199, 4294901760
    %v8723 = vsub.f32 %v6199, %v8722
    %v8724 = vand.u32 %v8723, 4294901760
    %8725 = vmatmul.mubr.f32.gmra.mxu0 %v8724
    %v8726 = vpop.f32.mrf.mxu0
    %v8727 = vadd.f32 %v8620, %v8726
    %v8728 = vpop.f32.mrf.mxu0
    %v8729 = vadd.f32 %v8622, %v8728
    %8730 = vmatprep.mubr.f32.mxu0 0.0
    %v8731 = vand.u32 %v6202, 4294901760
    %v8732 = vsub.f32 %v6202, %v8731
    %v8733 = vand.u32 %v8732, 4294901760
    %8734 = vmatmul.mubr.f32.gmra.mxu0 %v8733
    %v8735 = vpop.f32.mrf.mxu0
    %v8736 = vadd.f32 %v8628, %v8735
    %v8737 = vpop.f32.mrf.mxu0
    %v8738 = vadd.f32 %v8630, %v8737
    %8739 = vmatprep.mubr.f32.mxu0 0.0
    %v8740 = vand.u32 %v6205, 4294901760
    %v8741 = vsub.f32 %v6205, %v8740
    %v8742 = vand.u32 %v8741, 4294901760
    %8743 = vmatmul.mubr.f32.gmra.mxu0 %v8742
    %v8744 = vpop.f32.mrf.mxu0
    %v8745 = vadd.f32 %v8636, %v8744
    %v8746 = vpop.f32.mrf.mxu0
    %v8747 = vadd.f32 %v8638, %v8746
    %8748 = vdwg.mxu0
    %8749 = vmatprep.subr.mxu0 0.0
    %8750 = vmatpush1.msra.mxu0 0.0
    %8751 = vmatprep.subr.mxu0 0.0
    %8752 = vmatpush1.msra.mxu0 0.0
    %8753 = vmatprep.subr.mxu0 0.0
    %8754 = vmatpush1.msra.mxu0 0.0
    %8755 = vmatprep.subr.mxu0 0.0
    %8756 = vmatpush1.msra.mxu0 0.0
    %8757 = vmatprep.subr.mxu0 0.0
    %8758 = vmatpush1.msra.mxu0 0.0
    %8759 = vmatprep.subr.mxu0 0.0
    %8760 = vmatpush1.msra.mxu0 0.0
    %8761 = vmatprep.subr.mxu0 0.0
    %8762 = vmatpush1.msra.mxu0 0.0
    %8763 = vmatprep.subr.mxu0 0.0
    %8764 = vmatpush1.msra.mxu0 0.0
    %8765 = vmatprep.subr.mxu0 0.0
    %8766 = vmatpush1.msra.mxu0 0.0
    %8767 = vmatprep.subr.mxu0 0.0
    %8768 = vmatpush1.msra.mxu0 0.0
    %8769 = vmatprep.subr.mxu0 0.0
    %8770 = vmatpush1.msra.mxu0 0.0
    %8771 = vmatprep.subr.mxu0 0.0
    %8772 = vmatpush1.msra.mxu0 0.0
    %v8773 = vand.u32 %v6164, 4294901760
    %v8774 = vsub.f32 %v6164, %v8773
    %v8775 = vand.u32 %v8774, 4294901760
    %8776 = vmatprep.subr.mxu0 %v8775
    %v8777 = vand.u32 %v6163, 4294901760
    %v8778 = vsub.f32 %v6163, %v8777
    %v8779 = vand.u32 %v8778, 4294901760
    %8780 = vmatpush1.msra.mxu0 %v8779
    %v8781 = vand.u32 %v6156, 4294901760
    %v8782 = vsub.f32 %v6156, %v8781
    %v8783 = vand.u32 %v8782, 4294901760
    %8784 = vmatprep.subr.mxu0 %v8783
    %v8785 = vand.u32 %v6155, 4294901760
    %v8786 = vsub.f32 %v6155, %v8785
    %v8787 = vand.u32 %v8786, 4294901760
    %8788 = vmatpush1.msra.mxu0 %v8787
    %v8789 = vand.u32 %v6148, 4294901760
    %v8790 = vsub.f32 %v6148, %v8789
    %v8791 = vand.u32 %v8790, 4294901760
    %8792 = vmatprep.subr.mxu0 %v8791
    %v8793 = vand.u32 %v6147, 4294901760
    %v8794 = vsub.f32 %v6147, %v8793
    %v8795 = vand.u32 %v8794, 4294901760
    %8796 = vmatpush1.msra.mxu0 %v8795
    %v8797 = vand.u32 %v6140, 4294901760
    %v8798 = vsub.f32 %v6140, %v8797
    %v8799 = vand.u32 %v8798, 4294901760
    %8800 = vmatprep.subr.mxu0 %v8799
    %v8801 = vand.u32 %v6139, 4294901760
    %v8802 = vsub.f32 %v6139, %v8801
    %v8803 = vand.u32 %v8802, 4294901760
    %8804 = vmatpush1.msra.mxu0 %v8803
    %8805 = vmatprep.subr.mxu0 0.0
    %8806 = vmatpush2.msra.mxu0 0.0
    %8807 = vmatprep.subr.mxu0 0.0
    %8808 = vmatpush2.msra.mxu0 0.0
    %8809 = vmatprep.subr.mxu0 0.0
    %8810 = vmatpush2.msra.mxu0 0.0
    %8811 = vmatprep.subr.mxu0 0.0
    %8812 = vmatpush2.msra.mxu0 0.0
    %8813 = vmatprep.subr.mxu0 0.0
    %8814 = vmatpush2.msra.mxu0 0.0
    %8815 = vmatprep.subr.mxu0 0.0
    %8816 = vmatpush2.msra.mxu0 0.0
    %8817 = vmatprep.subr.mxu0 0.0
    %8818 = vmatpush2.msra.mxu0 0.0
    %8819 = vmatprep.subr.mxu0 0.0
    %8820 = vmatpush2.msra.mxu0 0.0
    %8821 = vmatprep.subr.mxu0 0.0
    %8822 = vmatpush2.msra.mxu0 0.0
    %8823 = vmatprep.subr.mxu0 0.0
    %8824 = vmatpush2.msra.mxu0 0.0
    %8825 = vmatprep.subr.mxu0 0.0
    %8826 = vmatpush2.msra.mxu0 0.0
    %8827 = vmatprep.subr.mxu0 0.0
    %8828 = vmatpush2.msra.mxu0 0.0
    %8829 = vmatprep.subr.mxu0 0.0
    %8830 = vmatpush2.msra.mxu0 0.0
    %8831 = vmatprep.subr.mxu0 0.0
    %8832 = vmatpush2.msra.mxu0 0.0
    %8833 = vmatprep.subr.mxu0 0.0
    %8834 = vmatpush2.msra.mxu0 0.0
    %8835 = vmatprep.subr.mxu0 0.0
    %8836 = vmatpush2.msra.mxu0 0.0
    %8837 = vmatprep.mubr.f32.mxu0 0.0
    %v8838 = vand.u32 %v6196, 4294901760
    %8839 = vmatmul.mubr.f32.gmra.mxu0 %v8838
    %v8840 = vpop.f32.mrf.mxu0
    %v8841 = vadd.f32 %v8718, %v8840
    %v8842 = vpop.f32.mrf.mxu0
    %v8843 = vadd.f32 %v8720, %v8842
    %8844 = vmatprep.mubr.f32.mxu0 0.0
    %v8845 = vand.u32 %v6199, 4294901760
    %8846 = vmatmul.mubr.f32.gmra.mxu0 %v8845
    %v8847 = vpop.f32.mrf.mxu0
    %v8848 = vadd.f32 %v8727, %v8847
    %v8849 = vpop.f32.mrf.mxu0
    %v8850 = vadd.f32 %v8729, %v8849
    %8851 = vmatprep.mubr.f32.mxu0 0.0
    %v8852 = vand.u32 %v6202, 4294901760
    %8853 = vmatmul.mubr.f32.gmra.mxu0 %v8852
    %v8854 = vpop.f32.mrf.mxu0
    %v8855 = vadd.f32 %v8736, %v8854
    %v8856 = vpop.f32.mrf.mxu0
    %v8857 = vadd.f32 %v8738, %v8856
    %8858 = vmatprep.mubr.f32.mxu0 0.0
    %v8859 = vand.u32 %v6205, 4294901760
    %8860 = vmatmul.mubr.f32.gmra.mxu0 %v8859
    %v8861 = vpop.f32.mrf.mxu0
    %v8862 = vadd.f32 %v8745, %v8861
    %v8863 = vpop.f32.mrf.mxu0
    %v8864 = vadd.f32 %v8747, %v8863
    %8865 = vdwg.mxu0
    %8866 = vmatprep.subr.mxu0 0.0
    %8867 = vmatpush1.msra.mxu0 0.0
    %8868 = vmatprep.subr.mxu0 0.0
    %8869 = vmatpush1.msra.mxu0 0.0
    %8870 = vmatprep.subr.mxu0 0.0
    %8871 = vmatpush1.msra.mxu0 0.0
    %8872 = vmatprep.subr.mxu0 0.0
    %8873 = vmatpush1.msra.mxu0 0.0
    %8874 = vmatprep.subr.mxu0 0.0
    %8875 = vmatpush1.msra.mxu0 0.0
    %8876 = vmatprep.subr.mxu0 0.0
    %8877 = vmatpush1.msra.mxu0 0.0
    %8878 = vmatprep.subr.mxu0 0.0
    %8879 = vmatpush1.msra.mxu0 0.0
    %8880 = vmatprep.subr.mxu0 0.0
    %8881 = vmatpush1.msra.mxu0 0.0
    %8882 = vmatprep.subr.mxu0 0.0
    %8883 = vmatpush1.msra.mxu0 0.0
    %8884 = vmatprep.subr.mxu0 0.0
    %8885 = vmatpush1.msra.mxu0 0.0
    %8886 = vmatprep.subr.mxu0 0.0
    %8887 = vmatpush1.msra.mxu0 0.0
    %8888 = vmatprep.subr.mxu0 0.0
    %8889 = vmatpush1.msra.mxu0 0.0
    %v8890 = vand.u32 %v6164, 4294901760
    %8891 = vmatprep.subr.mxu0 %v8890
    %v8892 = vand.u32 %v6163, 4294901760
    %8893 = vmatpush1.msra.mxu0 %v8892
    %v8894 = vand.u32 %v6156, 4294901760
    %8895 = vmatprep.subr.mxu0 %v8894
    %v8896 = vand.u32 %v6155, 4294901760
    %8897 = vmatpush1.msra.mxu0 %v8896
    %v8898 = vand.u32 %v6148, 4294901760
    %8899 = vmatprep.subr.mxu0 %v8898
    %v8900 = vand.u32 %v6147, 4294901760
    %8901 = vmatpush1.msra.mxu0 %v8900
    %v8902 = vand.u32 %v6140, 4294901760
    %8903 = vmatprep.subr.mxu0 %v8902
    %v8904 = vand.u32 %v6139, 4294901760
    %8905 = vmatpush1.msra.mxu0 %v8904
    %8906 = vmatprep.subr.mxu0 0.0
    %8907 = vmatpush2.msra.mxu0 0.0
    %8908 = vmatprep.subr.mxu0 0.0
    %8909 = vmatpush2.msra.mxu0 0.0
    %8910 = vmatprep.subr.mxu0 0.0
    %8911 = vmatpush2.msra.mxu0 0.0
    %8912 = vmatprep.subr.mxu0 0.0
    %8913 = vmatpush2.msra.mxu0 0.0
    %8914 = vmatprep.subr.mxu0 0.0
    %8915 = vmatpush2.msra.mxu0 0.0
    %8916 = vmatprep.subr.mxu0 0.0
    %8917 = vmatpush2.msra.mxu0 0.0
    %8918 = vmatprep.subr.mxu0 0.0
    %8919 = vmatpush2.msra.mxu0 0.0
    %8920 = vmatprep.subr.mxu0 0.0
    %8921 = vmatpush2.msra.mxu0 0.0
    %8922 = vmatprep.subr.mxu0 0.0
    %8923 = vmatpush2.msra.mxu0 0.0
    %8924 = vmatprep.subr.mxu0 0.0
    %8925 = vmatpush2.msra.mxu0 0.0
    %8926 = vmatprep.subr.mxu0 0.0
    %8927 = vmatpush2.msra.mxu0 0.0
    %8928 = vmatprep.subr.mxu0 0.0
    %8929 = vmatpush2.msra.mxu0 0.0
    %8930 = vmatprep.subr.mxu0 0.0
    %8931 = vmatpush2.msra.mxu0 0.0
    %8932 = vmatprep.subr.mxu0 0.0
    %8933 = vmatpush2.msra.mxu0 0.0
    %8934 = vmatprep.subr.mxu0 0.0
    %8935 = vmatpush2.msra.mxu0 0.0
    %8936 = vmatprep.subr.mxu0 0.0
    %8937 = vmatpush2.msra.mxu0 0.0
    %8938 = vmatprep.mubr.f32.mxu0 0.0
    %v8939 = vand.u32 %v6196, 4294901760
    %8940 = vmatmul.mubr.f32.gmra.mxu0 %v8939
    %v8941 = vpop.f32.mrf.mxu0
    %v8942 = vadd.f32 %v8841, %v8941
    %v8943 = vpop.f32.mrf.mxu0
    %v8944 = vadd.f32 %v8843, %v8943
    %8945 = vmatprep.mubr.f32.mxu0 0.0
    %v8946 = vand.u32 %v6199, 4294901760
    %8947 = vmatmul.mubr.f32.gmra.mxu0 %v8946
    %v8948 = vpop.f32.mrf.mxu0
    %v8949 = vadd.f32 %v8848, %v8948
    %v8950 = vpop.f32.mrf.mxu0
    %v8951 = vadd.f32 %v8850, %v8950
    %8952 = vmatprep.mubr.f32.mxu0 0.0
    %v8953 = vand.u32 %v6202, 4294901760
    %8954 = vmatmul.mubr.f32.gmra.mxu0 %v8953
    %v8955 = vpop.f32.mrf.mxu0
    %v8956 = vadd.f32 %v8855, %v8955
    %v8957 = vpop.f32.mrf.mxu0
    %v8958 = vadd.f32 %v8857, %v8957
    %8959 = vmatprep.mubr.f32.mxu0 0.0
    %v8960 = vand.u32 %v6205, 4294901760
    %8961 = vmatmul.mubr.f32.gmra.mxu0 %v8960
    %v8962 = vpop.f32.mrf.mxu0
    %v8963 = vadd.f32 %v8862, %v8962
    %v8964 = vpop.f32.mrf.mxu0
    %v8965 = vadd.f32 %v8864, %v8964
    %8966 = vdwg.mxu0
    %v8967 = vtanh.pop %v6872
    %v8968 = vtanh.pop %v6874
    %v8969 = vtanh.pop %v7562
    %v8970 = vtanh.pop %v7564
    %v8971 = vtanh.pop %v8252
    %v8972 = vtanh.pop %v8254
    %v8973 = vtanh.pop %v8942
    %v8974 = vtanh.pop %v8944
    %v8975 = vtanh.pop %v6879
    %v8976 = vtanh.pop %v6881
    %v8977 = vtanh.pop %v7569
    %v8978 = vtanh.pop %v7571
    %v8979 = vtanh.pop %v8259
    %v8980 = vtanh.pop %v8261
    %v8981 = vtanh.pop %v8949
    %v8982 = vtanh.pop %v8951
    %v8983 = vtanh.pop %v6886
    %v8984 = vtanh.pop %v6888
    %v8985 = vtanh.pop %v7576
    %v8986 = vtanh.pop %v7578
    %v8987 = vtanh.pop %v8266
    %v8988 = vtanh.pop %v8268
    %v8989 = vtanh.pop %v8956
    %v8990 = vtanh.pop %v8958
    %v8991 = vtanh.pop %v6893
    %v8992 = vtanh.pop %v6895
    %v8993 = vtanh.pop %v7583
    %v8994 = vtanh.pop %v7585
    %v8995 = vtanh.pop %v8273
    %v8996 = vtanh.pop %v8275
    %v8997 = vtanh.pop %v8963
    %v8998 = vtanh.pop %v8965
    %v8999 = vmul.f32 %v8967, %v8967
    %v9000 = vmul.f32 %v8968, %v8968
    %v9001 = vmul.f32 %v8969, %v8969
    %v9002 = vmul.f32 %v8970, %v8970
    %v9003 = vmul.f32 %v8971, %v8971
    %v9004 = vmul.f32 %v8972, %v8972
    %v9005 = vmul.f32 %v8973, %v8973
    %v9006 = vmul.f32 %v8974, %v8974
    %v9007 = vmul.f32 %v8975, %v8975
    %v9008 = vmul.f32 %v8976, %v8976
    %v9009 = vmul.f32 %v8977, %v8977
    %v9010 = vmul.f32 %v8978, %v8978
    %v9011 = vmul.f32 %v8979, %v8979
    %v9012 = vmul.f32 %v8980, %v8980
    %v9013 = vmul.f32 %v8981, %v8981
    %v9014 = vmul.f32 %v8982, %v8982
    %v9015 = vmul.f32 %v8983, %v8983
    %v9016 = vmul.f32 %v8984, %v8984
    %v9017 = vmul.f32 %v8985, %v8985
    %v9018 = vmul.f32 %v8986, %v8986
    %v9019 = vmul.f32 %v8987, %v8987
    %v9020 = vmul.f32 %v8988, %v8988
    %v9021 = vmul.f32 %v8989, %v8989
    %v9022 = vmul.f32 %v8990, %v8990
    %v9023 = vmul.f32 %v8991, %v8991
    %v9024 = vmul.f32 %v8992, %v8992
    %v9025 = vmul.f32 %v8993, %v8993
    %v9026 = vmul.f32 %v8994, %v8994
    %v9027 = vmul.f32 %v8995, %v8995
    %v9028 = vmul.f32 %v8996, %v8996
    %v9029 = vmul.f32 %v8997, %v8997
    %v9030 = vmul.f32 %v8998, %v8998
    %v9031 = vmul.f32 %v8999, %v8967
    %v9032 = vmul.f32 %v9000, %v8968
    %v9033 = vmul.f32 %v9001, %v8969
    %v9034 = vmul.f32 %v9002, %v8970
    %v9035 = vmul.f32 %v9003, %v8971
    %v9036 = vmul.f32 %v9004, %v8972
    %v9037 = vmul.f32 %v9005, %v8973
    %v9038 = vmul.f32 %v9006, %v8974
    %v9039 = vmul.f32 %v9007, %v8975
    %v9040 = vmul.f32 %v9008, %v8976
    %v9041 = vmul.f32 %v9009, %v8977
    %v9042 = vmul.f32 %v9010, %v8978
    %v9043 = vmul.f32 %v9011, %v8979
    %v9044 = vmul.f32 %v9012, %v8980
    %v9045 = vmul.f32 %v9013, %v8981
    %v9046 = vmul.f32 %v9014, %v8982
    %v9047 = vmul.f32 %v9015, %v8983
    %v9048 = vmul.f32 %v9016, %v8984
    %v9049 = vmul.f32 %v9017, %v8985
    %v9050 = vmul.f32 %v9018, %v8986
    %v9051 = vmul.f32 %v9019, %v8987
    %v9052 = vmul.f32 %v9020, %v8988
    %v9053 = vmul.f32 %v9021, %v8989
    %v9054 = vmul.f32 %v9022, %v8990
    %v9055 = vmul.f32 %v9023, %v8991
    %v9056 = vmul.f32 %v9024, %v8992
    %v9057 = vmul.f32 %v9025, %v8993
    %v9058 = vmul.f32 %v9026, %v8994
    %v9059 = vmul.f32 %v9027, %v8995
    %v9060 = vmul.f32 %v9028, %v8996
    %v9061 = vmul.f32 %v9029, %v8997
    %v9062 = vmul.f32 %v9030, %v8998
    %v9063 = vadd.f32 %v9031, %v6133
    %v9064 = vadd.f32 %v9032, %v6134
    %v9065 = vadd.f32 %v9033, %v6135
    %v9066 = vadd.f32 %v9034, %v6136
    %v9067 = vadd.f32 %v9035, %v6137
    %v9068 = vadd.f32 %v9036, %v6138
    %v9069 = vadd.f32 %v9037, %v6139
    %v9070 = vadd.f32 %v9038, %v6140
    %v9071 = vadd.f32 %v9039, %v6141
    %v9072 = vadd.f32 %v9040, %v6142
    %v9073 = vadd.f32 %v9041, %v6143
    %v9074 = vadd.f32 %v9042, %v6144
    %v9075 = vadd.f32 %v9043, %v6145
    %v9076 = vadd.f32 %v9044, %v6146
    %v9077 = vadd.f32 %v9045, %v6147
    %v9078 = vadd.f32 %v9046, %v6148
    %v9079 = vadd.f32 %v9047, %v6149
    %v9080 = vadd.f32 %v9048, %v6150
    %v9081 = vadd.f32 %v9049, %v6151
    %v9082 = vadd.f32 %v9050, %v6152
    %v9083 = vadd.f32 %v9051, %v6153
    %v9084 = vadd.f32 %v9052, %v6154
    %v9085 = vadd.f32 %v9053, %v6155
    %v9086 = vadd.f32 %v9054, %v6156
    %v9087 = vadd.f32 %v9055, %v6157
    %v9088 = vadd.f32 %v9056, %v6158
    %v9089 = vadd.f32 %v9057, %v6159
    %v9090 = vadd.f32 %v9058, %v6160
    %v9091 = vadd.f32 %v9059, %v6161
    %v9092 = vadd.f32 %v9060, %v6162
    %v9093 = vadd.f32 %v9061, %v6163
    %v9094 = vadd.f32 %v9062, %v6164
    %v9095 = vld [vmem:[%s5] sm:$0xff]
    %v9096 = vld [vmem:[%s5 + $0x8] sm:$0xff]
    %v9097 = vld [vmem:[%s5 + $0x10] sm:$0xff]
    %v9098 = vld [vmem:[%s5 + $0x18] sm:$0xff]
    %9100 = vset.pattern.permute.xlu0 0
    %9101 = vperm.xlu0 %9100, %v9095
    %v9102 = vpop.permute.xlu0 %9101
    %9105 = vset.pattern.permute.xlu0 0
    %9106 = vperm.xlu0 %9105, %v9096
    %v9107 = vpop.permute.xlu0 %9106
    %9110 = vset.pattern.permute.xlu0 0
    %9111 = vperm.xlu0 %9110, %v9097
    %v9112 = vpop.permute.xlu0 %9111
    %9115 = vset.pattern.permute.xlu0 0
    %9116 = vperm.xlu0 %9115, %v9098
    %v9117 = vpop.permute.xlu0 %9116
    %v9119 = vmul.f32 %v9102, %v9063
    %v9120 = vmul.f32 %v9102, %v9064
    %v9121 = vmul.f32 %v9102, %v9065
    %v9122 = vmul.f32 %v9102, %v9066
    %v9123 = vmul.f32 %v9102, %v9067
    %v9124 = vmul.f32 %v9102, %v9068
    %v9125 = vmul.f32 %v9102, %v9069
    %v9126 = vmul.f32 %v9102, %v9070
    %v9127 = vmul.f32 %v9107, %v9071
    %v9128 = vmul.f32 %v9107, %v9072
    %v9129 = vmul.f32 %v9107, %v9073
    %v9130 = vmul.f32 %v9107, %v9074
    %v9131 = vmul.f32 %v9107, %v9075
    %v9132 = vmul.f32 %v9107, %v9076
    %v9133 = vmul.f32 %v9107, %v9077
    %v9134 = vmul.f32 %v9107, %v9078
    %v9135 = vmul.f32 %v9112, %v9079
    %v9136 = vmul.f32 %v9112, %v9080
    %v9137 = vmul.f32 %v9112, %v9081
    %v9138 = vmul.f32 %v9112, %v9082
    %v9139 = vmul.f32 %v9112, %v9083
    %v9140 = vmul.f32 %v9112, %v9084
    %v9141 = vmul.f32 %v9112, %v9085
    %v9142 = vmul.f32 %v9112, %v9086
    %v9143 = vmul.f32 %v9117, %v9087
    %v9144 = vmul.f32 %v9117, %v9088
    %v9145 = vmul.f32 %v9117, %v9089
    %v9146 = vmul.f32 %v9117, %v9090
    %v9147 = vmul.f32 %v9117, %v9091
    %v9148 = vmul.f32 %v9117, %v9092
    %v9149 = vmul.f32 %v9117, %v9093
    %v9150 = vmul.f32 %v9117, %v9094
    %v9151 = vadd.f32 %v9119, %v9127
    %v9152 = vadd.f32 %v9151, %v9135
    %v9153 = vadd.f32 %v9152, %v9143
    %v9154 = vrot.slane %v9153, 4
    %v9155 = vadd.f32 %v9153, %v9154
    %v9156 = vrot.slane %v9155, 2
    %v9157 = vadd.f32 %v9155, %v9156
    %v9158 = vrot.slane %v9157, 1
    %v9159 = vadd.f32 %v9157, %v9158
    %v9160 = vadd.f32 %v9120, %v9128
    %v9161 = vadd.f32 %v9160, %v9136
    %v9162 = vadd.f32 %v9161, %v9144
    %v9163 = vrot.slane %v9162, 4
    %v9164 = vadd.f32 %v9162, %v9163
    %v9165 = vrot.slane %v9164, 2
    %v9166 = vadd.f32 %v9164, %v9165
    %v9167 = vrot.slane %v9166, 1
    %v9168 = vadd.f32 %v9166, %v9167
    %v9169 = vadd.f32 %v9121, %v9129
    %v9170 = vadd.f32 %v9169, %v9137
    %v9171 = vadd.f32 %v9170, %v9145
    %v9172 = vrot.slane %v9171, 4
    %v9173 = vadd.f32 %v9171, %v9172
    %v9174 = vrot.slane %v9173, 2
    %v9175 = vadd.f32 %v9173, %v9174
    %v9176 = vrot.slane %v9175, 1
    %v9177 = vadd.f32 %v9175, %v9176
    %v9178 = vadd.f32 %v9122, %v9130
    %v9179 = vadd.f32 %v9178, %v9138
    %v9180 = vadd.f32 %v9179, %v9146
    %v9181 = vrot.slane %v9180, 4
    %v9182 = vadd.f32 %v9180, %v9181
    %v9183 = vrot.slane %v9182, 2
    %v9184 = vadd.f32 %v9182, %v9183
    %v9185 = vrot.slane %v9184, 1
    %v9186 = vadd.f32 %v9184, %v9185
    %v9187 = vadd.f32 %v9123, %v9131
    %v9188 = vadd.f32 %v9187, %v9139
    %v9189 = vadd.f32 %v9188, %v9147
    %v9190 = vrot.slane %v9189, 4
    %v9191 = vadd.f32 %v9189, %v9190
    %v9192 = vrot.slane %v9191, 2
    %v9193 = vadd.f32 %v9191, %v9192
    %v9194 = vrot.slane %v9193, 1
    %v9195 = vadd.f32 %v9193, %v9194
    %v9196 = vadd.f32 %v9124, %v9132
    %v9197 = vadd.f32 %v9196, %v9140
    %v9198 = vadd.f32 %v9197, %v9148
    %v9199 = vrot.slane %v9198, 4
    %v9200 = vadd.f32 %v9198, %v9199
    %v9201 = vrot.slane %v9200, 2
    %v9202 = vadd.f32 %v9200, %v9201
    %v9203 = vrot.slane %v9202, 1
    %v9204 = vadd.f32 %v9202, %v9203
    %v9205 = vadd.f32 %v9125, %v9133
    %v9206 = vadd.f32 %v9205, %v9141
    %v9207 = vadd.f32 %v9206, %v9149
    %v9208 = vrot.slane %v9207, 4
    %v9209 = vadd.f32 %v9207, %v9208
    %v9210 = vrot.slane %v9209, 2
    %v9211 = vadd.f32 %v9209, %v9210
    %v9212 = vrot.slane %v9211, 1
    %v9213 = vadd.f32 %v9211, %v9212
    %v9214 = vadd.f32 %v9126, %v9134
    %v9215 = vadd.f32 %v9214, %v9142
    %v9216 = vadd.f32 %v9215, %v9150
    %v9217 = vrot.slane %v9216, 4
    %v9218 = vadd.f32 %v9216, %v9217
    %v9219 = vrot.slane %v9218, 2
    %v9220 = vadd.f32 %v9218, %v9219
    %v9221 = vrot.slane %v9220, 1
    %v9222 = vadd.f32 %v9220, %v9221
    %v9223 = vld [vmem:[#allocation2] sm:$0x1]
    %9225 = vset.pattern.permute.xlu0 0
    %9226 = vperm.xlu0 %9225, %v9223
    %v9227 = vpop.permute.xlu0 %9226
    %v9229 = vlaneseq
    %v9230 = vshrl.u32 %v9229, 7
    %v9231 = vsub.s32 0, %v9230
    %v9232 = vrot.slane %v9227, %v9231
    %v9233 = vadd.f32 %v9159, %v9232
    %v9234 = vadd.f32 %v9168, %v9232
    %v9235 = vadd.f32 %v9177, %v9232
    %v9236 = vadd.f32 %v9186, %v9232
    %v9237 = vadd.f32 %v9195, %v9232
    %v9238 = vadd.f32 %v9204, %v9232
    %v9239 = vadd.f32 %v9213, %v9232
    %v9240 = vadd.f32 %v9222, %v9232
    %v9241 = vsub.f32 1.0, %v29
    %v9242 = vmul.f32 %v9241, %v29
    %v9251 = vcombine.low %v9233, %v9234
    %v9252 = vcombine.low %v9235, %v9236
    %v9253 = vcombine.low %v9237, %v9238
    %v9254 = vcombine.low %v9239, %v9240
    %v9256 = vunpack.c.l.s4 1966171168
    %v9257 = vunpack.c.0.s8 %v9256
    %v9258 = vlaneseq
    %v9259 = vshrl.u32 %v9258, 7
    %v9260 = vsub.s32 %v9257, %v9259
    %v9261 = vrot.slane %v9251, %v9260
    %v9263 = vunpack.c.l.s4 1966171168
    %v9264 = vunpack.c.0.s8 %v9263
    %v9265 = vlaneseq
    %v9266 = vshrl.u32 %v9265, 7
    %v9267 = vsub.s32 %v9264, %v9266
    %v9268 = vrot.slane %v9252, %v9267
    %v9270 = vunpack.c.l.s4 1966171168
    %v9271 = vunpack.c.0.s8 %v9270
    %v9272 = vlaneseq
    %v9273 = vshrl.u32 %v9272, 7
    %v9274 = vsub.s32 %v9271, %v9273
    %v9275 = vrot.slane %v9253, %v9274
    %v9277 = vunpack.c.l.s4 1966171168
    %v9278 = vunpack.c.0.s8 %v9277
    %v9279 = vlaneseq
    %v9280 = vshrl.u32 %v9279, 7
    %v9281 = vsub.s32 %v9278, %v9280
    %v9282 = vrot.slane %v9254, %v9281
    %v9283 = vcombine.low %v9261, %v9268
    %v9284 = vcombine.low %v9275, %v9282
    %v9286 = vunpack.c.l.s4 1966171168
    %v9287 = vunpack.c.0.s8 %v9286
    %v9288 = vlaneseq
    %v9289 = vshrl.u32 %v9288, 7
    %v9290 = vsub.s32 %v9287, %v9289
    %v9291 = vrot.slane %v9283, %v9290
    %v9293 = vunpack.c.l.s4 1966171168
    %v9294 = vunpack.c.0.s8 %v9293
    %v9295 = vlaneseq
    %v9296 = vshrl.u32 %v9295, 7
    %v9297 = vsub.s32 %v9294, %v9296
    %v9298 = vrot.slane %v9284, %v9297
    %v9299 = vcombine.low %v9291, %v9298
    %v9301 = vmul.f32 %v9242, %v9299
    %v9302 = vadd.f32 %v9301, %v29
    %9303 = vst [vmem:[#allocation3] sm:$0xff] %v9302
    // Predicated region
    $region30: #{tpu_custom_call.1} parent=1 // pred_check
      _
    $region31: #{tpu_custom_call.1} parent=1 // pred_check_branch
      %9305 = sbr.rel (0) target = $region33
    $region32: #{tpu_custom_call.1} parent=1 // pred_region
      %s9307 = ssub.s32 128, 128
      %9308 = vsyncadd [#allocation4], %s9307
      %s9310 = sshll.u32 [#allocation3], 4
      %s9311 = int_to_ptr.vmem [resolvable:$true] %s9310
      %9313 = dma.vmem_to_hbm [thread:$0]  %s9311, 128, %s7, [#allocation4]
    $region33: #{tpu_custom_call.1} parent=1 // pred_fallthru
      _
    // Predicated region
    $region34: #{tpu_custom_call.1} parent=1 // pred_check
      _
    $region35: #{tpu_custom_call.1} parent=1 // pred_check_branch
      %9315 = sbr.rel (0) target = $region37
    $region36: #{tpu_custom_call.1} parent=1 // pred_region
      %9316 = dma.done [#allocation4], 128
    $region37: #{tpu_custom_call.1} parent=1 // pred_fallthru
      _
    %9317 = vsyncpa [#allocation4], 1

</llo_original>
